<compile_context>
chip_gen: v7x
topology: tpu7x:2x2x1
jax: 0.10.0
libtpu: 0.0.40
codegen_flags: <defaults>
</compile_context>

<pallas_src>
import numpy as np
import jax
import jax.numpy as jnp
from jax.experimental import pallas as pl
from jax.experimental.pallas import tpu as pltpu


def stn3d_kernel(x_ref, w1_ref, b1_ref, w2_ref, b2_ref, w3_ref, b3_ref,
                 w4_ref, b4_ref, w5_ref, b5_ref, w6_ref, b6_ref, out_ref):
    # x_ref block: (BT, 3, N) f32.  Weights: bf16 (Cout, Cin).  Biases: f32 (Cout, 1).
    BT, _, N = x_ref.shape

    # Flatten the BT clouds along the lane axis: channels on sublanes, points
    # on lanes -> (3, BT*N).  128-lane-aligned concat; no transpose anywhere.
    x = jnp.concatenate([x_ref[bt] for bt in range(BT)], axis=1)

    def layer(h, w_ref, b_ref, relu=True):
        # bf16 operands on the MXU, f32 accumulation, f32 bias/ReLU on the VPU.
        z = jnp.dot(w_ref[...], h.astype(jnp.bfloat16),
                    preferred_element_type=jnp.float32) + b_ref[...]
        return jnp.maximum(z, 0.0) if relu else z

    h = layer(x, w1_ref, b1_ref)      # conv1+bn1+relu -> (64,   BT*N)
    h = layer(h, w2_ref, b2_ref)      # conv2+bn2+relu -> (128,  BT*N)
    h = layer(h, w3_ref, b3_ref)      # conv3+bn3+relu -> (1024, BT*N)

    # Global max over the N points of each cloud (lane-segment reduction),
    # assembled into a (1024, BT) feature matrix with an iota/where scatter
    # (avoids sub-128 lane concatenation).
    C3 = h.shape[0]
    lane = jax.lax.broadcasted_iota(jnp.int32, (C3, BT), 1)
    g = jnp.zeros((C3, BT), jnp.float32)
    for bt in range(BT):
        pooled = jnp.max(h[:, bt * N:(bt + 1) * N], axis=1, keepdims=True)
        g = jnp.where(lane == bt, pooled, g)

    # FC head, still channels-on-sublanes: (Cout, Cin) @ (Cin, BT).
    f = layer(g, w4_ref, b4_ref)                 # fc1+bn4+relu -> (512, BT)
    f = layer(f, w5_ref, b5_ref)                 # fc2+bn5+relu -> (256, BT)
    out = layer(f, w6_ref, b6_ref, relu=False)   # fc3 (+identity in bias) -> (9, BT)
    out_ref[0] = out


def _resident_spec(shape):
    # Whole-array block with a constant index_map: the tile never changes
    # across the batch grid, so it is DMA'd once and stays VMEM-resident
    # (bf16 weights total ~1.6 MB; even double-buffered they fit every
    # generation's scoped-VMEM default).
    return pl.BlockSpec(shape, lambda b: (0,) * len(shape))


def stn3d_forward(x_bcn, prepped_params, *, bt=None):
    """x_bcn: (B, 3, N) float32 (PyTorch NCW), N a multiple of 128.
    prepped_params: output of prepare_params().  Returns (B, 3, 3) float32."""
    B, C, N = x_bcn.shape
    assert C == 3
    # TODO(synk): pad + mask the points axis when N is not a multiple of 128
    # (e.g. 2500-point clouds); the lane-aligned flatten below assumes it.
    assert N % 128 == 0, "points axis must be a multiple of 128"

    # Batch tile: BT*N ~ 1024-2048 fills the MXU lane dimension on v5e/v6e/v7x
    # while keeping the (1024, BT*N) f32 intermediate plus resident weights a
    # few MB -- inside v5e's 16 MiB and v7x's 32 MiB scoped-VMEM defaults, so
    # no vmem_limit_bytes override is needed at these sizes.
    if bt is None:
        bt = max(1, min(B, 2048 // N))
    b_pad = ((B + bt - 1) // bt) * bt
    if b_pad != B:
        x_bcn = jnp.concatenate(
            [x_bcn, jnp.zeros((b_pad - B, C, N), x_bcn.dtype)], axis=0)
    num_tiles = b_pad // bt

    kernel_args = []
    in_specs = [pl.BlockSpec((bt, 3, N), lambda b: (b, 0, 0))]
    for w, bias in prepped_params:
        kernel_args += [w, bias]
        in_specs += [_resident_spec(w.shape), _resident_spec(bias.shape)]

    # Advisory cost estimate so XLA schedules the surrounding graph sensibly.
    flops = (2 * b_pad * N * (3 * 64 + 64 * 128 + 128 * 1024)
             + 2 * b_pad * (1024 * 512 + 512 * 256 + 256 * 9))
    bytes_accessed = (int(x_bcn.size) * x_bcn.dtype.itemsize
                      + sum(int(w.size) * w.dtype.itemsize
                            + int(b.size) * b.dtype.itemsize
                            for w, b in prepped_params)
                      + b_pad * 9 * 4)

    out = pl.pallas_call(
        stn3d_kernel,
        out_shape=jax.ShapeDtypeStruct((num_tiles, 9, bt), jnp.float32),
        grid_spec=pltpu.PrefetchScalarGridSpec(
            num_scalar_prefetch=0,
            grid=(num_tiles,),
            in_specs=in_specs,
            out_specs=pl.BlockSpec((1, 9, bt), lambda b: (b, 0, 0)),
        ),
        compiler_params=pltpu.CompilerParams(
            dimension_semantics=("parallel",)),   # batch tiles are independent
        cost_estimate=pl.CostEstimate(
            flops=flops, transcendentals=0, bytes_accessed=bytes_accessed),
    )(x_bcn, *kernel_args)

    out = jnp.transpose(out, (0, 2, 1)).reshape(b_pad, 9)[:B]
    return out.reshape(B, 3, 3)


def make_params(key):
    """PyTorch-default-style init with eval-mode BN folded in (f32)."""
    eps = 1e-5
    dims = [(3, 64), (64, 128), (128, 1024), (1024, 512), (512, 256), (256, 9)]
    keys = jax.random.split(key, len(dims))
    folded = []
    for i, (k, (fin, fout)) in enumerate(zip(keys, dims)):
        k1, k2 = jax.random.split(k)
        bound = 1.0 / np.sqrt(fin)
        w = jax.random.uniform(k1, (fout, fin), jnp.float32, -bound, bound)
        b = jax.random.uniform(k2, (fout,), jnp.float32, -bound, bound)
        if i < 5:  # conv1-3 / fc1-2 are followed by BN (gamma=1, beta=0, mean=0, var=1)
            scale = jnp.float32(1.0 / np.sqrt(1.0 + eps))
            w = w * scale
            b = b * scale
        folded.append((w, b))
    # Fold the STN 3x3 identity into the fc3 bias.
    iden = jnp.array([1, 0, 0, 0, 1, 0, 0, 0, 1], dtype=jnp.float32)
    w6, b6 = folded[5]
    folded[5] = (w6, b6 + iden)
    return folded


def prepare_params(folded):
    """One-time kernel-ready prep: weights stay in native PyTorch (Cout, Cin)
    orientation, cast to bf16 (MXU operands); biases become f32 (Cout, 1)."""
    return [(jnp.asarray(w, jnp.bfloat16),
             jnp.asarray(b, jnp.float32).reshape(-1, 1))
            for w, b in folded]


def ref_forward(x_bcn, prepped_params):
    """Pure-JAX reference with matching bf16-operand / f32-accumulate precision."""
    h = jnp.transpose(x_bcn, (0, 2, 1))                      # (B, N, 3)
    for i in range(3):
        w, b = prepped_params[i]                             # (Cout, Cin) bf16, (Cout, 1) f32
        z = jnp.einsum("bnc,oc->bno", h.astype(jnp.bfloat16), w,
                       preferred_element_type=jnp.float32)
        h = jnp.maximum(z + b[:, 0], 0.0)
    g = jnp.max(h, axis=1)                                   # (B, 1024)
    for i in range(3, 5):
        w, b = prepped_params[i]
        z = jnp.einsum("bc,oc->bo", g.astype(jnp.bfloat16), w,
                       preferred_element_type=jnp.float32)
        g = jnp.maximum(z + b[:, 0], 0.0)
    w, b = prepped_params[5]
    out = jnp.einsum("bc,oc->bo", g.astype(jnp.bfloat16), w,
                     preferred_element_type=jnp.float32) + b[:, 0]
    return out.reshape(-1, 3, 3)


if __name__ == "__main__":
    key = jax.random.PRNGKey(0)
    kp, kx = jax.random.split(key)

    B, N = 8, 128                     # small demo: 8 clouds of 128 points
    params = prepare_params(make_params(kp))
    x = jax.random.normal(kx, (B, 3, N), dtype=jnp.float32)   # PyTorch NCW input

    out = jax.block_until_ready(stn3d_forward(x, params, bt=4))  # grid of 2 tiles
    ref = jax.block_until_ready(ref_forward(x, params))

    assert out.shape == (B, 3, 3)
    np.testing.assert_allclose(np.asarray(out), np.asarray(ref),
                               rtol=2e-2, atol=2e-2)
    print("KERNEL_OK")
</pallas_src>

<mosaic_0001>
module attributes {stable_mosaic.version = 11 : i64} {
  func.func @stn3d_kernel(%arg0: i32, %arg1: memref<4x3x128xf32, #tpu.memory_space<vmem>>, %arg2: memref<64x3xbf16, #tpu.memory_space<vmem>>, %arg3: memref<64x1xf32, #tpu.memory_space<vmem>>, %arg4: memref<128x64xbf16, #tpu.memory_space<vmem>>, %arg5: memref<128x1xf32, #tpu.memory_space<vmem>>, %arg6: memref<1024x128xbf16, #tpu.memory_space<vmem>>, %arg7: memref<1024x1xf32, #tpu.memory_space<vmem>>, %arg8: memref<512x1024xbf16, #tpu.memory_space<vmem>>, %arg9: memref<512x1xf32, #tpu.memory_space<vmem>>, %arg10: memref<256x512xbf16, #tpu.memory_space<vmem>>, %arg11: memref<256x1xf32, #tpu.memory_space<vmem>>, %arg12: memref<9x256xbf16, #tpu.memory_space<vmem>>, %arg13: memref<9x1xf32, #tpu.memory_space<vmem>>, %arg14: memref<1x9x4xf32, #tpu.memory_space<vmem>>) attributes {dimension_semantics = [#tpu.dimension_semantics<parallel>], iteration_bounds = array<i64: 2>, scalar_prefetch = 0 : i64, scratch_operands = 0 : i64, tpu.core_type = #tpu.core_type<tc>, window_params = [{transform_indices = @transform_0, window_bounds = array<i64: 4, 3, 128>}, {pipeline_mode = #tpu.pipeline_mode<synchronous>, transform_indices = @transform_1, window_bounds = array<i64: 64, 3>}, {pipeline_mode = #tpu.pipeline_mode<synchronous>, transform_indices = @transform_2, window_bounds = array<i64: 64, 1>}, {pipeline_mode = #tpu.pipeline_mode<synchronous>, transform_indices = @transform_3, window_bounds = array<i64: 128, 64>}, {pipeline_mode = #tpu.pipeline_mode<synchronous>, transform_indices = @transform_4, window_bounds = array<i64: 128, 1>}, {pipeline_mode = #tpu.pipeline_mode<synchronous>, transform_indices = @transform_5, window_bounds = array<i64: 1024, 128>}, {pipeline_mode = #tpu.pipeline_mode<synchronous>, transform_indices = @transform_6, window_bounds = array<i64: 1024, 1>}, {pipeline_mode = #tpu.pipeline_mode<synchronous>, transform_indices = @transform_7, window_bounds = array<i64: 512, 1024>}, {pipeline_mode = #tpu.pipeline_mode<synchronous>, transform_indices = @transform_8, window_bounds = array<i64: 512, 1>}, {pipeline_mode = #tpu.pipeline_mode<synchronous>, transform_indices = @transform_9, window_bounds = array<i64: 256, 512>}, {pipeline_mode = #tpu.pipeline_mode<synchronous>, transform_indices = @transform_10, window_bounds = array<i64: 256, 1>}, {pipeline_mode = #tpu.pipeline_mode<synchronous>, transform_indices = @transform_11, window_bounds = array<i64: 9, 256>}, {pipeline_mode = #tpu.pipeline_mode<synchronous>, transform_indices = @transform_12, window_bounds = array<i64: 9, 1>}, {transform_indices = @transform_13, window_bounds = array<i64: 1, 9, 4>}]} {
    %c0 = arith.constant 0 : index
    %c0_0 = arith.constant 0 : index
    %c0_1 = arith.constant 0 : index
    %0 = vector.load %arg1[%c0, %c0_0, %c0_1] : memref<4x3x128xf32, #tpu.memory_space<vmem>>, vector<1x3x128xf32>
    %1 = vector.shape_cast %0 : vector<1x3x128xf32> to vector<3x128xf32>
    %c1 = arith.constant 1 : index
    %c0_2 = arith.constant 0 : index
    %c0_3 = arith.constant 0 : index
    %2 = vector.load %arg1[%c1, %c0_2, %c0_3] : memref<4x3x128xf32, #tpu.memory_space<vmem>>, vector<1x3x128xf32>
    %3 = vector.shape_cast %2 : vector<1x3x128xf32> to vector<3x128xf32>
    %c2 = arith.constant 2 : index
    %c0_4 = arith.constant 0 : index
    %c0_5 = arith.constant 0 : index
    %4 = vector.load %arg1[%c2, %c0_4, %c0_5] : memref<4x3x128xf32, #tpu.memory_space<vmem>>, vector<1x3x128xf32>
    %5 = vector.shape_cast %4 : vector<1x3x128xf32> to vector<3x128xf32>
    %c3 = arith.constant 3 : index
    %c0_6 = arith.constant 0 : index
    %c0_7 = arith.constant 0 : index
    %6 = vector.load %arg1[%c3, %c0_6, %c0_7] : memref<4x3x128xf32, #tpu.memory_space<vmem>>, vector<1x3x128xf32>
    %7 = vector.shape_cast %6 : vector<1x3x128xf32> to vector<3x128xf32>
    %8 = tpu.concatenate %1, %3, %5, %7 in 1 : vector<3x128xf32>, vector<3x128xf32>, vector<3x128xf32>, vector<3x128xf32> -> vector<3x512xf32>
    %c0_8 = arith.constant 0 : index
    %c0_9 = arith.constant 0 : index
    %9 = vector.load %arg2[%c0_8, %c0_9] : memref<64x3xbf16, #tpu.memory_space<vmem>>, vector<64x3xbf16>
    %10 = arith.truncf %8 : vector<3x512xf32> to vector<3x512xbf16>
    %cst = arith.constant dense<0.000000e+00> : vector<64x512xf32>
    %11 = tpu.matmul %9, %10, %cst {dimension_numbers = #tpu.dot_dimension_numbers<[1], [0], [0], [1], [0, 0, 1, 1], [], []>} : vector<64x3xbf16>, vector<3x512xbf16>, vector<64x512xf32> -> vector<64x512xf32>
    %c0_10 = arith.constant 0 : index
    %c0_11 = arith.constant 0 : index
    %12 = vector.load %arg3[%c0_10, %c0_11] : memref<64x1xf32, #tpu.memory_space<vmem>>, vector<64x1xf32>
    %13 = vector.broadcast %12 : vector<64x1xf32> to vector<64x512xf32>
    %14 = arith.addf %11, %13 : vector<64x512xf32>
    %cst_12 = arith.constant 0.000000e+00 : f32
    %15 = vector.broadcast %cst_12 : f32 to vector<64x512xf32>
    %16 = arith.maximumf %14, %15 : vector<64x512xf32>
    %c0_13 = arith.constant 0 : index
    %c0_14 = arith.constant 0 : index
    %17 = vector.load %arg4[%c0_13, %c0_14] : memref<128x64xbf16, #tpu.memory_space<vmem>>, vector<128x64xbf16>
    %18 = arith.truncf %16 : vector<64x512xf32> to vector<64x512xbf16>
    %cst_15 = arith.constant dense<0.000000e+00> : vector<128x512xf32>
    %19 = tpu.matmul %17, %18, %cst_15 {dimension_numbers = #tpu.dot_dimension_numbers<[1], [0], [0], [1], [0, 0, 1, 1], [], []>} : vector<128x64xbf16>, vector<64x512xbf16>, vector<128x512xf32> -> vector<128x512xf32>
    %c0_16 = arith.constant 0 : index
    %c0_17 = arith.constant 0 : index
    %20 = vector.load %arg5[%c0_16, %c0_17] : memref<128x1xf32, #tpu.memory_space<vmem>>, vector<128x1xf32>
    %21 = vector.broadcast %20 : vector<128x1xf32> to vector<128x512xf32>
    %22 = arith.addf %19, %21 : vector<128x512xf32>
    %cst_18 = arith.constant 0.000000e+00 : f32
    %23 = vector.broadcast %cst_18 : f32 to vector<128x512xf32>
    %24 = arith.maximumf %22, %23 : vector<128x512xf32>
    %c0_19 = arith.constant 0 : index
    %c0_20 = arith.constant 0 : index
    %25 = vector.load %arg6[%c0_19, %c0_20] : memref<1024x128xbf16, #tpu.memory_space<vmem>>, vector<1024x128xbf16>
    %26 = arith.truncf %24 : vector<128x512xf32> to vector<128x512xbf16>
    %cst_21 = arith.constant dense<0.000000e+00> : vector<1024x512xf32>
    %27 = tpu.matmul %25, %26, %cst_21 {dimension_numbers = #tpu.dot_dimension_numbers<[1], [0], [0], [1], [0, 0, 1, 1], [], []>} : vector<1024x128xbf16>, vector<128x512xbf16>, vector<1024x512xf32> -> vector<1024x512xf32>
    %c0_22 = arith.constant 0 : index
    %c0_23 = arith.constant 0 : index
    %28 = vector.load %arg7[%c0_22, %c0_23] : memref<1024x1xf32, #tpu.memory_space<vmem>>, vector<1024x1xf32>
    %29 = vector.broadcast %28 : vector<1024x1xf32> to vector<1024x512xf32>
    %30 = arith.addf %27, %29 : vector<1024x512xf32>
    %cst_24 = arith.constant 0.000000e+00 : f32
    %31 = vector.broadcast %cst_24 : f32 to vector<1024x512xf32>
    %32 = arith.maximumf %30, %31 : vector<1024x512xf32>
    %33 = tpu.iota {dimensions = array<i32: 1>} : vector<1024x4xi32>
    %cst_25 = arith.constant 0.000000e+00 : f32
    %34 = vector.broadcast %cst_25 : f32 to vector<1024x4xf32>
    %35 = vector.extract_strided_slice %32 {offsets = [0, 0], sizes = [1024, 128], strides = [1, 1]} : vector<1024x512xf32> to vector<1024x128xf32>
    %cst_26 = arith.constant dense<0xFF800000> : vector<1024xf32>
    %36 = vector.multi_reduction <maximumf>, %35, %cst_26 [1] : vector<1024x128xf32> to vector<1024xf32>
    %37 = vector.shape_cast %36 : vector<1024xf32> to vector<1024x1xf32>
    %c0_i32 = arith.constant 0 : i32
    %38 = vector.broadcast %c0_i32 : i32 to vector<1024x4xi32>
    %39 = arith.cmpi eq, %33, %38 : vector<1024x4xi32>
    %40 = vector.shape_cast %37 : vector<1024x1xf32> to vector<1024x1xf32>
    %41 = vector.broadcast %40 : vector<1024x1xf32> to vector<1024x4xf32>
    %42 = arith.select %39, %41, %34 : vector<1024x4xi1>, vector<1024x4xf32>
    %43 = vector.extract_strided_slice %32 {offsets = [0, 128], sizes = [1024, 128], strides = [1, 1]} : vector<1024x512xf32> to vector<1024x128xf32>
    %cst_27 = arith.constant dense<0xFF800000> : vector<1024xf32>
    %44 = vector.multi_reduction <maximumf>, %43, %cst_27 [1] : vector<1024x128xf32> to vector<1024xf32>
    %45 = vector.shape_cast %44 : vector<1024xf32> to vector<1024x1xf32>
    %c1_i32 = arith.constant 1 : i32
    %46 = vector.broadcast %c1_i32 : i32 to vector<1024x4xi32>
    %47 = arith.cmpi eq, %33, %46 : vector<1024x4xi32>
    %48 = vector.shape_cast %45 : vector<1024x1xf32> to vector<1024x1xf32>
    %49 = vector.broadcast %48 : vector<1024x1xf32> to vector<1024x4xf32>
    %50 = arith.select %47, %49, %42 : vector<1024x4xi1>, vector<1024x4xf32>
    %51 = vector.extract_strided_slice %32 {offsets = [0, 256], sizes = [1024, 128], strides = [1, 1]} : vector<1024x512xf32> to vector<1024x128xf32>
    %cst_28 = arith.constant dense<0xFF800000> : vector<1024xf32>
    %52 = vector.multi_reduction <maximumf>, %51, %cst_28 [1] : vector<1024x128xf32> to vector<1024xf32>
    %53 = vector.shape_cast %52 : vector<1024xf32> to vector<1024x1xf32>
    %c2_i32 = arith.constant 2 : i32
    %54 = vector.broadcast %c2_i32 : i32 to vector<1024x4xi32>
    %55 = arith.cmpi eq, %33, %54 : vector<1024x4xi32>
    %56 = vector.shape_cast %53 : vector<1024x1xf32> to vector<1024x1xf32>
    %57 = vector.broadcast %56 : vector<1024x1xf32> to vector<1024x4xf32>
    %58 = arith.select %55, %57, %50 : vector<1024x4xi1>, vector<1024x4xf32>
    %59 = vector.extract_strided_slice %32 {offsets = [0, 384], sizes = [1024, 128], strides = [1, 1]} : vector<1024x512xf32> to vector<1024x128xf32>
    %cst_29 = arith.constant dense<0xFF800000> : vector<1024xf32>
    %60 = vector.multi_reduction <maximumf>, %59, %cst_29 [1] : vector<1024x128xf32> to vector<1024xf32>
    %61 = vector.shape_cast %60 : vector<1024xf32> to vector<1024x1xf32>
    %c3_i32 = arith.constant 3 : i32
    %62 = vector.broadcast %c3_i32 : i32 to vector<1024x4xi32>
    %63 = arith.cmpi eq, %33, %62 : vector<1024x4xi32>
    %64 = vector.shape_cast %61 : vector<1024x1xf32> to vector<1024x1xf32>
    %65 = vector.broadcast %64 : vector<1024x1xf32> to vector<1024x4xf32>
    %66 = arith.select %63, %65, %58 : vector<1024x4xi1>, vector<1024x4xf32>
    %c0_30 = arith.constant 0 : index
    %c0_31 = arith.constant 0 : index
    %67 = vector.load %arg8[%c0_30, %c0_31] : memref<512x1024xbf16, #tpu.memory_space<vmem>>, vector<512x1024xbf16>
    %68 = arith.truncf %66 : vector<1024x4xf32> to vector<1024x4xbf16>
    %cst_32 = arith.constant dense<0.000000e+00> : vector<512x4xf32>
    %69 = tpu.matmul %67, %68, %cst_32 {dimension_numbers = #tpu.dot_dimension_numbers<[1], [0], [0], [1], [0, 0, 1, 1], [], []>} : vector<512x1024xbf16>, vector<1024x4xbf16>, vector<512x4xf32> -> vector<512x4xf32>
    %c0_33 = arith.constant 0 : index
    %c0_34 = arith.constant 0 : index
    %70 = vector.load %arg9[%c0_33, %c0_34] : memref<512x1xf32, #tpu.memory_space<vmem>>, vector<512x1xf32>
    %71 = vector.broadcast %70 : vector<512x1xf32> to vector<512x4xf32>
    %72 = arith.addf %69, %71 : vector<512x4xf32>
    %cst_35 = arith.constant 0.000000e+00 : f32
    %73 = vector.broadcast %cst_35 : f32 to vector<512x4xf32>
    %74 = arith.maximumf %72, %73 : vector<512x4xf32>
    %c0_36 = arith.constant 0 : index
    %c0_37 = arith.constant 0 : index
    %75 = vector.load %arg10[%c0_36, %c0_37] : memref<256x512xbf16, #tpu.memory_space<vmem>>, vector<256x512xbf16>
    %76 = arith.truncf %74 : vector<512x4xf32> to vector<512x4xbf16>
    %cst_38 = arith.constant dense<0.000000e+00> : vector<256x4xf32>
    %77 = tpu.matmul %75, %76, %cst_38 {dimension_numbers = #tpu.dot_dimension_numbers<[1], [0], [0], [1], [0, 0, 1, 1], [], []>} : vector<256x512xbf16>, vector<512x4xbf16>, vector<256x4xf32> -> vector<256x4xf32>
    %c0_39 = arith.constant 0 : index
    %c0_40 = arith.constant 0 : index
    %78 = vector.load %arg11[%c0_39, %c0_40] : memref<256x1xf32, #tpu.memory_space<vmem>>, vector<256x1xf32>
    %79 = vector.broadcast %78 : vector<256x1xf32> to vector<256x4xf32>
    %80 = arith.addf %77, %79 : vector<256x4xf32>
    %cst_41 = arith.constant 0.000000e+00 : f32
    %81 = vector.broadcast %cst_41 : f32 to vector<256x4xf32>
    %82 = arith.maximumf %80, %81 : vector<256x4xf32>
    %c0_42 = arith.constant 0 : index
    %c0_43 = arith.constant 0 : index
    %83 = vector.load %arg12[%c0_42, %c0_43] : memref<9x256xbf16, #tpu.memory_space<vmem>>, vector<9x256xbf16>
    %84 = arith.truncf %82 : vector<256x4xf32> to vector<256x4xbf16>
    %cst_44 = arith.constant dense<0.000000e+00> : vector<9x4xf32>
    %85 = tpu.matmul %83, %84, %cst_44 {dimension_numbers = #tpu.dot_dimension_numbers<[1], [0], [0], [1], [0, 0, 1, 1], [], []>} : vector<9x256xbf16>, vector<256x4xbf16>, vector<9x4xf32> -> vector<9x4xf32>
    %c0_45 = arith.constant 0 : index
    %c0_46 = arith.constant 0 : index
    %86 = vector.load %arg13[%c0_45, %c0_46] : memref<9x1xf32, #tpu.memory_space<vmem>>, vector<9x1xf32>
    %87 = vector.broadcast %86 : vector<9x1xf32> to vector<9x4xf32>
    %88 = arith.addf %85, %87 : vector<9x4xf32>
    %c0_47 = arith.constant 0 : index
    %c0_48 = arith.constant 0 : index
    %c0_49 = arith.constant 0 : index
    %89 = vector.load %arg14[%c0_47, %c0_48, %c0_49] : memref<1x9x4xf32, #tpu.memory_space<vmem>>, vector<1x9x4xf32>
    %90 = vector.shape_cast %89 : vector<1x9x4xf32> to vector<9x4xf32>
    %91 = vector.shape_cast %88 : vector<9x4xf32> to vector<1x9x4xf32>
    tpu.vector_store %arg14[%c0_47, %c0_48, %c0_49], %91 {strides = array<i32>} : memref<1x9x4xf32, #tpu.memory_space<vmem>>, vector<1x9x4xf32>,
    return
  }
  func.func @transform_0(%arg0: i32) -> (i32, i32, i32) {
    %c0_i32 = arith.constant 0 : i32
    %c0_i32_0 = arith.constant 0 : i32
    %c0_i32_1 = arith.constant 0 : i32
    return %arg0, %c0_i32, %c0_i32_0 : i32, i32, i32
  }
  func.func @transform_1(%arg0: i32) -> (i32, i32) {
    %c0_i32 = arith.constant 0 : i32
    %c0_i32_0 = arith.constant 0 : i32
    %c0_i32_1 = arith.constant 0 : i32
    return %c0_i32, %c0_i32_0 : i32, i32
  }
  func.func @transform_2(%arg0: i32) -> (i32, i32) {
    %c0_i32 = arith.constant 0 : i32
    %c0_i32_0 = arith.constant 0 : i32
    %c0_i32_1 = arith.constant 0 : i32
    return %c0_i32, %c0_i32_0 : i32, i32
  }
  func.func @transform_3(%arg0: i32) -> (i32, i32) {
    %c0_i32 = arith.constant 0 : i32
    %c0_i32_0 = arith.constant 0 : i32
    %c0_i32_1 = arith.constant 0 : i32
    return %c0_i32, %c0_i32_0 : i32, i32
  }
  func.func @transform_4(%arg0: i32) -> (i32, i32) {
    %c0_i32 = arith.constant 0 : i32
    %c0_i32_0 = arith.constant 0 : i32
    %c0_i32_1 = arith.constant 0 : i32
    return %c0_i32, %c0_i32_0 : i32, i32
  }
  func.func @transform_5(%arg0: i32) -> (i32, i32) {
    %c0_i32 = arith.constant 0 : i32
    %c0_i32_0 = arith.constant 0 : i32
    %c0_i32_1 = arith.constant 0 : i32
    return %c0_i32, %c0_i32_0 : i32, i32
  }
  func.func @transform_6(%arg0: i32) -> (i32, i32) {
    %c0_i32 = arith.constant 0 : i32
    %c0_i32_0 = arith.constant 0 : i32
    %c0_i32_1 = arith.constant 0 : i32
    return %c0_i32, %c0_i32_0 : i32, i32
  }
  func.func @transform_7(%arg0: i32) -> (i32, i32) {
    %c0_i32 = arith.constant 0 : i32
    %c0_i32_0 = arith.constant 0 : i32
    %c0_i32_1 = arith.constant 0 : i32
    return %c0_i32, %c0_i32_0 : i32, i32
  }
  func.func @transform_8(%arg0: i32) -> (i32, i32) {
    %c0_i32 = arith.constant 0 : i32
    %c0_i32_0 = arith.constant 0 : i32
    %c0_i32_1 = arith.constant 0 : i32
    return %c0_i32, %c0_i32_0 : i32, i32
  }
  func.func @transform_9(%arg0: i32) -> (i32, i32) {
    %c0_i32 = arith.constant 0 : i32
    %c0_i32_0 = arith.constant 0 : i32
    %c0_i32_1 = arith.constant 0 : i32
    return %c0_i32, %c0_i32_0 : i32, i32
  }
  func.func @transform_10(%arg0: i32) -> (i32, i32) {
    %c0_i32 = arith.constant 0 : i32
    %c0_i32_0 = arith.constant 0 : i32
    %c0_i32_1 = arith.constant 0 : i32
    return %c0_i32, %c0_i32_0 : i32, i32
  }
  func.func @transform_11(%arg0: i32) -> (i32, i32) {
    %c0_i32 = arith.constant 0 : i32
    %c0_i32_0 = arith.constant 0 : i32
    %c0_i32_1 = arith.constant 0 : i32
    return %c0_i32, %c0_i32_0 : i32, i32
  }
  func.func @transform_12(%arg0: i32) -> (i32, i32) {
    %c0_i32 = arith.constant 0 : i32
    %c0_i32_0 = arith.constant 0 : i32
    %c0_i32_1 = arith.constant 0 : i32
    return %c0_i32, %c0_i32_0 : i32, i32
  }
  func.func @transform_13(%arg0: i32) -> (i32, i32, i32) {
    %c0_i32 = arith.constant 0 : i32
    %c0_i32_0 = arith.constant 0 : i32
    %c0_i32_1 = arith.constant 0 : i32
    return %arg0, %c0_i32, %c0_i32_0 : i32, i32, i32
  }
}

</mosaic_0001>

<llo_original>
// kernel: tpu_custom_call.1
$region0: #{tpu_custom_call.1}
  #allocation0 [shape = 'u32[]', space=smem, size = 0x4, offset = 0x4, fixed_abs, tag = 'smem constant byte address 0x4 - core index']
  #allocation1 [shape = 'u32[144,128]{1,0:T(1,128)}', space=vmem, size = 0x12000, scoped, tag = 'internal scratch']
  %s0 = inlined_call_operand.vmem [shape: f32[8,3,128], index: 0, kind: input, shape index: {}]
  %s1 = inlined_call_operand.vmem [shape: bf16[64,3], index: 1, kind: input, shape index: {}]
  %s2 = inlined_call_operand.vmem [shape: f32[64,1], index: 2, kind: input, shape index: {}]
  %s3 = inlined_call_operand.vmem [shape: bf16[128,64], index: 3, kind: input, shape index: {}]
  %s4 = inlined_call_operand.vmem [shape: f32[128,1], index: 4, kind: input, shape index: {}]
  %s5 = inlined_call_operand.hbm [shape: bf16[1024,128], index: 5, kind: input, shape index: {}]
  %s6 = inlined_call_operand.vmem [shape: f32[1024,1], index: 6, kind: input, shape index: {}]
  %s7 = inlined_call_operand.vmem [shape: bf16[512,1024], index: 7, kind: input, shape index: {}]
  %s8 = inlined_call_operand.vmem [shape: f32[512,1], index: 8, kind: input, shape index: {}]
  %s9 = inlined_call_operand.hbm [shape: bf16[256,512], index: 9, kind: input, shape index: {}]
  %s10 = inlined_call_operand.vmem [shape: f32[256,1], index: 10, kind: input, shape index: {}]
  %s11 = inlined_call_operand.vmem [shape: bf16[9,256], index: 11, kind: input, shape index: {}]
  %s12 = inlined_call_operand.vmem [shape: f32[9,1], index: 12, kind: input, shape index: {}]
  %s13 = inlined_call_operand.vmem [shape: f32[2,9,4], index: 13, kind: output, shape index: {}]
  %s14 = sld [smem:[#allocation0]]
  $region93: #{tpu_custom_call.1} parent=0
    _
  %s16 = ssub.s32 1, %s14
  %s17 = scalar_select 0, %s16, %s14
  $region1: #{tpu_custom_call.1} parent=0
    #allocation2 [shape = 'u8[262144]{0}', space=vmem, size = 0x40000, scoped, tag = 'input window, operand 5, single buffered']
    #allocation3 [shape = 's32[2]{0}', space=sflag, size = 0x8, scoped, tag = 'scoped memory for tpu_custom_call.1']
    #allocation4 [shape = 'u8[262144]{0}', space=vmem, size = 0x40000, scoped, tag = 'input window, operand 9, single buffered']
    #allocation5 [shape = 's32[1]{0}', space=sflag, size = 0x4, scoped, tag = 'scoped memory for tpu_custom_call.1']
    %18 = vsyncpa [#allocation3], 0
    %19 = vsyncpa [#allocation5], 0
    loop: start=0, step=1, limit=4
    $region2: #{tpu_custom_call.1} parent=1 // loop_pre_header
      _
    $region3: #{tpu_custom_call.1} parent=1 // loop_header
      %s21 = sphi 0, %s25
      %p22 = scmp.ge.s32.totalorder %s21, 4
      %s31 = sphi 0, %s33
      %s34 = sphi 0, %s31
      %s35 = sphi 0, %s34
      %s51 = sphi 0, %s35
      %s55 = sphi 0, %s55
      %s57 = sphi 0, %s55
      %s58 = sphi 0, %s57
      %s72 = sphi 0, %s58
      %s76 = sphi 0, %s76
      %s78 = sphi 0, %s76
      %s79 = sphi 0, %s78
      %s93 = sphi 0, %s79
      %s97 = sphi 0, %s97
      %s99 = sphi 0, %s97
      %s100 = sphi 0, %s99
      %s114 = sphi 0, %s100
      %s118 = sphi 0, %s118
      %s120 = sphi 0, %s118
      %s121 = sphi 0, %s120
      %s135 = sphi 0, %s121
      %s139 = sphi 0, %s139
      %s141 = sphi 0, %s139
      %s142 = sphi 0, %s141
      %s156 = sphi 0, %s142
      %s160 = sphi 0, %s160
      %s162 = sphi 0, %s160
      %s163 = sphi 0, %s162
      %s177 = sphi 0, %s163
      %s181 = sphi 0, %s181
      %s183 = sphi 0, %s181
      %s184 = sphi 0, %s183
      %s198 = sphi 0, %s184
      %s202 = sphi 0, %s202
      %s204 = sphi 0, %s202
      %s205 = sphi 0, %s204
      %s219 = sphi 0, %s205
      %s223 = sphi 0, %s223
      %s225 = sphi 0, %s223
      %s226 = sphi 0, %s225
      %s240 = sphi 0, %s226
      %s244 = sphi 0, %s244
      %s246 = sphi 0, %s244
      %s247 = sphi 0, %s246
      %s261 = sphi 0, %s247
      %s265 = sphi 0, %s265
      %s267 = sphi 0, %s265
      %s268 = sphi 0, %s267
      %s282 = sphi 0, %s268
      %s286 = sphi 0, %s286
      %s288 = sphi 0, %s286
      %s289 = sphi 0, %s288
      %s303 = sphi 0, %s289
      %s309 = sphi 0, %s311
      %s312 = sphi 0, %s309
      %s313 = sphi 0, %s312
      %s329 = sphi 0, %s313
    $region4: #{tpu_custom_call.1} parent=1 // loop_header_branch
      %24 = sbr.rel (%p22) target = $region8
    $region5: #{tpu_custom_call.1} parent=1 // loop_body
      %s26 = ssub.s32 %s21, 1
      %s27 = ssub.s32 %s21, 2
      %s28 = sadd.s32 %s21, 1
      %s29 = ssub.s32 %s21, %s28
      %p30 = scmp.eq.s32.totalorder %s29, 0
      %s32 = sadd.s32 %s31, 1
      %s33 = scalar_select %p30, %s31, %s32
      %p36 = pneg %p30
      %p37 = scmp.eq.s32.totalorder %s21, 1
      %p38 = por %p36, %p37
      %p39 = scmp.ne.s32.totalorder %s31, %s34
      %p40 = scmp.eq.s32.totalorder %s21, 0
      %p41 = por %p39, %p40
      %p42 = scmp.ne.s32.totalorder %s31, %s34
      %p43 = scmp.eq.s32.totalorder %s26, 1
      %p44 = por %p42, %p43
      %p45 = scmp.ne.s32.totalorder %s34, %s35
      %p46 = scmp.eq.s32.totalorder %s26, 0
      %p47 = por %p45, %p46
      %p48 = scmp.ne.s32.totalorder %s34, %s35
      %p49 = scmp.eq.s32.totalorder %s27, 1
      %p50 = por %p48, %p49
      %p52 = scmp.ne.s32.totalorder %s35, %s51
      %p53 = scmp.eq.s32.totalorder %s27, 0
      %p54 = por %p52, %p53
      %s56 = sadd.s32 %s55, 1
      %p59 = scmp.eq.s32.totalorder %s21, 1
      %p60 = scmp.ne.s32.totalorder %s55, %s57
      %p61 = scmp.eq.s32.totalorder %s21, 0
      %p62 = por %p60, %p61
      %p63 = scmp.ne.s32.totalorder %s55, %s57
      %p64 = scmp.eq.s32.totalorder %s26, 1
      %p65 = por %p63, %p64
      %p66 = scmp.ne.s32.totalorder %s57, %s58
      %p67 = scmp.eq.s32.totalorder %s26, 0
      %p68 = por %p66, %p67
      %p69 = scmp.ne.s32.totalorder %s57, %s58
      %p70 = scmp.eq.s32.totalorder %s27, 1
      %p71 = por %p69, %p70
      %p73 = scmp.ne.s32.totalorder %s58, %s72
      %p74 = scmp.eq.s32.totalorder %s27, 0
      %p75 = por %p73, %p74
      %s77 = sadd.s32 %s76, 1
      %p80 = scmp.eq.s32.totalorder %s21, 1
      %p81 = scmp.ne.s32.totalorder %s76, %s78
      %p82 = scmp.eq.s32.totalorder %s21, 0
      %p83 = por %p81, %p82
      %p84 = scmp.ne.s32.totalorder %s76, %s78
      %p85 = scmp.eq.s32.totalorder %s26, 1
      %p86 = por %p84, %p85
      %p87 = scmp.ne.s32.totalorder %s78, %s79
      %p88 = scmp.eq.s32.totalorder %s26, 0
      %p89 = por %p87, %p88
      %p90 = scmp.ne.s32.totalorder %s78, %s79
      %p91 = scmp.eq.s32.totalorder %s27, 1
      %p92 = por %p90, %p91
      %p94 = scmp.ne.s32.totalorder %s79, %s93
      %p95 = scmp.eq.s32.totalorder %s27, 0
      %p96 = por %p94, %p95
      %s98 = sadd.s32 %s97, 1
      %p101 = scmp.eq.s32.totalorder %s21, 1
      %p102 = scmp.ne.s32.totalorder %s97, %s99
      %p103 = scmp.eq.s32.totalorder %s21, 0
      %p104 = por %p102, %p103
      %p105 = scmp.ne.s32.totalorder %s97, %s99
      %p106 = scmp.eq.s32.totalorder %s26, 1
      %p107 = por %p105, %p106
      %p108 = scmp.ne.s32.totalorder %s99, %s100
      %p109 = scmp.eq.s32.totalorder %s26, 0
      %p110 = por %p108, %p109
      %p111 = scmp.ne.s32.totalorder %s99, %s100
      %p112 = scmp.eq.s32.totalorder %s27, 1
      %p113 = por %p111, %p112
      %p115 = scmp.ne.s32.totalorder %s100, %s114
      %p116 = scmp.eq.s32.totalorder %s27, 0
      %p117 = por %p115, %p116
      %s119 = sadd.s32 %s118, 1
      %p122 = scmp.eq.s32.totalorder %s21, 1
      %p123 = scmp.ne.s32.totalorder %s118, %s120
      %p124 = scmp.eq.s32.totalorder %s21, 0
      %p125 = por %p123, %p124
      %p126 = scmp.ne.s32.totalorder %s118, %s120
      %p127 = scmp.eq.s32.totalorder %s26, 1
      %p128 = por %p126, %p127
      %p129 = scmp.ne.s32.totalorder %s120, %s121
      %p130 = scmp.eq.s32.totalorder %s26, 0
      %p131 = por %p129, %p130
      %p132 = scmp.ne.s32.totalorder %s120, %s121
      %p133 = scmp.eq.s32.totalorder %s27, 1
      %p134 = por %p132, %p133
      %p136 = scmp.ne.s32.totalorder %s121, %s135
      %p137 = scmp.eq.s32.totalorder %s27, 0
      %p138 = por %p136, %p137
      %s140 = sadd.s32 %s139, 1
      %p143 = scmp.eq.s32.totalorder %s21, 1
      %p144 = scmp.ne.s32.totalorder %s139, %s141
      %p145 = scmp.eq.s32.totalorder %s21, 0
      %p146 = por %p144, %p145
      %p147 = scmp.ne.s32.totalorder %s139, %s141
      %p148 = scmp.eq.s32.totalorder %s26, 1
      %p149 = por %p147, %p148
      %p150 = scmp.ne.s32.totalorder %s141, %s142
      %p151 = scmp.eq.s32.totalorder %s26, 0
      %p152 = por %p150, %p151
      %p153 = scmp.ne.s32.totalorder %s141, %s142
      %p154 = scmp.eq.s32.totalorder %s27, 1
      %p155 = por %p153, %p154
      %p157 = scmp.ne.s32.totalorder %s142, %s156
      %p158 = scmp.eq.s32.totalorder %s27, 0
      %p159 = por %p157, %p158
      %s161 = sadd.s32 %s160, 1
      %p164 = scmp.eq.s32.totalorder %s21, 1
      %p165 = scmp.ne.s32.totalorder %s160, %s162
      %p166 = scmp.eq.s32.totalorder %s21, 0
      %p167 = por %p165, %p166
      %p168 = scmp.ne.s32.totalorder %s160, %s162
      %p169 = scmp.eq.s32.totalorder %s26, 1
      %p170 = por %p168, %p169
      %p171 = scmp.ne.s32.totalorder %s162, %s163
      %p172 = scmp.eq.s32.totalorder %s26, 0
      %p173 = por %p171, %p172
      %p174 = scmp.ne.s32.totalorder %s162, %s163
      %p175 = scmp.eq.s32.totalorder %s27, 1
      %p176 = por %p174, %p175
      %p178 = scmp.ne.s32.totalorder %s163, %s177
      %p179 = scmp.eq.s32.totalorder %s27, 0
      %p180 = por %p178, %p179
      %s182 = sadd.s32 %s181, 1
      %p185 = scmp.eq.s32.totalorder %s21, 1
      %p186 = scmp.ne.s32.totalorder %s181, %s183
      %p187 = scmp.eq.s32.totalorder %s21, 0
      %p188 = por %p186, %p187
      %p189 = scmp.ne.s32.totalorder %s181, %s183
      %p190 = scmp.eq.s32.totalorder %s26, 1
      %p191 = por %p189, %p190
      %p192 = scmp.ne.s32.totalorder %s183, %s184
      %p193 = scmp.eq.s32.totalorder %s26, 0
      %p194 = por %p192, %p193
      %p195 = scmp.ne.s32.totalorder %s183, %s184
      %p196 = scmp.eq.s32.totalorder %s27, 1
      %p197 = por %p195, %p196
      %p199 = scmp.ne.s32.totalorder %s184, %s198
      %p200 = scmp.eq.s32.totalorder %s27, 0
      %p201 = por %p199, %p200
      %s203 = sadd.s32 %s202, 1
      %p206 = scmp.eq.s32.totalorder %s21, 1
      %p207 = scmp.ne.s32.totalorder %s202, %s204
      %p208 = scmp.eq.s32.totalorder %s21, 0
      %p209 = por %p207, %p208
      %p210 = scmp.ne.s32.totalorder %s202, %s204
      %p211 = scmp.eq.s32.totalorder %s26, 1
      %p212 = por %p210, %p211
      %p213 = scmp.ne.s32.totalorder %s204, %s205
      %p214 = scmp.eq.s32.totalorder %s26, 0
      %p215 = por %p213, %p214
      %p216 = scmp.ne.s32.totalorder %s204, %s205
      %p217 = scmp.eq.s32.totalorder %s27, 1
      %p218 = por %p216, %p217
      %p220 = scmp.ne.s32.totalorder %s205, %s219
      %p221 = scmp.eq.s32.totalorder %s27, 0
      %p222 = por %p220, %p221
      %s224 = sadd.s32 %s223, 1
      %p227 = scmp.eq.s32.totalorder %s21, 1
      %p228 = scmp.ne.s32.totalorder %s223, %s225
      %p229 = scmp.eq.s32.totalorder %s21, 0
      %p230 = por %p228, %p229
      %p231 = scmp.ne.s32.totalorder %s223, %s225
      %p232 = scmp.eq.s32.totalorder %s26, 1
      %p233 = por %p231, %p232
      %p234 = scmp.ne.s32.totalorder %s225, %s226
      %p235 = scmp.eq.s32.totalorder %s26, 0
      %p236 = por %p234, %p235
      %p237 = scmp.ne.s32.totalorder %s225, %s226
      %p238 = scmp.eq.s32.totalorder %s27, 1
      %p239 = por %p237, %p238
      %p241 = scmp.ne.s32.totalorder %s226, %s240
      %p242 = scmp.eq.s32.totalorder %s27, 0
      %p243 = por %p241, %p242
      %s245 = sadd.s32 %s244, 1
      %p248 = scmp.eq.s32.totalorder %s21, 1
      %p249 = scmp.ne.s32.totalorder %s244, %s246
      %p250 = scmp.eq.s32.totalorder %s21, 0
      %p251 = por %p249, %p250
      %p252 = scmp.ne.s32.totalorder %s244, %s246
      %p253 = scmp.eq.s32.totalorder %s26, 1
      %p254 = por %p252, %p253
      %p255 = scmp.ne.s32.totalorder %s246, %s247
      %p256 = scmp.eq.s32.totalorder %s26, 0
      %p257 = por %p255, %p256
      %p258 = scmp.ne.s32.totalorder %s246, %s247
      %p259 = scmp.eq.s32.totalorder %s27, 1
      %p260 = por %p258, %p259
      %p262 = scmp.ne.s32.totalorder %s247, %s261
      %p263 = scmp.eq.s32.totalorder %s27, 0
      %p264 = por %p262, %p263
      %s266 = sadd.s32 %s265, 1
      %p269 = scmp.eq.s32.totalorder %s21, 1
      %p270 = scmp.ne.s32.totalorder %s265, %s267
      %p271 = scmp.eq.s32.totalorder %s21, 0
      %p272 = por %p270, %p271
      %p273 = scmp.ne.s32.totalorder %s265, %s267
      %p274 = scmp.eq.s32.totalorder %s26, 1
      %p275 = por %p273, %p274
      %p276 = scmp.ne.s32.totalorder %s267, %s268
      %p277 = scmp.eq.s32.totalorder %s26, 0
      %p278 = por %p276, %p277
      %p279 = scmp.ne.s32.totalorder %s267, %s268
      %p280 = scmp.eq.s32.totalorder %s27, 1
      %p281 = por %p279, %p280
      %p283 = scmp.ne.s32.totalorder %s268, %s282
      %p284 = scmp.eq.s32.totalorder %s27, 0
      %p285 = por %p283, %p284
      %s287 = sadd.s32 %s286, 1
      %p290 = scmp.eq.s32.totalorder %s21, 1
      %p291 = scmp.ne.s32.totalorder %s286, %s288
      %p292 = scmp.eq.s32.totalorder %s21, 0
      %p293 = por %p291, %p292
      %p294 = scmp.ne.s32.totalorder %s286, %s288
      %p295 = scmp.eq.s32.totalorder %s26, 1
      %p296 = por %p294, %p295
      %p297 = scmp.ne.s32.totalorder %s288, %s289
      %p298 = scmp.eq.s32.totalorder %s26, 0
      %p299 = por %p297, %p298
      %p300 = scmp.ne.s32.totalorder %s288, %s289
      %p301 = scmp.eq.s32.totalorder %s27, 1
      %p302 = por %p300, %p301
      %p304 = scmp.ne.s32.totalorder %s289, %s303
      %p305 = scmp.eq.s32.totalorder %s27, 0
      %p306 = por %p304, %p305
      %s307 = ssub.s32 %s21, %s28
      %p308 = scmp.eq.s32.totalorder %s307, 0
      %s310 = sadd.s32 %s309, 1
      %s311 = scalar_select %p308, %s309, %s310
      %p314 = pneg %p308
      %p315 = scmp.eq.s32.totalorder %s21, 1
      %p316 = por %p314, %p315
      %p317 = scmp.ne.s32.totalorder %s309, %s312
      %p318 = scmp.eq.s32.totalorder %s21, 0
      %p319 = por %p317, %p318
      %p320 = scmp.ne.s32.totalorder %s309, %s312
      %p321 = scmp.eq.s32.totalorder %s26, 1
      %p322 = por %p320, %p321
      %p323 = scmp.ne.s32.totalorder %s312, %s313
      %p324 = scmp.eq.s32.totalorder %s26, 0
      %p325 = por %p323, %p324
      %p326 = scmp.ne.s32.totalorder %s312, %s313
      %p327 = scmp.eq.s32.totalorder %s27, 1
      %p328 = por %p326, %p327
      %p330 = scmp.ne.s32.totalorder %s313, %s329
      %p331 = scmp.eq.s32.totalorder %s27, 0
      %p332 = por %p330, %p331
      %p333 = scmp.le.s32.totalorder 1, %s21
      %p334 = scmp.lt.s32.totalorder %s21, 3
      %p335 = pnand %p333, %p334
      %p336 = pneg %p335
      // Predicated region
      $region9: #{tpu_custom_call.1} parent=5 // pred_check
        _
      $region10: #{tpu_custom_call.1} parent=5 // pred_check_branch
        %338 = sbr.rel (%p335) target = $region12
      $region11: #{tpu_custom_call.1} parent=5 // pred_region
        %s339 = ssub.s32 %s21, 1
        // Predicated region
        $region13: #{tpu_custom_call.1} parent=11 // pred_check
          %p340 = pneg %p68
        $region14: #{tpu_custom_call.1} parent=11 // pred_check_branch
          %342 = sbr.rel (%p340) target = $region16
        $region15: #{tpu_custom_call.1} parent=11 // pred_region
          _
        $region16: #{tpu_custom_call.1} parent=11 // pred_fallthru
          _
        // Predicated region
        $region17: #{tpu_custom_call.1} parent=11 // pred_check
          %p343 = pneg %p89
        $region18: #{tpu_custom_call.1} parent=11 // pred_check_branch
          %345 = sbr.rel (%p343) target = $region20
        $region19: #{tpu_custom_call.1} parent=11 // pred_region
          _
        $region20: #{tpu_custom_call.1} parent=11 // pred_fallthru
          _
        // Predicated region
        $region21: #{tpu_custom_call.1} parent=11 // pred_check
          %p346 = pneg %p110
        $region22: #{tpu_custom_call.1} parent=11 // pred_check_branch
          %348 = sbr.rel (%p346) target = $region24
        $region23: #{tpu_custom_call.1} parent=11 // pred_region
          _
        $region24: #{tpu_custom_call.1} parent=11 // pred_fallthru
          _
        // Predicated region
        $region25: #{tpu_custom_call.1} parent=11 // pred_check
          %p349 = pneg %p131
        $region26: #{tpu_custom_call.1} parent=11 // pred_check_branch
          %351 = sbr.rel (%p349) target = $region28
        $region27: #{tpu_custom_call.1} parent=11 // pred_region
          _
        $region28: #{tpu_custom_call.1} parent=11 // pred_fallthru
          _
        // Predicated region
        $region29: #{tpu_custom_call.1} parent=11 // pred_check
          %p352 = pneg %p152
        $region30: #{tpu_custom_call.1} parent=11 // pred_check_branch
          %354 = sbr.rel (%p352) target = $region32
        $region31: #{tpu_custom_call.1} parent=11 // pred_region
          %s356 = ssub.s32 8192, 8192
          %357 = vsyncadd [#allocation3], %s356
          %s358 = sshll.u32 [#allocation2], 4
          %s359 = int_to_ptr.vmem [resolvable:$true] %s358
          %364 = dma.hbm_to_vmem [thread:$0]  %s5, 8192, %s359, [#allocation3], 64, 64, 4
        $region32: #{tpu_custom_call.1} parent=11 // pred_fallthru
          _
        // Predicated region
        $region33: #{tpu_custom_call.1} parent=11 // pred_check
          %p365 = pneg %p173
        $region34: #{tpu_custom_call.1} parent=11 // pred_check_branch
          %367 = sbr.rel (%p365) target = $region36
        $region35: #{tpu_custom_call.1} parent=11 // pred_region
          _
        $region36: #{tpu_custom_call.1} parent=11 // pred_fallthru
          _
        // Predicated region
        $region37: #{tpu_custom_call.1} parent=11 // pred_check
          %p368 = pneg %p194
        $region38: #{tpu_custom_call.1} parent=11 // pred_check_branch
          %370 = sbr.rel (%p368) target = $region40
        $region39: #{tpu_custom_call.1} parent=11 // pred_region
          _
        $region40: #{tpu_custom_call.1} parent=11 // pred_fallthru
          _
        // Predicated region
        $region41: #{tpu_custom_call.1} parent=11 // pred_check
          %p371 = pneg %p215
        $region42: #{tpu_custom_call.1} parent=11 // pred_check_branch
          %373 = sbr.rel (%p371) target = $region44
        $region43: #{tpu_custom_call.1} parent=11 // pred_region
          _
        $region44: #{tpu_custom_call.1} parent=11 // pred_fallthru
          _
        // Predicated region
        $region45: #{tpu_custom_call.1} parent=11 // pred_check
          %p374 = pneg %p236
        $region46: #{tpu_custom_call.1} parent=11 // pred_check_branch
          %376 = sbr.rel (%p374) target = $region48
        $region47: #{tpu_custom_call.1} parent=11 // pred_region
          %s378 = ssub.s32 8192, 8192
          %379 = vsyncadd [#allocation5], %s378
          %s380 = sshll.u32 [#allocation4], 4
          %s381 = int_to_ptr.vmem [resolvable:$true] %s380
          %386 = dma.hbm_to_vmem [thread:$0]  %s9, 8192, %s381, [#allocation5], 256, 256, 16
        $region48: #{tpu_custom_call.1} parent=11 // pred_fallthru
          _
        // Predicated region
        $region49: #{tpu_custom_call.1} parent=11 // pred_check
          %p387 = pneg %p257
        $region50: #{tpu_custom_call.1} parent=11 // pred_check_branch
          %389 = sbr.rel (%p387) target = $region52
        $region51: #{tpu_custom_call.1} parent=11 // pred_region
          _
        $region52: #{tpu_custom_call.1} parent=11 // pred_fallthru
          _
        // Predicated region
        $region53: #{tpu_custom_call.1} parent=11 // pred_check
          %p390 = pneg %p278
        $region54: #{tpu_custom_call.1} parent=11 // pred_check_branch
          %392 = sbr.rel (%p390) target = $region56
        $region55: #{tpu_custom_call.1} parent=11 // pred_region
          _
        $region56: #{tpu_custom_call.1} parent=11 // pred_fallthru
          _
        // Predicated region
        $region57: #{tpu_custom_call.1} parent=11 // pred_check
          %p393 = pneg %p299
        $region58: #{tpu_custom_call.1} parent=11 // pred_check_branch
          %395 = sbr.rel (%p393) target = $region60
        $region59: #{tpu_custom_call.1} parent=11 // pred_region
          _
        $region60: #{tpu_custom_call.1} parent=11 // pred_fallthru
          _
      $region12: #{tpu_custom_call.1} parent=5 // pred_fallthru
        _
      %p396 = scmp.lt.s32.totalorder %s21, 2
      // Predicated region
      $region61: #{tpu_custom_call.1} parent=5 // pred_check
        %p397 = pneg %p396
      $region62: #{tpu_custom_call.1} parent=5 // pred_check_branch
        %399 = sbr.rel (%p397) target = $region64
      $region63: #{tpu_custom_call.1} parent=5 // pred_region
        // Predicated region
        $region65: #{tpu_custom_call.1} parent=63 // pred_check
          %p400 = pneg %p41
        $region66: #{tpu_custom_call.1} parent=63 // pred_check_branch
          %402 = sbr.rel (%p400) target = $region68
        $region67: #{tpu_custom_call.1} parent=63 // pred_region
          %s403 = smul.u32 4, %s21
          %p404 = scmp.lt.s32.totalorder %s403, 7
          %s405 = scalar_select %p404, %s403, 7
          %s406 = smul.addr %s405, 4
          %s407 = scalar_lea.vmem %s0, %s406
          %s408 = smul.u32 4, %s21
        $region68: #{tpu_custom_call.1} parent=63 // pred_fallthru
          _
      $region64: #{tpu_custom_call.1} parent=5 // pred_fallthru
        _
      %p409 = scmp.le.s32.totalorder 1, %s21
      %p410 = scmp.lt.s32.totalorder %s21, 3
      %p411 = pnand %p409, %p410
      %p412 = pneg %p411
      // Predicated region
      $region69: #{tpu_custom_call.1} parent=5 // pred_check
        _
      $region70: #{tpu_custom_call.1} parent=5 // pred_check_branch
        %414 = sbr.rel (%p411) target = $region72
      $region71: #{tpu_custom_call.1} parent=5 // pred_region
        %s415 = ssub.s32 %s21, 1
        // Predicated region
        $region73: #{tpu_custom_call.1} parent=71 // pred_check
          %p416 = pneg %p152
        $region74: #{tpu_custom_call.1} parent=71 // pred_check_branch
          %418 = sbr.rel (%p416) target = $region76
        $region75: #{tpu_custom_call.1} parent=71 // pred_region
          %419 = dma.done [#allocation3], 8192
        $region76: #{tpu_custom_call.1} parent=71 // pred_fallthru
          _
        // Predicated region
        $region77: #{tpu_custom_call.1} parent=71 // pred_check
          %p420 = pneg %p236
        $region78: #{tpu_custom_call.1} parent=71 // pred_check_branch
          %422 = sbr.rel (%p420) target = $region80
        $region79: #{tpu_custom_call.1} parent=71 // pred_region
          %423 = dma.done [#allocation5], 8192
        $region80: #{tpu_custom_call.1} parent=71 // pred_fallthru
          _
        %s424 = smul.u32 4, %s26
        %p425 = scmp.lt.s32.totalorder %s424, 7
        %s426 = scalar_select %p425, %s424, 7
        %s427 = smul.addr %s426, 4
        %s428 = scalar_lea.vmem %s0, %s427
        %p429 = pneg %p47
        %p430 = pneg %p44
        %p431 = pneg %p68
        %p432 = pneg %p65
        %p433 = pneg %p89
        %p434 = pneg %p86
        %p435 = pneg %p110
        %p436 = pneg %p107
        %p437 = pneg %p131
        %p438 = pneg %p128
        %p439 = pneg %p152
        %p440 = pneg %p149
        %p441 = pneg %p173
        %p442 = pneg %p170
        %p443 = pneg %p194
        %p444 = pneg %p191
        %p445 = pneg %p215
        %p446 = pneg %p212
        %p447 = pneg %p236
        %p448 = pneg %p233
        %p449 = pneg %p257
        %p450 = pneg %p254
        %p451 = pneg %p278
        %p452 = pneg %p275
        %p453 = pneg %p299
        %p454 = pneg %p296
        %p455 = pneg %p325
        %p456 = pneg %p322
        %p457 = scmp.lt.s32.totalorder %s26, 1
        %s458 = scalar_select %p457, %s26, 1
        %s459 = smul.addr %s458, 2
        %s460 = smul.addr %s459, 8
        %s461 = scalar_lea.vmem %s13, %s460
        %s462 = smul.u32 4, %s26
        %p463 = scmp.lt.s32.totalorder %s462, 7
        %s464 = scalar_select %p463, %s462, 7
        %s465 = smul.addr %s464, 4
        %s466 = scalar_lea.vmem %s0, %s465
        %s467 = smul.u32 4, %s26
        %p468 = scmp.lt.s32.totalorder %s26, 1
        %s469 = scalar_select %p468, %s26, 1
        %s470 = smul.addr %s469, 2
        %s471 = smul.addr %s470, 8
        %s472 = scalar_lea.vmem %s13, %s471
        %v474 = vld [vmem:[%s466] sm:$0x7]
        %s475 = scalar_lea.vmem %s466, 4
        %v476 = vld [vmem:[%s475] sm:$0x7]
        %s477 = scalar_lea.vmem %s466, 8
        %v478 = vld [vmem:[%s477] sm:$0x7]
        %s479 = scalar_lea.vmem %s466, 12
        %v480 = vld [vmem:[%s479] sm:$0x7]
        %v481 = vld [vmem:[%s1] sm:$0xf]
        %v482 = vld [vmem:[%s1 + $0x4] sm:$0xf]
        %v483 = vld [vmem:[%s1 + $0x8] sm:$0xf]
        %v484 = vld [vmem:[%s1 + $0xc] sm:$0xf]
        %v485 = vld [vmem:[%s1 + $0x10] sm:$0xf]
        %v486 = vld [vmem:[%s1 + $0x14] sm:$0xf]
        %v487 = vld [vmem:[%s1 + $0x18] sm:$0xf]
        %v488 = vld [vmem:[%s1 + $0x1c] sm:$0xf]
        %v489 = vpack.c.bf16 %v474, %v474
        %v490 = vpack.c.bf16 %v476, %v476
        %v491 = vpack.c.bf16 %v478, %v478
        %v492 = vpack.c.bf16 %v480, %v480
        %v493 = vld [vmem:[%s2] sm:$0xff]
        %v494 = vld [vmem:[%s2 + $0x8] sm:$0xff]
        %v495 = vld [vmem:[%s2 + $0x10] sm:$0xff]
        %v496 = vld [vmem:[%s2 + $0x18] sm:$0xff]
        %v497 = vld [vmem:[%s2 + $0x20] sm:$0xff]
        %v498 = vld [vmem:[%s2 + $0x28] sm:$0xff]
        %v499 = vld [vmem:[%s2 + $0x30] sm:$0xff]
        %v500 = vld [vmem:[%s2 + $0x38] sm:$0xff]
        %502 = vset.pattern.permute.xlu0 0
        %503 = vperm.xlu0 %502, %v493
        %v504 = vpop.permute.xlu0 %503
        %507 = vset.pattern.permute.xlu0 0
        %508 = vperm.xlu0 %507, %v494
        %v509 = vpop.permute.xlu0 %508
        %512 = vset.pattern.permute.xlu0 0
        %513 = vperm.xlu0 %512, %v495
        %v514 = vpop.permute.xlu0 %513
        %517 = vset.pattern.permute.xlu0 0
        %518 = vperm.xlu0 %517, %v496
        %v519 = vpop.permute.xlu0 %518
        %522 = vset.pattern.permute.xlu0 0
        %523 = vperm.xlu0 %522, %v497
        %v524 = vpop.permute.xlu0 %523
        %527 = vset.pattern.permute.xlu0 0
        %528 = vperm.xlu0 %527, %v498
        %v529 = vpop.permute.xlu0 %528
        %532 = vset.pattern.permute.xlu0 0
        %533 = vperm.xlu0 %532, %v499
        %v534 = vpop.permute.xlu0 %533
        %537 = vset.pattern.permute.xlu0 0
        %538 = vperm.xlu0 %537, %v500
        %v539 = vpop.permute.xlu0 %538
        %v549 = vunpack.c.l.b16 %v481
        %v550 = vunpack.c.l.b16 %v482
        %v551 = vunpack.c.l.b16 %v483
        %v552 = vunpack.c.l.b16 %v484
        %v553 = vunpack.c.l.b16 %v485
        %v554 = vunpack.c.l.b16 %v486
        %v555 = vunpack.c.l.b16 %v487
        %v556 = vunpack.c.l.b16 %v488
        %v557 = vpack.c.b16 %v550, %v549
        %v558 = vpack.c.b16 %v552, %v551
        %v559 = vpack.c.b16 %v554, %v553
        %v560 = vpack.c.b16 %v556, %v555
        %vm561 = vcmask 23552
        %v563 = vsel %vm561, %v557, 0
        %v566 = vsel %vm561, %v558, 0
        %v569 = vsel %vm561, %v559, 0
        %v572 = vsel %vm561, %v560, 0
        %vm574 = vcmask 1040384
        %vm575 = vcmask 1041408
        %v576 = vsel %vm574, 4294967295, 65535
        %v577 = vsel %vm575, %v576, 0
        %v579 = vand.u32 %v489, %v577
        %v582 = vand.u32 %v490, %v577
        %v585 = vand.u32 %v491, %v577
        %v588 = vand.u32 %v492, %v577
        %590 = vmatprep.subr.bf16.mxu0 %v582
        %591 = vmatpush1.bf16.msra.mxu0 %v579
        %592 = vmatprep.subr.bf16.mxu0 0
        %593 = vmatpush1.bf16.msra.mxu0 0
        %594 = vmatprep.subr.bf16.mxu0 0
        %595 = vmatpush1.bf16.msra.mxu0 0
        %596 = vmatprep.subr.bf16.mxu0 0
        %597 = vmatpush1.bf16.msra.mxu0 0
        %598 = vmatprep.subr.bf16.mxu0 0
        %599 = vmatpush1.bf16.msra.mxu0 0
        %600 = vmatprep.subr.bf16.mxu0 0
        %601 = vmatpush1.bf16.msra.mxu0 0
        %602 = vmatprep.subr.bf16.mxu0 0
        %603 = vmatpush1.bf16.msra.mxu0 0
        %604 = vmatprep.subr.bf16.mxu0 0
        %605 = vmatpush1.bf16.msra.mxu0 0
        %606 = vmatprep.subr.bf16.mxu0 0
        %607 = vmatpush1.bf16.msra.mxu0 0
        %608 = vmatprep.subr.bf16.mxu0 0
        %609 = vmatpush1.bf16.msra.mxu0 0
        %610 = vmatprep.subr.bf16.mxu0 0
        %611 = vmatpush1.bf16.msra.mxu0 0
        %612 = vmatprep.subr.bf16.mxu0 0
        %613 = vmatpush1.bf16.msra.mxu0 0
        %614 = vmatprep.subr.bf16.mxu0 0
        %615 = vmatpush1.bf16.msra.mxu0 0
        %616 = vmatprep.subr.bf16.mxu0 0
        %617 = vmatpush1.bf16.msra.mxu0 0
        %618 = vmatprep.subr.bf16.mxu0 0
        %619 = vmatpush1.bf16.msra.mxu0 0
        %620 = vmatprep.subr.bf16.mxu0 0
        %621 = vmatpush1.bf16.msra.mxu0 0
        %622 = vmatprep.mubr.bf16.mxu0 0
        %623 = vmatmul.mubr.bf16.gmra.mrb[0].mxu0 %v563
        %v624 = vpop.f32.mrb[0].mxu0
        %v625 = vadd.f32 %v504, %v624
        %v626 = vpop.f32.mrb[0].mxu0
        %v627 = vadd.f32 %v504, %v626
        %v628 = vpop.f32.mrb[0].mxu0
        %v629 = vadd.f32 %v509, %v628
        %v630 = vpop.f32.mrb[0].mxu0
        %v631 = vadd.f32 %v509, %v630
        %632 = vmatprep.mubr.bf16.mxu0 0
        %633 = vmatmul.mubr.bf16.gmra.mrb[0].mxu0 %v566
        %v634 = vpop.f32.mrb[0].mxu0
        %v635 = vadd.f32 %v514, %v634
        %v636 = vpop.f32.mrb[0].mxu0
        %v637 = vadd.f32 %v514, %v636
        %v638 = vpop.f32.mrb[0].mxu0
        %v639 = vadd.f32 %v519, %v638
        %v640 = vpop.f32.mrb[0].mxu0
        %v641 = vadd.f32 %v519, %v640
        %642 = vmatprep.mubr.bf16.mxu0 0
        %643 = vmatmul.mubr.bf16.gmra.mrb[0].mxu0 %v569
        %v644 = vpop.f32.mrb[0].mxu0
        %v645 = vadd.f32 %v524, %v644
        %v646 = vpop.f32.mrb[0].mxu0
        %v647 = vadd.f32 %v524, %v646
        %v648 = vpop.f32.mrb[0].mxu0
        %v649 = vadd.f32 %v529, %v648
        %v650 = vpop.f32.mrb[0].mxu0
        %v651 = vadd.f32 %v529, %v650
        %652 = vmatprep.mubr.bf16.mxu0 0
        %653 = vmatmul.mubr.bf16.gmra.mrb[0].mxu0 %v572
        %v654 = vpop.f32.mrb[0].mxu0
        %v655 = vadd.f32 %v534, %v654
        %v656 = vpop.f32.mrb[0].mxu0
        %v657 = vadd.f32 %v534, %v656
        %v658 = vpop.f32.mrb[0].mxu0
        %v659 = vadd.f32 %v539, %v658
        %v660 = vpop.f32.mrb[0].mxu0
        %v661 = vadd.f32 %v539, %v660
        %662 = vdwg.mxu0
        %663 = vmatprep.subr.bf16.mxu0 %v588
        %664 = vmatpush1.bf16.msra.mxu0 %v585
        %665 = vmatprep.subr.bf16.mxu0 0
        %666 = vmatpush1.bf16.msra.mxu0 0
        %667 = vmatprep.subr.bf16.mxu0 0
        %668 = vmatpush1.bf16.msra.mxu0 0
        %669 = vmatprep.subr.bf16.mxu0 0
        %670 = vmatpush1.bf16.msra.mxu0 0
        %671 = vmatprep.subr.bf16.mxu0 0
        %672 = vmatpush1.bf16.msra.mxu0 0
        %673 = vmatprep.subr.bf16.mxu0 0
        %674 = vmatpush1.bf16.msra.mxu0 0
        %675 = vmatprep.subr.bf16.mxu0 0
        %676 = vmatpush1.bf16.msra.mxu0 0
        %677 = vmatprep.subr.bf16.mxu0 0
        %678 = vmatpush1.bf16.msra.mxu0 0
        %679 = vmatprep.subr.bf16.mxu0 0
        %680 = vmatpush1.bf16.msra.mxu0 0
        %681 = vmatprep.subr.bf16.mxu0 0
        %682 = vmatpush1.bf16.msra.mxu0 0
        %683 = vmatprep.subr.bf16.mxu0 0
        %684 = vmatpush1.bf16.msra.mxu0 0
        %685 = vmatprep.subr.bf16.mxu0 0
        %686 = vmatpush1.bf16.msra.mxu0 0
        %687 = vmatprep.subr.bf16.mxu0 0
        %688 = vmatpush1.bf16.msra.mxu0 0
        %689 = vmatprep.subr.bf16.mxu0 0
        %690 = vmatpush1.bf16.msra.mxu0 0
        %691 = vmatprep.subr.bf16.mxu0 0
        %692 = vmatpush1.bf16.msra.mxu0 0
        %693 = vmatprep.subr.bf16.mxu0 0
        %694 = vmatpush1.bf16.msra.mxu0 0
        %695 = vmatprep.mubr.bf16.mxu0 0
        %696 = vmatmul.mubr.bf16.gmra.mrb[0].mxu0 %v563
        %v697 = vpop.f32.mrb[0].mxu0
        %v698 = vadd.f32 %v504, %v697
        %v699 = vpop.f32.mrb[0].mxu0
        %v700 = vadd.f32 %v504, %v699
        %v701 = vpop.f32.mrb[0].mxu0
        %v702 = vadd.f32 %v509, %v701
        %v703 = vpop.f32.mrb[0].mxu0
        %v704 = vadd.f32 %v509, %v703
        %705 = vmatprep.mubr.bf16.mxu0 0
        %706 = vmatmul.mubr.bf16.gmra.mrb[0].mxu0 %v566
        %v707 = vpop.f32.mrb[0].mxu0
        %v708 = vadd.f32 %v514, %v707
        %v709 = vpop.f32.mrb[0].mxu0
        %v710 = vadd.f32 %v514, %v709
        %v711 = vpop.f32.mrb[0].mxu0
        %v712 = vadd.f32 %v519, %v711
        %v713 = vpop.f32.mrb[0].mxu0
        %v714 = vadd.f32 %v519, %v713
        %715 = vmatprep.mubr.bf16.mxu0 0
        %716 = vmatmul.mubr.bf16.gmra.mrb[0].mxu0 %v569
        %v717 = vpop.f32.mrb[0].mxu0
        %v718 = vadd.f32 %v524, %v717
        %v719 = vpop.f32.mrb[0].mxu0
        %v720 = vadd.f32 %v524, %v719
        %v721 = vpop.f32.mrb[0].mxu0
        %v722 = vadd.f32 %v529, %v721
        %v723 = vpop.f32.mrb[0].mxu0
        %v724 = vadd.f32 %v529, %v723
        %725 = vmatprep.mubr.bf16.mxu0 0
        %726 = vmatmul.mubr.bf16.gmra.mrb[0].mxu0 %v572
        %v727 = vpop.f32.mrb[0].mxu0
        %v728 = vadd.f32 %v534, %v727
        %v729 = vpop.f32.mrb[0].mxu0
        %v730 = vadd.f32 %v534, %v729
        %v731 = vpop.f32.mrb[0].mxu0
        %v732 = vadd.f32 %v539, %v731
        %v733 = vpop.f32.mrb[0].mxu0
        %v734 = vadd.f32 %v539, %v733
        %735 = vdwg.mxu0
        %v736 = vmax.f32 %v625, 0.0
        %v737 = vmax.f32 %v627, 0.0
        %v738 = vmax.f32 %v698, 0.0
        %v739 = vmax.f32 %v700, 0.0
        %v740 = vmax.f32 %v629, 0.0
        %v741 = vmax.f32 %v631, 0.0
        %v742 = vmax.f32 %v702, 0.0
        %v743 = vmax.f32 %v704, 0.0
        %v744 = vmax.f32 %v635, 0.0
        %v745 = vmax.f32 %v637, 0.0
        %v746 = vmax.f32 %v708, 0.0
        %v747 = vmax.f32 %v710, 0.0
        %v748 = vmax.f32 %v639, 0.0
        %v749 = vmax.f32 %v641, 0.0
        %v750 = vmax.f32 %v712, 0.0
        %v751 = vmax.f32 %v714, 0.0
        %v752 = vmax.f32 %v645, 0.0
        %v753 = vmax.f32 %v647, 0.0
        %v754 = vmax.f32 %v718, 0.0
        %v755 = vmax.f32 %v720, 0.0
        %v756 = vmax.f32 %v649, 0.0
        %v757 = vmax.f32 %v651, 0.0
        %v758 = vmax.f32 %v722, 0.0
        %v759 = vmax.f32 %v724, 0.0
        %v760 = vmax.f32 %v655, 0.0
        %v761 = vmax.f32 %v657, 0.0
        %v762 = vmax.f32 %v728, 0.0
        %v763 = vmax.f32 %v730, 0.0
        %v764 = vmax.f32 %v659, 0.0
        %v765 = vmax.f32 %v661, 0.0
        %v766 = vmax.f32 %v732, 0.0
        %v767 = vmax.f32 %v734, 0.0
        %v768 = vld [vmem:[%s3] sm:$0xf]
        %v769 = vld [vmem:[%s3 + $0x4] sm:$0xf]
        %v770 = vld [vmem:[%s3 + $0x8] sm:$0xf]
        %v771 = vld [vmem:[%s3 + $0xc] sm:$0xf]
        %v772 = vld [vmem:[%s3 + $0x10] sm:$0xf]
        %v773 = vld [vmem:[%s3 + $0x14] sm:$0xf]
        %v774 = vld [vmem:[%s3 + $0x18] sm:$0xf]
        %v775 = vld [vmem:[%s3 + $0x1c] sm:$0xf]
        %v776 = vld [vmem:[%s3 + $0x20] sm:$0xf]
        %v777 = vld [vmem:[%s3 + $0x24] sm:$0xf]
        %v778 = vld [vmem:[%s3 + $0x28] sm:$0xf]
        %v779 = vld [vmem:[%s3 + $0x2c] sm:$0xf]
        %v780 = vld [vmem:[%s3 + $0x30] sm:$0xf]
        %v781 = vld [vmem:[%s3 + $0x34] sm:$0xf]
        %v782 = vld [vmem:[%s3 + $0x38] sm:$0xf]
        %v783 = vld [vmem:[%s3 + $0x3c] sm:$0xf]
        %v784 = vpack.c.bf16 %v740, %v736
        %v785 = vpack.c.bf16 %v741, %v737
        %v786 = vpack.c.bf16 %v742, %v738
        %v787 = vpack.c.bf16 %v743, %v739
        %v788 = vpack.c.bf16 %v748, %v744
        %v789 = vpack.c.bf16 %v749, %v745
        %v790 = vpack.c.bf16 %v750, %v746
        %v791 = vpack.c.bf16 %v751, %v747
        %v792 = vpack.c.bf16 %v756, %v752
        %v793 = vpack.c.bf16 %v757, %v753
        %v794 = vpack.c.bf16 %v758, %v754
        %v795 = vpack.c.bf16 %v759, %v755
        %v796 = vpack.c.bf16 %v764, %v760
        %v797 = vpack.c.bf16 %v765, %v761
        %v798 = vpack.c.bf16 %v766, %v762
        %v799 = vpack.c.bf16 %v767, %v763
        %v800 = vld [vmem:[%s4] sm:$0xff]
        %v801 = vld [vmem:[%s4 + $0x8] sm:$0xff]
        %v802 = vld [vmem:[%s4 + $0x10] sm:$0xff]
        %v803 = vld [vmem:[%s4 + $0x18] sm:$0xff]
        %v804 = vld [vmem:[%s4 + $0x20] sm:$0xff]
        %v805 = vld [vmem:[%s4 + $0x28] sm:$0xff]
        %v806 = vld [vmem:[%s4 + $0x30] sm:$0xff]
        %v807 = vld [vmem:[%s4 + $0x38] sm:$0xff]
        %v808 = vld [vmem:[%s4 + $0x40] sm:$0xff]
        %v809 = vld [vmem:[%s4 + $0x48] sm:$0xff]
        %v810 = vld [vmem:[%s4 + $0x50] sm:$0xff]
        %v811 = vld [vmem:[%s4 + $0x58] sm:$0xff]
        %v812 = vld [vmem:[%s4 + $0x60] sm:$0xff]
        %v813 = vld [vmem:[%s4 + $0x68] sm:$0xff]
        %v814 = vld [vmem:[%s4 + $0x70] sm:$0xff]
        %v815 = vld [vmem:[%s4 + $0x78] sm:$0xff]
        %817 = vset.pattern.permute.xlu0 0
        %818 = vperm.xlu0 %817, %v800
        %v819 = vpop.permute.xlu0 %818
        %822 = vset.pattern.permute.xlu0 0
        %823 = vperm.xlu0 %822, %v801
        %v824 = vpop.permute.xlu0 %823
        %827 = vset.pattern.permute.xlu0 0
        %828 = vperm.xlu0 %827, %v802
        %v829 = vpop.permute.xlu0 %828
        %832 = vset.pattern.permute.xlu0 0
        %833 = vperm.xlu0 %832, %v803
        %v834 = vpop.permute.xlu0 %833
        %837 = vset.pattern.permute.xlu0 0
        %838 = vperm.xlu0 %837, %v804
        %v839 = vpop.permute.xlu0 %838
        %842 = vset.pattern.permute.xlu0 0
        %843 = vperm.xlu0 %842, %v805
        %v844 = vpop.permute.xlu0 %843
        %847 = vset.pattern.permute.xlu0 0
        %848 = vperm.xlu0 %847, %v806
        %v849 = vpop.permute.xlu0 %848
        %852 = vset.pattern.permute.xlu0 0
        %853 = vperm.xlu0 %852, %v807
        %v854 = vpop.permute.xlu0 %853
        %857 = vset.pattern.permute.xlu0 0
        %858 = vperm.xlu0 %857, %v808
        %v859 = vpop.permute.xlu0 %858
        %862 = vset.pattern.permute.xlu0 0
        %863 = vperm.xlu0 %862, %v809
        %v864 = vpop.permute.xlu0 %863
        %867 = vset.pattern.permute.xlu0 0
        %868 = vperm.xlu0 %867, %v810
        %v869 = vpop.permute.xlu0 %868
        %872 = vset.pattern.permute.xlu0 0
        %873 = vperm.xlu0 %872, %v811
        %v874 = vpop.permute.xlu0 %873
        %877 = vset.pattern.permute.xlu0 0
        %878 = vperm.xlu0 %877, %v812
        %v879 = vpop.permute.xlu0 %878
        %882 = vset.pattern.permute.xlu0 0
        %883 = vperm.xlu0 %882, %v813
        %v884 = vpop.permute.xlu0 %883
        %887 = vset.pattern.permute.xlu0 0
        %888 = vperm.xlu0 %887, %v814
        %v889 = vpop.permute.xlu0 %888
        %892 = vset.pattern.permute.xlu0 0
        %893 = vperm.xlu0 %892, %v815
        %v894 = vpop.permute.xlu0 %893
        %v912 = vunpack.c.l.b16 %v768
        %v913 = vunpack.c.l.b16 %v769
        %v914 = vunpack.c.l.b16 %v770
        %v915 = vunpack.c.l.b16 %v771
        %v916 = vunpack.c.l.b16 %v772
        %v917 = vunpack.c.l.b16 %v773
        %v918 = vunpack.c.l.b16 %v774
        %v919 = vunpack.c.l.b16 %v775
        %v920 = vunpack.c.l.b16 %v776
        %v921 = vunpack.c.l.b16 %v777
        %v922 = vunpack.c.l.b16 %v778
        %v923 = vunpack.c.l.b16 %v779
        %v924 = vunpack.c.l.b16 %v780
        %v925 = vunpack.c.l.b16 %v781
        %v926 = vunpack.c.l.b16 %v782
        %v927 = vunpack.c.l.b16 %v783
        %v928 = vpack.c.b16 %v913, %v912
        %v929 = vpack.c.b16 %v915, %v914
        %v930 = vpack.c.b16 %v917, %v916
        %v931 = vpack.c.b16 %v919, %v918
        %v932 = vpack.c.b16 %v921, %v920
        %v933 = vpack.c.b16 %v923, %v922
        %v934 = vpack.c.b16 %v925, %v924
        %v935 = vpack.c.b16 %v927, %v926
        %vm936 = vcmask 523264
        %v938 = vsel %vm936, %v928, 0
        %v941 = vsel %vm936, %v929, 0
        %v944 = vsel %vm936, %v930, 0
        %v947 = vsel %vm936, %v931, 0
        %v950 = vsel %vm936, %v932, 0
        %v953 = vsel %vm936, %v933, 0
        %v956 = vsel %vm936, %v934, 0
        %v959 = vsel %vm936, %v935, 0
        %961 = vmatprep.subr.bf16.mxu0 %v785
        %962 = vmatpush1.bf16.msra.mxu0 %v784
        %963 = vmatprep.subr.bf16.mxu0 %v789
        %964 = vmatpush1.bf16.msra.mxu0 %v788
        %965 = vmatprep.subr.bf16.mxu0 %v793
        %966 = vmatpush1.bf16.msra.mxu0 %v792
        %967 = vmatprep.subr.bf16.mxu0 %v797
        %968 = vmatpush1.bf16.msra.mxu0 %v796
        %969 = vmatprep.subr.bf16.mxu0 0
        %970 = vmatpush1.bf16.msra.mxu0 0
        %971 = vmatprep.subr.bf16.mxu0 0
        %972 = vmatpush1.bf16.msra.mxu0 0
        %973 = vmatprep.subr.bf16.mxu0 0
        %974 = vmatpush1.bf16.msra.mxu0 0
        %975 = vmatprep.subr.bf16.mxu0 0
        %976 = vmatpush1.bf16.msra.mxu0 0
        %977 = vmatprep.subr.bf16.mxu0 0
        %978 = vmatpush1.bf16.msra.mxu0 0
        %979 = vmatprep.subr.bf16.mxu0 0
        %980 = vmatpush1.bf16.msra.mxu0 0
        %981 = vmatprep.subr.bf16.mxu0 0
        %982 = vmatpush1.bf16.msra.mxu0 0
        %983 = vmatprep.subr.bf16.mxu0 0
        %984 = vmatpush1.bf16.msra.mxu0 0
        %985 = vmatprep.subr.bf16.mxu0 0
        %986 = vmatpush1.bf16.msra.mxu0 0
        %987 = vmatprep.subr.bf16.mxu0 0
        %988 = vmatpush1.bf16.msra.mxu0 0
        %989 = vmatprep.subr.bf16.mxu0 0
        %990 = vmatpush1.bf16.msra.mxu0 0
        %991 = vmatprep.subr.bf16.mxu0 0
        %992 = vmatpush1.bf16.msra.mxu0 0
        %993 = vmatprep.mubr.bf16.mxu0 0
        %994 = vmatmul.mubr.bf16.gmra.mrb[0].mxu0 %v938
        %v995 = vpop.f32.mrb[0].mxu0
        %v996 = vadd.f32 %v819, %v995
        %v997 = vpop.f32.mrb[0].mxu0
        %v998 = vadd.f32 %v819, %v997
        %v999 = vpop.f32.mrb[0].mxu0
        %v1000 = vadd.f32 %v824, %v999
        %v1001 = vpop.f32.mrb[0].mxu0
        %v1002 = vadd.f32 %v824, %v1001
        %1003 = vmatprep.mubr.bf16.mxu0 0
        %1004 = vmatmul.mubr.bf16.gmra.mrb[0].mxu0 %v941
        %v1005 = vpop.f32.mrb[0].mxu0
        %v1006 = vadd.f32 %v829, %v1005
        %v1007 = vpop.f32.mrb[0].mxu0
        %v1008 = vadd.f32 %v829, %v1007
        %v1009 = vpop.f32.mrb[0].mxu0
        %v1010 = vadd.f32 %v834, %v1009
        %v1011 = vpop.f32.mrb[0].mxu0
        %v1012 = vadd.f32 %v834, %v1011
        %1013 = vmatprep.mubr.bf16.mxu0 0
        %1014 = vmatmul.mubr.bf16.gmra.mrb[0].mxu0 %v944
        %v1015 = vpop.f32.mrb[0].mxu0
        %v1016 = vadd.f32 %v839, %v1015
        %v1017 = vpop.f32.mrb[0].mxu0
        %v1018 = vadd.f32 %v839, %v1017
        %v1019 = vpop.f32.mrb[0].mxu0
        %v1020 = vadd.f32 %v844, %v1019
        %v1021 = vpop.f32.mrb[0].mxu0
        %v1022 = vadd.f32 %v844, %v1021
        %1023 = vmatprep.mubr.bf16.mxu0 0
        %1024 = vmatmul.mubr.bf16.gmra.mrb[0].mxu0 %v947
        %v1025 = vpop.f32.mrb[0].mxu0
        %v1026 = vadd.f32 %v849, %v1025
        %v1027 = vpop.f32.mrb[0].mxu0
        %v1028 = vadd.f32 %v849, %v1027
        %v1029 = vpop.f32.mrb[0].mxu0
        %v1030 = vadd.f32 %v854, %v1029
        %v1031 = vpop.f32.mrb[0].mxu0
        %v1032 = vadd.f32 %v854, %v1031
        %1033 = vmatprep.mubr.bf16.mxu0 0
        %1034 = vmatmul.mubr.bf16.gmra.mrb[0].mxu0 %v950
        %v1035 = vpop.f32.mrb[0].mxu0
        %v1036 = vadd.f32 %v859, %v1035
        %v1037 = vpop.f32.mrb[0].mxu0
        %v1038 = vadd.f32 %v859, %v1037
        %v1039 = vpop.f32.mrb[0].mxu0
        %v1040 = vadd.f32 %v864, %v1039
        %v1041 = vpop.f32.mrb[0].mxu0
        %v1042 = vadd.f32 %v864, %v1041
        %1043 = vmatprep.mubr.bf16.mxu0 0
        %1044 = vmatmul.mubr.bf16.gmra.mrb[0].mxu0 %v953
        %v1045 = vpop.f32.mrb[0].mxu0
        %v1046 = vadd.f32 %v869, %v1045
        %v1047 = vpop.f32.mrb[0].mxu0
        %v1048 = vadd.f32 %v869, %v1047
        %v1049 = vpop.f32.mrb[0].mxu0
        %v1050 = vadd.f32 %v874, %v1049
        %v1051 = vpop.f32.mrb[0].mxu0
        %v1052 = vadd.f32 %v874, %v1051
        %1053 = vmatprep.mubr.bf16.mxu0 0
        %1054 = vmatmul.mubr.bf16.gmra.mrb[0].mxu0 %v956
        %v1055 = vpop.f32.mrb[0].mxu0
        %v1056 = vadd.f32 %v879, %v1055
        %v1057 = vpop.f32.mrb[0].mxu0
        %v1058 = vadd.f32 %v879, %v1057
        %v1059 = vpop.f32.mrb[0].mxu0
        %v1060 = vadd.f32 %v884, %v1059
        %v1061 = vpop.f32.mrb[0].mxu0
        %v1062 = vadd.f32 %v884, %v1061
        %1063 = vmatprep.mubr.bf16.mxu0 0
        %1064 = vmatmul.mubr.bf16.gmra.mrb[0].mxu0 %v959
        %v1065 = vpop.f32.mrb[0].mxu0
        %v1066 = vadd.f32 %v889, %v1065
        %v1067 = vpop.f32.mrb[0].mxu0
        %v1068 = vadd.f32 %v889, %v1067
        %v1069 = vpop.f32.mrb[0].mxu0
        %v1070 = vadd.f32 %v894, %v1069
        %v1071 = vpop.f32.mrb[0].mxu0
        %v1072 = vadd.f32 %v894, %v1071
        %1073 = vdwg.mxu0
        %1074 = vmatprep.subr.bf16.mxu0 %v787
        %1075 = vmatpush1.bf16.msra.mxu0 %v786
        %1076 = vmatprep.subr.bf16.mxu0 %v791
        %1077 = vmatpush1.bf16.msra.mxu0 %v790
        %1078 = vmatprep.subr.bf16.mxu0 %v795
        %1079 = vmatpush1.bf16.msra.mxu0 %v794
        %1080 = vmatprep.subr.bf16.mxu0 %v799
        %1081 = vmatpush1.bf16.msra.mxu0 %v798
        %1082 = vmatprep.subr.bf16.mxu0 0
        %1083 = vmatpush1.bf16.msra.mxu0 0
        %1084 = vmatprep.subr.bf16.mxu0 0
        %1085 = vmatpush1.bf16.msra.mxu0 0
        %1086 = vmatprep.subr.bf16.mxu0 0
        %1087 = vmatpush1.bf16.msra.mxu0 0
        %1088 = vmatprep.subr.bf16.mxu0 0
        %1089 = vmatpush1.bf16.msra.mxu0 0
        %1090 = vmatprep.subr.bf16.mxu0 0
        %1091 = vmatpush1.bf16.msra.mxu0 0
        %1092 = vmatprep.subr.bf16.mxu0 0
        %1093 = vmatpush1.bf16.msra.mxu0 0
        %1094 = vmatprep.subr.bf16.mxu0 0
        %1095 = vmatpush1.bf16.msra.mxu0 0
        %1096 = vmatprep.subr.bf16.mxu0 0
        %1097 = vmatpush1.bf16.msra.mxu0 0
        %1098 = vmatprep.subr.bf16.mxu0 0
        %1099 = vmatpush1.bf16.msra.mxu0 0
        %1100 = vmatprep.subr.bf16.mxu0 0
        %1101 = vmatpush1.bf16.msra.mxu0 0
        %1102 = vmatprep.subr.bf16.mxu0 0
        %1103 = vmatpush1.bf16.msra.mxu0 0
        %1104 = vmatprep.subr.bf16.mxu0 0
        %1105 = vmatpush1.bf16.msra.mxu0 0
        %1106 = vmatprep.mubr.bf16.mxu0 0
        %1107 = vmatmul.mubr.bf16.gmra.mrb[0].mxu0 %v938
        %v1108 = vpop.f32.mrb[0].mxu0
        %v1109 = vadd.f32 %v819, %v1108
        %v1110 = vpop.f32.mrb[0].mxu0
        %v1111 = vadd.f32 %v819, %v1110
        %v1112 = vpop.f32.mrb[0].mxu0
        %v1113 = vadd.f32 %v824, %v1112
        %v1114 = vpop.f32.mrb[0].mxu0
        %v1115 = vadd.f32 %v824, %v1114
        %1116 = vmatprep.mubr.bf16.mxu0 0
        %1117 = vmatmul.mubr.bf16.gmra.mrb[0].mxu0 %v941
        %v1118 = vpop.f32.mrb[0].mxu0
        %v1119 = vadd.f32 %v829, %v1118
        %v1120 = vpop.f32.mrb[0].mxu0
        %v1121 = vadd.f32 %v829, %v1120
        %v1122 = vpop.f32.mrb[0].mxu0
        %v1123 = vadd.f32 %v834, %v1122
        %v1124 = vpop.f32.mrb[0].mxu0
        %v1125 = vadd.f32 %v834, %v1124
        %1126 = vmatprep.mubr.bf16.mxu0 0
        %1127 = vmatmul.mubr.bf16.gmra.mrb[0].mxu0 %v944
        %v1128 = vpop.f32.mrb[0].mxu0
        %v1129 = vadd.f32 %v839, %v1128
        %v1130 = vpop.f32.mrb[0].mxu0
        %v1131 = vadd.f32 %v839, %v1130
        %v1132 = vpop.f32.mrb[0].mxu0
        %v1133 = vadd.f32 %v844, %v1132
        %v1134 = vpop.f32.mrb[0].mxu0
        %v1135 = vadd.f32 %v844, %v1134
        %1136 = vmatprep.mubr.bf16.mxu0 0
        %1137 = vmatmul.mubr.bf16.gmra.mrb[0].mxu0 %v947
        %v1138 = vpop.f32.mrb[0].mxu0
        %v1139 = vadd.f32 %v849, %v1138
        %v1140 = vpop.f32.mrb[0].mxu0
        %v1141 = vadd.f32 %v849, %v1140
        %v1142 = vpop.f32.mrb[0].mxu0
        %v1143 = vadd.f32 %v854, %v1142
        %v1144 = vpop.f32.mrb[0].mxu0
        %v1145 = vadd.f32 %v854, %v1144
        %1146 = vmatprep.mubr.bf16.mxu0 0
        %1147 = vmatmul.mubr.bf16.gmra.mrb[0].mxu0 %v950
        %v1148 = vpop.f32.mrb[0].mxu0
        %v1149 = vadd.f32 %v859, %v1148
        %v1150 = vpop.f32.mrb[0].mxu0
        %v1151 = vadd.f32 %v859, %v1150
        %v1152 = vpop.f32.mrb[0].mxu0
        %v1153 = vadd.f32 %v864, %v1152
        %v1154 = vpop.f32.mrb[0].mxu0
        %v1155 = vadd.f32 %v864, %v1154
        %1156 = vmatprep.mubr.bf16.mxu0 0
        %1157 = vmatmul.mubr.bf16.gmra.mrb[0].mxu0 %v953
        %v1158 = vpop.f32.mrb[0].mxu0
        %v1159 = vadd.f32 %v869, %v1158
        %v1160 = vpop.f32.mrb[0].mxu0
        %v1161 = vadd.f32 %v869, %v1160
        %v1162 = vpop.f32.mrb[0].mxu0
        %v1163 = vadd.f32 %v874, %v1162
        %v1164 = vpop.f32.mrb[0].mxu0
        %v1165 = vadd.f32 %v874, %v1164
        %1166 = vmatprep.mubr.bf16.mxu0 0
        %1167 = vmatmul.mubr.bf16.gmra.mrb[0].mxu0 %v956
        %v1168 = vpop.f32.mrb[0].mxu0
        %v1169 = vadd.f32 %v879, %v1168
        %v1170 = vpop.f32.mrb[0].mxu0
        %v1171 = vadd.f32 %v879, %v1170
        %v1172 = vpop.f32.mrb[0].mxu0
        %v1173 = vadd.f32 %v884, %v1172
        %v1174 = vpop.f32.mrb[0].mxu0
        %v1175 = vadd.f32 %v884, %v1174
        %1176 = vmatprep.mubr.bf16.mxu0 0
        %1177 = vmatmul.mubr.bf16.gmra.mrb[0].mxu0 %v959
        %v1178 = vpop.f32.mrb[0].mxu0
        %v1179 = vadd.f32 %v889, %v1178
        %v1180 = vpop.f32.mrb[0].mxu0
        %v1181 = vadd.f32 %v889, %v1180
        %v1182 = vpop.f32.mrb[0].mxu0
        %v1183 = vadd.f32 %v894, %v1182
        %v1184 = vpop.f32.mrb[0].mxu0
        %v1185 = vadd.f32 %v894, %v1184
        %1186 = vdwg.mxu0
        %v1187 = vmax.f32 %v996, 0.0
        %v1188 = vmax.f32 %v998, 0.0
        %v1189 = vmax.f32 %v1109, 0.0
        %v1190 = vmax.f32 %v1111, 0.0
        %v1191 = vmax.f32 %v1000, 0.0
        %v1192 = vmax.f32 %v1002, 0.0
        %v1193 = vmax.f32 %v1113, 0.0
        %v1194 = vmax.f32 %v1115, 0.0
        %v1195 = vmax.f32 %v1006, 0.0
        %v1196 = vmax.f32 %v1008, 0.0
        %v1197 = vmax.f32 %v1119, 0.0
        %v1198 = vmax.f32 %v1121, 0.0
        %v1199 = vmax.f32 %v1010, 0.0
        %v1200 = vmax.f32 %v1012, 0.0
        %v1201 = vmax.f32 %v1123, 0.0
        %v1202 = vmax.f32 %v1125, 0.0
        %v1203 = vmax.f32 %v1016, 0.0
        %v1204 = vmax.f32 %v1018, 0.0
        %v1205 = vmax.f32 %v1129, 0.0
        %v1206 = vmax.f32 %v1131, 0.0
        %v1207 = vmax.f32 %v1020, 0.0
        %v1208 = vmax.f32 %v1022, 0.0
        %v1209 = vmax.f32 %v1133, 0.0
        %v1210 = vmax.f32 %v1135, 0.0
        %v1211 = vmax.f32 %v1026, 0.0
        %v1212 = vmax.f32 %v1028, 0.0
        %v1213 = vmax.f32 %v1139, 0.0
        %v1214 = vmax.f32 %v1141, 0.0
        %v1215 = vmax.f32 %v1030, 0.0
        %v1216 = vmax.f32 %v1032, 0.0
        %v1217 = vmax.f32 %v1143, 0.0
        %v1218 = vmax.f32 %v1145, 0.0
        %v1219 = vmax.f32 %v1036, 0.0
        %v1220 = vmax.f32 %v1038, 0.0
        %v1221 = vmax.f32 %v1149, 0.0
        %v1222 = vmax.f32 %v1151, 0.0
        %v1223 = vmax.f32 %v1040, 0.0
        %v1224 = vmax.f32 %v1042, 0.0
        %v1225 = vmax.f32 %v1153, 0.0
        %v1226 = vmax.f32 %v1155, 0.0
        %v1227 = vmax.f32 %v1046, 0.0
        %v1228 = vmax.f32 %v1048, 0.0
        %v1229 = vmax.f32 %v1159, 0.0
        %v1230 = vmax.f32 %v1161, 0.0
        %v1231 = vmax.f32 %v1050, 0.0
        %v1232 = vmax.f32 %v1052, 0.0
        %v1233 = vmax.f32 %v1163, 0.0
        %v1234 = vmax.f32 %v1165, 0.0
        %v1235 = vmax.f32 %v1056, 0.0
        %v1236 = vmax.f32 %v1058, 0.0
        %v1237 = vmax.f32 %v1169, 0.0
        %v1238 = vmax.f32 %v1171, 0.0
        %v1239 = vmax.f32 %v1060, 0.0
        %v1240 = vmax.f32 %v1062, 0.0
        %v1241 = vmax.f32 %v1173, 0.0
        %v1242 = vmax.f32 %v1175, 0.0
        %v1243 = vmax.f32 %v1066, 0.0
        %v1244 = vmax.f32 %v1068, 0.0
        %v1245 = vmax.f32 %v1179, 0.0
        %v1246 = vmax.f32 %v1181, 0.0
        %v1247 = vmax.f32 %v1070, 0.0
        %v1248 = vmax.f32 %v1072, 0.0
        %v1249 = vmax.f32 %v1183, 0.0
        %v1250 = vmax.f32 %v1185, 0.0
        %v1251 = vld [vmem:[#allocation2] sm:$0xf]
        %v1252 = vld [vmem:[#allocation2 + $0x4] sm:$0xf]
        %v1253 = vld [vmem:[#allocation2 + $0x8] sm:$0xf]
        %v1254 = vld [vmem:[#allocation2 + $0xc] sm:$0xf]
        %v1255 = vld [vmem:[#allocation2 + $0x10] sm:$0xf]
        %v1256 = vld [vmem:[#allocation2 + $0x14] sm:$0xf]
        %v1257 = vld [vmem:[#allocation2 + $0x18] sm:$0xf]
        %v1258 = vld [vmem:[#allocation2 + $0x1c] sm:$0xf]
        %v1259 = vld [vmem:[#allocation2 + $0x20] sm:$0xf]
        %v1260 = vld [vmem:[#allocation2 + $0x24] sm:$0xf]
        %v1261 = vld [vmem:[#allocation2 + $0x28] sm:$0xf]
        %v1262 = vld [vmem:[#allocation2 + $0x2c] sm:$0xf]
        %v1263 = vld [vmem:[#allocation2 + $0x30] sm:$0xf]
        %v1264 = vld [vmem:[#allocation2 + $0x34] sm:$0xf]
        %v1265 = vld [vmem:[#allocation2 + $0x38] sm:$0xf]
        %v1266 = vld [vmem:[#allocation2 + $0x3c] sm:$0xf]
        %v1267 = vld [vmem:[#allocation2 + $0x40] sm:$0xf]
        %v1268 = vld [vmem:[#allocation2 + $0x44] sm:$0xf]
        %v1269 = vld [vmem:[#allocation2 + $0x48] sm:$0xf]
        %v1270 = vld [vmem:[#allocation2 + $0x4c] sm:$0xf]
        %v1271 = vld [vmem:[#allocation2 + $0x50] sm:$0xf]
        %v1272 = vld [vmem:[#allocation2 + $0x54] sm:$0xf]
        %v1273 = vld [vmem:[#allocation2 + $0x58] sm:$0xf]
        %v1274 = vld [vmem:[#allocation2 + $0x5c] sm:$0xf]
        %v1275 = vld [vmem:[#allocation2 + $0x60] sm:$0xf]
        %v1276 = vld [vmem:[#allocation2 + $0x64] sm:$0xf]
        %v1277 = vld [vmem:[#allocation2 + $0x68] sm:$0xf]
        %v1278 = vld [vmem:[#allocation2 + $0x6c] sm:$0xf]
        %v1279 = vld [vmem:[#allocation2 + $0x70] sm:$0xf]
        %v1280 = vld [vmem:[#allocation2 + $0x74] sm:$0xf]
        %v1281 = vld [vmem:[#allocation2 + $0x78] sm:$0xf]
        %v1282 = vld [vmem:[#allocation2 + $0x7c] sm:$0xf]
        %v1283 = vld [vmem:[#allocation2 + $0x80] sm:$0xf]
        %v1284 = vld [vmem:[#allocation2 + $0x84] sm:$0xf]
        %v1285 = vld [vmem:[#allocation2 + $0x88] sm:$0xf]
        %v1286 = vld [vmem:[#allocation2 + $0x8c] sm:$0xf]
        %v1287 = vld [vmem:[#allocation2 + $0x90] sm:$0xf]
        %v1288 = vld [vmem:[#allocation2 + $0x94] sm:$0xf]
        %v1289 = vld [vmem:[#allocation2 + $0x98] sm:$0xf]
        %v1290 = vld [vmem:[#allocation2 + $0x9c] sm:$0xf]
        %v1291 = vld [vmem:[#allocation2 + $0xa0] sm:$0xf]
        %v1292 = vld [vmem:[#allocation2 + $0xa4] sm:$0xf]
        %v1293 = vld [vmem:[#allocation2 + $0xa8] sm:$0xf]
        %v1294 = vld [vmem:[#allocation2 + $0xac] sm:$0xf]
        %v1295 = vld [vmem:[#allocation2 + $0xb0] sm:$0xf]
        %v1296 = vld [vmem:[#allocation2 + $0xb4] sm:$0xf]
        %v1297 = vld [vmem:[#allocation2 + $0xb8] sm:$0xf]
        %v1298 = vld [vmem:[#allocation2 + $0xbc] sm:$0xf]
        %v1299 = vld [vmem:[#allocation2 + $0xc0] sm:$0xf]
        %v1300 = vld [vmem:[#allocation2 + $0xc4] sm:$0xf]
        %v1301 = vld [vmem:[#allocation2 + $0xc8] sm:$0xf]
        %v1302 = vld [vmem:[#allocation2 + $0xcc] sm:$0xf]
        %v1303 = vld [vmem:[#allocation2 + $0xd0] sm:$0xf]
        %v1304 = vld [vmem:[#allocation2 + $0xd4] sm:$0xf]
        %v1305 = vld [vmem:[#allocation2 + $0xd8] sm:$0xf]
        %v1306 = vld [vmem:[#allocation2 + $0xdc] sm:$0xf]
        %v1307 = vld [vmem:[#allocation2 + $0xe0] sm:$0xf]
        %v1308 = vld [vmem:[#allocation2 + $0xe4] sm:$0xf]
        %v1309 = vld [vmem:[#allocation2 + $0xe8] sm:$0xf]
        %v1310 = vld [vmem:[#allocation2 + $0xec] sm:$0xf]
        %v1311 = vld [vmem:[#allocation2 + $0xf0] sm:$0xf]
        %v1312 = vld [vmem:[#allocation2 + $0xf4] sm:$0xf]
        %v1313 = vld [vmem:[#allocation2 + $0xf8] sm:$0xf]
        %v1314 = vld [vmem:[#allocation2 + $0xfc] sm:$0xf]
        %v1315 = vld [vmem:[#allocation2 + $0x100] sm:$0xf]
        %v1316 = vld [vmem:[#allocation2 + $0x104] sm:$0xf]
        %v1317 = vld [vmem:[#allocation2 + $0x108] sm:$0xf]
        %v1318 = vld [vmem:[#allocation2 + $0x10c] sm:$0xf]
        %v1319 = vld [vmem:[#allocation2 + $0x110] sm:$0xf]
        %v1320 = vld [vmem:[#allocation2 + $0x114] sm:$0xf]
        %v1321 = vld [vmem:[#allocation2 + $0x118] sm:$0xf]
        %v1322 = vld [vmem:[#allocation2 + $0x11c] sm:$0xf]
        %v1323 = vld [vmem:[#allocation2 + $0x120] sm:$0xf]
        %v1324 = vld [vmem:[#allocation2 + $0x124] sm:$0xf]
        %v1325 = vld [vmem:[#allocation2 + $0x128] sm:$0xf]
        %v1326 = vld [vmem:[#allocation2 + $0x12c] sm:$0xf]
        %v1327 = vld [vmem:[#allocation2 + $0x130] sm:$0xf]
        %v1328 = vld [vmem:[#allocation2 + $0x134] sm:$0xf]
        %v1329 = vld [vmem:[#allocation2 + $0x138] sm:$0xf]
        %v1330 = vld [vmem:[#allocation2 + $0x13c] sm:$0xf]
        %v1331 = vld [vmem:[#allocation2 + $0x140] sm:$0xf]
        %v1332 = vld [vmem:[#allocation2 + $0x144] sm:$0xf]
        %v1333 = vld [vmem:[#allocation2 + $0x148] sm:$0xf]
        %v1334 = vld [vmem:[#allocation2 + $0x14c] sm:$0xf]
        %v1335 = vld [vmem:[#allocation2 + $0x150] sm:$0xf]
        %v1336 = vld [vmem:[#allocation2 + $0x154] sm:$0xf]
        %v1337 = vld [vmem:[#allocation2 + $0x158] sm:$0xf]
        %v1338 = vld [vmem:[#allocation2 + $0x15c] sm:$0xf]
        %v1339 = vld [vmem:[#allocation2 + $0x160] sm:$0xf]
        %v1340 = vld [vmem:[#allocation2 + $0x164] sm:$0xf]
        %v1341 = vld [vmem:[#allocation2 + $0x168] sm:$0xf]
        %v1342 = vld [vmem:[#allocation2 + $0x16c] sm:$0xf]
        %v1343 = vld [vmem:[#allocation2 + $0x170] sm:$0xf]
        %v1344 = vld [vmem:[#allocation2 + $0x174] sm:$0xf]
        %v1345 = vld [vmem:[#allocation2 + $0x178] sm:$0xf]
        %v1346 = vld [vmem:[#allocation2 + $0x17c] sm:$0xf]
        %v1347 = vld [vmem:[#allocation2 + $0x180] sm:$0xf]
        %v1348 = vld [vmem:[#allocation2 + $0x184] sm:$0xf]
        %v1349 = vld [vmem:[#allocation2 + $0x188] sm:$0xf]
        %v1350 = vld [vmem:[#allocation2 + $0x18c] sm:$0xf]
        %v1351 = vld [vmem:[#allocation2 + $0x190] sm:$0xf]
        %v1352 = vld [vmem:[#allocation2 + $0x194] sm:$0xf]
        %v1353 = vld [vmem:[#allocation2 + $0x198] sm:$0xf]
        %v1354 = vld [vmem:[#allocation2 + $0x19c] sm:$0xf]
        %v1355 = vld [vmem:[#allocation2 + $0x1a0] sm:$0xf]
        %v1356 = vld [vmem:[#allocation2 + $0x1a4] sm:$0xf]
        %v1357 = vld [vmem:[#allocation2 + $0x1a8] sm:$0xf]
        %v1358 = vld [vmem:[#allocation2 + $0x1ac] sm:$0xf]
        %v1359 = vld [vmem:[#allocation2 + $0x1b0] sm:$0xf]
        %v1360 = vld [vmem:[#allocation2 + $0x1b4] sm:$0xf]
        %v1361 = vld [vmem:[#allocation2 + $0x1b8] sm:$0xf]
        %v1362 = vld [vmem:[#allocation2 + $0x1bc] sm:$0xf]
        %v1363 = vld [vmem:[#allocation2 + $0x1c0] sm:$0xf]
        %v1364 = vld [vmem:[#allocation2 + $0x1c4] sm:$0xf]
        %v1365 = vld [vmem:[#allocation2 + $0x1c8] sm:$0xf]
        %v1366 = vld [vmem:[#allocation2 + $0x1cc] sm:$0xf]
        %v1367 = vld [vmem:[#allocation2 + $0x1d0] sm:$0xf]
        %v1368 = vld [vmem:[#allocation2 + $0x1d4] sm:$0xf]
        %v1369 = vld [vmem:[#allocation2 + $0x1d8] sm:$0xf]
        %v1370 = vld [vmem:[#allocation2 + $0x1dc] sm:$0xf]
        %v1371 = vld [vmem:[#allocation2 + $0x1e0] sm:$0xf]
        %v1372 = vld [vmem:[#allocation2 + $0x1e4] sm:$0xf]
        %v1373 = vld [vmem:[#allocation2 + $0x1e8] sm:$0xf]
        %v1374 = vld [vmem:[#allocation2 + $0x1ec] sm:$0xf]
        %v1375 = vld [vmem:[#allocation2 + $0x1f0] sm:$0xf]
        %v1376 = vld [vmem:[#allocation2 + $0x1f4] sm:$0xf]
        %v1377 = vld [vmem:[#allocation2 + $0x1f8] sm:$0xf]
        %v1378 = vld [vmem:[#allocation2 + $0x1fc] sm:$0xf]
        %v1379 = vpack.c.bf16 %v1191, %v1187
        %v1380 = vpack.c.bf16 %v1192, %v1188
        %v1381 = vpack.c.bf16 %v1193, %v1189
        %v1382 = vpack.c.bf16 %v1194, %v1190
        %v1383 = vpack.c.bf16 %v1199, %v1195
        %v1384 = vpack.c.bf16 %v1200, %v1196
        %v1385 = vpack.c.bf16 %v1201, %v1197
        %v1386 = vpack.c.bf16 %v1202, %v1198
        %v1387 = vpack.c.bf16 %v1207, %v1203
        %v1388 = vpack.c.bf16 %v1208, %v1204
        %v1389 = vpack.c.bf16 %v1209, %v1205
        %v1390 = vpack.c.bf16 %v1210, %v1206
        %v1391 = vpack.c.bf16 %v1215, %v1211
        %v1392 = vpack.c.bf16 %v1216, %v1212
        %v1393 = vpack.c.bf16 %v1217, %v1213
        %v1394 = vpack.c.bf16 %v1218, %v1214
        %v1395 = vpack.c.bf16 %v1223, %v1219
        %v1396 = vpack.c.bf16 %v1224, %v1220
        %v1397 = vpack.c.bf16 %v1225, %v1221
        %v1398 = vpack.c.bf16 %v1226, %v1222
        %v1399 = vpack.c.bf16 %v1231, %v1227
        %v1400 = vpack.c.bf16 %v1232, %v1228
        %v1401 = vpack.c.bf16 %v1233, %v1229
        %v1402 = vpack.c.bf16 %v1234, %v1230
        %v1403 = vpack.c.bf16 %v1239, %v1235
        %v1404 = vpack.c.bf16 %v1240, %v1236
        %v1405 = vpack.c.bf16 %v1241, %v1237
        %v1406 = vpack.c.bf16 %v1242, %v1238
        %v1407 = vpack.c.bf16 %v1247, %v1243
        %v1408 = vpack.c.bf16 %v1248, %v1244
        %v1409 = vpack.c.bf16 %v1249, %v1245
        %v1410 = vpack.c.bf16 %v1250, %v1246
        %v1411 = vld [vmem:[%s6] sm:$0xff]
        %v1412 = vld [vmem:[%s6 + $0x8] sm:$0xff]
        %v1413 = vld [vmem:[%s6 + $0x10] sm:$0xff]
        %v1414 = vld [vmem:[%s6 + $0x18] sm:$0xff]
        %v1415 = vld [vmem:[%s6 + $0x20] sm:$0xff]
        %v1416 = vld [vmem:[%s6 + $0x28] sm:$0xff]
        %v1417 = vld [vmem:[%s6 + $0x30] sm:$0xff]
        %v1418 = vld [vmem:[%s6 + $0x38] sm:$0xff]
        %v1419 = vld [vmem:[%s6 + $0x40] sm:$0xff]
        %v1420 = vld [vmem:[%s6 + $0x48] sm:$0xff]
        %v1421 = vld [vmem:[%s6 + $0x50] sm:$0xff]
        %v1422 = vld [vmem:[%s6 + $0x58] sm:$0xff]
        %v1423 = vld [vmem:[%s6 + $0x60] sm:$0xff]
        %v1424 = vld [vmem:[%s6 + $0x68] sm:$0xff]
        %v1425 = vld [vmem:[%s6 + $0x70] sm:$0xff]
        %v1426 = vld [vmem:[%s6 + $0x78] sm:$0xff]
        %v1427 = vld [vmem:[%s6 + $0x80] sm:$0xff]
        %v1428 = vld [vmem:[%s6 + $0x88] sm:$0xff]
        %v1429 = vld [vmem:[%s6 + $0x90] sm:$0xff]
        %v1430 = vld [vmem:[%s6 + $0x98] sm:$0xff]
        %v1431 = vld [vmem:[%s6 + $0xa0] sm:$0xff]
        %v1432 = vld [vmem:[%s6 + $0xa8] sm:$0xff]
        %v1433 = vld [vmem:[%s6 + $0xb0] sm:$0xff]
        %v1434 = vld [vmem:[%s6 + $0xb8] sm:$0xff]
        %v1435 = vld [vmem:[%s6 + $0xc0] sm:$0xff]
        %v1436 = vld [vmem:[%s6 + $0xc8] sm:$0xff]
        %v1437 = vld [vmem:[%s6 + $0xd0] sm:$0xff]
        %v1438 = vld [vmem:[%s6 + $0xd8] sm:$0xff]
        %v1439 = vld [vmem:[%s6 + $0xe0] sm:$0xff]
        %v1440 = vld [vmem:[%s6 + $0xe8] sm:$0xff]
        %v1441 = vld [vmem:[%s6 + $0xf0] sm:$0xff]
        %v1442 = vld [vmem:[%s6 + $0xf8] sm:$0xff]
        %v1443 = vld [vmem:[%s6 + $0x100] sm:$0xff]
        %v1444 = vld [vmem:[%s6 + $0x108] sm:$0xff]
        %v1445 = vld [vmem:[%s6 + $0x110] sm:$0xff]
        %v1446 = vld [vmem:[%s6 + $0x118] sm:$0xff]
        %v1447 = vld [vmem:[%s6 + $0x120] sm:$0xff]
        %v1448 = vld [vmem:[%s6 + $0x128] sm:$0xff]
        %v1449 = vld [vmem:[%s6 + $0x130] sm:$0xff]
        %v1450 = vld [vmem:[%s6 + $0x138] sm:$0xff]
        %v1451 = vld [vmem:[%s6 + $0x140] sm:$0xff]
        %v1452 = vld [vmem:[%s6 + $0x148] sm:$0xff]
        %v1453 = vld [vmem:[%s6 + $0x150] sm:$0xff]
        %v1454 = vld [vmem:[%s6 + $0x158] sm:$0xff]
        %v1455 = vld [vmem:[%s6 + $0x160] sm:$0xff]
        %v1456 = vld [vmem:[%s6 + $0x168] sm:$0xff]
        %v1457 = vld [vmem:[%s6 + $0x170] sm:$0xff]
        %v1458 = vld [vmem:[%s6 + $0x178] sm:$0xff]
        %v1459 = vld [vmem:[%s6 + $0x180] sm:$0xff]
        %v1460 = vld [vmem:[%s6 + $0x188] sm:$0xff]
        %v1461 = vld [vmem:[%s6 + $0x190] sm:$0xff]
        %v1462 = vld [vmem:[%s6 + $0x198] sm:$0xff]
        %v1463 = vld [vmem:[%s6 + $0x1a0] sm:$0xff]
        %v1464 = vld [vmem:[%s6 + $0x1a8] sm:$0xff]
        %v1465 = vld [vmem:[%s6 + $0x1b0] sm:$0xff]
        %v1466 = vld [vmem:[%s6 + $0x1b8] sm:$0xff]
        %v1467 = vld [vmem:[%s6 + $0x1c0] sm:$0xff]
        %v1468 = vld [vmem:[%s6 + $0x1c8] sm:$0xff]
        %v1469 = vld [vmem:[%s6 + $0x1d0] sm:$0xff]
        %v1470 = vld [vmem:[%s6 + $0x1d8] sm:$0xff]
        %v1471 = vld [vmem:[%s6 + $0x1e0] sm:$0xff]
        %v1472 = vld [vmem:[%s6 + $0x1e8] sm:$0xff]
        %v1473 = vld [vmem:[%s6 + $0x1f0] sm:$0xff]
        %v1474 = vld [vmem:[%s6 + $0x1f8] sm:$0xff]
        %v1475 = vld [vmem:[%s6 + $0x200] sm:$0xff]
        %v1476 = vld [vmem:[%s6 + $0x208] sm:$0xff]
        %v1477 = vld [vmem:[%s6 + $0x210] sm:$0xff]
        %v1478 = vld [vmem:[%s6 + $0x218] sm:$0xff]
        %v1479 = vld [vmem:[%s6 + $0x220] sm:$0xff]
        %v1480 = vld [vmem:[%s6 + $0x228] sm:$0xff]
        %v1481 = vld [vmem:[%s6 + $0x230] sm:$0xff]
        %v1482 = vld [vmem:[%s6 + $0x238] sm:$0xff]
        %v1483 = vld [vmem:[%s6 + $0x240] sm:$0xff]
        %v1484 = vld [vmem:[%s6 + $0x248] sm:$0xff]
        %v1485 = vld [vmem:[%s6 + $0x250] sm:$0xff]
        %v1486 = vld [vmem:[%s6 + $0x258] sm:$0xff]
        %v1487 = vld [vmem:[%s6 + $0x260] sm:$0xff]
        %v1488 = vld [vmem:[%s6 + $0x268] sm:$0xff]
        %v1489 = vld [vmem:[%s6 + $0x270] sm:$0xff]
        %v1490 = vld [vmem:[%s6 + $0x278] sm:$0xff]
        %v1491 = vld [vmem:[%s6 + $0x280] sm:$0xff]
        %v1492 = vld [vmem:[%s6 + $0x288] sm:$0xff]
        %v1493 = vld [vmem:[%s6 + $0x290] sm:$0xff]
        %v1494 = vld [vmem:[%s6 + $0x298] sm:$0xff]
        %v1495 = vld [vmem:[%s6 + $0x2a0] sm:$0xff]
        %v1496 = vld [vmem:[%s6 + $0x2a8] sm:$0xff]
        %v1497 = vld [vmem:[%s6 + $0x2b0] sm:$0xff]
        %v1498 = vld [vmem:[%s6 + $0x2b8] sm:$0xff]
        %v1499 = vld [vmem:[%s6 + $0x2c0] sm:$0xff]
        %v1500 = vld [vmem:[%s6 + $0x2c8] sm:$0xff]
        %v1501 = vld [vmem:[%s6 + $0x2d0] sm:$0xff]
        %v1502 = vld [vmem:[%s6 + $0x2d8] sm:$0xff]
        %v1503 = vld [vmem:[%s6 + $0x2e0] sm:$0xff]
        %v1504 = vld [vmem:[%s6 + $0x2e8] sm:$0xff]
        %v1505 = vld [vmem:[%s6 + $0x2f0] sm:$0xff]
        %v1506 = vld [vmem:[%s6 + $0x2f8] sm:$0xff]
        %v1507 = vld [vmem:[%s6 + $0x300] sm:$0xff]
        %v1508 = vld [vmem:[%s6 + $0x308] sm:$0xff]
        %v1509 = vld [vmem:[%s6 + $0x310] sm:$0xff]
        %v1510 = vld [vmem:[%s6 + $0x318] sm:$0xff]
        %v1511 = vld [vmem:[%s6 + $0x320] sm:$0xff]
        %v1512 = vld [vmem:[%s6 + $0x328] sm:$0xff]
        %v1513 = vld [vmem:[%s6 + $0x330] sm:$0xff]
        %v1514 = vld [vmem:[%s6 + $0x338] sm:$0xff]
        %v1515 = vld [vmem:[%s6 + $0x340] sm:$0xff]
        %v1516 = vld [vmem:[%s6 + $0x348] sm:$0xff]
        %v1517 = vld [vmem:[%s6 + $0x350] sm:$0xff]
        %v1518 = vld [vmem:[%s6 + $0x358] sm:$0xff]
        %v1519 = vld [vmem:[%s6 + $0x360] sm:$0xff]
        %v1520 = vld [vmem:[%s6 + $0x368] sm:$0xff]
        %v1521 = vld [vmem:[%s6 + $0x370] sm:$0xff]
        %v1522 = vld [vmem:[%s6 + $0x378] sm:$0xff]
        %v1523 = vld [vmem:[%s6 + $0x380] sm:$0xff]
        %v1524 = vld [vmem:[%s6 + $0x388] sm:$0xff]
        %v1525 = vld [vmem:[%s6 + $0x390] sm:$0xff]
        %v1526 = vld [vmem:[%s6 + $0x398] sm:$0xff]
        %v1527 = vld [vmem:[%s6 + $0x3a0] sm:$0xff]
        %v1528 = vld [vmem:[%s6 + $0x3a8] sm:$0xff]
        %v1529 = vld [vmem:[%s6 + $0x3b0] sm:$0xff]
        %v1530 = vld [vmem:[%s6 + $0x3b8] sm:$0xff]
        %v1531 = vld [vmem:[%s6 + $0x3c0] sm:$0xff]
        %v1532 = vld [vmem:[%s6 + $0x3c8] sm:$0xff]
        %v1533 = vld [vmem:[%s6 + $0x3d0] sm:$0xff]
        %v1534 = vld [vmem:[%s6 + $0x3d8] sm:$0xff]
        %v1535 = vld [vmem:[%s6 + $0x3e0] sm:$0xff]
        %v1536 = vld [vmem:[%s6 + $0x3e8] sm:$0xff]
        %v1537 = vld [vmem:[%s6 + $0x3f0] sm:$0xff]
        %v1538 = vld [vmem:[%s6 + $0x3f8] sm:$0xff]
        %1540 = vset.pattern.permute.xlu0 0
        %1541 = vperm.xlu0 %1540, %v1411
        %v1542 = vpop.permute.xlu0 %1541
        %1545 = vset.pattern.permute.xlu0 0
        %1546 = vperm.xlu0 %1545, %v1412
        %v1547 = vpop.permute.xlu0 %1546
        %1550 = vset.pattern.permute.xlu0 0
        %1551 = vperm.xlu0 %1550, %v1413
        %v1552 = vpop.permute.xlu0 %1551
        %1555 = vset.pattern.permute.xlu0 0
        %1556 = vperm.xlu0 %1555, %v1414
        %v1557 = vpop.permute.xlu0 %1556
        %1560 = vset.pattern.permute.xlu0 0
        %1561 = vperm.xlu0 %1560, %v1415
        %v1562 = vpop.permute.xlu0 %1561
        %1565 = vset.pattern.permute.xlu0 0
        %1566 = vperm.xlu0 %1565, %v1416
        %v1567 = vpop.permute.xlu0 %1566
        %1570 = vset.pattern.permute.xlu0 0
        %1571 = vperm.xlu0 %1570, %v1417
        %v1572 = vpop.permute.xlu0 %1571
        %1575 = vset.pattern.permute.xlu0 0
        %1576 = vperm.xlu0 %1575, %v1418
        %v1577 = vpop.permute.xlu0 %1576
        %1580 = vset.pattern.permute.xlu0 0
        %1581 = vperm.xlu0 %1580, %v1419
        %v1582 = vpop.permute.xlu0 %1581
        %1585 = vset.pattern.permute.xlu0 0
        %1586 = vperm.xlu0 %1585, %v1420
        %v1587 = vpop.permute.xlu0 %1586
        %1590 = vset.pattern.permute.xlu0 0
        %1591 = vperm.xlu0 %1590, %v1421
        %v1592 = vpop.permute.xlu0 %1591
        %1595 = vset.pattern.permute.xlu0 0
        %1596 = vperm.xlu0 %1595, %v1422
        %v1597 = vpop.permute.xlu0 %1596
        %1600 = vset.pattern.permute.xlu0 0
        %1601 = vperm.xlu0 %1600, %v1423
        %v1602 = vpop.permute.xlu0 %1601
        %1605 = vset.pattern.permute.xlu0 0
        %1606 = vperm.xlu0 %1605, %v1424
        %v1607 = vpop.permute.xlu0 %1606
        %1610 = vset.pattern.permute.xlu0 0
        %1611 = vperm.xlu0 %1610, %v1425
        %v1612 = vpop.permute.xlu0 %1611
        %1615 = vset.pattern.permute.xlu0 0
        %1616 = vperm.xlu0 %1615, %v1426
        %v1617 = vpop.permute.xlu0 %1616
        %1620 = vset.pattern.permute.xlu0 0
        %1621 = vperm.xlu0 %1620, %v1427
        %v1622 = vpop.permute.xlu0 %1621
        %1625 = vset.pattern.permute.xlu0 0
        %1626 = vperm.xlu0 %1625, %v1428
        %v1627 = vpop.permute.xlu0 %1626
        %1630 = vset.pattern.permute.xlu0 0
        %1631 = vperm.xlu0 %1630, %v1429
        %v1632 = vpop.permute.xlu0 %1631
        %1635 = vset.pattern.permute.xlu0 0
        %1636 = vperm.xlu0 %1635, %v1430
        %v1637 = vpop.permute.xlu0 %1636
        %1640 = vset.pattern.permute.xlu0 0
        %1641 = vperm.xlu0 %1640, %v1431
        %v1642 = vpop.permute.xlu0 %1641
        %1645 = vset.pattern.permute.xlu0 0
        %1646 = vperm.xlu0 %1645, %v1432
        %v1647 = vpop.permute.xlu0 %1646
        %1650 = vset.pattern.permute.xlu0 0
        %1651 = vperm.xlu0 %1650, %v1433
        %v1652 = vpop.permute.xlu0 %1651
        %1655 = vset.pattern.permute.xlu0 0
        %1656 = vperm.xlu0 %1655, %v1434
        %v1657 = vpop.permute.xlu0 %1656
        %1660 = vset.pattern.permute.xlu0 0
        %1661 = vperm.xlu0 %1660, %v1435
        %v1662 = vpop.permute.xlu0 %1661
        %1665 = vset.pattern.permute.xlu0 0
        %1666 = vperm.xlu0 %1665, %v1436
        %v1667 = vpop.permute.xlu0 %1666
        %1670 = vset.pattern.permute.xlu0 0
        %1671 = vperm.xlu0 %1670, %v1437
        %v1672 = vpop.permute.xlu0 %1671
        %1675 = vset.pattern.permute.xlu0 0
        %1676 = vperm.xlu0 %1675, %v1438
        %v1677 = vpop.permute.xlu0 %1676
        %1680 = vset.pattern.permute.xlu0 0
        %1681 = vperm.xlu0 %1680, %v1439
        %v1682 = vpop.permute.xlu0 %1681
        %1685 = vset.pattern.permute.xlu0 0
        %1686 = vperm.xlu0 %1685, %v1440
        %v1687 = vpop.permute.xlu0 %1686
        %1690 = vset.pattern.permute.xlu0 0
        %1691 = vperm.xlu0 %1690, %v1441
        %v1692 = vpop.permute.xlu0 %1691
        %1695 = vset.pattern.permute.xlu0 0
        %1696 = vperm.xlu0 %1695, %v1442
        %v1697 = vpop.permute.xlu0 %1696
        %1700 = vset.pattern.permute.xlu0 0
        %1701 = vperm.xlu0 %1700, %v1443
        %v1702 = vpop.permute.xlu0 %1701
        %1705 = vset.pattern.permute.xlu0 0
        %1706 = vperm.xlu0 %1705, %v1444
        %v1707 = vpop.permute.xlu0 %1706
        %1710 = vset.pattern.permute.xlu0 0
        %1711 = vperm.xlu0 %1710, %v1445
        %v1712 = vpop.permute.xlu0 %1711
        %1715 = vset.pattern.permute.xlu0 0
        %1716 = vperm.xlu0 %1715, %v1446
        %v1717 = vpop.permute.xlu0 %1716
        %1720 = vset.pattern.permute.xlu0 0
        %1721 = vperm.xlu0 %1720, %v1447
        %v1722 = vpop.permute.xlu0 %1721
        %1725 = vset.pattern.permute.xlu0 0
        %1726 = vperm.xlu0 %1725, %v1448
        %v1727 = vpop.permute.xlu0 %1726
        %1730 = vset.pattern.permute.xlu0 0
        %1731 = vperm.xlu0 %1730, %v1449
        %v1732 = vpop.permute.xlu0 %1731
        %1735 = vset.pattern.permute.xlu0 0
        %1736 = vperm.xlu0 %1735, %v1450
        %v1737 = vpop.permute.xlu0 %1736
        %1740 = vset.pattern.permute.xlu0 0
        %1741 = vperm.xlu0 %1740, %v1451
        %v1742 = vpop.permute.xlu0 %1741
        %1745 = vset.pattern.permute.xlu0 0
        %1746 = vperm.xlu0 %1745, %v1452
        %v1747 = vpop.permute.xlu0 %1746
        %1750 = vset.pattern.permute.xlu0 0
        %1751 = vperm.xlu0 %1750, %v1453
        %v1752 = vpop.permute.xlu0 %1751
        %1755 = vset.pattern.permute.xlu0 0
        %1756 = vperm.xlu0 %1755, %v1454
        %v1757 = vpop.permute.xlu0 %1756
        %1760 = vset.pattern.permute.xlu0 0
        %1761 = vperm.xlu0 %1760, %v1455
        %v1762 = vpop.permute.xlu0 %1761
        %1765 = vset.pattern.permute.xlu0 0
        %1766 = vperm.xlu0 %1765, %v1456
        %v1767 = vpop.permute.xlu0 %1766
        %1770 = vset.pattern.permute.xlu0 0
        %1771 = vperm.xlu0 %1770, %v1457
        %v1772 = vpop.permute.xlu0 %1771
        %1775 = vset.pattern.permute.xlu0 0
        %1776 = vperm.xlu0 %1775, %v1458
        %v1777 = vpop.permute.xlu0 %1776
        %1780 = vset.pattern.permute.xlu0 0
        %1781 = vperm.xlu0 %1780, %v1459
        %v1782 = vpop.permute.xlu0 %1781
        %1785 = vset.pattern.permute.xlu0 0
        %1786 = vperm.xlu0 %1785, %v1460
        %v1787 = vpop.permute.xlu0 %1786
        %1790 = vset.pattern.permute.xlu0 0
        %1791 = vperm.xlu0 %1790, %v1461
        %v1792 = vpop.permute.xlu0 %1791
        %1795 = vset.pattern.permute.xlu0 0
        %1796 = vperm.xlu0 %1795, %v1462
        %v1797 = vpop.permute.xlu0 %1796
        %1800 = vset.pattern.permute.xlu0 0
        %1801 = vperm.xlu0 %1800, %v1463
        %v1802 = vpop.permute.xlu0 %1801
        %1805 = vset.pattern.permute.xlu0 0
        %1806 = vperm.xlu0 %1805, %v1464
        %v1807 = vpop.permute.xlu0 %1806
        %1810 = vset.pattern.permute.xlu0 0
        %1811 = vperm.xlu0 %1810, %v1465
        %v1812 = vpop.permute.xlu0 %1811
        %1815 = vset.pattern.permute.xlu0 0
        %1816 = vperm.xlu0 %1815, %v1466
        %v1817 = vpop.permute.xlu0 %1816
        %1820 = vset.pattern.permute.xlu0 0
        %1821 = vperm.xlu0 %1820, %v1467
        %v1822 = vpop.permute.xlu0 %1821
        %1825 = vset.pattern.permute.xlu0 0
        %1826 = vperm.xlu0 %1825, %v1468
        %v1827 = vpop.permute.xlu0 %1826
        %1830 = vset.pattern.permute.xlu0 0
        %1831 = vperm.xlu0 %1830, %v1469
        %v1832 = vpop.permute.xlu0 %1831
        %1835 = vset.pattern.permute.xlu0 0
        %1836 = vperm.xlu0 %1835, %v1470
        %v1837 = vpop.permute.xlu0 %1836
        %1840 = vset.pattern.permute.xlu0 0
        %1841 = vperm.xlu0 %1840, %v1471
        %v1842 = vpop.permute.xlu0 %1841
        %1845 = vset.pattern.permute.xlu0 0
        %1846 = vperm.xlu0 %1845, %v1472
        %v1847 = vpop.permute.xlu0 %1846
        %1850 = vset.pattern.permute.xlu0 0
        %1851 = vperm.xlu0 %1850, %v1473
        %v1852 = vpop.permute.xlu0 %1851
        %1855 = vset.pattern.permute.xlu0 0
        %1856 = vperm.xlu0 %1855, %v1474
        %v1857 = vpop.permute.xlu0 %1856
        %1860 = vset.pattern.permute.xlu0 0
        %1861 = vperm.xlu0 %1860, %v1475
        %v1862 = vpop.permute.xlu0 %1861
        %1865 = vset.pattern.permute.xlu0 0
        %1866 = vperm.xlu0 %1865, %v1476
        %v1867 = vpop.permute.xlu0 %1866
        %1870 = vset.pattern.permute.xlu0 0
        %1871 = vperm.xlu0 %1870, %v1477
        %v1872 = vpop.permute.xlu0 %1871
        %1875 = vset.pattern.permute.xlu0 0
        %1876 = vperm.xlu0 %1875, %v1478
        %v1877 = vpop.permute.xlu0 %1876
        %1880 = vset.pattern.permute.xlu0 0
        %1881 = vperm.xlu0 %1880, %v1479
        %v1882 = vpop.permute.xlu0 %1881
        %1885 = vset.pattern.permute.xlu0 0
        %1886 = vperm.xlu0 %1885, %v1480
        %v1887 = vpop.permute.xlu0 %1886
        %1890 = vset.pattern.permute.xlu0 0
        %1891 = vperm.xlu0 %1890, %v1481
        %v1892 = vpop.permute.xlu0 %1891
        %1895 = vset.pattern.permute.xlu0 0
        %1896 = vperm.xlu0 %1895, %v1482
        %v1897 = vpop.permute.xlu0 %1896
        %1900 = vset.pattern.permute.xlu0 0
        %1901 = vperm.xlu0 %1900, %v1483
        %v1902 = vpop.permute.xlu0 %1901
        %1905 = vset.pattern.permute.xlu0 0
        %1906 = vperm.xlu0 %1905, %v1484
        %v1907 = vpop.permute.xlu0 %1906
        %1910 = vset.pattern.permute.xlu0 0
        %1911 = vperm.xlu0 %1910, %v1485
        %v1912 = vpop.permute.xlu0 %1911
        %1915 = vset.pattern.permute.xlu0 0
        %1916 = vperm.xlu0 %1915, %v1486
        %v1917 = vpop.permute.xlu0 %1916
        %1920 = vset.pattern.permute.xlu0 0
        %1921 = vperm.xlu0 %1920, %v1487
        %v1922 = vpop.permute.xlu0 %1921
        %1925 = vset.pattern.permute.xlu0 0
        %1926 = vperm.xlu0 %1925, %v1488
        %v1927 = vpop.permute.xlu0 %1926
        %1930 = vset.pattern.permute.xlu0 0
        %1931 = vperm.xlu0 %1930, %v1489
        %v1932 = vpop.permute.xlu0 %1931
        %1935 = vset.pattern.permute.xlu0 0
        %1936 = vperm.xlu0 %1935, %v1490
        %v1937 = vpop.permute.xlu0 %1936
        %1940 = vset.pattern.permute.xlu0 0
        %1941 = vperm.xlu0 %1940, %v1491
        %v1942 = vpop.permute.xlu0 %1941
        %1945 = vset.pattern.permute.xlu0 0
        %1946 = vperm.xlu0 %1945, %v1492
        %v1947 = vpop.permute.xlu0 %1946
        %1950 = vset.pattern.permute.xlu0 0
        %1951 = vperm.xlu0 %1950, %v1493
        %v1952 = vpop.permute.xlu0 %1951
        %1955 = vset.pattern.permute.xlu0 0
        %1956 = vperm.xlu0 %1955, %v1494
        %v1957 = vpop.permute.xlu0 %1956
        %1960 = vset.pattern.permute.xlu0 0
        %1961 = vperm.xlu0 %1960, %v1495
        %v1962 = vpop.permute.xlu0 %1961
        %1965 = vset.pattern.permute.xlu0 0
        %1966 = vperm.xlu0 %1965, %v1496
        %v1967 = vpop.permute.xlu0 %1966
        %1970 = vset.pattern.permute.xlu0 0
        %1971 = vperm.xlu0 %1970, %v1497
        %v1972 = vpop.permute.xlu0 %1971
        %1975 = vset.pattern.permute.xlu0 0
        %1976 = vperm.xlu0 %1975, %v1498
        %v1977 = vpop.permute.xlu0 %1976
        %1980 = vset.pattern.permute.xlu0 0
        %1981 = vperm.xlu0 %1980, %v1499
        %v1982 = vpop.permute.xlu0 %1981
        %1985 = vset.pattern.permute.xlu0 0
        %1986 = vperm.xlu0 %1985, %v1500
        %v1987 = vpop.permute.xlu0 %1986
        %1990 = vset.pattern.permute.xlu0 0
        %1991 = vperm.xlu0 %1990, %v1501
        %v1992 = vpop.permute.xlu0 %1991
        %1995 = vset.pattern.permute.xlu0 0
        %1996 = vperm.xlu0 %1995, %v1502
        %v1997 = vpop.permute.xlu0 %1996
        %2000 = vset.pattern.permute.xlu0 0
        %2001 = vperm.xlu0 %2000, %v1503
        %v2002 = vpop.permute.xlu0 %2001
        %2005 = vset.pattern.permute.xlu0 0
        %2006 = vperm.xlu0 %2005, %v1504
        %v2007 = vpop.permute.xlu0 %2006
        %2010 = vset.pattern.permute.xlu0 0
        %2011 = vperm.xlu0 %2010, %v1505
        %v2012 = vpop.permute.xlu0 %2011
        %2015 = vset.pattern.permute.xlu0 0
        %2016 = vperm.xlu0 %2015, %v1506
        %v2017 = vpop.permute.xlu0 %2016
        %2020 = vset.pattern.permute.xlu0 0
        %2021 = vperm.xlu0 %2020, %v1507
        %v2022 = vpop.permute.xlu0 %2021
        %2025 = vset.pattern.permute.xlu0 0
        %2026 = vperm.xlu0 %2025, %v1508
        %v2027 = vpop.permute.xlu0 %2026
        %2030 = vset.pattern.permute.xlu0 0
        %2031 = vperm.xlu0 %2030, %v1509
        %v2032 = vpop.permute.xlu0 %2031
        %2035 = vset.pattern.permute.xlu0 0
        %2036 = vperm.xlu0 %2035, %v1510
        %v2037 = vpop.permute.xlu0 %2036
        %2040 = vset.pattern.permute.xlu0 0
        %2041 = vperm.xlu0 %2040, %v1511
        %v2042 = vpop.permute.xlu0 %2041
        %2045 = vset.pattern.permute.xlu0 0
        %2046 = vperm.xlu0 %2045, %v1512
        %v2047 = vpop.permute.xlu0 %2046
        %2050 = vset.pattern.permute.xlu0 0
        %2051 = vperm.xlu0 %2050, %v1513
        %v2052 = vpop.permute.xlu0 %2051
        %2055 = vset.pattern.permute.xlu0 0
        %2056 = vperm.xlu0 %2055, %v1514
        %v2057 = vpop.permute.xlu0 %2056
        %2060 = vset.pattern.permute.xlu0 0
        %2061 = vperm.xlu0 %2060, %v1515
        %v2062 = vpop.permute.xlu0 %2061
        %2065 = vset.pattern.permute.xlu0 0
        %2066 = vperm.xlu0 %2065, %v1516
        %v2067 = vpop.permute.xlu0 %2066
        %2070 = vset.pattern.permute.xlu0 0
        %2071 = vperm.xlu0 %2070, %v1517
        %v2072 = vpop.permute.xlu0 %2071
        %2075 = vset.pattern.permute.xlu0 0
        %2076 = vperm.xlu0 %2075, %v1518
        %v2077 = vpop.permute.xlu0 %2076
        %2080 = vset.pattern.permute.xlu0 0
        %2081 = vperm.xlu0 %2080, %v1519
        %v2082 = vpop.permute.xlu0 %2081
        %2085 = vset.pattern.permute.xlu0 0
        %2086 = vperm.xlu0 %2085, %v1520
        %v2087 = vpop.permute.xlu0 %2086
        %2090 = vset.pattern.permute.xlu0 0
        %2091 = vperm.xlu0 %2090, %v1521
        %v2092 = vpop.permute.xlu0 %2091
        %2095 = vset.pattern.permute.xlu0 0
        %2096 = vperm.xlu0 %2095, %v1522
        %v2097 = vpop.permute.xlu0 %2096
        %2100 = vset.pattern.permute.xlu0 0
        %2101 = vperm.xlu0 %2100, %v1523
        %v2102 = vpop.permute.xlu0 %2101
        %2105 = vset.pattern.permute.xlu0 0
        %2106 = vperm.xlu0 %2105, %v1524
        %v2107 = vpop.permute.xlu0 %2106
        %2110 = vset.pattern.permute.xlu0 0
        %2111 = vperm.xlu0 %2110, %v1525
        %v2112 = vpop.permute.xlu0 %2111
        %2115 = vset.pattern.permute.xlu0 0
        %2116 = vperm.xlu0 %2115, %v1526
        %v2117 = vpop.permute.xlu0 %2116
        %2120 = vset.pattern.permute.xlu0 0
        %2121 = vperm.xlu0 %2120, %v1527
        %v2122 = vpop.permute.xlu0 %2121
        %2125 = vset.pattern.permute.xlu0 0
        %2126 = vperm.xlu0 %2125, %v1528
        %v2127 = vpop.permute.xlu0 %2126
        %2130 = vset.pattern.permute.xlu0 0
        %2131 = vperm.xlu0 %2130, %v1529
        %v2132 = vpop.permute.xlu0 %2131
        %2135 = vset.pattern.permute.xlu0 0
        %2136 = vperm.xlu0 %2135, %v1530
        %v2137 = vpop.permute.xlu0 %2136
        %2140 = vset.pattern.permute.xlu0 0
        %2141 = vperm.xlu0 %2140, %v1531
        %v2142 = vpop.permute.xlu0 %2141
        %2145 = vset.pattern.permute.xlu0 0
        %2146 = vperm.xlu0 %2145, %v1532
        %v2147 = vpop.permute.xlu0 %2146
        %2150 = vset.pattern.permute.xlu0 0
        %2151 = vperm.xlu0 %2150, %v1533
        %v2152 = vpop.permute.xlu0 %2151
        %2155 = vset.pattern.permute.xlu0 0
        %2156 = vperm.xlu0 %2155, %v1534
        %v2157 = vpop.permute.xlu0 %2156
        %2160 = vset.pattern.permute.xlu0 0
        %2161 = vperm.xlu0 %2160, %v1535
        %v2162 = vpop.permute.xlu0 %2161
        %2165 = vset.pattern.permute.xlu0 0
        %2166 = vperm.xlu0 %2165, %v1536
        %v2167 = vpop.permute.xlu0 %2166
        %2170 = vset.pattern.permute.xlu0 0
        %2171 = vperm.xlu0 %2170, %v1537
        %v2172 = vpop.permute.xlu0 %2171
        %2175 = vset.pattern.permute.xlu0 0
        %2176 = vperm.xlu0 %2175, %v1538
        %v2177 = vpop.permute.xlu0 %2176
        %v2307 = vunpack.c.l.b16 %v1251
        %v2308 = vunpack.c.l.b16 %v1252
        %v2309 = vunpack.c.l.b16 %v1253
        %v2310 = vunpack.c.l.b16 %v1254
        %v2311 = vunpack.c.l.b16 %v1255
        %v2312 = vunpack.c.l.b16 %v1256
        %v2313 = vunpack.c.l.b16 %v1257
        %v2314 = vunpack.c.l.b16 %v1258
        %v2315 = vunpack.c.l.b16 %v1259
        %v2316 = vunpack.c.l.b16 %v1260
        %v2317 = vunpack.c.l.b16 %v1261
        %v2318 = vunpack.c.l.b16 %v1262
        %v2319 = vunpack.c.l.b16 %v1263
        %v2320 = vunpack.c.l.b16 %v1264
        %v2321 = vunpack.c.l.b16 %v1265
        %v2322 = vunpack.c.l.b16 %v1266
        %v2323 = vunpack.c.l.b16 %v1267
        %v2324 = vunpack.c.l.b16 %v1268
        %v2325 = vunpack.c.l.b16 %v1269
        %v2326 = vunpack.c.l.b16 %v1270
        %v2327 = vunpack.c.l.b16 %v1271
        %v2328 = vunpack.c.l.b16 %v1272
        %v2329 = vunpack.c.l.b16 %v1273
        %v2330 = vunpack.c.l.b16 %v1274
        %v2331 = vunpack.c.l.b16 %v1275
        %v2332 = vunpack.c.l.b16 %v1276
        %v2333 = vunpack.c.l.b16 %v1277
        %v2334 = vunpack.c.l.b16 %v1278
        %v2335 = vunpack.c.l.b16 %v1279
        %v2336 = vunpack.c.l.b16 %v1280
        %v2337 = vunpack.c.l.b16 %v1281
        %v2338 = vunpack.c.l.b16 %v1282
        %v2339 = vunpack.c.l.b16 %v1283
        %v2340 = vunpack.c.l.b16 %v1284
        %v2341 = vunpack.c.l.b16 %v1285
        %v2342 = vunpack.c.l.b16 %v1286
        %v2343 = vunpack.c.l.b16 %v1287
        %v2344 = vunpack.c.l.b16 %v1288
        %v2345 = vunpack.c.l.b16 %v1289
        %v2346 = vunpack.c.l.b16 %v1290
        %v2347 = vunpack.c.l.b16 %v1291
        %v2348 = vunpack.c.l.b16 %v1292
        %v2349 = vunpack.c.l.b16 %v1293
        %v2350 = vunpack.c.l.b16 %v1294
        %v2351 = vunpack.c.l.b16 %v1295
        %v2352 = vunpack.c.l.b16 %v1296
        %v2353 = vunpack.c.l.b16 %v1297
        %v2354 = vunpack.c.l.b16 %v1298
        %v2355 = vunpack.c.l.b16 %v1299
        %v2356 = vunpack.c.l.b16 %v1300
        %v2357 = vunpack.c.l.b16 %v1301
        %v2358 = vunpack.c.l.b16 %v1302
        %v2359 = vunpack.c.l.b16 %v1303
        %v2360 = vunpack.c.l.b16 %v1304
        %v2361 = vunpack.c.l.b16 %v1305
        %v2362 = vunpack.c.l.b16 %v1306
        %v2363 = vunpack.c.l.b16 %v1307
        %v2364 = vunpack.c.l.b16 %v1308
        %v2365 = vunpack.c.l.b16 %v1309
        %v2366 = vunpack.c.l.b16 %v1310
        %v2367 = vunpack.c.l.b16 %v1311
        %v2368 = vunpack.c.l.b16 %v1312
        %v2369 = vunpack.c.l.b16 %v1313
        %v2370 = vunpack.c.l.b16 %v1314
        %v2371 = vunpack.c.l.b16 %v1315
        %v2372 = vunpack.c.l.b16 %v1316
        %v2373 = vunpack.c.l.b16 %v1317
        %v2374 = vunpack.c.l.b16 %v1318
        %v2375 = vunpack.c.l.b16 %v1319
        %v2376 = vunpack.c.l.b16 %v1320
        %v2377 = vunpack.c.l.b16 %v1321
        %v2378 = vunpack.c.l.b16 %v1322
        %v2379 = vunpack.c.l.b16 %v1323
        %v2380 = vunpack.c.l.b16 %v1324
        %v2381 = vunpack.c.l.b16 %v1325
        %v2382 = vunpack.c.l.b16 %v1326
        %v2383 = vunpack.c.l.b16 %v1327
        %v2384 = vunpack.c.l.b16 %v1328
        %v2385 = vunpack.c.l.b16 %v1329
        %v2386 = vunpack.c.l.b16 %v1330
        %v2387 = vunpack.c.l.b16 %v1331
        %v2388 = vunpack.c.l.b16 %v1332
        %v2389 = vunpack.c.l.b16 %v1333
        %v2390 = vunpack.c.l.b16 %v1334
        %v2391 = vunpack.c.l.b16 %v1335
        %v2392 = vunpack.c.l.b16 %v1336
        %v2393 = vunpack.c.l.b16 %v1337
        %v2394 = vunpack.c.l.b16 %v1338
        %v2395 = vunpack.c.l.b16 %v1339
        %v2396 = vunpack.c.l.b16 %v1340
        %v2397 = vunpack.c.l.b16 %v1341
        %v2398 = vunpack.c.l.b16 %v1342
        %v2399 = vunpack.c.l.b16 %v1343
        %v2400 = vunpack.c.l.b16 %v1344
        %v2401 = vunpack.c.l.b16 %v1345
        %v2402 = vunpack.c.l.b16 %v1346
        %v2403 = vunpack.c.l.b16 %v1347
        %v2404 = vunpack.c.l.b16 %v1348
        %v2405 = vunpack.c.l.b16 %v1349
        %v2406 = vunpack.c.l.b16 %v1350
        %v2407 = vunpack.c.l.b16 %v1351
        %v2408 = vunpack.c.l.b16 %v1352
        %v2409 = vunpack.c.l.b16 %v1353
        %v2410 = vunpack.c.l.b16 %v1354
        %v2411 = vunpack.c.l.b16 %v1355
        %v2412 = vunpack.c.l.b16 %v1356
        %v2413 = vunpack.c.l.b16 %v1357
        %v2414 = vunpack.c.l.b16 %v1358
        %v2415 = vunpack.c.l.b16 %v1359
        %v2416 = vunpack.c.l.b16 %v1360
        %v2417 = vunpack.c.l.b16 %v1361
        %v2418 = vunpack.c.l.b16 %v1362
        %v2419 = vunpack.c.l.b16 %v1363
        %v2420 = vunpack.c.l.b16 %v1364
        %v2421 = vunpack.c.l.b16 %v1365
        %v2422 = vunpack.c.l.b16 %v1366
        %v2423 = vunpack.c.l.b16 %v1367
        %v2424 = vunpack.c.l.b16 %v1368
        %v2425 = vunpack.c.l.b16 %v1369
        %v2426 = vunpack.c.l.b16 %v1370
        %v2427 = vunpack.c.l.b16 %v1371
        %v2428 = vunpack.c.l.b16 %v1372
        %v2429 = vunpack.c.l.b16 %v1373
        %v2430 = vunpack.c.l.b16 %v1374
        %v2431 = vunpack.c.l.b16 %v1375
        %v2432 = vunpack.c.l.b16 %v1376
        %v2433 = vunpack.c.l.b16 %v1377
        %v2434 = vunpack.c.l.b16 %v1378
        %v2435 = vpack.c.b16 %v2308, %v2307
        %v2436 = vpack.c.b16 %v2310, %v2309
        %v2437 = vpack.c.b16 %v2312, %v2311
        %v2438 = vpack.c.b16 %v2314, %v2313
        %v2439 = vpack.c.b16 %v2316, %v2315
        %v2440 = vpack.c.b16 %v2318, %v2317
        %v2441 = vpack.c.b16 %v2320, %v2319
        %v2442 = vpack.c.b16 %v2322, %v2321
        %v2443 = vpack.c.b16 %v2324, %v2323
        %v2444 = vpack.c.b16 %v2326, %v2325
        %v2445 = vpack.c.b16 %v2328, %v2327
        %v2446 = vpack.c.b16 %v2330, %v2329
        %v2447 = vpack.c.b16 %v2332, %v2331
        %v2448 = vpack.c.b16 %v2334, %v2333
        %v2449 = vpack.c.b16 %v2336, %v2335
        %v2450 = vpack.c.b16 %v2338, %v2337
        %v2451 = vpack.c.b16 %v2340, %v2339
        %v2452 = vpack.c.b16 %v2342, %v2341
        %v2453 = vpack.c.b16 %v2344, %v2343
        %v2454 = vpack.c.b16 %v2346, %v2345
        %v2455 = vpack.c.b16 %v2348, %v2347
        %v2456 = vpack.c.b16 %v2350, %v2349
        %v2457 = vpack.c.b16 %v2352, %v2351
        %v2458 = vpack.c.b16 %v2354, %v2353
        %v2459 = vpack.c.b16 %v2356, %v2355
        %v2460 = vpack.c.b16 %v2358, %v2357
        %v2461 = vpack.c.b16 %v2360, %v2359
        %v2462 = vpack.c.b16 %v2362, %v2361
        %v2463 = vpack.c.b16 %v2364, %v2363
        %v2464 = vpack.c.b16 %v2366, %v2365
        %v2465 = vpack.c.b16 %v2368, %v2367
        %v2466 = vpack.c.b16 %v2370, %v2369
        %v2467 = vpack.c.b16 %v2372, %v2371
        %v2468 = vpack.c.b16 %v2374, %v2373
        %v2469 = vpack.c.b16 %v2376, %v2375
        %v2470 = vpack.c.b16 %v2378, %v2377
        %v2471 = vpack.c.b16 %v2380, %v2379
        %v2472 = vpack.c.b16 %v2382, %v2381
        %v2473 = vpack.c.b16 %v2384, %v2383
        %v2474 = vpack.c.b16 %v2386, %v2385
        %v2475 = vpack.c.b16 %v2388, %v2387
        %v2476 = vpack.c.b16 %v2390, %v2389
        %v2477 = vpack.c.b16 %v2392, %v2391
        %v2478 = vpack.c.b16 %v2394, %v2393
        %v2479 = vpack.c.b16 %v2396, %v2395
        %v2480 = vpack.c.b16 %v2398, %v2397
        %v2481 = vpack.c.b16 %v2400, %v2399
        %v2482 = vpack.c.b16 %v2402, %v2401
        %v2483 = vpack.c.b16 %v2404, %v2403
        %v2484 = vpack.c.b16 %v2406, %v2405
        %v2485 = vpack.c.b16 %v2408, %v2407
        %v2486 = vpack.c.b16 %v2410, %v2409
        %v2487 = vpack.c.b16 %v2412, %v2411
        %v2488 = vpack.c.b16 %v2414, %v2413
        %v2489 = vpack.c.b16 %v2416, %v2415
        %v2490 = vpack.c.b16 %v2418, %v2417
        %v2491 = vpack.c.b16 %v2420, %v2419
        %v2492 = vpack.c.b16 %v2422, %v2421
        %v2493 = vpack.c.b16 %v2424, %v2423
        %v2494 = vpack.c.b16 %v2426, %v2425
        %v2495 = vpack.c.b16 %v2428, %v2427
        %v2496 = vpack.c.b16 %v2430, %v2429
        %v2497 = vpack.c.b16 %v2432, %v2431
        %v2498 = vpack.c.b16 %v2434, %v2433
        %2563 = vmatprep.subr.bf16.mxu0 %v1380
        %2564 = vmatpush1.bf16.msra.mxu0 %v1379
        %2565 = vmatprep.subr.bf16.mxu0 %v1384
        %2566 = vmatpush1.bf16.msra.mxu0 %v1383
        %2567 = vmatprep.subr.bf16.mxu0 %v1388
        %2568 = vmatpush1.bf16.msra.mxu0 %v1387
        %2569 = vmatprep.subr.bf16.mxu0 %v1392
        %2570 = vmatpush1.bf16.msra.mxu0 %v1391
        %2571 = vmatprep.subr.bf16.mxu0 %v1396
        %2572 = vmatpush1.bf16.msra.mxu0 %v1395
        %2573 = vmatprep.subr.bf16.mxu0 %v1400
        %2574 = vmatpush1.bf16.msra.mxu0 %v1399
        %2575 = vmatprep.subr.bf16.mxu0 %v1404
        %2576 = vmatpush1.bf16.msra.mxu0 %v1403
        %2577 = vmatprep.subr.bf16.mxu0 %v1408
        %2578 = vmatpush1.bf16.msra.mxu0 %v1407
        %2579 = vmatprep.subr.bf16.mxu0 0
        %2580 = vmatpush1.bf16.msra.mxu0 0
        %2581 = vmatprep.subr.bf16.mxu0 0
        %2582 = vmatpush1.bf16.msra.mxu0 0
        %2583 = vmatprep.subr.bf16.mxu0 0
        %2584 = vmatpush1.bf16.msra.mxu0 0
        %2585 = vmatprep.subr.bf16.mxu0 0
        %2586 = vmatpush1.bf16.msra.mxu0 0
        %2587 = vmatprep.subr.bf16.mxu0 0
        %2588 = vmatpush1.bf16.msra.mxu0 0
        %2589 = vmatprep.subr.bf16.mxu0 0
        %2590 = vmatpush1.bf16.msra.mxu0 0
        %2591 = vmatprep.subr.bf16.mxu0 0
        %2592 = vmatpush1.bf16.msra.mxu0 0
        %2593 = vmatprep.subr.bf16.mxu0 0
        %2594 = vmatpush1.bf16.msra.mxu0 0
        %2595 = vmatprep.mubr.bf16.mxu0 0
        %2596 = vmatmul.mubr.bf16.gmra.mrb[0].mxu0 %v2435
        %v2597 = vpop.f32.mrb[0].mxu0
        %v2598 = vadd.f32 %v1542, %v2597
        %v2599 = vpop.f32.mrb[0].mxu0
        %v2600 = vadd.f32 %v1542, %v2599
        %v2601 = vpop.f32.mrb[0].mxu0
        %v2602 = vadd.f32 %v1547, %v2601
        %v2603 = vpop.f32.mrb[0].mxu0
        %v2604 = vadd.f32 %v1547, %v2603
        %2605 = vmatprep.mubr.bf16.mxu0 0
        %2606 = vmatmul.mubr.bf16.gmra.mrb[0].mxu0 %v2436
        %v2607 = vpop.f32.mrb[0].mxu0
        %v2608 = vadd.f32 %v1552, %v2607
        %v2609 = vpop.f32.mrb[0].mxu0
        %v2610 = vadd.f32 %v1552, %v2609
        %v2611 = vpop.f32.mrb[0].mxu0
        %v2612 = vadd.f32 %v1557, %v2611
        %v2613 = vpop.f32.mrb[0].mxu0
        %v2614 = vadd.f32 %v1557, %v2613
        %2615 = vmatprep.mubr.bf16.mxu0 0
        %2616 = vmatmul.mubr.bf16.gmra.mrb[0].mxu0 %v2437
        %v2617 = vpop.f32.mrb[0].mxu0
        %v2618 = vadd.f32 %v1562, %v2617
        %v2619 = vpop.f32.mrb[0].mxu0
        %v2620 = vadd.f32 %v1562, %v2619
        %v2621 = vpop.f32.mrb[0].mxu0
        %v2622 = vadd.f32 %v1567, %v2621
        %v2623 = vpop.f32.mrb[0].mxu0
        %v2624 = vadd.f32 %v1567, %v2623
        %2625 = vmatprep.mubr.bf16.mxu0 0
        %2626 = vmatmul.mubr.bf16.gmra.mrb[0].mxu0 %v2438
        %v2627 = vpop.f32.mrb[0].mxu0
        %v2628 = vadd.f32 %v1572, %v2627
        %v2629 = vpop.f32.mrb[0].mxu0
        %v2630 = vadd.f32 %v1572, %v2629
        %v2631 = vpop.f32.mrb[0].mxu0
        %v2632 = vadd.f32 %v1577, %v2631
        %v2633 = vpop.f32.mrb[0].mxu0
        %v2634 = vadd.f32 %v1577, %v2633
        %2635 = vmatprep.mubr.bf16.mxu0 0
        %2636 = vmatmul.mubr.bf16.gmra.mrb[0].mxu0 %v2439
        %v2637 = vpop.f32.mrb[0].mxu0
        %v2638 = vadd.f32 %v1582, %v2637
        %v2639 = vpop.f32.mrb[0].mxu0
        %v2640 = vadd.f32 %v1582, %v2639
        %v2641 = vpop.f32.mrb[0].mxu0
        %v2642 = vadd.f32 %v1587, %v2641
        %v2643 = vpop.f32.mrb[0].mxu0
        %v2644 = vadd.f32 %v1587, %v2643
        %2645 = vmatprep.mubr.bf16.mxu0 0
        %2646 = vmatmul.mubr.bf16.gmra.mrb[0].mxu0 %v2440
        %v2647 = vpop.f32.mrb[0].mxu0
        %v2648 = vadd.f32 %v1592, %v2647
        %v2649 = vpop.f32.mrb[0].mxu0
        %v2650 = vadd.f32 %v1592, %v2649
        %v2651 = vpop.f32.mrb[0].mxu0
        %v2652 = vadd.f32 %v1597, %v2651
        %v2653 = vpop.f32.mrb[0].mxu0
        %v2654 = vadd.f32 %v1597, %v2653
        %2655 = vmatprep.mubr.bf16.mxu0 0
        %2656 = vmatmul.mubr.bf16.gmra.mrb[0].mxu0 %v2441
        %v2657 = vpop.f32.mrb[0].mxu0
        %v2658 = vadd.f32 %v1602, %v2657
        %v2659 = vpop.f32.mrb[0].mxu0
        %v2660 = vadd.f32 %v1602, %v2659
        %v2661 = vpop.f32.mrb[0].mxu0
        %v2662 = vadd.f32 %v1607, %v2661
        %v2663 = vpop.f32.mrb[0].mxu0
        %v2664 = vadd.f32 %v1607, %v2663
        %2665 = vmatprep.mubr.bf16.mxu0 0
        %2666 = vmatmul.mubr.bf16.gmra.mrb[0].mxu0 %v2442
        %v2667 = vpop.f32.mrb[0].mxu0
        %v2668 = vadd.f32 %v1612, %v2667
        %v2669 = vpop.f32.mrb[0].mxu0
        %v2670 = vadd.f32 %v1612, %v2669
        %v2671 = vpop.f32.mrb[0].mxu0
        %v2672 = vadd.f32 %v1617, %v2671
        %v2673 = vpop.f32.mrb[0].mxu0
        %v2674 = vadd.f32 %v1617, %v2673
        %2675 = vmatprep.mubr.bf16.mxu0 0
        %2676 = vmatmul.mubr.bf16.gmra.mrb[0].mxu0 %v2443
        %v2677 = vpop.f32.mrb[0].mxu0
        %v2678 = vadd.f32 %v1622, %v2677
        %v2679 = vpop.f32.mrb[0].mxu0
        %v2680 = vadd.f32 %v1622, %v2679
        %v2681 = vpop.f32.mrb[0].mxu0
        %v2682 = vadd.f32 %v1627, %v2681
        %v2683 = vpop.f32.mrb[0].mxu0
        %v2684 = vadd.f32 %v1627, %v2683
        %2685 = vmatprep.mubr.bf16.mxu0 0
        %2686 = vmatmul.mubr.bf16.gmra.mrb[0].mxu0 %v2444
        %v2687 = vpop.f32.mrb[0].mxu0
        %v2688 = vadd.f32 %v1632, %v2687
        %v2689 = vpop.f32.mrb[0].mxu0
        %v2690 = vadd.f32 %v1632, %v2689
        %v2691 = vpop.f32.mrb[0].mxu0
        %v2692 = vadd.f32 %v1637, %v2691
        %v2693 = vpop.f32.mrb[0].mxu0
        %v2694 = vadd.f32 %v1637, %v2693
        %2695 = vmatprep.mubr.bf16.mxu0 0
        %2696 = vmatmul.mubr.bf16.gmra.mrb[0].mxu0 %v2445
        %v2697 = vpop.f32.mrb[0].mxu0
        %v2698 = vadd.f32 %v1642, %v2697
        %v2699 = vpop.f32.mrb[0].mxu0
        %v2700 = vadd.f32 %v1642, %v2699
        %v2701 = vpop.f32.mrb[0].mxu0
        %v2702 = vadd.f32 %v1647, %v2701
        %v2703 = vpop.f32.mrb[0].mxu0
        %v2704 = vadd.f32 %v1647, %v2703
        %2705 = vmatprep.mubr.bf16.mxu0 0
        %2706 = vmatmul.mubr.bf16.gmra.mrb[0].mxu0 %v2446
        %v2707 = vpop.f32.mrb[0].mxu0
        %v2708 = vadd.f32 %v1652, %v2707
        %v2709 = vpop.f32.mrb[0].mxu0
        %v2710 = vadd.f32 %v1652, %v2709
        %v2711 = vpop.f32.mrb[0].mxu0
        %v2712 = vadd.f32 %v1657, %v2711
        %v2713 = vpop.f32.mrb[0].mxu0
        %v2714 = vadd.f32 %v1657, %v2713
        %2715 = vmatprep.mubr.bf16.mxu0 0
        %2716 = vmatmul.mubr.bf16.gmra.mrb[0].mxu0 %v2447
        %v2717 = vpop.f32.mrb[0].mxu0
        %v2718 = vadd.f32 %v1662, %v2717
        %v2719 = vpop.f32.mrb[0].mxu0
        %v2720 = vadd.f32 %v1662, %v2719
        %v2721 = vpop.f32.mrb[0].mxu0
        %v2722 = vadd.f32 %v1667, %v2721
        %v2723 = vpop.f32.mrb[0].mxu0
        %v2724 = vadd.f32 %v1667, %v2723
        %2725 = vmatprep.mubr.bf16.mxu0 0
        %2726 = vmatmul.mubr.bf16.gmra.mrb[0].mxu0 %v2448
        %v2727 = vpop.f32.mrb[0].mxu0
        %v2728 = vadd.f32 %v1672, %v2727
        %v2729 = vpop.f32.mrb[0].mxu0
        %v2730 = vadd.f32 %v1672, %v2729
        %v2731 = vpop.f32.mrb[0].mxu0
        %v2732 = vadd.f32 %v1677, %v2731
        %v2733 = vpop.f32.mrb[0].mxu0
        %v2734 = vadd.f32 %v1677, %v2733
        %2735 = vmatprep.mubr.bf16.mxu0 0
        %2736 = vmatmul.mubr.bf16.gmra.mrb[0].mxu0 %v2449
        %v2737 = vpop.f32.mrb[0].mxu0
        %v2738 = vadd.f32 %v1682, %v2737
        %v2739 = vpop.f32.mrb[0].mxu0
        %v2740 = vadd.f32 %v1682, %v2739
        %v2741 = vpop.f32.mrb[0].mxu0
        %v2742 = vadd.f32 %v1687, %v2741
        %v2743 = vpop.f32.mrb[0].mxu0
        %v2744 = vadd.f32 %v1687, %v2743
        %2745 = vmatprep.mubr.bf16.mxu0 0
        %2746 = vmatmul.mubr.bf16.gmra.mrb[0].mxu0 %v2450
        %v2747 = vpop.f32.mrb[0].mxu0
        %v2748 = vadd.f32 %v1692, %v2747
        %v2749 = vpop.f32.mrb[0].mxu0
        %v2750 = vadd.f32 %v1692, %v2749
        %v2751 = vpop.f32.mrb[0].mxu0
        %v2752 = vadd.f32 %v1697, %v2751
        %v2753 = vpop.f32.mrb[0].mxu0
        %v2754 = vadd.f32 %v1697, %v2753
        %2755 = vmatprep.mubr.bf16.mxu0 0
        %2756 = vmatmul.mubr.bf16.gmra.mrb[0].mxu0 %v2451
        %v2757 = vpop.f32.mrb[0].mxu0
        %v2758 = vadd.f32 %v1702, %v2757
        %v2759 = vpop.f32.mrb[0].mxu0
        %v2760 = vadd.f32 %v1702, %v2759
        %v2761 = vpop.f32.mrb[0].mxu0
        %v2762 = vadd.f32 %v1707, %v2761
        %v2763 = vpop.f32.mrb[0].mxu0
        %v2764 = vadd.f32 %v1707, %v2763
        %2765 = vmatprep.mubr.bf16.mxu0 0
        %2766 = vmatmul.mubr.bf16.gmra.mrb[0].mxu0 %v2452
        %v2767 = vpop.f32.mrb[0].mxu0
        %v2768 = vadd.f32 %v1712, %v2767
        %v2769 = vpop.f32.mrb[0].mxu0
        %v2770 = vadd.f32 %v1712, %v2769
        %v2771 = vpop.f32.mrb[0].mxu0
        %v2772 = vadd.f32 %v1717, %v2771
        %v2773 = vpop.f32.mrb[0].mxu0
        %v2774 = vadd.f32 %v1717, %v2773
        %2775 = vmatprep.mubr.bf16.mxu0 0
        %2776 = vmatmul.mubr.bf16.gmra.mrb[0].mxu0 %v2453
        %v2777 = vpop.f32.mrb[0].mxu0
        %v2778 = vadd.f32 %v1722, %v2777
        %v2779 = vpop.f32.mrb[0].mxu0
        %v2780 = vadd.f32 %v1722, %v2779
        %v2781 = vpop.f32.mrb[0].mxu0
        %v2782 = vadd.f32 %v1727, %v2781
        %v2783 = vpop.f32.mrb[0].mxu0
        %v2784 = vadd.f32 %v1727, %v2783
        %2785 = vmatprep.mubr.bf16.mxu0 0
        %2786 = vmatmul.mubr.bf16.gmra.mrb[0].mxu0 %v2454
        %v2787 = vpop.f32.mrb[0].mxu0
        %v2788 = vadd.f32 %v1732, %v2787
        %v2789 = vpop.f32.mrb[0].mxu0
        %v2790 = vadd.f32 %v1732, %v2789
        %v2791 = vpop.f32.mrb[0].mxu0
        %v2792 = vadd.f32 %v1737, %v2791
        %v2793 = vpop.f32.mrb[0].mxu0
        %v2794 = vadd.f32 %v1737, %v2793
        %2795 = vmatprep.mubr.bf16.mxu0 0
        %2796 = vmatmul.mubr.bf16.gmra.mrb[0].mxu0 %v2455
        %v2797 = vpop.f32.mrb[0].mxu0
        %v2798 = vadd.f32 %v1742, %v2797
        %v2799 = vpop.f32.mrb[0].mxu0
        %v2800 = vadd.f32 %v1742, %v2799
        %v2801 = vpop.f32.mrb[0].mxu0
        %v2802 = vadd.f32 %v1747, %v2801
        %v2803 = vpop.f32.mrb[0].mxu0
        %v2804 = vadd.f32 %v1747, %v2803
        %2805 = vmatprep.mubr.bf16.mxu0 0
        %2806 = vmatmul.mubr.bf16.gmra.mrb[0].mxu0 %v2456
        %v2807 = vpop.f32.mrb[0].mxu0
        %v2808 = vadd.f32 %v1752, %v2807
        %v2809 = vpop.f32.mrb[0].mxu0
        %v2810 = vadd.f32 %v1752, %v2809
        %v2811 = vpop.f32.mrb[0].mxu0
        %v2812 = vadd.f32 %v1757, %v2811
        %v2813 = vpop.f32.mrb[0].mxu0
        %v2814 = vadd.f32 %v1757, %v2813
        %2815 = vmatprep.mubr.bf16.mxu0 0
        %2816 = vmatmul.mubr.bf16.gmra.mrb[0].mxu0 %v2457
        %v2817 = vpop.f32.mrb[0].mxu0
        %v2818 = vadd.f32 %v1762, %v2817
        %v2819 = vpop.f32.mrb[0].mxu0
        %v2820 = vadd.f32 %v1762, %v2819
        %v2821 = vpop.f32.mrb[0].mxu0
        %v2822 = vadd.f32 %v1767, %v2821
        %v2823 = vpop.f32.mrb[0].mxu0
        %v2824 = vadd.f32 %v1767, %v2823
        %2825 = vmatprep.mubr.bf16.mxu0 0
        %2826 = vmatmul.mubr.bf16.gmra.mrb[0].mxu0 %v2458
        %v2827 = vpop.f32.mrb[0].mxu0
        %v2828 = vadd.f32 %v1772, %v2827
        %v2829 = vpop.f32.mrb[0].mxu0
        %v2830 = vadd.f32 %v1772, %v2829
        %v2831 = vpop.f32.mrb[0].mxu0
        %v2832 = vadd.f32 %v1777, %v2831
        %v2833 = vpop.f32.mrb[0].mxu0
        %v2834 = vadd.f32 %v1777, %v2833
        %2835 = vmatprep.mubr.bf16.mxu0 0
        %2836 = vmatmul.mubr.bf16.gmra.mrb[0].mxu0 %v2459
        %v2837 = vpop.f32.mrb[0].mxu0
        %v2838 = vadd.f32 %v1782, %v2837
        %v2839 = vpop.f32.mrb[0].mxu0
        %v2840 = vadd.f32 %v1782, %v2839
        %v2841 = vpop.f32.mrb[0].mxu0
        %v2842 = vadd.f32 %v1787, %v2841
        %v2843 = vpop.f32.mrb[0].mxu0
        %v2844 = vadd.f32 %v1787, %v2843
        %2845 = vmatprep.mubr.bf16.mxu0 0
        %2846 = vmatmul.mubr.bf16.gmra.mrb[0].mxu0 %v2460
        %v2847 = vpop.f32.mrb[0].mxu0
        %v2848 = vadd.f32 %v1792, %v2847
        %v2849 = vpop.f32.mrb[0].mxu0
        %v2850 = vadd.f32 %v1792, %v2849
        %v2851 = vpop.f32.mrb[0].mxu0
        %v2852 = vadd.f32 %v1797, %v2851
        %v2853 = vpop.f32.mrb[0].mxu0
        %v2854 = vadd.f32 %v1797, %v2853
        %2855 = vmatprep.mubr.bf16.mxu0 0
        %2856 = vmatmul.mubr.bf16.gmra.mrb[0].mxu0 %v2461
        %v2857 = vpop.f32.mrb[0].mxu0
        %v2858 = vadd.f32 %v1802, %v2857
        %v2859 = vpop.f32.mrb[0].mxu0
        %v2860 = vadd.f32 %v1802, %v2859
        %v2861 = vpop.f32.mrb[0].mxu0
        %v2862 = vadd.f32 %v1807, %v2861
        %v2863 = vpop.f32.mrb[0].mxu0
        %v2864 = vadd.f32 %v1807, %v2863
        %2865 = vmatprep.mubr.bf16.mxu0 0
        %2866 = vmatmul.mubr.bf16.gmra.mrb[0].mxu0 %v2462
        %v2867 = vpop.f32.mrb[0].mxu0
        %v2868 = vadd.f32 %v1812, %v2867
        %v2869 = vpop.f32.mrb[0].mxu0
        %v2870 = vadd.f32 %v1812, %v2869
        %v2871 = vpop.f32.mrb[0].mxu0
        %v2872 = vadd.f32 %v1817, %v2871
        %v2873 = vpop.f32.mrb[0].mxu0
        %v2874 = vadd.f32 %v1817, %v2873
        %2875 = vmatprep.mubr.bf16.mxu0 0
        %2876 = vmatmul.mubr.bf16.gmra.mrb[0].mxu0 %v2463
        %v2877 = vpop.f32.mrb[0].mxu0
        %v2878 = vadd.f32 %v1822, %v2877
        %v2879 = vpop.f32.mrb[0].mxu0
        %v2880 = vadd.f32 %v1822, %v2879
        %v2881 = vpop.f32.mrb[0].mxu0
        %v2882 = vadd.f32 %v1827, %v2881
        %v2883 = vpop.f32.mrb[0].mxu0
        %v2884 = vadd.f32 %v1827, %v2883
        %2885 = vmatprep.mubr.bf16.mxu0 0
        %2886 = vmatmul.mubr.bf16.gmra.mrb[0].mxu0 %v2464
        %v2887 = vpop.f32.mrb[0].mxu0
        %v2888 = vadd.f32 %v1832, %v2887
        %v2889 = vpop.f32.mrb[0].mxu0
        %v2890 = vadd.f32 %v1832, %v2889
        %v2891 = vpop.f32.mrb[0].mxu0
        %v2892 = vadd.f32 %v1837, %v2891
        %v2893 = vpop.f32.mrb[0].mxu0
        %v2894 = vadd.f32 %v1837, %v2893
        %2895 = vmatprep.mubr.bf16.mxu0 0
        %2896 = vmatmul.mubr.bf16.gmra.mrb[0].mxu0 %v2465
        %v2897 = vpop.f32.mrb[0].mxu0
        %v2898 = vadd.f32 %v1842, %v2897
        %v2899 = vpop.f32.mrb[0].mxu0
        %v2900 = vadd.f32 %v1842, %v2899
        %v2901 = vpop.f32.mrb[0].mxu0
        %v2902 = vadd.f32 %v1847, %v2901
        %v2903 = vpop.f32.mrb[0].mxu0
        %v2904 = vadd.f32 %v1847, %v2903
        %2905 = vmatprep.mubr.bf16.mxu0 0
        %2906 = vmatmul.mubr.bf16.gmra.mrb[0].mxu0 %v2466
        %v2907 = vpop.f32.mrb[0].mxu0
        %v2908 = vadd.f32 %v1852, %v2907
        %v2909 = vpop.f32.mrb[0].mxu0
        %v2910 = vadd.f32 %v1852, %v2909
        %v2911 = vpop.f32.mrb[0].mxu0
        %v2912 = vadd.f32 %v1857, %v2911
        %v2913 = vpop.f32.mrb[0].mxu0
        %v2914 = vadd.f32 %v1857, %v2913
        %2915 = vmatprep.mubr.bf16.mxu0 0
        %2916 = vmatmul.mubr.bf16.gmra.mrb[0].mxu0 %v2467
        %v2917 = vpop.f32.mrb[0].mxu0
        %v2918 = vadd.f32 %v1862, %v2917
        %v2919 = vpop.f32.mrb[0].mxu0
        %v2920 = vadd.f32 %v1862, %v2919
        %v2921 = vpop.f32.mrb[0].mxu0
        %v2922 = vadd.f32 %v1867, %v2921
        %v2923 = vpop.f32.mrb[0].mxu0
        %v2924 = vadd.f32 %v1867, %v2923
        %2925 = vmatprep.mubr.bf16.mxu0 0
        %2926 = vmatmul.mubr.bf16.gmra.mrb[0].mxu0 %v2468
        %v2927 = vpop.f32.mrb[0].mxu0
        %v2928 = vadd.f32 %v1872, %v2927
        %v2929 = vpop.f32.mrb[0].mxu0
        %v2930 = vadd.f32 %v1872, %v2929
        %v2931 = vpop.f32.mrb[0].mxu0
        %v2932 = vadd.f32 %v1877, %v2931
        %v2933 = vpop.f32.mrb[0].mxu0
        %v2934 = vadd.f32 %v1877, %v2933
        %2935 = vmatprep.mubr.bf16.mxu0 0
        %2936 = vmatmul.mubr.bf16.gmra.mrb[0].mxu0 %v2469
        %v2937 = vpop.f32.mrb[0].mxu0
        %v2938 = vadd.f32 %v1882, %v2937
        %v2939 = vpop.f32.mrb[0].mxu0
        %v2940 = vadd.f32 %v1882, %v2939
        %v2941 = vpop.f32.mrb[0].mxu0
        %v2942 = vadd.f32 %v1887, %v2941
        %v2943 = vpop.f32.mrb[0].mxu0
        %v2944 = vadd.f32 %v1887, %v2943
        %2945 = vmatprep.mubr.bf16.mxu0 0
        %2946 = vmatmul.mubr.bf16.gmra.mrb[0].mxu0 %v2470
        %v2947 = vpop.f32.mrb[0].mxu0
        %v2948 = vadd.f32 %v1892, %v2947
        %v2949 = vpop.f32.mrb[0].mxu0
        %v2950 = vadd.f32 %v1892, %v2949
        %v2951 = vpop.f32.mrb[0].mxu0
        %v2952 = vadd.f32 %v1897, %v2951
        %v2953 = vpop.f32.mrb[0].mxu0
        %v2954 = vadd.f32 %v1897, %v2953
        %2955 = vmatprep.mubr.bf16.mxu0 0
        %2956 = vmatmul.mubr.bf16.gmra.mrb[0].mxu0 %v2471
        %v2957 = vpop.f32.mrb[0].mxu0
        %v2958 = vadd.f32 %v1902, %v2957
        %v2959 = vpop.f32.mrb[0].mxu0
        %v2960 = vadd.f32 %v1902, %v2959
        %v2961 = vpop.f32.mrb[0].mxu0
        %v2962 = vadd.f32 %v1907, %v2961
        %v2963 = vpop.f32.mrb[0].mxu0
        %v2964 = vadd.f32 %v1907, %v2963
        %2965 = vmatprep.mubr.bf16.mxu0 0
        %2966 = vmatmul.mubr.bf16.gmra.mrb[0].mxu0 %v2472
        %v2967 = vpop.f32.mrb[0].mxu0
        %v2968 = vadd.f32 %v1912, %v2967
        %v2969 = vpop.f32.mrb[0].mxu0
        %v2970 = vadd.f32 %v1912, %v2969
        %v2971 = vpop.f32.mrb[0].mxu0
        %v2972 = vadd.f32 %v1917, %v2971
        %v2973 = vpop.f32.mrb[0].mxu0
        %v2974 = vadd.f32 %v1917, %v2973
        %2975 = vmatprep.mubr.bf16.mxu0 0
        %2976 = vmatmul.mubr.bf16.gmra.mrb[0].mxu0 %v2473
        %v2977 = vpop.f32.mrb[0].mxu0
        %v2978 = vadd.f32 %v1922, %v2977
        %v2979 = vpop.f32.mrb[0].mxu0
        %v2980 = vadd.f32 %v1922, %v2979
        %v2981 = vpop.f32.mrb[0].mxu0
        %v2982 = vadd.f32 %v1927, %v2981
        %v2983 = vpop.f32.mrb[0].mxu0
        %v2984 = vadd.f32 %v1927, %v2983
        %2985 = vmatprep.mubr.bf16.mxu0 0
        %2986 = vmatmul.mubr.bf16.gmra.mrb[0].mxu0 %v2474
        %v2987 = vpop.f32.mrb[0].mxu0
        %v2988 = vadd.f32 %v1932, %v2987
        %v2989 = vpop.f32.mrb[0].mxu0
        %v2990 = vadd.f32 %v1932, %v2989
        %v2991 = vpop.f32.mrb[0].mxu0
        %v2992 = vadd.f32 %v1937, %v2991
        %v2993 = vpop.f32.mrb[0].mxu0
        %v2994 = vadd.f32 %v1937, %v2993
        %2995 = vmatprep.mubr.bf16.mxu0 0
        %2996 = vmatmul.mubr.bf16.gmra.mrb[0].mxu0 %v2475
        %v2997 = vpop.f32.mrb[0].mxu0
        %v2998 = vadd.f32 %v1942, %v2997
        %v2999 = vpop.f32.mrb[0].mxu0
        %v3000 = vadd.f32 %v1942, %v2999
        %v3001 = vpop.f32.mrb[0].mxu0
        %v3002 = vadd.f32 %v1947, %v3001
        %v3003 = vpop.f32.mrb[0].mxu0
        %v3004 = vadd.f32 %v1947, %v3003
        %3005 = vmatprep.mubr.bf16.mxu0 0
        %3006 = vmatmul.mubr.bf16.gmra.mrb[0].mxu0 %v2476
        %v3007 = vpop.f32.mrb[0].mxu0
        %v3008 = vadd.f32 %v1952, %v3007
        %v3009 = vpop.f32.mrb[0].mxu0
        %v3010 = vadd.f32 %v1952, %v3009
        %v3011 = vpop.f32.mrb[0].mxu0
        %v3012 = vadd.f32 %v1957, %v3011
        %v3013 = vpop.f32.mrb[0].mxu0
        %v3014 = vadd.f32 %v1957, %v3013
        %3015 = vmatprep.mubr.bf16.mxu0 0
        %3016 = vmatmul.mubr.bf16.gmra.mrb[0].mxu0 %v2477
        %v3017 = vpop.f32.mrb[0].mxu0
        %v3018 = vadd.f32 %v1962, %v3017
        %v3019 = vpop.f32.mrb[0].mxu0
        %v3020 = vadd.f32 %v1962, %v3019
        %v3021 = vpop.f32.mrb[0].mxu0
        %v3022 = vadd.f32 %v1967, %v3021
        %v3023 = vpop.f32.mrb[0].mxu0
        %v3024 = vadd.f32 %v1967, %v3023
        %3025 = vmatprep.mubr.bf16.mxu0 0
        %3026 = vmatmul.mubr.bf16.gmra.mrb[0].mxu0 %v2478
        %v3027 = vpop.f32.mrb[0].mxu0
        %v3028 = vadd.f32 %v1972, %v3027
        %v3029 = vpop.f32.mrb[0].mxu0
        %v3030 = vadd.f32 %v1972, %v3029
        %v3031 = vpop.f32.mrb[0].mxu0
        %v3032 = vadd.f32 %v1977, %v3031
        %v3033 = vpop.f32.mrb[0].mxu0
        %v3034 = vadd.f32 %v1977, %v3033
        %3035 = vmatprep.mubr.bf16.mxu0 0
        %3036 = vmatmul.mubr.bf16.gmra.mrb[0].mxu0 %v2479
        %v3037 = vpop.f32.mrb[0].mxu0
        %v3038 = vadd.f32 %v1982, %v3037
        %v3039 = vpop.f32.mrb[0].mxu0
        %v3040 = vadd.f32 %v1982, %v3039
        %v3041 = vpop.f32.mrb[0].mxu0
        %v3042 = vadd.f32 %v1987, %v3041
        %v3043 = vpop.f32.mrb[0].mxu0
        %v3044 = vadd.f32 %v1987, %v3043
        %3045 = vmatprep.mubr.bf16.mxu0 0
        %3046 = vmatmul.mubr.bf16.gmra.mrb[0].mxu0 %v2480
        %v3047 = vpop.f32.mrb[0].mxu0
        %v3048 = vadd.f32 %v1992, %v3047
        %v3049 = vpop.f32.mrb[0].mxu0
        %v3050 = vadd.f32 %v1992, %v3049
        %v3051 = vpop.f32.mrb[0].mxu0
        %v3052 = vadd.f32 %v1997, %v3051
        %v3053 = vpop.f32.mrb[0].mxu0
        %v3054 = vadd.f32 %v1997, %v3053
        %3055 = vmatprep.mubr.bf16.mxu0 0
        %3056 = vmatmul.mubr.bf16.gmra.mrb[0].mxu0 %v2481
        %v3057 = vpop.f32.mrb[0].mxu0
        %v3058 = vadd.f32 %v2002, %v3057
        %v3059 = vpop.f32.mrb[0].mxu0
        %v3060 = vadd.f32 %v2002, %v3059
        %v3061 = vpop.f32.mrb[0].mxu0
        %v3062 = vadd.f32 %v2007, %v3061
        %v3063 = vpop.f32.mrb[0].mxu0
        %v3064 = vadd.f32 %v2007, %v3063
        %3065 = vmatprep.mubr.bf16.mxu0 0
        %3066 = vmatmul.mubr.bf16.gmra.mrb[0].mxu0 %v2482
        %v3067 = vpop.f32.mrb[0].mxu0
        %v3068 = vadd.f32 %v2012, %v3067
        %v3069 = vpop.f32.mrb[0].mxu0
        %v3070 = vadd.f32 %v2012, %v3069
        %v3071 = vpop.f32.mrb[0].mxu0
        %v3072 = vadd.f32 %v2017, %v3071
        %v3073 = vpop.f32.mrb[0].mxu0
        %v3074 = vadd.f32 %v2017, %v3073
        %3075 = vmatprep.mubr.bf16.mxu0 0
        %3076 = vmatmul.mubr.bf16.gmra.mrb[0].mxu0 %v2483
        %v3077 = vpop.f32.mrb[0].mxu0
        %v3078 = vadd.f32 %v2022, %v3077
        %v3079 = vpop.f32.mrb[0].mxu0
        %v3080 = vadd.f32 %v2022, %v3079
        %v3081 = vpop.f32.mrb[0].mxu0
        %v3082 = vadd.f32 %v2027, %v3081
        %v3083 = vpop.f32.mrb[0].mxu0
        %v3084 = vadd.f32 %v2027, %v3083
        %3085 = vmatprep.mubr.bf16.mxu0 0
        %3086 = vmatmul.mubr.bf16.gmra.mrb[0].mxu0 %v2484
        %v3087 = vpop.f32.mrb[0].mxu0
        %v3088 = vadd.f32 %v2032, %v3087
        %v3089 = vpop.f32.mrb[0].mxu0
        %v3090 = vadd.f32 %v2032, %v3089
        %v3091 = vpop.f32.mrb[0].mxu0
        %v3092 = vadd.f32 %v2037, %v3091
        %v3093 = vpop.f32.mrb[0].mxu0
        %v3094 = vadd.f32 %v2037, %v3093
        %3095 = vmatprep.mubr.bf16.mxu0 0
        %3096 = vmatmul.mubr.bf16.gmra.mrb[0].mxu0 %v2485
        %v3097 = vpop.f32.mrb[0].mxu0
        %v3098 = vadd.f32 %v2042, %v3097
        %v3099 = vpop.f32.mrb[0].mxu0
        %v3100 = vadd.f32 %v2042, %v3099
        %v3101 = vpop.f32.mrb[0].mxu0
        %v3102 = vadd.f32 %v2047, %v3101
        %v3103 = vpop.f32.mrb[0].mxu0
        %v3104 = vadd.f32 %v2047, %v3103
        %3105 = vmatprep.mubr.bf16.mxu0 0
        %3106 = vmatmul.mubr.bf16.gmra.mrb[0].mxu0 %v2486
        %v3107 = vpop.f32.mrb[0].mxu0
        %v3108 = vadd.f32 %v2052, %v3107
        %v3109 = vpop.f32.mrb[0].mxu0
        %v3110 = vadd.f32 %v2052, %v3109
        %v3111 = vpop.f32.mrb[0].mxu0
        %v3112 = vadd.f32 %v2057, %v3111
        %v3113 = vpop.f32.mrb[0].mxu0
        %v3114 = vadd.f32 %v2057, %v3113
        %3115 = vmatprep.mubr.bf16.mxu0 0
        %3116 = vmatmul.mubr.bf16.gmra.mrb[0].mxu0 %v2487
        %v3117 = vpop.f32.mrb[0].mxu0
        %v3118 = vadd.f32 %v2062, %v3117
        %v3119 = vpop.f32.mrb[0].mxu0
        %v3120 = vadd.f32 %v2062, %v3119
        %v3121 = vpop.f32.mrb[0].mxu0
        %v3122 = vadd.f32 %v2067, %v3121
        %v3123 = vpop.f32.mrb[0].mxu0
        %v3124 = vadd.f32 %v2067, %v3123
        %3125 = vmatprep.mubr.bf16.mxu0 0
        %3126 = vmatmul.mubr.bf16.gmra.mrb[0].mxu0 %v2488
        %v3127 = vpop.f32.mrb[0].mxu0
        %v3128 = vadd.f32 %v2072, %v3127
        %v3129 = vpop.f32.mrb[0].mxu0
        %v3130 = vadd.f32 %v2072, %v3129
        %v3131 = vpop.f32.mrb[0].mxu0
        %v3132 = vadd.f32 %v2077, %v3131
        %v3133 = vpop.f32.mrb[0].mxu0
        %v3134 = vadd.f32 %v2077, %v3133
        %3135 = vmatprep.mubr.bf16.mxu0 0
        %3136 = vmatmul.mubr.bf16.gmra.mrb[0].mxu0 %v2489
        %v3137 = vpop.f32.mrb[0].mxu0
        %v3138 = vadd.f32 %v2082, %v3137
        %v3139 = vpop.f32.mrb[0].mxu0
        %v3140 = vadd.f32 %v2082, %v3139
        %v3141 = vpop.f32.mrb[0].mxu0
        %v3142 = vadd.f32 %v2087, %v3141
        %v3143 = vpop.f32.mrb[0].mxu0
        %v3144 = vadd.f32 %v2087, %v3143
        %3145 = vmatprep.mubr.bf16.mxu0 0
        %3146 = vmatmul.mubr.bf16.gmra.mrb[0].mxu0 %v2490
        %v3147 = vpop.f32.mrb[0].mxu0
        %v3148 = vadd.f32 %v2092, %v3147
        %v3149 = vpop.f32.mrb[0].mxu0
        %v3150 = vadd.f32 %v2092, %v3149
        %v3151 = vpop.f32.mrb[0].mxu0
        %v3152 = vadd.f32 %v2097, %v3151
        %v3153 = vpop.f32.mrb[0].mxu0
        %v3154 = vadd.f32 %v2097, %v3153
        %3155 = vmatprep.mubr.bf16.mxu0 0
        %3156 = vmatmul.mubr.bf16.gmra.mrb[0].mxu0 %v2491
        %v3157 = vpop.f32.mrb[0].mxu0
        %v3158 = vadd.f32 %v2102, %v3157
        %v3159 = vpop.f32.mrb[0].mxu0
        %v3160 = vadd.f32 %v2102, %v3159
        %v3161 = vpop.f32.mrb[0].mxu0
        %v3162 = vadd.f32 %v2107, %v3161
        %v3163 = vpop.f32.mrb[0].mxu0
        %v3164 = vadd.f32 %v2107, %v3163
        %3165 = vmatprep.mubr.bf16.mxu0 0
        %3166 = vmatmul.mubr.bf16.gmra.mrb[0].mxu0 %v2492
        %v3167 = vpop.f32.mrb[0].mxu0
        %v3168 = vadd.f32 %v2112, %v3167
        %v3169 = vpop.f32.mrb[0].mxu0
        %v3170 = vadd.f32 %v2112, %v3169
        %v3171 = vpop.f32.mrb[0].mxu0
        %v3172 = vadd.f32 %v2117, %v3171
        %v3173 = vpop.f32.mrb[0].mxu0
        %v3174 = vadd.f32 %v2117, %v3173
        %3175 = vmatprep.mubr.bf16.mxu0 0
        %3176 = vmatmul.mubr.bf16.gmra.mrb[0].mxu0 %v2493
        %v3177 = vpop.f32.mrb[0].mxu0
        %v3178 = vadd.f32 %v2122, %v3177
        %v3179 = vpop.f32.mrb[0].mxu0
        %v3180 = vadd.f32 %v2122, %v3179
        %v3181 = vpop.f32.mrb[0].mxu0
        %v3182 = vadd.f32 %v2127, %v3181
        %v3183 = vpop.f32.mrb[0].mxu0
        %v3184 = vadd.f32 %v2127, %v3183
        %3185 = vmatprep.mubr.bf16.mxu0 0
        %3186 = vmatmul.mubr.bf16.gmra.mrb[0].mxu0 %v2494
        %v3187 = vpop.f32.mrb[0].mxu0
        %v3188 = vadd.f32 %v2132, %v3187
        %v3189 = vpop.f32.mrb[0].mxu0
        %v3190 = vadd.f32 %v2132, %v3189
        %v3191 = vpop.f32.mrb[0].mxu0
        %v3192 = vadd.f32 %v2137, %v3191
        %v3193 = vpop.f32.mrb[0].mxu0
        %v3194 = vadd.f32 %v2137, %v3193
        %3195 = vmatprep.mubr.bf16.mxu0 0
        %3196 = vmatmul.mubr.bf16.gmra.mrb[0].mxu0 %v2495
        %v3197 = vpop.f32.mrb[0].mxu0
        %v3198 = vadd.f32 %v2142, %v3197
        %v3199 = vpop.f32.mrb[0].mxu0
        %v3200 = vadd.f32 %v2142, %v3199
        %v3201 = vpop.f32.mrb[0].mxu0
        %v3202 = vadd.f32 %v2147, %v3201
        %v3203 = vpop.f32.mrb[0].mxu0
        %v3204 = vadd.f32 %v2147, %v3203
        %3205 = vmatprep.mubr.bf16.mxu0 0
        %3206 = vmatmul.mubr.bf16.gmra.mrb[0].mxu0 %v2496
        %v3207 = vpop.f32.mrb[0].mxu0
        %v3208 = vadd.f32 %v2152, %v3207
        %v3209 = vpop.f32.mrb[0].mxu0
        %v3210 = vadd.f32 %v2152, %v3209
        %v3211 = vpop.f32.mrb[0].mxu0
        %v3212 = vadd.f32 %v2157, %v3211
        %v3213 = vpop.f32.mrb[0].mxu0
        %v3214 = vadd.f32 %v2157, %v3213
        %3215 = vmatprep.mubr.bf16.mxu0 0
        %3216 = vmatmul.mubr.bf16.gmra.mrb[0].mxu0 %v2497
        %v3217 = vpop.f32.mrb[0].mxu0
        %v3218 = vadd.f32 %v2162, %v3217
        %v3219 = vpop.f32.mrb[0].mxu0
        %v3220 = vadd.f32 %v2162, %v3219
        %v3221 = vpop.f32.mrb[0].mxu0
        %v3222 = vadd.f32 %v2167, %v3221
        %v3223 = vpop.f32.mrb[0].mxu0
        %v3224 = vadd.f32 %v2167, %v3223
        %3225 = vmatprep.mubr.bf16.mxu0 0
        %3226 = vmatmul.mubr.bf16.gmra.mrb[0].mxu0 %v2498
        %v3227 = vpop.f32.mrb[0].mxu0
        %v3228 = vadd.f32 %v2172, %v3227
        %v3229 = vpop.f32.mrb[0].mxu0
        %v3230 = vadd.f32 %v2172, %v3229
        %v3231 = vpop.f32.mrb[0].mxu0
        %v3232 = vadd.f32 %v2177, %v3231
        %v3233 = vpop.f32.mrb[0].mxu0
        %v3234 = vadd.f32 %v2177, %v3233
        %3235 = vdwg.mxu0
        %3236 = vmatprep.subr.bf16.mxu0 %v1382
        %3237 = vmatpush1.bf16.msra.mxu0 %v1381
        %3238 = vmatprep.subr.bf16.mxu0 %v1386
        %3239 = vmatpush1.bf16.msra.mxu0 %v1385
        %3240 = vmatprep.subr.bf16.mxu0 %v1390
        %3241 = vmatpush1.bf16.msra.mxu0 %v1389
        %3242 = vmatprep.subr.bf16.mxu0 %v1394
        %3243 = vmatpush1.bf16.msra.mxu0 %v1393
        %3244 = vmatprep.subr.bf16.mxu0 %v1398
        %3245 = vmatpush1.bf16.msra.mxu0 %v1397
        %3246 = vmatprep.subr.bf16.mxu0 %v1402
        %3247 = vmatpush1.bf16.msra.mxu0 %v1401
        %3248 = vmatprep.subr.bf16.mxu0 %v1406
        %3249 = vmatpush1.bf16.msra.mxu0 %v1405
        %3250 = vmatprep.subr.bf16.mxu0 %v1410
        %3251 = vmatpush1.bf16.msra.mxu0 %v1409
        %3252 = vmatprep.subr.bf16.mxu0 0
        %3253 = vmatpush1.bf16.msra.mxu0 0
        %3254 = vmatprep.subr.bf16.mxu0 0
        %3255 = vmatpush1.bf16.msra.mxu0 0
        %3256 = vmatprep.subr.bf16.mxu0 0
        %3257 = vmatpush1.bf16.msra.mxu0 0
        %3258 = vmatprep.subr.bf16.mxu0 0
        %3259 = vmatpush1.bf16.msra.mxu0 0
        %3260 = vmatprep.subr.bf16.mxu0 0
        %3261 = vmatpush1.bf16.msra.mxu0 0
        %3262 = vmatprep.subr.bf16.mxu0 0
        %3263 = vmatpush1.bf16.msra.mxu0 0
        %3264 = vmatprep.subr.bf16.mxu0 0
        %3265 = vmatpush1.bf16.msra.mxu0 0
        %3266 = vmatprep.subr.bf16.mxu0 0
        %3267 = vmatpush1.bf16.msra.mxu0 0
        %3268 = vmatprep.mubr.bf16.mxu0 0
        %3269 = vmatmul.mubr.bf16.gmra.mrb[0].mxu0 %v2435
        %v3270 = vpop.f32.mrb[0].mxu0
        %v3271 = vadd.f32 %v1542, %v3270
        %v3272 = vpop.f32.mrb[0].mxu0
        %v3273 = vadd.f32 %v1542, %v3272
        %v3274 = vpop.f32.mrb[0].mxu0
        %v3275 = vadd.f32 %v1547, %v3274
        %v3276 = vpop.f32.mrb[0].mxu0
        %v3277 = vadd.f32 %v1547, %v3276
        %3278 = vmatprep.mubr.bf16.mxu0 0
        %3279 = vmatmul.mubr.bf16.gmra.mrb[0].mxu0 %v2436
        %v3280 = vpop.f32.mrb[0].mxu0
        %v3281 = vadd.f32 %v1552, %v3280
        %v3282 = vpop.f32.mrb[0].mxu0
        %v3283 = vadd.f32 %v1552, %v3282
        %v3284 = vpop.f32.mrb[0].mxu0
        %v3285 = vadd.f32 %v1557, %v3284
        %v3286 = vpop.f32.mrb[0].mxu0
        %v3287 = vadd.f32 %v1557, %v3286
        %3288 = vmatprep.mubr.bf16.mxu0 0
        %3289 = vmatmul.mubr.bf16.gmra.mrb[0].mxu0 %v2437
        %v3290 = vpop.f32.mrb[0].mxu0
        %v3291 = vadd.f32 %v1562, %v3290
        %v3292 = vpop.f32.mrb[0].mxu0
        %v3293 = vadd.f32 %v1562, %v3292
        %v3294 = vpop.f32.mrb[0].mxu0
        %v3295 = vadd.f32 %v1567, %v3294
        %v3296 = vpop.f32.mrb[0].mxu0
        %v3297 = vadd.f32 %v1567, %v3296
        %3298 = vmatprep.mubr.bf16.mxu0 0
        %3299 = vmatmul.mubr.bf16.gmra.mrb[0].mxu0 %v2438
        %v3300 = vpop.f32.mrb[0].mxu0
        %v3301 = vadd.f32 %v1572, %v3300
        %v3302 = vpop.f32.mrb[0].mxu0
        %v3303 = vadd.f32 %v1572, %v3302
        %v3304 = vpop.f32.mrb[0].mxu0
        %v3305 = vadd.f32 %v1577, %v3304
        %v3306 = vpop.f32.mrb[0].mxu0
        %v3307 = vadd.f32 %v1577, %v3306
        %3308 = vmatprep.mubr.bf16.mxu0 0
        %3309 = vmatmul.mubr.bf16.gmra.mrb[0].mxu0 %v2439
        %v3310 = vpop.f32.mrb[0].mxu0
        %v3311 = vadd.f32 %v1582, %v3310
        %v3312 = vpop.f32.mrb[0].mxu0
        %v3313 = vadd.f32 %v1582, %v3312
        %v3314 = vpop.f32.mrb[0].mxu0
        %v3315 = vadd.f32 %v1587, %v3314
        %v3316 = vpop.f32.mrb[0].mxu0
        %v3317 = vadd.f32 %v1587, %v3316
        %3318 = vmatprep.mubr.bf16.mxu0 0
        %3319 = vmatmul.mubr.bf16.gmra.mrb[0].mxu0 %v2440
        %v3320 = vpop.f32.mrb[0].mxu0
        %v3321 = vadd.f32 %v1592, %v3320
        %v3322 = vpop.f32.mrb[0].mxu0
        %v3323 = vadd.f32 %v1592, %v3322
        %v3324 = vpop.f32.mrb[0].mxu0
        %v3325 = vadd.f32 %v1597, %v3324
        %v3326 = vpop.f32.mrb[0].mxu0
        %v3327 = vadd.f32 %v1597, %v3326
        %3328 = vmatprep.mubr.bf16.mxu0 0
        %3329 = vmatmul.mubr.bf16.gmra.mrb[0].mxu0 %v2441
        %v3330 = vpop.f32.mrb[0].mxu0
        %v3331 = vadd.f32 %v1602, %v3330
        %v3332 = vpop.f32.mrb[0].mxu0
        %v3333 = vadd.f32 %v1602, %v3332
        %v3334 = vpop.f32.mrb[0].mxu0
        %v3335 = vadd.f32 %v1607, %v3334
        %v3336 = vpop.f32.mrb[0].mxu0
        %v3337 = vadd.f32 %v1607, %v3336
        %3338 = vmatprep.mubr.bf16.mxu0 0
        %3339 = vmatmul.mubr.bf16.gmra.mrb[0].mxu0 %v2442
        %v3340 = vpop.f32.mrb[0].mxu0
        %v3341 = vadd.f32 %v1612, %v3340
        %v3342 = vpop.f32.mrb[0].mxu0
        %v3343 = vadd.f32 %v1612, %v3342
        %v3344 = vpop.f32.mrb[0].mxu0
        %v3345 = vadd.f32 %v1617, %v3344
        %v3346 = vpop.f32.mrb[0].mxu0
        %v3347 = vadd.f32 %v1617, %v3346
        %3348 = vmatprep.mubr.bf16.mxu0 0
        %3349 = vmatmul.mubr.bf16.gmra.mrb[0].mxu0 %v2443
        %v3350 = vpop.f32.mrb[0].mxu0
        %v3351 = vadd.f32 %v1622, %v3350
        %v3352 = vpop.f32.mrb[0].mxu0
        %v3353 = vadd.f32 %v1622, %v3352
        %v3354 = vpop.f32.mrb[0].mxu0
        %v3355 = vadd.f32 %v1627, %v3354
        %v3356 = vpop.f32.mrb[0].mxu0
        %v3357 = vadd.f32 %v1627, %v3356
        %3358 = vmatprep.mubr.bf16.mxu0 0
        %3359 = vmatmul.mubr.bf16.gmra.mrb[0].mxu0 %v2444
        %v3360 = vpop.f32.mrb[0].mxu0
        %v3361 = vadd.f32 %v1632, %v3360
        %v3362 = vpop.f32.mrb[0].mxu0
        %v3363 = vadd.f32 %v1632, %v3362
        %v3364 = vpop.f32.mrb[0].mxu0
        %v3365 = vadd.f32 %v1637, %v3364
        %v3366 = vpop.f32.mrb[0].mxu0
        %v3367 = vadd.f32 %v1637, %v3366
        %3368 = vmatprep.mubr.bf16.mxu0 0
        %3369 = vmatmul.mubr.bf16.gmra.mrb[0].mxu0 %v2445
        %v3370 = vpop.f32.mrb[0].mxu0
        %v3371 = vadd.f32 %v1642, %v3370
        %v3372 = vpop.f32.mrb[0].mxu0
        %v3373 = vadd.f32 %v1642, %v3372
        %v3374 = vpop.f32.mrb[0].mxu0
        %v3375 = vadd.f32 %v1647, %v3374
        %v3376 = vpop.f32.mrb[0].mxu0
        %v3377 = vadd.f32 %v1647, %v3376
        %3378 = vmatprep.mubr.bf16.mxu0 0
        %3379 = vmatmul.mubr.bf16.gmra.mrb[0].mxu0 %v2446
        %v3380 = vpop.f32.mrb[0].mxu0
        %v3381 = vadd.f32 %v1652, %v3380
        %v3382 = vpop.f32.mrb[0].mxu0
        %v3383 = vadd.f32 %v1652, %v3382
        %v3384 = vpop.f32.mrb[0].mxu0
        %v3385 = vadd.f32 %v1657, %v3384
        %v3386 = vpop.f32.mrb[0].mxu0
        %v3387 = vadd.f32 %v1657, %v3386
        %3388 = vmatprep.mubr.bf16.mxu0 0
        %3389 = vmatmul.mubr.bf16.gmra.mrb[0].mxu0 %v2447
        %v3390 = vpop.f32.mrb[0].mxu0
        %v3391 = vadd.f32 %v1662, %v3390
        %v3392 = vpop.f32.mrb[0].mxu0
        %v3393 = vadd.f32 %v1662, %v3392
        %v3394 = vpop.f32.mrb[0].mxu0
        %v3395 = vadd.f32 %v1667, %v3394
        %v3396 = vpop.f32.mrb[0].mxu0
        %v3397 = vadd.f32 %v1667, %v3396
        %3398 = vmatprep.mubr.bf16.mxu0 0
        %3399 = vmatmul.mubr.bf16.gmra.mrb[0].mxu0 %v2448
        %v3400 = vpop.f32.mrb[0].mxu0
        %v3401 = vadd.f32 %v1672, %v3400
        %v3402 = vpop.f32.mrb[0].mxu0
        %v3403 = vadd.f32 %v1672, %v3402
        %v3404 = vpop.f32.mrb[0].mxu0
        %v3405 = vadd.f32 %v1677, %v3404
        %v3406 = vpop.f32.mrb[0].mxu0
        %v3407 = vadd.f32 %v1677, %v3406
        %3408 = vmatprep.mubr.bf16.mxu0 0
        %3409 = vmatmul.mubr.bf16.gmra.mrb[0].mxu0 %v2449
        %v3410 = vpop.f32.mrb[0].mxu0
        %v3411 = vadd.f32 %v1682, %v3410
        %v3412 = vpop.f32.mrb[0].mxu0
        %v3413 = vadd.f32 %v1682, %v3412
        %v3414 = vpop.f32.mrb[0].mxu0
        %v3415 = vadd.f32 %v1687, %v3414
        %v3416 = vpop.f32.mrb[0].mxu0
        %v3417 = vadd.f32 %v1687, %v3416
        %3418 = vmatprep.mubr.bf16.mxu0 0
        %3419 = vmatmul.mubr.bf16.gmra.mrb[0].mxu0 %v2450
        %v3420 = vpop.f32.mrb[0].mxu0
        %v3421 = vadd.f32 %v1692, %v3420
        %v3422 = vpop.f32.mrb[0].mxu0
        %v3423 = vadd.f32 %v1692, %v3422
        %v3424 = vpop.f32.mrb[0].mxu0
        %v3425 = vadd.f32 %v1697, %v3424
        %v3426 = vpop.f32.mrb[0].mxu0
        %v3427 = vadd.f32 %v1697, %v3426
        %3428 = vmatprep.mubr.bf16.mxu0 0
        %3429 = vmatmul.mubr.bf16.gmra.mrb[0].mxu0 %v2451
        %v3430 = vpop.f32.mrb[0].mxu0
        %v3431 = vadd.f32 %v1702, %v3430
        %v3432 = vpop.f32.mrb[0].mxu0
        %v3433 = vadd.f32 %v1702, %v3432
        %v3434 = vpop.f32.mrb[0].mxu0
        %v3435 = vadd.f32 %v1707, %v3434
        %v3436 = vpop.f32.mrb[0].mxu0
        %v3437 = vadd.f32 %v1707, %v3436
        %3438 = vmatprep.mubr.bf16.mxu0 0
        %3439 = vmatmul.mubr.bf16.gmra.mrb[0].mxu0 %v2452
        %v3440 = vpop.f32.mrb[0].mxu0
        %v3441 = vadd.f32 %v1712, %v3440
        %v3442 = vpop.f32.mrb[0].mxu0
        %v3443 = vadd.f32 %v1712, %v3442
        %v3444 = vpop.f32.mrb[0].mxu0
        %v3445 = vadd.f32 %v1717, %v3444
        %v3446 = vpop.f32.mrb[0].mxu0
        %v3447 = vadd.f32 %v1717, %v3446
        %3448 = vmatprep.mubr.bf16.mxu0 0
        %3449 = vmatmul.mubr.bf16.gmra.mrb[0].mxu0 %v2453
        %v3450 = vpop.f32.mrb[0].mxu0
        %v3451 = vadd.f32 %v1722, %v3450
        %v3452 = vpop.f32.mrb[0].mxu0
        %v3453 = vadd.f32 %v1722, %v3452
        %v3454 = vpop.f32.mrb[0].mxu0
        %v3455 = vadd.f32 %v1727, %v3454
        %v3456 = vpop.f32.mrb[0].mxu0
        %v3457 = vadd.f32 %v1727, %v3456
        %3458 = vmatprep.mubr.bf16.mxu0 0
        %3459 = vmatmul.mubr.bf16.gmra.mrb[0].mxu0 %v2454
        %v3460 = vpop.f32.mrb[0].mxu0
        %v3461 = vadd.f32 %v1732, %v3460
        %v3462 = vpop.f32.mrb[0].mxu0
        %v3463 = vadd.f32 %v1732, %v3462
        %v3464 = vpop.f32.mrb[0].mxu0
        %v3465 = vadd.f32 %v1737, %v3464
        %v3466 = vpop.f32.mrb[0].mxu0
        %v3467 = vadd.f32 %v1737, %v3466
        %3468 = vmatprep.mubr.bf16.mxu0 0
        %3469 = vmatmul.mubr.bf16.gmra.mrb[0].mxu0 %v2455
        %v3470 = vpop.f32.mrb[0].mxu0
        %v3471 = vadd.f32 %v1742, %v3470
        %v3472 = vpop.f32.mrb[0].mxu0
        %v3473 = vadd.f32 %v1742, %v3472
        %v3474 = vpop.f32.mrb[0].mxu0
        %v3475 = vadd.f32 %v1747, %v3474
        %v3476 = vpop.f32.mrb[0].mxu0
        %v3477 = vadd.f32 %v1747, %v3476
        %3478 = vmatprep.mubr.bf16.mxu0 0
        %3479 = vmatmul.mubr.bf16.gmra.mrb[0].mxu0 %v2456
        %v3480 = vpop.f32.mrb[0].mxu0
        %v3481 = vadd.f32 %v1752, %v3480
        %v3482 = vpop.f32.mrb[0].mxu0
        %v3483 = vadd.f32 %v1752, %v3482
        %v3484 = vpop.f32.mrb[0].mxu0
        %v3485 = vadd.f32 %v1757, %v3484
        %v3486 = vpop.f32.mrb[0].mxu0
        %v3487 = vadd.f32 %v1757, %v3486
        %3488 = vmatprep.mubr.bf16.mxu0 0
        %3489 = vmatmul.mubr.bf16.gmra.mrb[0].mxu0 %v2457
        %v3490 = vpop.f32.mrb[0].mxu0
        %v3491 = vadd.f32 %v1762, %v3490
        %v3492 = vpop.f32.mrb[0].mxu0
        %v3493 = vadd.f32 %v1762, %v3492
        %v3494 = vpop.f32.mrb[0].mxu0
        %v3495 = vadd.f32 %v1767, %v3494
        %v3496 = vpop.f32.mrb[0].mxu0
        %v3497 = vadd.f32 %v1767, %v3496
        %3498 = vmatprep.mubr.bf16.mxu0 0
        %3499 = vmatmul.mubr.bf16.gmra.mrb[0].mxu0 %v2458
        %v3500 = vpop.f32.mrb[0].mxu0
        %v3501 = vadd.f32 %v1772, %v3500
        %v3502 = vpop.f32.mrb[0].mxu0
        %v3503 = vadd.f32 %v1772, %v3502
        %v3504 = vpop.f32.mrb[0].mxu0
        %v3505 = vadd.f32 %v1777, %v3504
        %v3506 = vpop.f32.mrb[0].mxu0
        %v3507 = vadd.f32 %v1777, %v3506
        %3508 = vmatprep.mubr.bf16.mxu0 0
        %3509 = vmatmul.mubr.bf16.gmra.mrb[0].mxu0 %v2459
        %v3510 = vpop.f32.mrb[0].mxu0
        %v3511 = vadd.f32 %v1782, %v3510
        %v3512 = vpop.f32.mrb[0].mxu0
        %v3513 = vadd.f32 %v1782, %v3512
        %v3514 = vpop.f32.mrb[0].mxu0
        %v3515 = vadd.f32 %v1787, %v3514
        %v3516 = vpop.f32.mrb[0].mxu0
        %v3517 = vadd.f32 %v1787, %v3516
        %3518 = vmatprep.mubr.bf16.mxu0 0
        %3519 = vmatmul.mubr.bf16.gmra.mrb[0].mxu0 %v2460
        %v3520 = vpop.f32.mrb[0].mxu0
        %v3521 = vadd.f32 %v1792, %v3520
        %v3522 = vpop.f32.mrb[0].mxu0
        %v3523 = vadd.f32 %v1792, %v3522
        %v3524 = vpop.f32.mrb[0].mxu0
        %v3525 = vadd.f32 %v1797, %v3524
        %v3526 = vpop.f32.mrb[0].mxu0
        %v3527 = vadd.f32 %v1797, %v3526
        %3528 = vmatprep.mubr.bf16.mxu0 0
        %3529 = vmatmul.mubr.bf16.gmra.mrb[0].mxu0 %v2461
        %v3530 = vpop.f32.mrb[0].mxu0
        %v3531 = vadd.f32 %v1802, %v3530
        %v3532 = vpop.f32.mrb[0].mxu0
        %v3533 = vadd.f32 %v1802, %v3532
        %v3534 = vpop.f32.mrb[0].mxu0
        %v3535 = vadd.f32 %v1807, %v3534
        %v3536 = vpop.f32.mrb[0].mxu0
        %v3537 = vadd.f32 %v1807, %v3536
        %3538 = vmatprep.mubr.bf16.mxu0 0
        %3539 = vmatmul.mubr.bf16.gmra.mrb[0].mxu0 %v2462
        %v3540 = vpop.f32.mrb[0].mxu0
        %v3541 = vadd.f32 %v1812, %v3540
        %v3542 = vpop.f32.mrb[0].mxu0
        %v3543 = vadd.f32 %v1812, %v3542
        %v3544 = vpop.f32.mrb[0].mxu0
        %v3545 = vadd.f32 %v1817, %v3544
        %v3546 = vpop.f32.mrb[0].mxu0
        %v3547 = vadd.f32 %v1817, %v3546
        %3548 = vmatprep.mubr.bf16.mxu0 0
        %3549 = vmatmul.mubr.bf16.gmra.mrb[0].mxu0 %v2463
        %v3550 = vpop.f32.mrb[0].mxu0
        %v3551 = vadd.f32 %v1822, %v3550
        %v3552 = vpop.f32.mrb[0].mxu0
        %v3553 = vadd.f32 %v1822, %v3552
        %v3554 = vpop.f32.mrb[0].mxu0
        %v3555 = vadd.f32 %v1827, %v3554
        %v3556 = vpop.f32.mrb[0].mxu0
        %v3557 = vadd.f32 %v1827, %v3556
        %3558 = vmatprep.mubr.bf16.mxu0 0
        %3559 = vmatmul.mubr.bf16.gmra.mrb[0].mxu0 %v2464
        %v3560 = vpop.f32.mrb[0].mxu0
        %v3561 = vadd.f32 %v1832, %v3560
        %v3562 = vpop.f32.mrb[0].mxu0
        %v3563 = vadd.f32 %v1832, %v3562
        %v3564 = vpop.f32.mrb[0].mxu0
        %v3565 = vadd.f32 %v1837, %v3564
        %v3566 = vpop.f32.mrb[0].mxu0
        %v3567 = vadd.f32 %v1837, %v3566
        %3568 = vmatprep.mubr.bf16.mxu0 0
        %3569 = vmatmul.mubr.bf16.gmra.mrb[0].mxu0 %v2465
        %v3570 = vpop.f32.mrb[0].mxu0
        %v3571 = vadd.f32 %v1842, %v3570
        %v3572 = vpop.f32.mrb[0].mxu0
        %v3573 = vadd.f32 %v1842, %v3572
        %v3574 = vpop.f32.mrb[0].mxu0
        %v3575 = vadd.f32 %v1847, %v3574
        %v3576 = vpop.f32.mrb[0].mxu0
        %v3577 = vadd.f32 %v1847, %v3576
        %3578 = vmatprep.mubr.bf16.mxu0 0
        %3579 = vmatmul.mubr.bf16.gmra.mrb[0].mxu0 %v2466
        %v3580 = vpop.f32.mrb[0].mxu0
        %v3581 = vadd.f32 %v1852, %v3580
        %v3582 = vpop.f32.mrb[0].mxu0
        %v3583 = vadd.f32 %v1852, %v3582
        %v3584 = vpop.f32.mrb[0].mxu0
        %v3585 = vadd.f32 %v1857, %v3584
        %v3586 = vpop.f32.mrb[0].mxu0
        %v3587 = vadd.f32 %v1857, %v3586
        %3588 = vmatprep.mubr.bf16.mxu0 0
        %3589 = vmatmul.mubr.bf16.gmra.mrb[0].mxu0 %v2467
        %v3590 = vpop.f32.mrb[0].mxu0
        %v3591 = vadd.f32 %v1862, %v3590
        %v3592 = vpop.f32.mrb[0].mxu0
        %v3593 = vadd.f32 %v1862, %v3592
        %v3594 = vpop.f32.mrb[0].mxu0
        %v3595 = vadd.f32 %v1867, %v3594
        %v3596 = vpop.f32.mrb[0].mxu0
        %v3597 = vadd.f32 %v1867, %v3596
        %3598 = vmatprep.mubr.bf16.mxu0 0
        %3599 = vmatmul.mubr.bf16.gmra.mrb[0].mxu0 %v2468
        %v3600 = vpop.f32.mrb[0].mxu0
        %v3601 = vadd.f32 %v1872, %v3600
        %v3602 = vpop.f32.mrb[0].mxu0
        %v3603 = vadd.f32 %v1872, %v3602
        %v3604 = vpop.f32.mrb[0].mxu0
        %v3605 = vadd.f32 %v1877, %v3604
        %v3606 = vpop.f32.mrb[0].mxu0
        %v3607 = vadd.f32 %v1877, %v3606
        %3608 = vmatprep.mubr.bf16.mxu0 0
        %3609 = vmatmul.mubr.bf16.gmra.mrb[0].mxu0 %v2469
        %v3610 = vpop.f32.mrb[0].mxu0
        %v3611 = vadd.f32 %v1882, %v3610
        %v3612 = vpop.f32.mrb[0].mxu0
        %v3613 = vadd.f32 %v1882, %v3612
        %v3614 = vpop.f32.mrb[0].mxu0
        %v3615 = vadd.f32 %v1887, %v3614
        %v3616 = vpop.f32.mrb[0].mxu0
        %v3617 = vadd.f32 %v1887, %v3616
        %3618 = vmatprep.mubr.bf16.mxu0 0
        %3619 = vmatmul.mubr.bf16.gmra.mrb[0].mxu0 %v2470
        %v3620 = vpop.f32.mrb[0].mxu0
        %v3621 = vadd.f32 %v1892, %v3620
        %v3622 = vpop.f32.mrb[0].mxu0
        %v3623 = vadd.f32 %v1892, %v3622
        %v3624 = vpop.f32.mrb[0].mxu0
        %v3625 = vadd.f32 %v1897, %v3624
        %v3626 = vpop.f32.mrb[0].mxu0
        %v3627 = vadd.f32 %v1897, %v3626
        %3628 = vmatprep.mubr.bf16.mxu0 0
        %3629 = vmatmul.mubr.bf16.gmra.mrb[0].mxu0 %v2471
        %v3630 = vpop.f32.mrb[0].mxu0
        %v3631 = vadd.f32 %v1902, %v3630
        %v3632 = vpop.f32.mrb[0].mxu0
        %v3633 = vadd.f32 %v1902, %v3632
        %v3634 = vpop.f32.mrb[0].mxu0
        %v3635 = vadd.f32 %v1907, %v3634
        %v3636 = vpop.f32.mrb[0].mxu0
        %v3637 = vadd.f32 %v1907, %v3636
        %3638 = vmatprep.mubr.bf16.mxu0 0
        %3639 = vmatmul.mubr.bf16.gmra.mrb[0].mxu0 %v2472
        %v3640 = vpop.f32.mrb[0].mxu0
        %v3641 = vadd.f32 %v1912, %v3640
        %v3642 = vpop.f32.mrb[0].mxu0
        %v3643 = vadd.f32 %v1912, %v3642
        %v3644 = vpop.f32.mrb[0].mxu0
        %v3645 = vadd.f32 %v1917, %v3644
        %v3646 = vpop.f32.mrb[0].mxu0
        %v3647 = vadd.f32 %v1917, %v3646
        %3648 = vmatprep.mubr.bf16.mxu0 0
        %3649 = vmatmul.mubr.bf16.gmra.mrb[0].mxu0 %v2473
        %v3650 = vpop.f32.mrb[0].mxu0
        %v3651 = vadd.f32 %v1922, %v3650
        %v3652 = vpop.f32.mrb[0].mxu0
        %v3653 = vadd.f32 %v1922, %v3652
        %v3654 = vpop.f32.mrb[0].mxu0
        %v3655 = vadd.f32 %v1927, %v3654
        %v3656 = vpop.f32.mrb[0].mxu0
        %v3657 = vadd.f32 %v1927, %v3656
        %3658 = vmatprep.mubr.bf16.mxu0 0
        %3659 = vmatmul.mubr.bf16.gmra.mrb[0].mxu0 %v2474
        %v3660 = vpop.f32.mrb[0].mxu0
        %v3661 = vadd.f32 %v1932, %v3660
        %v3662 = vpop.f32.mrb[0].mxu0
        %v3663 = vadd.f32 %v1932, %v3662
        %v3664 = vpop.f32.mrb[0].mxu0
        %v3665 = vadd.f32 %v1937, %v3664
        %v3666 = vpop.f32.mrb[0].mxu0
        %v3667 = vadd.f32 %v1937, %v3666
        %3668 = vmatprep.mubr.bf16.mxu0 0
        %3669 = vmatmul.mubr.bf16.gmra.mrb[0].mxu0 %v2475
        %v3670 = vpop.f32.mrb[0].mxu0
        %v3671 = vadd.f32 %v1942, %v3670
        %v3672 = vpop.f32.mrb[0].mxu0
        %v3673 = vadd.f32 %v1942, %v3672
        %v3674 = vpop.f32.mrb[0].mxu0
        %v3675 = vadd.f32 %v1947, %v3674
        %v3676 = vpop.f32.mrb[0].mxu0
        %v3677 = vadd.f32 %v1947, %v3676
        %3678 = vmatprep.mubr.bf16.mxu0 0
        %3679 = vmatmul.mubr.bf16.gmra.mrb[0].mxu0 %v2476
        %v3680 = vpop.f32.mrb[0].mxu0
        %v3681 = vadd.f32 %v1952, %v3680
        %v3682 = vpop.f32.mrb[0].mxu0
        %v3683 = vadd.f32 %v1952, %v3682
        %v3684 = vpop.f32.mrb[0].mxu0
        %v3685 = vadd.f32 %v1957, %v3684
        %v3686 = vpop.f32.mrb[0].mxu0
        %v3687 = vadd.f32 %v1957, %v3686
        %3688 = vmatprep.mubr.bf16.mxu0 0
        %3689 = vmatmul.mubr.bf16.gmra.mrb[0].mxu0 %v2477
        %v3690 = vpop.f32.mrb[0].mxu0
        %v3691 = vadd.f32 %v1962, %v3690
        %v3692 = vpop.f32.mrb[0].mxu0
        %v3693 = vadd.f32 %v1962, %v3692
        %v3694 = vpop.f32.mrb[0].mxu0
        %v3695 = vadd.f32 %v1967, %v3694
        %v3696 = vpop.f32.mrb[0].mxu0
        %v3697 = vadd.f32 %v1967, %v3696
        %3698 = vmatprep.mubr.bf16.mxu0 0
        %3699 = vmatmul.mubr.bf16.gmra.mrb[0].mxu0 %v2478
        %v3700 = vpop.f32.mrb[0].mxu0
        %v3701 = vadd.f32 %v1972, %v3700
        %v3702 = vpop.f32.mrb[0].mxu0
        %v3703 = vadd.f32 %v1972, %v3702
        %v3704 = vpop.f32.mrb[0].mxu0
        %v3705 = vadd.f32 %v1977, %v3704
        %v3706 = vpop.f32.mrb[0].mxu0
        %v3707 = vadd.f32 %v1977, %v3706
        %3708 = vmatprep.mubr.bf16.mxu0 0
        %3709 = vmatmul.mubr.bf16.gmra.mrb[0].mxu0 %v2479
        %v3710 = vpop.f32.mrb[0].mxu0
        %v3711 = vadd.f32 %v1982, %v3710
        %v3712 = vpop.f32.mrb[0].mxu0
        %v3713 = vadd.f32 %v1982, %v3712
        %v3714 = vpop.f32.mrb[0].mxu0
        %v3715 = vadd.f32 %v1987, %v3714
        %v3716 = vpop.f32.mrb[0].mxu0
        %v3717 = vadd.f32 %v1987, %v3716
        %3718 = vmatprep.mubr.bf16.mxu0 0
        %3719 = vmatmul.mubr.bf16.gmra.mrb[0].mxu0 %v2480
        %v3720 = vpop.f32.mrb[0].mxu0
        %v3721 = vadd.f32 %v1992, %v3720
        %v3722 = vpop.f32.mrb[0].mxu0
        %v3723 = vadd.f32 %v1992, %v3722
        %v3724 = vpop.f32.mrb[0].mxu0
        %v3725 = vadd.f32 %v1997, %v3724
        %v3726 = vpop.f32.mrb[0].mxu0
        %v3727 = vadd.f32 %v1997, %v3726
        %3728 = vmatprep.mubr.bf16.mxu0 0
        %3729 = vmatmul.mubr.bf16.gmra.mrb[0].mxu0 %v2481
        %v3730 = vpop.f32.mrb[0].mxu0
        %v3731 = vadd.f32 %v2002, %v3730
        %v3732 = vpop.f32.mrb[0].mxu0
        %v3733 = vadd.f32 %v2002, %v3732
        %v3734 = vpop.f32.mrb[0].mxu0
        %v3735 = vadd.f32 %v2007, %v3734
        %v3736 = vpop.f32.mrb[0].mxu0
        %v3737 = vadd.f32 %v2007, %v3736
        %3738 = vmatprep.mubr.bf16.mxu0 0
        %3739 = vmatmul.mubr.bf16.gmra.mrb[0].mxu0 %v2482
        %v3740 = vpop.f32.mrb[0].mxu0
        %v3741 = vadd.f32 %v2012, %v3740
        %v3742 = vpop.f32.mrb[0].mxu0
        %v3743 = vadd.f32 %v2012, %v3742
        %v3744 = vpop.f32.mrb[0].mxu0
        %v3745 = vadd.f32 %v2017, %v3744
        %v3746 = vpop.f32.mrb[0].mxu0
        %v3747 = vadd.f32 %v2017, %v3746
        %3748 = vmatprep.mubr.bf16.mxu0 0
        %3749 = vmatmul.mubr.bf16.gmra.mrb[0].mxu0 %v2483
        %v3750 = vpop.f32.mrb[0].mxu0
        %v3751 = vadd.f32 %v2022, %v3750
        %v3752 = vpop.f32.mrb[0].mxu0
        %v3753 = vadd.f32 %v2022, %v3752
        %v3754 = vpop.f32.mrb[0].mxu0
        %v3755 = vadd.f32 %v2027, %v3754
        %v3756 = vpop.f32.mrb[0].mxu0
        %v3757 = vadd.f32 %v2027, %v3756
        %3758 = vmatprep.mubr.bf16.mxu0 0
        %3759 = vmatmul.mubr.bf16.gmra.mrb[0].mxu0 %v2484
        %v3760 = vpop.f32.mrb[0].mxu0
        %v3761 = vadd.f32 %v2032, %v3760
        %v3762 = vpop.f32.mrb[0].mxu0
        %v3763 = vadd.f32 %v2032, %v3762
        %v3764 = vpop.f32.mrb[0].mxu0
        %v3765 = vadd.f32 %v2037, %v3764
        %v3766 = vpop.f32.mrb[0].mxu0
        %v3767 = vadd.f32 %v2037, %v3766
        %3768 = vmatprep.mubr.bf16.mxu0 0
        %3769 = vmatmul.mubr.bf16.gmra.mrb[0].mxu0 %v2485
        %v3770 = vpop.f32.mrb[0].mxu0
        %v3771 = vadd.f32 %v2042, %v3770
        %v3772 = vpop.f32.mrb[0].mxu0
        %v3773 = vadd.f32 %v2042, %v3772
        %v3774 = vpop.f32.mrb[0].mxu0
        %v3775 = vadd.f32 %v2047, %v3774
        %v3776 = vpop.f32.mrb[0].mxu0
        %v3777 = vadd.f32 %v2047, %v3776
        %3778 = vmatprep.mubr.bf16.mxu0 0
        %3779 = vmatmul.mubr.bf16.gmra.mrb[0].mxu0 %v2486
        %v3780 = vpop.f32.mrb[0].mxu0
        %v3781 = vadd.f32 %v2052, %v3780
        %v3782 = vpop.f32.mrb[0].mxu0
        %v3783 = vadd.f32 %v2052, %v3782
        %v3784 = vpop.f32.mrb[0].mxu0
        %v3785 = vadd.f32 %v2057, %v3784
        %v3786 = vpop.f32.mrb[0].mxu0
        %v3787 = vadd.f32 %v2057, %v3786
        %3788 = vmatprep.mubr.bf16.mxu0 0
        %3789 = vmatmul.mubr.bf16.gmra.mrb[0].mxu0 %v2487
        %v3790 = vpop.f32.mrb[0].mxu0
        %v3791 = vadd.f32 %v2062, %v3790
        %v3792 = vpop.f32.mrb[0].mxu0
        %v3793 = vadd.f32 %v2062, %v3792
        %v3794 = vpop.f32.mrb[0].mxu0
        %v3795 = vadd.f32 %v2067, %v3794
        %v3796 = vpop.f32.mrb[0].mxu0
        %v3797 = vadd.f32 %v2067, %v3796
        %3798 = vmatprep.mubr.bf16.mxu0 0
        %3799 = vmatmul.mubr.bf16.gmra.mrb[0].mxu0 %v2488
        %v3800 = vpop.f32.mrb[0].mxu0
        %v3801 = vadd.f32 %v2072, %v3800
        %v3802 = vpop.f32.mrb[0].mxu0
        %v3803 = vadd.f32 %v2072, %v3802
        %v3804 = vpop.f32.mrb[0].mxu0
        %v3805 = vadd.f32 %v2077, %v3804
        %v3806 = vpop.f32.mrb[0].mxu0
        %v3807 = vadd.f32 %v2077, %v3806
        %3808 = vmatprep.mubr.bf16.mxu0 0
        %3809 = vmatmul.mubr.bf16.gmra.mrb[0].mxu0 %v2489
        %v3810 = vpop.f32.mrb[0].mxu0
        %v3811 = vadd.f32 %v2082, %v3810
        %v3812 = vpop.f32.mrb[0].mxu0
        %v3813 = vadd.f32 %v2082, %v3812
        %v3814 = vpop.f32.mrb[0].mxu0
        %v3815 = vadd.f32 %v2087, %v3814
        %v3816 = vpop.f32.mrb[0].mxu0
        %v3817 = vadd.f32 %v2087, %v3816
        %3818 = vmatprep.mubr.bf16.mxu0 0
        %3819 = vmatmul.mubr.bf16.gmra.mrb[0].mxu0 %v2490
        %v3820 = vpop.f32.mrb[0].mxu0
        %v3821 = vadd.f32 %v2092, %v3820
        %v3822 = vpop.f32.mrb[0].mxu0
        %v3823 = vadd.f32 %v2092, %v3822
        %v3824 = vpop.f32.mrb[0].mxu0
        %v3825 = vadd.f32 %v2097, %v3824
        %v3826 = vpop.f32.mrb[0].mxu0
        %v3827 = vadd.f32 %v2097, %v3826
        %3828 = vmatprep.mubr.bf16.mxu0 0
        %3829 = vmatmul.mubr.bf16.gmra.mrb[0].mxu0 %v2491
        %v3830 = vpop.f32.mrb[0].mxu0
        %v3831 = vadd.f32 %v2102, %v3830
        %v3832 = vpop.f32.mrb[0].mxu0
        %v3833 = vadd.f32 %v2102, %v3832
        %v3834 = vpop.f32.mrb[0].mxu0
        %v3835 = vadd.f32 %v2107, %v3834
        %v3836 = vpop.f32.mrb[0].mxu0
        %v3837 = vadd.f32 %v2107, %v3836
        %3838 = vmatprep.mubr.bf16.mxu0 0
        %3839 = vmatmul.mubr.bf16.gmra.mrb[0].mxu0 %v2492
        %v3840 = vpop.f32.mrb[0].mxu0
        %v3841 = vadd.f32 %v2112, %v3840
        %v3842 = vpop.f32.mrb[0].mxu0
        %v3843 = vadd.f32 %v2112, %v3842
        %v3844 = vpop.f32.mrb[0].mxu0
        %v3845 = vadd.f32 %v2117, %v3844
        %v3846 = vpop.f32.mrb[0].mxu0
        %v3847 = vadd.f32 %v2117, %v3846
        %3848 = vmatprep.mubr.bf16.mxu0 0
        %3849 = vmatmul.mubr.bf16.gmra.mrb[0].mxu0 %v2493
        %v3850 = vpop.f32.mrb[0].mxu0
        %v3851 = vadd.f32 %v2122, %v3850
        %v3852 = vpop.f32.mrb[0].mxu0
        %v3853 = vadd.f32 %v2122, %v3852
        %v3854 = vpop.f32.mrb[0].mxu0
        %v3855 = vadd.f32 %v2127, %v3854
        %v3856 = vpop.f32.mrb[0].mxu0
        %v3857 = vadd.f32 %v2127, %v3856
        %3858 = vmatprep.mubr.bf16.mxu0 0
        %3859 = vmatmul.mubr.bf16.gmra.mrb[0].mxu0 %v2494
        %v3860 = vpop.f32.mrb[0].mxu0
        %v3861 = vadd.f32 %v2132, %v3860
        %v3862 = vpop.f32.mrb[0].mxu0
        %v3863 = vadd.f32 %v2132, %v3862
        %v3864 = vpop.f32.mrb[0].mxu0
        %v3865 = vadd.f32 %v2137, %v3864
        %v3866 = vpop.f32.mrb[0].mxu0
        %v3867 = vadd.f32 %v2137, %v3866
        %3868 = vmatprep.mubr.bf16.mxu0 0
        %3869 = vmatmul.mubr.bf16.gmra.mrb[0].mxu0 %v2495
        %v3870 = vpop.f32.mrb[0].mxu0
        %v3871 = vadd.f32 %v2142, %v3870
        %v3872 = vpop.f32.mrb[0].mxu0
        %v3873 = vadd.f32 %v2142, %v3872
        %v3874 = vpop.f32.mrb[0].mxu0
        %v3875 = vadd.f32 %v2147, %v3874
        %v3876 = vpop.f32.mrb[0].mxu0
        %v3877 = vadd.f32 %v2147, %v3876
        %3878 = vmatprep.mubr.bf16.mxu0 0
        %3879 = vmatmul.mubr.bf16.gmra.mrb[0].mxu0 %v2496
        %v3880 = vpop.f32.mrb[0].mxu0
        %v3881 = vadd.f32 %v2152, %v3880
        %v3882 = vpop.f32.mrb[0].mxu0
        %v3883 = vadd.f32 %v2152, %v3882
        %v3884 = vpop.f32.mrb[0].mxu0
        %v3885 = vadd.f32 %v2157, %v3884
        %v3886 = vpop.f32.mrb[0].mxu0
        %v3887 = vadd.f32 %v2157, %v3886
        %3888 = vmatprep.mubr.bf16.mxu0 0
        %3889 = vmatmul.mubr.bf16.gmra.mrb[0].mxu0 %v2497
        %v3890 = vpop.f32.mrb[0].mxu0
        %v3891 = vadd.f32 %v2162, %v3890
        %v3892 = vpop.f32.mrb[0].mxu0
        %v3893 = vadd.f32 %v2162, %v3892
        %v3894 = vpop.f32.mrb[0].mxu0
        %v3895 = vadd.f32 %v2167, %v3894
        %v3896 = vpop.f32.mrb[0].mxu0
        %v3897 = vadd.f32 %v2167, %v3896
        %3898 = vmatprep.mubr.bf16.mxu0 0
        %3899 = vmatmul.mubr.bf16.gmra.mrb[0].mxu0 %v2498
        %v3900 = vpop.f32.mrb[0].mxu0
        %v3901 = vadd.f32 %v2172, %v3900
        %v3902 = vpop.f32.mrb[0].mxu0
        %v3903 = vadd.f32 %v2172, %v3902
        %v3904 = vpop.f32.mrb[0].mxu0
        %v3905 = vadd.f32 %v2177, %v3904
        %v3906 = vpop.f32.mrb[0].mxu0
        %v3907 = vadd.f32 %v2177, %v3906
        %3908 = vdwg.mxu0
        %v3909 = vmax.f32 %v2598, 0.0
        %v3910 = vmax.f32 %v2600, 0.0
        %v3911 = vmax.f32 %v3271, 0.0
        %v3912 = vmax.f32 %v3273, 0.0
        %v3913 = vmax.f32 %v2602, 0.0
        %v3914 = vmax.f32 %v2604, 0.0
        %v3915 = vmax.f32 %v3275, 0.0
        %v3916 = vmax.f32 %v3277, 0.0
        %v3917 = vmax.f32 %v2608, 0.0
        %v3918 = vmax.f32 %v2610, 0.0
        %v3919 = vmax.f32 %v3281, 0.0
        %v3920 = vmax.f32 %v3283, 0.0
        %v3921 = vmax.f32 %v2612, 0.0
        %v3922 = vmax.f32 %v2614, 0.0
        %v3923 = vmax.f32 %v3285, 0.0
        %v3924 = vmax.f32 %v3287, 0.0
        %v3925 = vmax.f32 %v2618, 0.0
        %v3926 = vmax.f32 %v2620, 0.0
        %v3927 = vmax.f32 %v3291, 0.0
        %v3928 = vmax.f32 %v3293, 0.0
        %v3929 = vmax.f32 %v2622, 0.0
        %v3930 = vmax.f32 %v2624, 0.0
        %v3931 = vmax.f32 %v3295, 0.0
        %v3932 = vmax.f32 %v3297, 0.0
        %v3933 = vmax.f32 %v2628, 0.0
        %v3934 = vmax.f32 %v2630, 0.0
        %v3935 = vmax.f32 %v3301, 0.0
        %v3936 = vmax.f32 %v3303, 0.0
        %v3937 = vmax.f32 %v2632, 0.0
        %v3938 = vmax.f32 %v2634, 0.0
        %v3939 = vmax.f32 %v3305, 0.0
        %v3940 = vmax.f32 %v3307, 0.0
        %v3941 = vmax.f32 %v2638, 0.0
        %v3942 = vmax.f32 %v2640, 0.0
        %v3943 = vmax.f32 %v3311, 0.0
        %v3944 = vmax.f32 %v3313, 0.0
        %v3945 = vmax.f32 %v2642, 0.0
        %v3946 = vmax.f32 %v2644, 0.0
        %v3947 = vmax.f32 %v3315, 0.0
        %v3948 = vmax.f32 %v3317, 0.0
        %v3949 = vmax.f32 %v2648, 0.0
        %v3950 = vmax.f32 %v2650, 0.0
        %v3951 = vmax.f32 %v3321, 0.0
        %v3952 = vmax.f32 %v3323, 0.0
        %v3953 = vmax.f32 %v2652, 0.0
        %v3954 = vmax.f32 %v2654, 0.0
        %v3955 = vmax.f32 %v3325, 0.0
        %v3956 = vmax.f32 %v3327, 0.0
        %v3957 = vmax.f32 %v2658, 0.0
        %v3958 = vmax.f32 %v2660, 0.0
        %v3959 = vmax.f32 %v3331, 0.0
        %v3960 = vmax.f32 %v3333, 0.0
        %v3961 = vmax.f32 %v2662, 0.0
        %v3962 = vmax.f32 %v2664, 0.0
        %v3963 = vmax.f32 %v3335, 0.0
        %v3964 = vmax.f32 %v3337, 0.0
        %v3965 = vmax.f32 %v2668, 0.0
        %v3966 = vmax.f32 %v2670, 0.0
        %v3967 = vmax.f32 %v3341, 0.0
        %v3968 = vmax.f32 %v3343, 0.0
        %v3969 = vmax.f32 %v2672, 0.0
        %v3970 = vmax.f32 %v2674, 0.0
        %v3971 = vmax.f32 %v3345, 0.0
        %v3972 = vmax.f32 %v3347, 0.0
        %v3973 = vmax.f32 %v2678, 0.0
        %v3974 = vmax.f32 %v2680, 0.0
        %v3975 = vmax.f32 %v3351, 0.0
        %v3976 = vmax.f32 %v3353, 0.0
        %v3977 = vmax.f32 %v2682, 0.0
        %v3978 = vmax.f32 %v2684, 0.0
        %v3979 = vmax.f32 %v3355, 0.0
        %v3980 = vmax.f32 %v3357, 0.0
        %v3981 = vmax.f32 %v2688, 0.0
        %v3982 = vmax.f32 %v2690, 0.0
        %v3983 = vmax.f32 %v3361, 0.0
        %v3984 = vmax.f32 %v3363, 0.0
        %v3985 = vmax.f32 %v2692, 0.0
        %v3986 = vmax.f32 %v2694, 0.0
        %v3987 = vmax.f32 %v3365, 0.0
        %v3988 = vmax.f32 %v3367, 0.0
        %v3989 = vmax.f32 %v2698, 0.0
        %v3990 = vmax.f32 %v2700, 0.0
        %v3991 = vmax.f32 %v3371, 0.0
        %v3992 = vmax.f32 %v3373, 0.0
        %v3993 = vmax.f32 %v2702, 0.0
        %v3994 = vmax.f32 %v2704, 0.0
        %v3995 = vmax.f32 %v3375, 0.0
        %v3996 = vmax.f32 %v3377, 0.0
        %v3997 = vmax.f32 %v2708, 0.0
        %v3998 = vmax.f32 %v2710, 0.0
        %v3999 = vmax.f32 %v3381, 0.0
        %v4000 = vmax.f32 %v3383, 0.0
        %v4001 = vmax.f32 %v2712, 0.0
        %v4002 = vmax.f32 %v2714, 0.0
        %v4003 = vmax.f32 %v3385, 0.0
        %v4004 = vmax.f32 %v3387, 0.0
        %v4005 = vmax.f32 %v2718, 0.0
        %v4006 = vmax.f32 %v2720, 0.0
        %v4007 = vmax.f32 %v3391, 0.0
        %v4008 = vmax.f32 %v3393, 0.0
        %v4009 = vmax.f32 %v2722, 0.0
        %v4010 = vmax.f32 %v2724, 0.0
        %v4011 = vmax.f32 %v3395, 0.0
        %v4012 = vmax.f32 %v3397, 0.0
        %v4013 = vmax.f32 %v2728, 0.0
        %v4014 = vmax.f32 %v2730, 0.0
        %v4015 = vmax.f32 %v3401, 0.0
        %v4016 = vmax.f32 %v3403, 0.0
        %v4017 = vmax.f32 %v2732, 0.0
        %v4018 = vmax.f32 %v2734, 0.0
        %v4019 = vmax.f32 %v3405, 0.0
        %v4020 = vmax.f32 %v3407, 0.0
        %v4021 = vmax.f32 %v2738, 0.0
        %v4022 = vmax.f32 %v2740, 0.0
        %v4023 = vmax.f32 %v3411, 0.0
        %v4024 = vmax.f32 %v3413, 0.0
        %v4025 = vmax.f32 %v2742, 0.0
        %v4026 = vmax.f32 %v2744, 0.0
        %v4027 = vmax.f32 %v3415, 0.0
        %v4028 = vmax.f32 %v3417, 0.0
        %v4029 = vmax.f32 %v2748, 0.0
        %v4030 = vmax.f32 %v2750, 0.0
        %v4031 = vmax.f32 %v3421, 0.0
        %v4032 = vmax.f32 %v3423, 0.0
        %v4033 = vmax.f32 %v2752, 0.0
        %v4034 = vmax.f32 %v2754, 0.0
        %v4035 = vmax.f32 %v3425, 0.0
        %v4036 = vmax.f32 %v3427, 0.0
        %v4037 = vmax.f32 %v2758, 0.0
        %v4038 = vmax.f32 %v2760, 0.0
        %v4039 = vmax.f32 %v3431, 0.0
        %v4040 = vmax.f32 %v3433, 0.0
        %v4041 = vmax.f32 %v2762, 0.0
        %v4042 = vmax.f32 %v2764, 0.0
        %v4043 = vmax.f32 %v3435, 0.0
        %v4044 = vmax.f32 %v3437, 0.0
        %v4045 = vmax.f32 %v2768, 0.0
        %v4046 = vmax.f32 %v2770, 0.0
        %v4047 = vmax.f32 %v3441, 0.0
        %v4048 = vmax.f32 %v3443, 0.0
        %v4049 = vmax.f32 %v2772, 0.0
        %v4050 = vmax.f32 %v2774, 0.0
        %v4051 = vmax.f32 %v3445, 0.0
        %v4052 = vmax.f32 %v3447, 0.0
        %v4053 = vmax.f32 %v2778, 0.0
        %v4054 = vmax.f32 %v2780, 0.0
        %v4055 = vmax.f32 %v3451, 0.0
        %v4056 = vmax.f32 %v3453, 0.0
        %v4057 = vmax.f32 %v2782, 0.0
        %v4058 = vmax.f32 %v2784, 0.0
        %v4059 = vmax.f32 %v3455, 0.0
        %v4060 = vmax.f32 %v3457, 0.0
        %v4061 = vmax.f32 %v2788, 0.0
        %v4062 = vmax.f32 %v2790, 0.0
        %v4063 = vmax.f32 %v3461, 0.0
        %v4064 = vmax.f32 %v3463, 0.0
        %v4065 = vmax.f32 %v2792, 0.0
        %v4066 = vmax.f32 %v2794, 0.0
        %v4067 = vmax.f32 %v3465, 0.0
        %v4068 = vmax.f32 %v3467, 0.0
        %v4069 = vmax.f32 %v2798, 0.0
        %v4070 = vmax.f32 %v2800, 0.0
        %v4071 = vmax.f32 %v3471, 0.0
        %v4072 = vmax.f32 %v3473, 0.0
        %v4073 = vmax.f32 %v2802, 0.0
        %v4074 = vmax.f32 %v2804, 0.0
        %v4075 = vmax.f32 %v3475, 0.0
        %v4076 = vmax.f32 %v3477, 0.0
        %v4077 = vmax.f32 %v2808, 0.0
        %v4078 = vmax.f32 %v2810, 0.0
        %v4079 = vmax.f32 %v3481, 0.0
        %v4080 = vmax.f32 %v3483, 0.0
        %v4081 = vmax.f32 %v2812, 0.0
        %v4082 = vmax.f32 %v2814, 0.0
        %v4083 = vmax.f32 %v3485, 0.0
        %v4084 = vmax.f32 %v3487, 0.0
        %v4085 = vmax.f32 %v2818, 0.0
        %v4086 = vmax.f32 %v2820, 0.0
        %v4087 = vmax.f32 %v3491, 0.0
        %v4088 = vmax.f32 %v3493, 0.0
        %v4089 = vmax.f32 %v2822, 0.0
        %v4090 = vmax.f32 %v2824, 0.0
        %v4091 = vmax.f32 %v3495, 0.0
        %v4092 = vmax.f32 %v3497, 0.0
        %v4093 = vmax.f32 %v2828, 0.0
        %v4094 = vmax.f32 %v2830, 0.0
        %v4095 = vmax.f32 %v3501, 0.0
        %v4096 = vmax.f32 %v3503, 0.0
        %v4097 = vmax.f32 %v2832, 0.0
        %v4098 = vmax.f32 %v2834, 0.0
        %v4099 = vmax.f32 %v3505, 0.0
        %v4100 = vmax.f32 %v3507, 0.0
        %v4101 = vmax.f32 %v2838, 0.0
        %v4102 = vmax.f32 %v2840, 0.0
        %v4103 = vmax.f32 %v3511, 0.0
        %v4104 = vmax.f32 %v3513, 0.0
        %v4105 = vmax.f32 %v2842, 0.0
        %v4106 = vmax.f32 %v2844, 0.0
        %v4107 = vmax.f32 %v3515, 0.0
        %v4108 = vmax.f32 %v3517, 0.0
        %v4109 = vmax.f32 %v2848, 0.0
        %v4110 = vmax.f32 %v2850, 0.0
        %v4111 = vmax.f32 %v3521, 0.0
        %v4112 = vmax.f32 %v3523, 0.0
        %v4113 = vmax.f32 %v2852, 0.0
        %v4114 = vmax.f32 %v2854, 0.0
        %v4115 = vmax.f32 %v3525, 0.0
        %v4116 = vmax.f32 %v3527, 0.0
        %v4117 = vmax.f32 %v2858, 0.0
        %v4118 = vmax.f32 %v2860, 0.0
        %v4119 = vmax.f32 %v3531, 0.0
        %v4120 = vmax.f32 %v3533, 0.0
        %v4121 = vmax.f32 %v2862, 0.0
        %v4122 = vmax.f32 %v2864, 0.0
        %v4123 = vmax.f32 %v3535, 0.0
        %v4124 = vmax.f32 %v3537, 0.0
        %v4125 = vmax.f32 %v2868, 0.0
        %v4126 = vmax.f32 %v2870, 0.0
        %v4127 = vmax.f32 %v3541, 0.0
        %v4128 = vmax.f32 %v3543, 0.0
        %v4129 = vmax.f32 %v2872, 0.0
        %v4130 = vmax.f32 %v2874, 0.0
        %v4131 = vmax.f32 %v3545, 0.0
        %v4132 = vmax.f32 %v3547, 0.0
        %v4133 = vmax.f32 %v2878, 0.0
        %v4134 = vmax.f32 %v2880, 0.0
        %v4135 = vmax.f32 %v3551, 0.0
        %v4136 = vmax.f32 %v3553, 0.0
        %v4137 = vmax.f32 %v2882, 0.0
        %v4138 = vmax.f32 %v2884, 0.0
        %v4139 = vmax.f32 %v3555, 0.0
        %v4140 = vmax.f32 %v3557, 0.0
        %v4141 = vmax.f32 %v2888, 0.0
        %v4142 = vmax.f32 %v2890, 0.0
        %v4143 = vmax.f32 %v3561, 0.0
        %v4144 = vmax.f32 %v3563, 0.0
        %v4145 = vmax.f32 %v2892, 0.0
        %v4146 = vmax.f32 %v2894, 0.0
        %v4147 = vmax.f32 %v3565, 0.0
        %v4148 = vmax.f32 %v3567, 0.0
        %v4149 = vmax.f32 %v2898, 0.0
        %v4150 = vmax.f32 %v2900, 0.0
        %v4151 = vmax.f32 %v3571, 0.0
        %v4152 = vmax.f32 %v3573, 0.0
        %v4153 = vmax.f32 %v2902, 0.0
        %v4154 = vmax.f32 %v2904, 0.0
        %v4155 = vmax.f32 %v3575, 0.0
        %v4156 = vmax.f32 %v3577, 0.0
        %v4157 = vmax.f32 %v2908, 0.0
        %v4158 = vmax.f32 %v2910, 0.0
        %v4159 = vmax.f32 %v3581, 0.0
        %v4160 = vmax.f32 %v3583, 0.0
        %v4161 = vmax.f32 %v2912, 0.0
        %v4162 = vmax.f32 %v2914, 0.0
        %v4163 = vmax.f32 %v3585, 0.0
        %v4164 = vmax.f32 %v3587, 0.0
        %v4165 = vmax.f32 %v2918, 0.0
        %v4166 = vmax.f32 %v2920, 0.0
        %v4167 = vmax.f32 %v3591, 0.0
        %v4168 = vmax.f32 %v3593, 0.0
        %v4169 = vmax.f32 %v2922, 0.0
        %v4170 = vmax.f32 %v2924, 0.0
        %v4171 = vmax.f32 %v3595, 0.0
        %v4172 = vmax.f32 %v3597, 0.0
        %v4173 = vmax.f32 %v2928, 0.0
        %v4174 = vmax.f32 %v2930, 0.0
        %v4175 = vmax.f32 %v3601, 0.0
        %v4176 = vmax.f32 %v3603, 0.0
        %v4177 = vmax.f32 %v2932, 0.0
        %v4178 = vmax.f32 %v2934, 0.0
        %v4179 = vmax.f32 %v3605, 0.0
        %v4180 = vmax.f32 %v3607, 0.0
        %v4181 = vmax.f32 %v2938, 0.0
        %v4182 = vmax.f32 %v2940, 0.0
        %v4183 = vmax.f32 %v3611, 0.0
        %v4184 = vmax.f32 %v3613, 0.0
        %v4185 = vmax.f32 %v2942, 0.0
        %v4186 = vmax.f32 %v2944, 0.0
        %v4187 = vmax.f32 %v3615, 0.0
        %v4188 = vmax.f32 %v3617, 0.0
        %v4189 = vmax.f32 %v2948, 0.0
        %v4190 = vmax.f32 %v2950, 0.0
        %v4191 = vmax.f32 %v3621, 0.0
        %v4192 = vmax.f32 %v3623, 0.0
        %v4193 = vmax.f32 %v2952, 0.0
        %v4194 = vmax.f32 %v2954, 0.0
        %v4195 = vmax.f32 %v3625, 0.0
        %v4196 = vmax.f32 %v3627, 0.0
        %v4197 = vmax.f32 %v2958, 0.0
        %v4198 = vmax.f32 %v2960, 0.0
        %v4199 = vmax.f32 %v3631, 0.0
        %v4200 = vmax.f32 %v3633, 0.0
        %v4201 = vmax.f32 %v2962, 0.0
        %v4202 = vmax.f32 %v2964, 0.0
        %v4203 = vmax.f32 %v3635, 0.0
        %v4204 = vmax.f32 %v3637, 0.0
        %v4205 = vmax.f32 %v2968, 0.0
        %v4206 = vmax.f32 %v2970, 0.0
        %v4207 = vmax.f32 %v3641, 0.0
        %v4208 = vmax.f32 %v3643, 0.0
        %v4209 = vmax.f32 %v2972, 0.0
        %v4210 = vmax.f32 %v2974, 0.0
        %v4211 = vmax.f32 %v3645, 0.0
        %v4212 = vmax.f32 %v3647, 0.0
        %v4213 = vmax.f32 %v2978, 0.0
        %v4214 = vmax.f32 %v2980, 0.0
        %v4215 = vmax.f32 %v3651, 0.0
        %v4216 = vmax.f32 %v3653, 0.0
        %v4217 = vmax.f32 %v2982, 0.0
        %v4218 = vmax.f32 %v2984, 0.0
        %v4219 = vmax.f32 %v3655, 0.0
        %v4220 = vmax.f32 %v3657, 0.0
        %v4221 = vmax.f32 %v2988, 0.0
        %v4222 = vmax.f32 %v2990, 0.0
        %v4223 = vmax.f32 %v3661, 0.0
        %v4224 = vmax.f32 %v3663, 0.0
        %v4225 = vmax.f32 %v2992, 0.0
        %v4226 = vmax.f32 %v2994, 0.0
        %v4227 = vmax.f32 %v3665, 0.0
        %v4228 = vmax.f32 %v3667, 0.0
        %v4229 = vmax.f32 %v2998, 0.0
        %v4230 = vmax.f32 %v3000, 0.0
        %v4231 = vmax.f32 %v3671, 0.0
        %v4232 = vmax.f32 %v3673, 0.0
        %v4233 = vmax.f32 %v3002, 0.0
        %v4234 = vmax.f32 %v3004, 0.0
        %v4235 = vmax.f32 %v3675, 0.0
        %v4236 = vmax.f32 %v3677, 0.0
        %v4237 = vmax.f32 %v3008, 0.0
        %v4238 = vmax.f32 %v3010, 0.0
        %v4239 = vmax.f32 %v3681, 0.0
        %v4240 = vmax.f32 %v3683, 0.0
        %v4241 = vmax.f32 %v3012, 0.0
        %v4242 = vmax.f32 %v3014, 0.0
        %v4243 = vmax.f32 %v3685, 0.0
        %v4244 = vmax.f32 %v3687, 0.0
        %v4245 = vmax.f32 %v3018, 0.0
        %v4246 = vmax.f32 %v3020, 0.0
        %v4247 = vmax.f32 %v3691, 0.0
        %v4248 = vmax.f32 %v3693, 0.0
        %v4249 = vmax.f32 %v3022, 0.0
        %v4250 = vmax.f32 %v3024, 0.0
        %v4251 = vmax.f32 %v3695, 0.0
        %v4252 = vmax.f32 %v3697, 0.0
        %v4253 = vmax.f32 %v3028, 0.0
        %v4254 = vmax.f32 %v3030, 0.0
        %v4255 = vmax.f32 %v3701, 0.0
        %v4256 = vmax.f32 %v3703, 0.0
        %v4257 = vmax.f32 %v3032, 0.0
        %v4258 = vmax.f32 %v3034, 0.0
        %v4259 = vmax.f32 %v3705, 0.0
        %v4260 = vmax.f32 %v3707, 0.0
        %v4261 = vmax.f32 %v3038, 0.0
        %v4262 = vmax.f32 %v3040, 0.0
        %v4263 = vmax.f32 %v3711, 0.0
        %v4264 = vmax.f32 %v3713, 0.0
        %v4265 = vmax.f32 %v3042, 0.0
        %v4266 = vmax.f32 %v3044, 0.0
        %v4267 = vmax.f32 %v3715, 0.0
        %v4268 = vmax.f32 %v3717, 0.0
        %v4269 = vmax.f32 %v3048, 0.0
        %v4270 = vmax.f32 %v3050, 0.0
        %v4271 = vmax.f32 %v3721, 0.0
        %v4272 = vmax.f32 %v3723, 0.0
        %v4273 = vmax.f32 %v3052, 0.0
        %v4274 = vmax.f32 %v3054, 0.0
        %v4275 = vmax.f32 %v3725, 0.0
        %v4276 = vmax.f32 %v3727, 0.0
        %v4277 = vmax.f32 %v3058, 0.0
        %v4278 = vmax.f32 %v3060, 0.0
        %v4279 = vmax.f32 %v3731, 0.0
        %v4280 = vmax.f32 %v3733, 0.0
        %v4281 = vmax.f32 %v3062, 0.0
        %v4282 = vmax.f32 %v3064, 0.0
        %v4283 = vmax.f32 %v3735, 0.0
        %v4284 = vmax.f32 %v3737, 0.0
        %v4285 = vmax.f32 %v3068, 0.0
        %v4286 = vmax.f32 %v3070, 0.0
        %v4287 = vmax.f32 %v3741, 0.0
        %v4288 = vmax.f32 %v3743, 0.0
        %v4289 = vmax.f32 %v3072, 0.0
        %v4290 = vmax.f32 %v3074, 0.0
        %v4291 = vmax.f32 %v3745, 0.0
        %v4292 = vmax.f32 %v3747, 0.0
        %v4293 = vmax.f32 %v3078, 0.0
        %v4294 = vmax.f32 %v3080, 0.0
        %v4295 = vmax.f32 %v3751, 0.0
        %v4296 = vmax.f32 %v3753, 0.0
        %v4297 = vmax.f32 %v3082, 0.0
        %v4298 = vmax.f32 %v3084, 0.0
        %v4299 = vmax.f32 %v3755, 0.0
        %v4300 = vmax.f32 %v3757, 0.0
        %v4301 = vmax.f32 %v3088, 0.0
        %v4302 = vmax.f32 %v3090, 0.0
        %v4303 = vmax.f32 %v3761, 0.0
        %v4304 = vmax.f32 %v3763, 0.0
        %v4305 = vmax.f32 %v3092, 0.0
        %v4306 = vmax.f32 %v3094, 0.0
        %v4307 = vmax.f32 %v3765, 0.0
        %v4308 = vmax.f32 %v3767, 0.0
        %v4309 = vmax.f32 %v3098, 0.0
        %v4310 = vmax.f32 %v3100, 0.0
        %v4311 = vmax.f32 %v3771, 0.0
        %v4312 = vmax.f32 %v3773, 0.0
        %v4313 = vmax.f32 %v3102, 0.0
        %v4314 = vmax.f32 %v3104, 0.0
        %v4315 = vmax.f32 %v3775, 0.0
        %v4316 = vmax.f32 %v3777, 0.0
        %v4317 = vmax.f32 %v3108, 0.0
        %v4318 = vmax.f32 %v3110, 0.0
        %v4319 = vmax.f32 %v3781, 0.0
        %v4320 = vmax.f32 %v3783, 0.0
        %v4321 = vmax.f32 %v3112, 0.0
        %v4322 = vmax.f32 %v3114, 0.0
        %v4323 = vmax.f32 %v3785, 0.0
        %v4324 = vmax.f32 %v3787, 0.0
        %v4325 = vmax.f32 %v3118, 0.0
        %v4326 = vmax.f32 %v3120, 0.0
        %v4327 = vmax.f32 %v3791, 0.0
        %v4328 = vmax.f32 %v3793, 0.0
        %v4329 = vmax.f32 %v3122, 0.0
        %v4330 = vmax.f32 %v3124, 0.0
        %v4331 = vmax.f32 %v3795, 0.0
        %v4332 = vmax.f32 %v3797, 0.0
        %v4333 = vmax.f32 %v3128, 0.0
        %v4334 = vmax.f32 %v3130, 0.0
        %v4335 = vmax.f32 %v3801, 0.0
        %v4336 = vmax.f32 %v3803, 0.0
        %v4337 = vmax.f32 %v3132, 0.0
        %v4338 = vmax.f32 %v3134, 0.0
        %v4339 = vmax.f32 %v3805, 0.0
        %v4340 = vmax.f32 %v3807, 0.0
        %v4341 = vmax.f32 %v3138, 0.0
        %v4342 = vmax.f32 %v3140, 0.0
        %v4343 = vmax.f32 %v3811, 0.0
        %v4344 = vmax.f32 %v3813, 0.0
        %v4345 = vmax.f32 %v3142, 0.0
        %v4346 = vmax.f32 %v3144, 0.0
        %v4347 = vmax.f32 %v3815, 0.0
        %v4348 = vmax.f32 %v3817, 0.0
        %v4349 = vmax.f32 %v3148, 0.0
        %v4350 = vmax.f32 %v3150, 0.0
        %v4351 = vmax.f32 %v3821, 0.0
        %v4352 = vmax.f32 %v3823, 0.0
        %v4353 = vmax.f32 %v3152, 0.0
        %v4354 = vmax.f32 %v3154, 0.0
        %v4355 = vmax.f32 %v3825, 0.0
        %v4356 = vmax.f32 %v3827, 0.0
        %v4357 = vmax.f32 %v3158, 0.0
        %v4358 = vmax.f32 %v3160, 0.0
        %v4359 = vmax.f32 %v3831, 0.0
        %v4360 = vmax.f32 %v3833, 0.0
        %v4361 = vmax.f32 %v3162, 0.0
        %v4362 = vmax.f32 %v3164, 0.0
        %v4363 = vmax.f32 %v3835, 0.0
        %v4364 = vmax.f32 %v3837, 0.0
        %v4365 = vmax.f32 %v3168, 0.0
        %v4366 = vmax.f32 %v3170, 0.0
        %v4367 = vmax.f32 %v3841, 0.0
        %v4368 = vmax.f32 %v3843, 0.0
        %v4369 = vmax.f32 %v3172, 0.0
        %v4370 = vmax.f32 %v3174, 0.0
        %v4371 = vmax.f32 %v3845, 0.0
        %v4372 = vmax.f32 %v3847, 0.0
        %v4373 = vmax.f32 %v3178, 0.0
        %v4374 = vmax.f32 %v3180, 0.0
        %v4375 = vmax.f32 %v3851, 0.0
        %v4376 = vmax.f32 %v3853, 0.0
        %v4377 = vmax.f32 %v3182, 0.0
        %v4378 = vmax.f32 %v3184, 0.0
        %v4379 = vmax.f32 %v3855, 0.0
        %v4380 = vmax.f32 %v3857, 0.0
        %v4381 = vmax.f32 %v3188, 0.0
        %v4382 = vmax.f32 %v3190, 0.0
        %v4383 = vmax.f32 %v3861, 0.0
        %v4384 = vmax.f32 %v3863, 0.0
        %v4385 = vmax.f32 %v3192, 0.0
        %v4386 = vmax.f32 %v3194, 0.0
        %v4387 = vmax.f32 %v3865, 0.0
        %v4388 = vmax.f32 %v3867, 0.0
        %v4389 = vmax.f32 %v3198, 0.0
        %v4390 = vmax.f32 %v3200, 0.0
        %v4391 = vmax.f32 %v3871, 0.0
        %v4392 = vmax.f32 %v3873, 0.0
        %v4393 = vmax.f32 %v3202, 0.0
        %v4394 = vmax.f32 %v3204, 0.0
        %v4395 = vmax.f32 %v3875, 0.0
        %v4396 = vmax.f32 %v3877, 0.0
        %v4397 = vmax.f32 %v3208, 0.0
        %v4398 = vmax.f32 %v3210, 0.0
        %v4399 = vmax.f32 %v3881, 0.0
        %v4400 = vmax.f32 %v3883, 0.0
        %v4401 = vmax.f32 %v3212, 0.0
        %v4402 = vmax.f32 %v3214, 0.0
        %v4403 = vmax.f32 %v3885, 0.0
        %v4404 = vmax.f32 %v3887, 0.0
        %v4405 = vmax.f32 %v3218, 0.0
        %v4406 = vmax.f32 %v3220, 0.0
        %v4407 = vmax.f32 %v3891, 0.0
        %v4408 = vmax.f32 %v3893, 0.0
        %v4409 = vmax.f32 %v3222, 0.0
        %v4410 = vmax.f32 %v3224, 0.0
        %v4411 = vmax.f32 %v3895, 0.0
        %v4412 = vmax.f32 %v3897, 0.0
        %v4413 = vmax.f32 %v3228, 0.0
        %v4414 = vmax.f32 %v3230, 0.0
        %v4415 = vmax.f32 %v3901, 0.0
        %v4416 = vmax.f32 %v3903, 0.0
        %v4417 = vmax.f32 %v3232, 0.0
        %v4418 = vmax.f32 %v3234, 0.0
        %v4419 = vmax.f32 %v3905, 0.0
        %v4420 = vmax.f32 %v3907, 0.0
        %v4421 = vlaneseq
        %v4422 = vand.u32 %v4421, 127
        %4423 = vmax.xlane.f32.xlu0 %v3909
        %v4424 = vpop.xlane.xlu0 %4423
        %4425 = vmax.xlane.f32.xlu0 %v3913
        %v4426 = vpop.xlane.xlu0 %4425
        %4427 = vmax.xlane.f32.xlu0 %v3917
        %v4428 = vpop.xlane.xlu0 %4427
        %4429 = vmax.xlane.f32.xlu0 %v3921
        %v4430 = vpop.xlane.xlu0 %4429
        %4431 = vmax.xlane.f32.xlu0 %v3925
        %v4432 = vpop.xlane.xlu0 %4431
        %4433 = vmax.xlane.f32.xlu0 %v3929
        %v4434 = vpop.xlane.xlu0 %4433
        %4435 = vmax.xlane.f32.xlu0 %v3933
        %v4436 = vpop.xlane.xlu0 %4435
        %4437 = vmax.xlane.f32.xlu0 %v3937
        %v4438 = vpop.xlane.xlu0 %4437
        %4439 = vmax.xlane.f32.xlu0 %v3941
        %v4440 = vpop.xlane.xlu0 %4439
        %4441 = vmax.xlane.f32.xlu0 %v3945
        %v4442 = vpop.xlane.xlu0 %4441
        %4443 = vmax.xlane.f32.xlu0 %v3949
        %v4444 = vpop.xlane.xlu0 %4443
        %4445 = vmax.xlane.f32.xlu0 %v3953
        %v4446 = vpop.xlane.xlu0 %4445
        %4447 = vmax.xlane.f32.xlu0 %v3957
        %v4448 = vpop.xlane.xlu0 %4447
        %4449 = vmax.xlane.f32.xlu0 %v3961
        %v4450 = vpop.xlane.xlu0 %4449
        %4451 = vmax.xlane.f32.xlu0 %v3965
        %v4452 = vpop.xlane.xlu0 %4451
        %4453 = vmax.xlane.f32.xlu0 %v3969
        %v4454 = vpop.xlane.xlu0 %4453
        %4455 = vmax.xlane.f32.xlu0 %v3973
        %v4456 = vpop.xlane.xlu0 %4455
        %4457 = vmax.xlane.f32.xlu0 %v3977
        %v4458 = vpop.xlane.xlu0 %4457
        %4459 = vmax.xlane.f32.xlu0 %v3981
        %v4460 = vpop.xlane.xlu0 %4459
        %4461 = vmax.xlane.f32.xlu0 %v3985
        %v4462 = vpop.xlane.xlu0 %4461
        %4463 = vmax.xlane.f32.xlu0 %v3989
        %v4464 = vpop.xlane.xlu0 %4463
        %4465 = vmax.xlane.f32.xlu0 %v3993
        %v4466 = vpop.xlane.xlu0 %4465
        %4467 = vmax.xlane.f32.xlu0 %v3997
        %v4468 = vpop.xlane.xlu0 %4467
        %4469 = vmax.xlane.f32.xlu0 %v4001
        %v4470 = vpop.xlane.xlu0 %4469
        %4471 = vmax.xlane.f32.xlu0 %v4005
        %v4472 = vpop.xlane.xlu0 %4471
        %4473 = vmax.xlane.f32.xlu0 %v4009
        %v4474 = vpop.xlane.xlu0 %4473
        %4475 = vmax.xlane.f32.xlu0 %v4013
        %v4476 = vpop.xlane.xlu0 %4475
        %4477 = vmax.xlane.f32.xlu0 %v4017
        %v4478 = vpop.xlane.xlu0 %4477
        %4479 = vmax.xlane.f32.xlu0 %v4021
        %v4480 = vpop.xlane.xlu0 %4479
        %4481 = vmax.xlane.f32.xlu0 %v4025
        %v4482 = vpop.xlane.xlu0 %4481
        %4483 = vmax.xlane.f32.xlu0 %v4029
        %v4484 = vpop.xlane.xlu0 %4483
        %4485 = vmax.xlane.f32.xlu0 %v4033
        %v4486 = vpop.xlane.xlu0 %4485
        %4487 = vmax.xlane.f32.xlu0 %v4037
        %v4488 = vpop.xlane.xlu0 %4487
        %4489 = vmax.xlane.f32.xlu0 %v4041
        %v4490 = vpop.xlane.xlu0 %4489
        %4491 = vmax.xlane.f32.xlu0 %v4045
        %v4492 = vpop.xlane.xlu0 %4491
        %4493 = vmax.xlane.f32.xlu0 %v4049
        %v4494 = vpop.xlane.xlu0 %4493
        %4495 = vmax.xlane.f32.xlu0 %v4053
        %v4496 = vpop.xlane.xlu0 %4495
        %4497 = vmax.xlane.f32.xlu0 %v4057
        %v4498 = vpop.xlane.xlu0 %4497
        %4499 = vmax.xlane.f32.xlu0 %v4061
        %v4500 = vpop.xlane.xlu0 %4499
        %4501 = vmax.xlane.f32.xlu0 %v4065
        %v4502 = vpop.xlane.xlu0 %4501
        %4503 = vmax.xlane.f32.xlu0 %v4069
        %v4504 = vpop.xlane.xlu0 %4503
        %4505 = vmax.xlane.f32.xlu0 %v4073
        %v4506 = vpop.xlane.xlu0 %4505
        %4507 = vmax.xlane.f32.xlu0 %v4077
        %v4508 = vpop.xlane.xlu0 %4507
        %4509 = vmax.xlane.f32.xlu0 %v4081
        %v4510 = vpop.xlane.xlu0 %4509
        %4511 = vmax.xlane.f32.xlu0 %v4085
        %v4512 = vpop.xlane.xlu0 %4511
        %4513 = vmax.xlane.f32.xlu0 %v4089
        %v4514 = vpop.xlane.xlu0 %4513
        %4515 = vmax.xlane.f32.xlu0 %v4093
        %v4516 = vpop.xlane.xlu0 %4515
        %4517 = vmax.xlane.f32.xlu0 %v4097
        %v4518 = vpop.xlane.xlu0 %4517
        %4519 = vmax.xlane.f32.xlu0 %v4101
        %v4520 = vpop.xlane.xlu0 %4519
        %4521 = vmax.xlane.f32.xlu0 %v4105
        %v4522 = vpop.xlane.xlu0 %4521
        %4523 = vmax.xlane.f32.xlu0 %v4109
        %v4524 = vpop.xlane.xlu0 %4523
        %4525 = vmax.xlane.f32.xlu0 %v4113
        %v4526 = vpop.xlane.xlu0 %4525
        %4527 = vmax.xlane.f32.xlu0 %v4117
        %v4528 = vpop.xlane.xlu0 %4527
        %4529 = vmax.xlane.f32.xlu0 %v4121
        %v4530 = vpop.xlane.xlu0 %4529
        %4531 = vmax.xlane.f32.xlu0 %v4125
        %v4532 = vpop.xlane.xlu0 %4531
        %4533 = vmax.xlane.f32.xlu0 %v4129
        %v4534 = vpop.xlane.xlu0 %4533
        %4535 = vmax.xlane.f32.xlu0 %v4133
        %v4536 = vpop.xlane.xlu0 %4535
        %4537 = vmax.xlane.f32.xlu0 %v4137
        %v4538 = vpop.xlane.xlu0 %4537
        %4539 = vmax.xlane.f32.xlu0 %v4141
        %v4540 = vpop.xlane.xlu0 %4539
        %4541 = vmax.xlane.f32.xlu0 %v4145
        %v4542 = vpop.xlane.xlu0 %4541
        %4543 = vmax.xlane.f32.xlu0 %v4149
        %v4544 = vpop.xlane.xlu0 %4543
        %4545 = vmax.xlane.f32.xlu0 %v4153
        %v4546 = vpop.xlane.xlu0 %4545
        %4547 = vmax.xlane.f32.xlu0 %v4157
        %v4548 = vpop.xlane.xlu0 %4547
        %4549 = vmax.xlane.f32.xlu0 %v4161
        %v4550 = vpop.xlane.xlu0 %4549
        %4551 = vmax.xlane.f32.xlu0 %v4165
        %v4552 = vpop.xlane.xlu0 %4551
        %4553 = vmax.xlane.f32.xlu0 %v4169
        %v4554 = vpop.xlane.xlu0 %4553
        %4555 = vmax.xlane.f32.xlu0 %v4173
        %v4556 = vpop.xlane.xlu0 %4555
        %4557 = vmax.xlane.f32.xlu0 %v4177
        %v4558 = vpop.xlane.xlu0 %4557
        %4559 = vmax.xlane.f32.xlu0 %v4181
        %v4560 = vpop.xlane.xlu0 %4559
        %4561 = vmax.xlane.f32.xlu0 %v4185
        %v4562 = vpop.xlane.xlu0 %4561
        %4563 = vmax.xlane.f32.xlu0 %v4189
        %v4564 = vpop.xlane.xlu0 %4563
        %4565 = vmax.xlane.f32.xlu0 %v4193
        %v4566 = vpop.xlane.xlu0 %4565
        %4567 = vmax.xlane.f32.xlu0 %v4197
        %v4568 = vpop.xlane.xlu0 %4567
        %4569 = vmax.xlane.f32.xlu0 %v4201
        %v4570 = vpop.xlane.xlu0 %4569
        %4571 = vmax.xlane.f32.xlu0 %v4205
        %v4572 = vpop.xlane.xlu0 %4571
        %4573 = vmax.xlane.f32.xlu0 %v4209
        %v4574 = vpop.xlane.xlu0 %4573
        %4575 = vmax.xlane.f32.xlu0 %v4213
        %v4576 = vpop.xlane.xlu0 %4575
        %4577 = vmax.xlane.f32.xlu0 %v4217
        %v4578 = vpop.xlane.xlu0 %4577
        %4579 = vmax.xlane.f32.xlu0 %v4221
        %v4580 = vpop.xlane.xlu0 %4579
        %4581 = vmax.xlane.f32.xlu0 %v4225
        %v4582 = vpop.xlane.xlu0 %4581
        %4583 = vmax.xlane.f32.xlu0 %v4229
        %v4584 = vpop.xlane.xlu0 %4583
        %4585 = vmax.xlane.f32.xlu0 %v4233
        %v4586 = vpop.xlane.xlu0 %4585
        %4587 = vmax.xlane.f32.xlu0 %v4237
        %v4588 = vpop.xlane.xlu0 %4587
        %4589 = vmax.xlane.f32.xlu0 %v4241
        %v4590 = vpop.xlane.xlu0 %4589
        %4591 = vmax.xlane.f32.xlu0 %v4245
        %v4592 = vpop.xlane.xlu0 %4591
        %4593 = vmax.xlane.f32.xlu0 %v4249
        %v4594 = vpop.xlane.xlu0 %4593
        %4595 = vmax.xlane.f32.xlu0 %v4253
        %v4596 = vpop.xlane.xlu0 %4595
        %4597 = vmax.xlane.f32.xlu0 %v4257
        %v4598 = vpop.xlane.xlu0 %4597
        %4599 = vmax.xlane.f32.xlu0 %v4261
        %v4600 = vpop.xlane.xlu0 %4599
        %4601 = vmax.xlane.f32.xlu0 %v4265
        %v4602 = vpop.xlane.xlu0 %4601
        %4603 = vmax.xlane.f32.xlu0 %v4269
        %v4604 = vpop.xlane.xlu0 %4603
        %4605 = vmax.xlane.f32.xlu0 %v4273
        %v4606 = vpop.xlane.xlu0 %4605
        %4607 = vmax.xlane.f32.xlu0 %v4277
        %v4608 = vpop.xlane.xlu0 %4607
        %4609 = vmax.xlane.f32.xlu0 %v4281
        %v4610 = vpop.xlane.xlu0 %4609
        %4611 = vmax.xlane.f32.xlu0 %v4285
        %v4612 = vpop.xlane.xlu0 %4611
        %4613 = vmax.xlane.f32.xlu0 %v4289
        %v4614 = vpop.xlane.xlu0 %4613
        %4615 = vmax.xlane.f32.xlu0 %v4293
        %v4616 = vpop.xlane.xlu0 %4615
        %4617 = vmax.xlane.f32.xlu0 %v4297
        %v4618 = vpop.xlane.xlu0 %4617
        %4619 = vmax.xlane.f32.xlu0 %v4301
        %v4620 = vpop.xlane.xlu0 %4619
        %4621 = vmax.xlane.f32.xlu0 %v4305
        %v4622 = vpop.xlane.xlu0 %4621
        %4623 = vmax.xlane.f32.xlu0 %v4309
        %v4624 = vpop.xlane.xlu0 %4623
        %4625 = vmax.xlane.f32.xlu0 %v4313
        %v4626 = vpop.xlane.xlu0 %4625
        %4627 = vmax.xlane.f32.xlu0 %v4317
        %v4628 = vpop.xlane.xlu0 %4627
        %4629 = vmax.xlane.f32.xlu0 %v4321
        %v4630 = vpop.xlane.xlu0 %4629
        %4631 = vmax.xlane.f32.xlu0 %v4325
        %v4632 = vpop.xlane.xlu0 %4631
        %4633 = vmax.xlane.f32.xlu0 %v4329
        %v4634 = vpop.xlane.xlu0 %4633
        %4635 = vmax.xlane.f32.xlu0 %v4333
        %v4636 = vpop.xlane.xlu0 %4635
        %4637 = vmax.xlane.f32.xlu0 %v4337
        %v4638 = vpop.xlane.xlu0 %4637
        %4639 = vmax.xlane.f32.xlu0 %v4341
        %v4640 = vpop.xlane.xlu0 %4639
        %4641 = vmax.xlane.f32.xlu0 %v4345
        %v4642 = vpop.xlane.xlu0 %4641
        %4643 = vmax.xlane.f32.xlu0 %v4349
        %v4644 = vpop.xlane.xlu0 %4643
        %4645 = vmax.xlane.f32.xlu0 %v4353
        %v4646 = vpop.xlane.xlu0 %4645
        %4647 = vmax.xlane.f32.xlu0 %v4357
        %v4648 = vpop.xlane.xlu0 %4647
        %4649 = vmax.xlane.f32.xlu0 %v4361
        %v4650 = vpop.xlane.xlu0 %4649
        %4651 = vmax.xlane.f32.xlu0 %v4365
        %v4652 = vpop.xlane.xlu0 %4651
        %4653 = vmax.xlane.f32.xlu0 %v4369
        %v4654 = vpop.xlane.xlu0 %4653
        %4655 = vmax.xlane.f32.xlu0 %v4373
        %v4656 = vpop.xlane.xlu0 %4655
        %4657 = vmax.xlane.f32.xlu0 %v4377
        %v4658 = vpop.xlane.xlu0 %4657
        %4659 = vmax.xlane.f32.xlu0 %v4381
        %v4660 = vpop.xlane.xlu0 %4659
        %4661 = vmax.xlane.f32.xlu0 %v4385
        %v4662 = vpop.xlane.xlu0 %4661
        %4663 = vmax.xlane.f32.xlu0 %v4389
        %v4664 = vpop.xlane.xlu0 %4663
        %4665 = vmax.xlane.f32.xlu0 %v4393
        %v4666 = vpop.xlane.xlu0 %4665
        %4667 = vmax.xlane.f32.xlu0 %v4397
        %v4668 = vpop.xlane.xlu0 %4667
        %4669 = vmax.xlane.f32.xlu0 %v4401
        %v4670 = vpop.xlane.xlu0 %4669
        %4671 = vmax.xlane.f32.xlu0 %v4405
        %v4672 = vpop.xlane.xlu0 %4671
        %4673 = vmax.xlane.f32.xlu0 %v4409
        %v4674 = vpop.xlane.xlu0 %4673
        %4675 = vmax.xlane.f32.xlu0 %v4413
        %v4676 = vpop.xlane.xlu0 %4675
        %4677 = vmax.xlane.f32.xlu0 %v4417
        %v4678 = vpop.xlane.xlu0 %4677
        %vm4679 = vcmp.eq.s32.totalorder %v4422, 0
        %v4680 = vsel %vm4679, %v4424, 0.0
        %v4681 = vsel %vm4679, %v4426, 0.0
        %v4682 = vsel %vm4679, %v4428, 0.0
        %v4683 = vsel %vm4679, %v4430, 0.0
        %v4684 = vsel %vm4679, %v4432, 0.0
        %v4685 = vsel %vm4679, %v4434, 0.0
        %v4686 = vsel %vm4679, %v4436, 0.0
        %v4687 = vsel %vm4679, %v4438, 0.0
        %v4688 = vsel %vm4679, %v4440, 0.0
        %v4689 = vsel %vm4679, %v4442, 0.0
        %v4690 = vsel %vm4679, %v4444, 0.0
        %v4691 = vsel %vm4679, %v4446, 0.0
        %v4692 = vsel %vm4679, %v4448, 0.0
        %v4693 = vsel %vm4679, %v4450, 0.0
        %v4694 = vsel %vm4679, %v4452, 0.0
        %v4695 = vsel %vm4679, %v4454, 0.0
        %v4696 = vsel %vm4679, %v4456, 0.0
        %v4697 = vsel %vm4679, %v4458, 0.0
        %v4698 = vsel %vm4679, %v4460, 0.0
        %v4699 = vsel %vm4679, %v4462, 0.0
        %v4700 = vsel %vm4679, %v4464, 0.0
        %v4701 = vsel %vm4679, %v4466, 0.0
        %v4702 = vsel %vm4679, %v4468, 0.0
        %v4703 = vsel %vm4679, %v4470, 0.0
        %v4704 = vsel %vm4679, %v4472, 0.0
        %v4705 = vsel %vm4679, %v4474, 0.0
        %v4706 = vsel %vm4679, %v4476, 0.0
        %v4707 = vsel %vm4679, %v4478, 0.0
        %v4708 = vsel %vm4679, %v4480, 0.0
        %v4709 = vsel %vm4679, %v4482, 0.0
        %v4710 = vsel %vm4679, %v4484, 0.0
        %v4711 = vsel %vm4679, %v4486, 0.0
        %v4712 = vsel %vm4679, %v4488, 0.0
        %v4713 = vsel %vm4679, %v4490, 0.0
        %v4714 = vsel %vm4679, %v4492, 0.0
        %v4715 = vsel %vm4679, %v4494, 0.0
        %v4716 = vsel %vm4679, %v4496, 0.0
        %v4717 = vsel %vm4679, %v4498, 0.0
        %v4718 = vsel %vm4679, %v4500, 0.0
        %v4719 = vsel %vm4679, %v4502, 0.0
        %v4720 = vsel %vm4679, %v4504, 0.0
        %v4721 = vsel %vm4679, %v4506, 0.0
        %v4722 = vsel %vm4679, %v4508, 0.0
        %v4723 = vsel %vm4679, %v4510, 0.0
        %v4724 = vsel %vm4679, %v4512, 0.0
        %v4725 = vsel %vm4679, %v4514, 0.0
        %v4726 = vsel %vm4679, %v4516, 0.0
        %v4727 = vsel %vm4679, %v4518, 0.0
        %v4728 = vsel %vm4679, %v4520, 0.0
        %v4729 = vsel %vm4679, %v4522, 0.0
        %v4730 = vsel %vm4679, %v4524, 0.0
        %v4731 = vsel %vm4679, %v4526, 0.0
        %v4732 = vsel %vm4679, %v4528, 0.0
        %v4733 = vsel %vm4679, %v4530, 0.0
        %v4734 = vsel %vm4679, %v4532, 0.0
        %v4735 = vsel %vm4679, %v4534, 0.0
        %v4736 = vsel %vm4679, %v4536, 0.0
        %v4737 = vsel %vm4679, %v4538, 0.0
        %v4738 = vsel %vm4679, %v4540, 0.0
        %v4739 = vsel %vm4679, %v4542, 0.0
        %v4740 = vsel %vm4679, %v4544, 0.0
        %v4741 = vsel %vm4679, %v4546, 0.0
        %v4742 = vsel %vm4679, %v4548, 0.0
        %v4743 = vsel %vm4679, %v4550, 0.0
        %v4744 = vsel %vm4679, %v4552, 0.0
        %v4745 = vsel %vm4679, %v4554, 0.0
        %v4746 = vsel %vm4679, %v4556, 0.0
        %v4747 = vsel %vm4679, %v4558, 0.0
        %v4748 = vsel %vm4679, %v4560, 0.0
        %v4749 = vsel %vm4679, %v4562, 0.0
        %v4750 = vsel %vm4679, %v4564, 0.0
        %v4751 = vsel %vm4679, %v4566, 0.0
        %v4752 = vsel %vm4679, %v4568, 0.0
        %v4753 = vsel %vm4679, %v4570, 0.0
        %v4754 = vsel %vm4679, %v4572, 0.0
        %v4755 = vsel %vm4679, %v4574, 0.0
        %v4756 = vsel %vm4679, %v4576, 0.0
        %v4757 = vsel %vm4679, %v4578, 0.0
        %v4758 = vsel %vm4679, %v4580, 0.0
        %v4759 = vsel %vm4679, %v4582, 0.0
        %v4760 = vsel %vm4679, %v4584, 0.0
        %v4761 = vsel %vm4679, %v4586, 0.0
        %v4762 = vsel %vm4679, %v4588, 0.0
        %v4763 = vsel %vm4679, %v4590, 0.0
        %v4764 = vsel %vm4679, %v4592, 0.0
        %v4765 = vsel %vm4679, %v4594, 0.0
        %v4766 = vsel %vm4679, %v4596, 0.0
        %v4767 = vsel %vm4679, %v4598, 0.0
        %v4768 = vsel %vm4679, %v4600, 0.0
        %v4769 = vsel %vm4679, %v4602, 0.0
        %v4770 = vsel %vm4679, %v4604, 0.0
        %v4771 = vsel %vm4679, %v4606, 0.0
        %v4772 = vsel %vm4679, %v4608, 0.0
        %v4773 = vsel %vm4679, %v4610, 0.0
        %v4774 = vsel %vm4679, %v4612, 0.0
        %v4775 = vsel %vm4679, %v4614, 0.0
        %v4776 = vsel %vm4679, %v4616, 0.0
        %v4777 = vsel %vm4679, %v4618, 0.0
        %v4778 = vsel %vm4679, %v4620, 0.0
        %v4779 = vsel %vm4679, %v4622, 0.0
        %v4780 = vsel %vm4679, %v4624, 0.0
        %v4781 = vsel %vm4679, %v4626, 0.0
        %v4782 = vsel %vm4679, %v4628, 0.0
        %v4783 = vsel %vm4679, %v4630, 0.0
        %v4784 = vsel %vm4679, %v4632, 0.0
        %v4785 = vsel %vm4679, %v4634, 0.0
        %v4786 = vsel %vm4679, %v4636, 0.0
        %v4787 = vsel %vm4679, %v4638, 0.0
        %v4788 = vsel %vm4679, %v4640, 0.0
        %v4789 = vsel %vm4679, %v4642, 0.0
        %v4790 = vsel %vm4679, %v4644, 0.0
        %v4791 = vsel %vm4679, %v4646, 0.0
        %v4792 = vsel %vm4679, %v4648, 0.0
        %v4793 = vsel %vm4679, %v4650, 0.0
        %v4794 = vsel %vm4679, %v4652, 0.0
        %v4795 = vsel %vm4679, %v4654, 0.0
        %v4796 = vsel %vm4679, %v4656, 0.0
        %v4797 = vsel %vm4679, %v4658, 0.0
        %v4798 = vsel %vm4679, %v4660, 0.0
        %v4799 = vsel %vm4679, %v4662, 0.0
        %v4800 = vsel %vm4679, %v4664, 0.0
        %v4801 = vsel %vm4679, %v4666, 0.0
        %v4802 = vsel %vm4679, %v4668, 0.0
        %v4803 = vsel %vm4679, %v4670, 0.0
        %v4804 = vsel %vm4679, %v4672, 0.0
        %v4805 = vsel %vm4679, %v4674, 0.0
        %v4806 = vsel %vm4679, %v4676, 0.0
        %v4807 = vsel %vm4679, %v4678, 0.0
        %4808 = vmax.xlane.f32.xlu0 %v3910
        %v4809 = vpop.xlane.xlu0 %4808
        %4810 = vmax.xlane.f32.xlu0 %v3914
        %v4811 = vpop.xlane.xlu0 %4810
        %4812 = vmax.xlane.f32.xlu0 %v3918
        %v4813 = vpop.xlane.xlu0 %4812
        %4814 = vmax.xlane.f32.xlu0 %v3922
        %v4815 = vpop.xlane.xlu0 %4814
        %4816 = vmax.xlane.f32.xlu0 %v3926
        %v4817 = vpop.xlane.xlu0 %4816
        %4818 = vmax.xlane.f32.xlu0 %v3930
        %v4819 = vpop.xlane.xlu0 %4818
        %4820 = vmax.xlane.f32.xlu0 %v3934
        %v4821 = vpop.xlane.xlu0 %4820
        %4822 = vmax.xlane.f32.xlu0 %v3938
        %v4823 = vpop.xlane.xlu0 %4822
        %4824 = vmax.xlane.f32.xlu0 %v3942
        %v4825 = vpop.xlane.xlu0 %4824
        %4826 = vmax.xlane.f32.xlu0 %v3946
        %v4827 = vpop.xlane.xlu0 %4826
        %4828 = vmax.xlane.f32.xlu0 %v3950
        %v4829 = vpop.xlane.xlu0 %4828
        %4830 = vmax.xlane.f32.xlu0 %v3954
        %v4831 = vpop.xlane.xlu0 %4830
        %4832 = vmax.xlane.f32.xlu0 %v3958
        %v4833 = vpop.xlane.xlu0 %4832
        %4834 = vmax.xlane.f32.xlu0 %v3962
        %v4835 = vpop.xlane.xlu0 %4834
        %4836 = vmax.xlane.f32.xlu0 %v3966
        %v4837 = vpop.xlane.xlu0 %4836
        %4838 = vmax.xlane.f32.xlu0 %v3970
        %v4839 = vpop.xlane.xlu0 %4838
        %4840 = vmax.xlane.f32.xlu0 %v3974
        %v4841 = vpop.xlane.xlu0 %4840
        %4842 = vmax.xlane.f32.xlu0 %v3978
        %v4843 = vpop.xlane.xlu0 %4842
        %4844 = vmax.xlane.f32.xlu0 %v3982
        %v4845 = vpop.xlane.xlu0 %4844
        %4846 = vmax.xlane.f32.xlu0 %v3986
        %v4847 = vpop.xlane.xlu0 %4846
        %4848 = vmax.xlane.f32.xlu0 %v3990
        %v4849 = vpop.xlane.xlu0 %4848
        %4850 = vmax.xlane.f32.xlu0 %v3994
        %v4851 = vpop.xlane.xlu0 %4850
        %4852 = vmax.xlane.f32.xlu0 %v3998
        %v4853 = vpop.xlane.xlu0 %4852
        %4854 = vmax.xlane.f32.xlu0 %v4002
        %v4855 = vpop.xlane.xlu0 %4854
        %4856 = vmax.xlane.f32.xlu0 %v4006
        %v4857 = vpop.xlane.xlu0 %4856
        %4858 = vmax.xlane.f32.xlu0 %v4010
        %v4859 = vpop.xlane.xlu0 %4858
        %4860 = vmax.xlane.f32.xlu0 %v4014
        %v4861 = vpop.xlane.xlu0 %4860
        %4862 = vmax.xlane.f32.xlu0 %v4018
        %v4863 = vpop.xlane.xlu0 %4862
        %4864 = vmax.xlane.f32.xlu0 %v4022
        %v4865 = vpop.xlane.xlu0 %4864
        %4866 = vmax.xlane.f32.xlu0 %v4026
        %v4867 = vpop.xlane.xlu0 %4866
        %4868 = vmax.xlane.f32.xlu0 %v4030
        %v4869 = vpop.xlane.xlu0 %4868
        %4870 = vmax.xlane.f32.xlu0 %v4034
        %v4871 = vpop.xlane.xlu0 %4870
        %4872 = vmax.xlane.f32.xlu0 %v4038
        %v4873 = vpop.xlane.xlu0 %4872
        %4874 = vmax.xlane.f32.xlu0 %v4042
        %v4875 = vpop.xlane.xlu0 %4874
        %4876 = vmax.xlane.f32.xlu0 %v4046
        %v4877 = vpop.xlane.xlu0 %4876
        %4878 = vmax.xlane.f32.xlu0 %v4050
        %v4879 = vpop.xlane.xlu0 %4878
        %4880 = vmax.xlane.f32.xlu0 %v4054
        %v4881 = vpop.xlane.xlu0 %4880
        %4882 = vmax.xlane.f32.xlu0 %v4058
        %v4883 = vpop.xlane.xlu0 %4882
        %4884 = vmax.xlane.f32.xlu0 %v4062
        %v4885 = vpop.xlane.xlu0 %4884
        %4886 = vmax.xlane.f32.xlu0 %v4066
        %v4887 = vpop.xlane.xlu0 %4886
        %4888 = vmax.xlane.f32.xlu0 %v4070
        %v4889 = vpop.xlane.xlu0 %4888
        %4890 = vmax.xlane.f32.xlu0 %v4074
        %v4891 = vpop.xlane.xlu0 %4890
        %4892 = vmax.xlane.f32.xlu0 %v4078
        %v4893 = vpop.xlane.xlu0 %4892
        %4894 = vmax.xlane.f32.xlu0 %v4082
        %v4895 = vpop.xlane.xlu0 %4894
        %4896 = vmax.xlane.f32.xlu0 %v4086
        %v4897 = vpop.xlane.xlu0 %4896
        %4898 = vmax.xlane.f32.xlu0 %v4090
        %v4899 = vpop.xlane.xlu0 %4898
        %4900 = vmax.xlane.f32.xlu0 %v4094
        %v4901 = vpop.xlane.xlu0 %4900
        %4902 = vmax.xlane.f32.xlu0 %v4098
        %v4903 = vpop.xlane.xlu0 %4902
        %4904 = vmax.xlane.f32.xlu0 %v4102
        %v4905 = vpop.xlane.xlu0 %4904
        %4906 = vmax.xlane.f32.xlu0 %v4106
        %v4907 = vpop.xlane.xlu0 %4906
        %4908 = vmax.xlane.f32.xlu0 %v4110
        %v4909 = vpop.xlane.xlu0 %4908
        %4910 = vmax.xlane.f32.xlu0 %v4114
        %v4911 = vpop.xlane.xlu0 %4910
        %4912 = vmax.xlane.f32.xlu0 %v4118
        %v4913 = vpop.xlane.xlu0 %4912
        %4914 = vmax.xlane.f32.xlu0 %v4122
        %v4915 = vpop.xlane.xlu0 %4914
        %4916 = vmax.xlane.f32.xlu0 %v4126
        %v4917 = vpop.xlane.xlu0 %4916
        %4918 = vmax.xlane.f32.xlu0 %v4130
        %v4919 = vpop.xlane.xlu0 %4918
        %4920 = vmax.xlane.f32.xlu0 %v4134
        %v4921 = vpop.xlane.xlu0 %4920
        %4922 = vmax.xlane.f32.xlu0 %v4138
        %v4923 = vpop.xlane.xlu0 %4922
        %4924 = vmax.xlane.f32.xlu0 %v4142
        %v4925 = vpop.xlane.xlu0 %4924
        %4926 = vmax.xlane.f32.xlu0 %v4146
        %v4927 = vpop.xlane.xlu0 %4926
        %4928 = vmax.xlane.f32.xlu0 %v4150
        %v4929 = vpop.xlane.xlu0 %4928
        %4930 = vmax.xlane.f32.xlu0 %v4154
        %v4931 = vpop.xlane.xlu0 %4930
        %4932 = vmax.xlane.f32.xlu0 %v4158
        %v4933 = vpop.xlane.xlu0 %4932
        %4934 = vmax.xlane.f32.xlu0 %v4162
        %v4935 = vpop.xlane.xlu0 %4934
        %4936 = vmax.xlane.f32.xlu0 %v4166
        %v4937 = vpop.xlane.xlu0 %4936
        %4938 = vmax.xlane.f32.xlu0 %v4170
        %v4939 = vpop.xlane.xlu0 %4938
        %4940 = vmax.xlane.f32.xlu0 %v4174
        %v4941 = vpop.xlane.xlu0 %4940
        %4942 = vmax.xlane.f32.xlu0 %v4178
        %v4943 = vpop.xlane.xlu0 %4942
        %4944 = vmax.xlane.f32.xlu0 %v4182
        %v4945 = vpop.xlane.xlu0 %4944
        %4946 = vmax.xlane.f32.xlu0 %v4186
        %v4947 = vpop.xlane.xlu0 %4946
        %4948 = vmax.xlane.f32.xlu0 %v4190
        %v4949 = vpop.xlane.xlu0 %4948
        %4950 = vmax.xlane.f32.xlu0 %v4194
        %v4951 = vpop.xlane.xlu0 %4950
        %4952 = vmax.xlane.f32.xlu0 %v4198
        %v4953 = vpop.xlane.xlu0 %4952
        %4954 = vmax.xlane.f32.xlu0 %v4202
        %v4955 = vpop.xlane.xlu0 %4954
        %4956 = vmax.xlane.f32.xlu0 %v4206
        %v4957 = vpop.xlane.xlu0 %4956
        %4958 = vmax.xlane.f32.xlu0 %v4210
        %v4959 = vpop.xlane.xlu0 %4958
        %4960 = vmax.xlane.f32.xlu0 %v4214
        %v4961 = vpop.xlane.xlu0 %4960
        %4962 = vmax.xlane.f32.xlu0 %v4218
        %v4963 = vpop.xlane.xlu0 %4962
        %4964 = vmax.xlane.f32.xlu0 %v4222
        %v4965 = vpop.xlane.xlu0 %4964
        %4966 = vmax.xlane.f32.xlu0 %v4226
        %v4967 = vpop.xlane.xlu0 %4966
        %4968 = vmax.xlane.f32.xlu0 %v4230
        %v4969 = vpop.xlane.xlu0 %4968
        %4970 = vmax.xlane.f32.xlu0 %v4234
        %v4971 = vpop.xlane.xlu0 %4970
        %4972 = vmax.xlane.f32.xlu0 %v4238
        %v4973 = vpop.xlane.xlu0 %4972
        %4974 = vmax.xlane.f32.xlu0 %v4242
        %v4975 = vpop.xlane.xlu0 %4974
        %4976 = vmax.xlane.f32.xlu0 %v4246
        %v4977 = vpop.xlane.xlu0 %4976
        %4978 = vmax.xlane.f32.xlu0 %v4250
        %v4979 = vpop.xlane.xlu0 %4978
        %4980 = vmax.xlane.f32.xlu0 %v4254
        %v4981 = vpop.xlane.xlu0 %4980
        %4982 = vmax.xlane.f32.xlu0 %v4258
        %v4983 = vpop.xlane.xlu0 %4982
        %4984 = vmax.xlane.f32.xlu0 %v4262
        %v4985 = vpop.xlane.xlu0 %4984
        %4986 = vmax.xlane.f32.xlu0 %v4266
        %v4987 = vpop.xlane.xlu0 %4986
        %4988 = vmax.xlane.f32.xlu0 %v4270
        %v4989 = vpop.xlane.xlu0 %4988
        %4990 = vmax.xlane.f32.xlu0 %v4274
        %v4991 = vpop.xlane.xlu0 %4990
        %4992 = vmax.xlane.f32.xlu0 %v4278
        %v4993 = vpop.xlane.xlu0 %4992
        %4994 = vmax.xlane.f32.xlu0 %v4282
        %v4995 = vpop.xlane.xlu0 %4994
        %4996 = vmax.xlane.f32.xlu0 %v4286
        %v4997 = vpop.xlane.xlu0 %4996
        %4998 = vmax.xlane.f32.xlu0 %v4290
        %v4999 = vpop.xlane.xlu0 %4998
        %5000 = vmax.xlane.f32.xlu0 %v4294
        %v5001 = vpop.xlane.xlu0 %5000
        %5002 = vmax.xlane.f32.xlu0 %v4298
        %v5003 = vpop.xlane.xlu0 %5002
        %5004 = vmax.xlane.f32.xlu0 %v4302
        %v5005 = vpop.xlane.xlu0 %5004
        %5006 = vmax.xlane.f32.xlu0 %v4306
        %v5007 = vpop.xlane.xlu0 %5006
        %5008 = vmax.xlane.f32.xlu0 %v4310
        %v5009 = vpop.xlane.xlu0 %5008
        %5010 = vmax.xlane.f32.xlu0 %v4314
        %v5011 = vpop.xlane.xlu0 %5010
        %5012 = vmax.xlane.f32.xlu0 %v4318
        %v5013 = vpop.xlane.xlu0 %5012
        %5014 = vmax.xlane.f32.xlu0 %v4322
        %v5015 = vpop.xlane.xlu0 %5014
        %5016 = vmax.xlane.f32.xlu0 %v4326
        %v5017 = vpop.xlane.xlu0 %5016
        %5018 = vmax.xlane.f32.xlu0 %v4330
        %v5019 = vpop.xlane.xlu0 %5018
        %5020 = vmax.xlane.f32.xlu0 %v4334
        %v5021 = vpop.xlane.xlu0 %5020
        %5022 = vmax.xlane.f32.xlu0 %v4338
        %v5023 = vpop.xlane.xlu0 %5022
        %5024 = vmax.xlane.f32.xlu0 %v4342
        %v5025 = vpop.xlane.xlu0 %5024
        %5026 = vmax.xlane.f32.xlu0 %v4346
        %v5027 = vpop.xlane.xlu0 %5026
        %5028 = vmax.xlane.f32.xlu0 %v4350
        %v5029 = vpop.xlane.xlu0 %5028
        %5030 = vmax.xlane.f32.xlu0 %v4354
        %v5031 = vpop.xlane.xlu0 %5030
        %5032 = vmax.xlane.f32.xlu0 %v4358
        %v5033 = vpop.xlane.xlu0 %5032
        %5034 = vmax.xlane.f32.xlu0 %v4362
        %v5035 = vpop.xlane.xlu0 %5034
        %5036 = vmax.xlane.f32.xlu0 %v4366
        %v5037 = vpop.xlane.xlu0 %5036
        %5038 = vmax.xlane.f32.xlu0 %v4370
        %v5039 = vpop.xlane.xlu0 %5038
        %5040 = vmax.xlane.f32.xlu0 %v4374
        %v5041 = vpop.xlane.xlu0 %5040
        %5042 = vmax.xlane.f32.xlu0 %v4378
        %v5043 = vpop.xlane.xlu0 %5042
        %5044 = vmax.xlane.f32.xlu0 %v4382
        %v5045 = vpop.xlane.xlu0 %5044
        %5046 = vmax.xlane.f32.xlu0 %v4386
        %v5047 = vpop.xlane.xlu0 %5046
        %5048 = vmax.xlane.f32.xlu0 %v4390
        %v5049 = vpop.xlane.xlu0 %5048
        %5050 = vmax.xlane.f32.xlu0 %v4394
        %v5051 = vpop.xlane.xlu0 %5050
        %5052 = vmax.xlane.f32.xlu0 %v4398
        %v5053 = vpop.xlane.xlu0 %5052
        %5054 = vmax.xlane.f32.xlu0 %v4402
        %v5055 = vpop.xlane.xlu0 %5054
        %5056 = vmax.xlane.f32.xlu0 %v4406
        %v5057 = vpop.xlane.xlu0 %5056
        %5058 = vmax.xlane.f32.xlu0 %v4410
        %v5059 = vpop.xlane.xlu0 %5058
        %5060 = vmax.xlane.f32.xlu0 %v4414
        %v5061 = vpop.xlane.xlu0 %5060
        %5062 = vmax.xlane.f32.xlu0 %v4418
        %v5063 = vpop.xlane.xlu0 %5062
        %vm5064 = vcmp.eq.s32.totalorder %v4422, 1
        %v5065 = vsel %vm5064, %v4809, %v4680
        %v5066 = vsel %vm5064, %v4811, %v4681
        %v5067 = vsel %vm5064, %v4813, %v4682
        %v5068 = vsel %vm5064, %v4815, %v4683
        %v5069 = vsel %vm5064, %v4817, %v4684
        %v5070 = vsel %vm5064, %v4819, %v4685
        %v5071 = vsel %vm5064, %v4821, %v4686
        %v5072 = vsel %vm5064, %v4823, %v4687
        %v5073 = vsel %vm5064, %v4825, %v4688
        %v5074 = vsel %vm5064, %v4827, %v4689
        %v5075 = vsel %vm5064, %v4829, %v4690
        %v5076 = vsel %vm5064, %v4831, %v4691
        %v5077 = vsel %vm5064, %v4833, %v4692
        %v5078 = vsel %vm5064, %v4835, %v4693
        %v5079 = vsel %vm5064, %v4837, %v4694
        %v5080 = vsel %vm5064, %v4839, %v4695
        %v5081 = vsel %vm5064, %v4841, %v4696
        %v5082 = vsel %vm5064, %v4843, %v4697
        %v5083 = vsel %vm5064, %v4845, %v4698
        %v5084 = vsel %vm5064, %v4847, %v4699
        %v5085 = vsel %vm5064, %v4849, %v4700
        %v5086 = vsel %vm5064, %v4851, %v4701
        %v5087 = vsel %vm5064, %v4853, %v4702
        %v5088 = vsel %vm5064, %v4855, %v4703
        %v5089 = vsel %vm5064, %v4857, %v4704
        %v5090 = vsel %vm5064, %v4859, %v4705
        %v5091 = vsel %vm5064, %v4861, %v4706
        %v5092 = vsel %vm5064, %v4863, %v4707
        %v5093 = vsel %vm5064, %v4865, %v4708
        %v5094 = vsel %vm5064, %v4867, %v4709
        %v5095 = vsel %vm5064, %v4869, %v4710
        %v5096 = vsel %vm5064, %v4871, %v4711
        %v5097 = vsel %vm5064, %v4873, %v4712
        %v5098 = vsel %vm5064, %v4875, %v4713
        %v5099 = vsel %vm5064, %v4877, %v4714
        %v5100 = vsel %vm5064, %v4879, %v4715
        %v5101 = vsel %vm5064, %v4881, %v4716
        %v5102 = vsel %vm5064, %v4883, %v4717
        %v5103 = vsel %vm5064, %v4885, %v4718
        %v5104 = vsel %vm5064, %v4887, %v4719
        %v5105 = vsel %vm5064, %v4889, %v4720
        %v5106 = vsel %vm5064, %v4891, %v4721
        %v5107 = vsel %vm5064, %v4893, %v4722
        %v5108 = vsel %vm5064, %v4895, %v4723
        %v5109 = vsel %vm5064, %v4897, %v4724
        %v5110 = vsel %vm5064, %v4899, %v4725
        %v5111 = vsel %vm5064, %v4901, %v4726
        %v5112 = vsel %vm5064, %v4903, %v4727
        %v5113 = vsel %vm5064, %v4905, %v4728
        %v5114 = vsel %vm5064, %v4907, %v4729
        %v5115 = vsel %vm5064, %v4909, %v4730
        %v5116 = vsel %vm5064, %v4911, %v4731
        %v5117 = vsel %vm5064, %v4913, %v4732
        %v5118 = vsel %vm5064, %v4915, %v4733
        %v5119 = vsel %vm5064, %v4917, %v4734
        %v5120 = vsel %vm5064, %v4919, %v4735
        %v5121 = vsel %vm5064, %v4921, %v4736
        %v5122 = vsel %vm5064, %v4923, %v4737
        %v5123 = vsel %vm5064, %v4925, %v4738
        %v5124 = vsel %vm5064, %v4927, %v4739
        %v5125 = vsel %vm5064, %v4929, %v4740
        %v5126 = vsel %vm5064, %v4931, %v4741
        %v5127 = vsel %vm5064, %v4933, %v4742
        %v5128 = vsel %vm5064, %v4935, %v4743
        %v5129 = vsel %vm5064, %v4937, %v4744
        %v5130 = vsel %vm5064, %v4939, %v4745
        %v5131 = vsel %vm5064, %v4941, %v4746
        %v5132 = vsel %vm5064, %v4943, %v4747
        %v5133 = vsel %vm5064, %v4945, %v4748
        %v5134 = vsel %vm5064, %v4947, %v4749
        %v5135 = vsel %vm5064, %v4949, %v4750
        %v5136 = vsel %vm5064, %v4951, %v4751
        %v5137 = vsel %vm5064, %v4953, %v4752
        %v5138 = vsel %vm5064, %v4955, %v4753
        %v5139 = vsel %vm5064, %v4957, %v4754
        %v5140 = vsel %vm5064, %v4959, %v4755
        %v5141 = vsel %vm5064, %v4961, %v4756
        %v5142 = vsel %vm5064, %v4963, %v4757
        %v5143 = vsel %vm5064, %v4965, %v4758
        %v5144 = vsel %vm5064, %v4967, %v4759
        %v5145 = vsel %vm5064, %v4969, %v4760
        %v5146 = vsel %vm5064, %v4971, %v4761
        %v5147 = vsel %vm5064, %v4973, %v4762
        %v5148 = vsel %vm5064, %v4975, %v4763
        %v5149 = vsel %vm5064, %v4977, %v4764
        %v5150 = vsel %vm5064, %v4979, %v4765
        %v5151 = vsel %vm5064, %v4981, %v4766
        %v5152 = vsel %vm5064, %v4983, %v4767
        %v5153 = vsel %vm5064, %v4985, %v4768
        %v5154 = vsel %vm5064, %v4987, %v4769
        %v5155 = vsel %vm5064, %v4989, %v4770
        %v5156 = vsel %vm5064, %v4991, %v4771
        %v5157 = vsel %vm5064, %v4993, %v4772
        %v5158 = vsel %vm5064, %v4995, %v4773
        %v5159 = vsel %vm5064, %v4997, %v4774
        %v5160 = vsel %vm5064, %v4999, %v4775
        %v5161 = vsel %vm5064, %v5001, %v4776
        %v5162 = vsel %vm5064, %v5003, %v4777
        %v5163 = vsel %vm5064, %v5005, %v4778
        %v5164 = vsel %vm5064, %v5007, %v4779
        %v5165 = vsel %vm5064, %v5009, %v4780
        %v5166 = vsel %vm5064, %v5011, %v4781
        %v5167 = vsel %vm5064, %v5013, %v4782
        %v5168 = vsel %vm5064, %v5015, %v4783
        %v5169 = vsel %vm5064, %v5017, %v4784
        %v5170 = vsel %vm5064, %v5019, %v4785
        %v5171 = vsel %vm5064, %v5021, %v4786
        %v5172 = vsel %vm5064, %v5023, %v4787
        %v5173 = vsel %vm5064, %v5025, %v4788
        %v5174 = vsel %vm5064, %v5027, %v4789
        %v5175 = vsel %vm5064, %v5029, %v4790
        %v5176 = vsel %vm5064, %v5031, %v4791
        %v5177 = vsel %vm5064, %v5033, %v4792
        %v5178 = vsel %vm5064, %v5035, %v4793
        %v5179 = vsel %vm5064, %v5037, %v4794
        %v5180 = vsel %vm5064, %v5039, %v4795
        %v5181 = vsel %vm5064, %v5041, %v4796
        %v5182 = vsel %vm5064, %v5043, %v4797
        %v5183 = vsel %vm5064, %v5045, %v4798
        %v5184 = vsel %vm5064, %v5047, %v4799
        %v5185 = vsel %vm5064, %v5049, %v4800
        %v5186 = vsel %vm5064, %v5051, %v4801
        %v5187 = vsel %vm5064, %v5053, %v4802
        %v5188 = vsel %vm5064, %v5055, %v4803
        %v5189 = vsel %vm5064, %v5057, %v4804
        %v5190 = vsel %vm5064, %v5059, %v4805
        %v5191 = vsel %vm5064, %v5061, %v4806
        %v5192 = vsel %vm5064, %v5063, %v4807
        %5193 = vmax.xlane.f32.xlu0 %v3911
        %v5194 = vpop.xlane.xlu0 %5193
        %5195 = vmax.xlane.f32.xlu0 %v3915
        %v5196 = vpop.xlane.xlu0 %5195
        %5197 = vmax.xlane.f32.xlu0 %v3919
        %v5198 = vpop.xlane.xlu0 %5197
        %5199 = vmax.xlane.f32.xlu0 %v3923
        %v5200 = vpop.xlane.xlu0 %5199
        %5201 = vmax.xlane.f32.xlu0 %v3927
        %v5202 = vpop.xlane.xlu0 %5201
        %5203 = vmax.xlane.f32.xlu0 %v3931
        %v5204 = vpop.xlane.xlu0 %5203
        %5205 = vmax.xlane.f32.xlu0 %v3935
        %v5206 = vpop.xlane.xlu0 %5205
        %5207 = vmax.xlane.f32.xlu0 %v3939
        %v5208 = vpop.xlane.xlu0 %5207
        %5209 = vmax.xlane.f32.xlu0 %v3943
        %v5210 = vpop.xlane.xlu0 %5209
        %5211 = vmax.xlane.f32.xlu0 %v3947
        %v5212 = vpop.xlane.xlu0 %5211
        %5213 = vmax.xlane.f32.xlu0 %v3951
        %v5214 = vpop.xlane.xlu0 %5213
        %5215 = vmax.xlane.f32.xlu0 %v3955
        %v5216 = vpop.xlane.xlu0 %5215
        %5217 = vmax.xlane.f32.xlu0 %v3959
        %v5218 = vpop.xlane.xlu0 %5217
        %5219 = vmax.xlane.f32.xlu0 %v3963
        %v5220 = vpop.xlane.xlu0 %5219
        %5221 = vmax.xlane.f32.xlu0 %v3967
        %v5222 = vpop.xlane.xlu0 %5221
        %5223 = vmax.xlane.f32.xlu0 %v3971
        %v5224 = vpop.xlane.xlu0 %5223
        %5225 = vmax.xlane.f32.xlu0 %v3975
        %v5226 = vpop.xlane.xlu0 %5225
        %5227 = vmax.xlane.f32.xlu0 %v3979
        %v5228 = vpop.xlane.xlu0 %5227
        %5229 = vmax.xlane.f32.xlu0 %v3983
        %v5230 = vpop.xlane.xlu0 %5229
        %5231 = vmax.xlane.f32.xlu0 %v3987
        %v5232 = vpop.xlane.xlu0 %5231
        %5233 = vmax.xlane.f32.xlu0 %v3991
        %v5234 = vpop.xlane.xlu0 %5233
        %5235 = vmax.xlane.f32.xlu0 %v3995
        %v5236 = vpop.xlane.xlu0 %5235
        %5237 = vmax.xlane.f32.xlu0 %v3999
        %v5238 = vpop.xlane.xlu0 %5237
        %5239 = vmax.xlane.f32.xlu0 %v4003
        %v5240 = vpop.xlane.xlu0 %5239
        %5241 = vmax.xlane.f32.xlu0 %v4007
        %v5242 = vpop.xlane.xlu0 %5241
        %5243 = vmax.xlane.f32.xlu0 %v4011
        %v5244 = vpop.xlane.xlu0 %5243
        %5245 = vmax.xlane.f32.xlu0 %v4015
        %v5246 = vpop.xlane.xlu0 %5245
        %5247 = vmax.xlane.f32.xlu0 %v4019
        %v5248 = vpop.xlane.xlu0 %5247
        %5249 = vmax.xlane.f32.xlu0 %v4023
        %v5250 = vpop.xlane.xlu0 %5249
        %5251 = vmax.xlane.f32.xlu0 %v4027
        %v5252 = vpop.xlane.xlu0 %5251
        %5253 = vmax.xlane.f32.xlu0 %v4031
        %v5254 = vpop.xlane.xlu0 %5253
        %5255 = vmax.xlane.f32.xlu0 %v4035
        %v5256 = vpop.xlane.xlu0 %5255
        %5257 = vmax.xlane.f32.xlu0 %v4039
        %v5258 = vpop.xlane.xlu0 %5257
        %5259 = vmax.xlane.f32.xlu0 %v4043
        %v5260 = vpop.xlane.xlu0 %5259
        %5261 = vmax.xlane.f32.xlu0 %v4047
        %v5262 = vpop.xlane.xlu0 %5261
        %5263 = vmax.xlane.f32.xlu0 %v4051
        %v5264 = vpop.xlane.xlu0 %5263
        %5265 = vmax.xlane.f32.xlu0 %v4055
        %v5266 = vpop.xlane.xlu0 %5265
        %5267 = vmax.xlane.f32.xlu0 %v4059
        %v5268 = vpop.xlane.xlu0 %5267
        %5269 = vmax.xlane.f32.xlu0 %v4063
        %v5270 = vpop.xlane.xlu0 %5269
        %5271 = vmax.xlane.f32.xlu0 %v4067
        %v5272 = vpop.xlane.xlu0 %5271
        %5273 = vmax.xlane.f32.xlu0 %v4071
        %v5274 = vpop.xlane.xlu0 %5273
        %5275 = vmax.xlane.f32.xlu0 %v4075
        %v5276 = vpop.xlane.xlu0 %5275
        %5277 = vmax.xlane.f32.xlu0 %v4079
        %v5278 = vpop.xlane.xlu0 %5277
        %5279 = vmax.xlane.f32.xlu0 %v4083
        %v5280 = vpop.xlane.xlu0 %5279
        %5281 = vmax.xlane.f32.xlu0 %v4087
        %v5282 = vpop.xlane.xlu0 %5281
        %5283 = vmax.xlane.f32.xlu0 %v4091
        %v5284 = vpop.xlane.xlu0 %5283
        %5285 = vmax.xlane.f32.xlu0 %v4095
        %v5286 = vpop.xlane.xlu0 %5285
        %5287 = vmax.xlane.f32.xlu0 %v4099
        %v5288 = vpop.xlane.xlu0 %5287
        %5289 = vmax.xlane.f32.xlu0 %v4103
        %v5290 = vpop.xlane.xlu0 %5289
        %5291 = vmax.xlane.f32.xlu0 %v4107
        %v5292 = vpop.xlane.xlu0 %5291
        %5293 = vmax.xlane.f32.xlu0 %v4111
        %v5294 = vpop.xlane.xlu0 %5293
        %5295 = vmax.xlane.f32.xlu0 %v4115
        %v5296 = vpop.xlane.xlu0 %5295
        %5297 = vmax.xlane.f32.xlu0 %v4119
        %v5298 = vpop.xlane.xlu0 %5297
        %5299 = vmax.xlane.f32.xlu0 %v4123
        %v5300 = vpop.xlane.xlu0 %5299
        %5301 = vmax.xlane.f32.xlu0 %v4127
        %v5302 = vpop.xlane.xlu0 %5301
        %5303 = vmax.xlane.f32.xlu0 %v4131
        %v5304 = vpop.xlane.xlu0 %5303
        %5305 = vmax.xlane.f32.xlu0 %v4135
        %v5306 = vpop.xlane.xlu0 %5305
        %5307 = vmax.xlane.f32.xlu0 %v4139
        %v5308 = vpop.xlane.xlu0 %5307
        %5309 = vmax.xlane.f32.xlu0 %v4143
        %v5310 = vpop.xlane.xlu0 %5309
        %5311 = vmax.xlane.f32.xlu0 %v4147
        %v5312 = vpop.xlane.xlu0 %5311
        %5313 = vmax.xlane.f32.xlu0 %v4151
        %v5314 = vpop.xlane.xlu0 %5313
        %5315 = vmax.xlane.f32.xlu0 %v4155
        %v5316 = vpop.xlane.xlu0 %5315
        %5317 = vmax.xlane.f32.xlu0 %v4159
        %v5318 = vpop.xlane.xlu0 %5317
        %5319 = vmax.xlane.f32.xlu0 %v4163
        %v5320 = vpop.xlane.xlu0 %5319
        %5321 = vmax.xlane.f32.xlu0 %v4167
        %v5322 = vpop.xlane.xlu0 %5321
        %5323 = vmax.xlane.f32.xlu0 %v4171
        %v5324 = vpop.xlane.xlu0 %5323
        %5325 = vmax.xlane.f32.xlu0 %v4175
        %v5326 = vpop.xlane.xlu0 %5325
        %5327 = vmax.xlane.f32.xlu0 %v4179
        %v5328 = vpop.xlane.xlu0 %5327
        %5329 = vmax.xlane.f32.xlu0 %v4183
        %v5330 = vpop.xlane.xlu0 %5329
        %5331 = vmax.xlane.f32.xlu0 %v4187
        %v5332 = vpop.xlane.xlu0 %5331
        %5333 = vmax.xlane.f32.xlu0 %v4191
        %v5334 = vpop.xlane.xlu0 %5333
        %5335 = vmax.xlane.f32.xlu0 %v4195
        %v5336 = vpop.xlane.xlu0 %5335
        %5337 = vmax.xlane.f32.xlu0 %v4199
        %v5338 = vpop.xlane.xlu0 %5337
        %5339 = vmax.xlane.f32.xlu0 %v4203
        %v5340 = vpop.xlane.xlu0 %5339
        %5341 = vmax.xlane.f32.xlu0 %v4207
        %v5342 = vpop.xlane.xlu0 %5341
        %5343 = vmax.xlane.f32.xlu0 %v4211
        %v5344 = vpop.xlane.xlu0 %5343
        %5345 = vmax.xlane.f32.xlu0 %v4215
        %v5346 = vpop.xlane.xlu0 %5345
        %5347 = vmax.xlane.f32.xlu0 %v4219
        %v5348 = vpop.xlane.xlu0 %5347
        %5349 = vmax.xlane.f32.xlu0 %v4223
        %v5350 = vpop.xlane.xlu0 %5349
        %5351 = vmax.xlane.f32.xlu0 %v4227
        %v5352 = vpop.xlane.xlu0 %5351
        %5353 = vmax.xlane.f32.xlu0 %v4231
        %v5354 = vpop.xlane.xlu0 %5353
        %5355 = vmax.xlane.f32.xlu0 %v4235
        %v5356 = vpop.xlane.xlu0 %5355
        %5357 = vmax.xlane.f32.xlu0 %v4239
        %v5358 = vpop.xlane.xlu0 %5357
        %5359 = vmax.xlane.f32.xlu0 %v4243
        %v5360 = vpop.xlane.xlu0 %5359
        %5361 = vmax.xlane.f32.xlu0 %v4247
        %v5362 = vpop.xlane.xlu0 %5361
        %5363 = vmax.xlane.f32.xlu0 %v4251
        %v5364 = vpop.xlane.xlu0 %5363
        %5365 = vmax.xlane.f32.xlu0 %v4255
        %v5366 = vpop.xlane.xlu0 %5365
        %5367 = vmax.xlane.f32.xlu0 %v4259
        %v5368 = vpop.xlane.xlu0 %5367
        %5369 = vmax.xlane.f32.xlu0 %v4263
        %v5370 = vpop.xlane.xlu0 %5369
        %5371 = vmax.xlane.f32.xlu0 %v4267
        %v5372 = vpop.xlane.xlu0 %5371
        %5373 = vmax.xlane.f32.xlu0 %v4271
        %v5374 = vpop.xlane.xlu0 %5373
        %5375 = vmax.xlane.f32.xlu0 %v4275
        %v5376 = vpop.xlane.xlu0 %5375
        %5377 = vmax.xlane.f32.xlu0 %v4279
        %v5378 = vpop.xlane.xlu0 %5377
        %5379 = vmax.xlane.f32.xlu0 %v4283
        %v5380 = vpop.xlane.xlu0 %5379
        %5381 = vmax.xlane.f32.xlu0 %v4287
        %v5382 = vpop.xlane.xlu0 %5381
        %5383 = vmax.xlane.f32.xlu0 %v4291
        %v5384 = vpop.xlane.xlu0 %5383
        %5385 = vmax.xlane.f32.xlu0 %v4295
        %v5386 = vpop.xlane.xlu0 %5385
        %5387 = vmax.xlane.f32.xlu0 %v4299
        %v5388 = vpop.xlane.xlu0 %5387
        %5389 = vmax.xlane.f32.xlu0 %v4303
        %v5390 = vpop.xlane.xlu0 %5389
        %5391 = vmax.xlane.f32.xlu0 %v4307
        %v5392 = vpop.xlane.xlu0 %5391
        %5393 = vmax.xlane.f32.xlu0 %v4311
        %v5394 = vpop.xlane.xlu0 %5393
        %5395 = vmax.xlane.f32.xlu0 %v4315
        %v5396 = vpop.xlane.xlu0 %5395
        %5397 = vmax.xlane.f32.xlu0 %v4319
        %v5398 = vpop.xlane.xlu0 %5397
        %5399 = vmax.xlane.f32.xlu0 %v4323
        %v5400 = vpop.xlane.xlu0 %5399
        %5401 = vmax.xlane.f32.xlu0 %v4327
        %v5402 = vpop.xlane.xlu0 %5401
        %5403 = vmax.xlane.f32.xlu0 %v4331
        %v5404 = vpop.xlane.xlu0 %5403
        %5405 = vmax.xlane.f32.xlu0 %v4335
        %v5406 = vpop.xlane.xlu0 %5405
        %5407 = vmax.xlane.f32.xlu0 %v4339
        %v5408 = vpop.xlane.xlu0 %5407
        %5409 = vmax.xlane.f32.xlu0 %v4343
        %v5410 = vpop.xlane.xlu0 %5409
        %5411 = vmax.xlane.f32.xlu0 %v4347
        %v5412 = vpop.xlane.xlu0 %5411
        %5413 = vmax.xlane.f32.xlu0 %v4351
        %v5414 = vpop.xlane.xlu0 %5413
        %5415 = vmax.xlane.f32.xlu0 %v4355
        %v5416 = vpop.xlane.xlu0 %5415
        %5417 = vmax.xlane.f32.xlu0 %v4359
        %v5418 = vpop.xlane.xlu0 %5417
        %5419 = vmax.xlane.f32.xlu0 %v4363
        %v5420 = vpop.xlane.xlu0 %5419
        %5421 = vmax.xlane.f32.xlu0 %v4367
        %v5422 = vpop.xlane.xlu0 %5421
        %5423 = vmax.xlane.f32.xlu0 %v4371
        %v5424 = vpop.xlane.xlu0 %5423
        %5425 = vmax.xlane.f32.xlu0 %v4375
        %v5426 = vpop.xlane.xlu0 %5425
        %5427 = vmax.xlane.f32.xlu0 %v4379
        %v5428 = vpop.xlane.xlu0 %5427
        %5429 = vmax.xlane.f32.xlu0 %v4383
        %v5430 = vpop.xlane.xlu0 %5429
        %5431 = vmax.xlane.f32.xlu0 %v4387
        %v5432 = vpop.xlane.xlu0 %5431
        %5433 = vmax.xlane.f32.xlu0 %v4391
        %v5434 = vpop.xlane.xlu0 %5433
        %5435 = vmax.xlane.f32.xlu0 %v4395
        %v5436 = vpop.xlane.xlu0 %5435
        %5437 = vmax.xlane.f32.xlu0 %v4399
        %v5438 = vpop.xlane.xlu0 %5437
        %5439 = vmax.xlane.f32.xlu0 %v4403
        %v5440 = vpop.xlane.xlu0 %5439
        %5441 = vmax.xlane.f32.xlu0 %v4407
        %v5442 = vpop.xlane.xlu0 %5441
        %5443 = vmax.xlane.f32.xlu0 %v4411
        %v5444 = vpop.xlane.xlu0 %5443
        %5445 = vmax.xlane.f32.xlu0 %v4415
        %v5446 = vpop.xlane.xlu0 %5445
        %5447 = vmax.xlane.f32.xlu0 %v4419
        %v5448 = vpop.xlane.xlu0 %5447
        %vm5449 = vcmp.eq.s32.totalorder %v4422, 2
        %v5450 = vsel %vm5449, %v5194, %v5065
        %v5451 = vsel %vm5449, %v5196, %v5066
        %v5452 = vsel %vm5449, %v5198, %v5067
        %v5453 = vsel %vm5449, %v5200, %v5068
        %v5454 = vsel %vm5449, %v5202, %v5069
        %v5455 = vsel %vm5449, %v5204, %v5070
        %v5456 = vsel %vm5449, %v5206, %v5071
        %v5457 = vsel %vm5449, %v5208, %v5072
        %v5458 = vsel %vm5449, %v5210, %v5073
        %v5459 = vsel %vm5449, %v5212, %v5074
        %v5460 = vsel %vm5449, %v5214, %v5075
        %v5461 = vsel %vm5449, %v5216, %v5076
        %v5462 = vsel %vm5449, %v5218, %v5077
        %v5463 = vsel %vm5449, %v5220, %v5078
        %v5464 = vsel %vm5449, %v5222, %v5079
        %v5465 = vsel %vm5449, %v5224, %v5080
        %v5466 = vsel %vm5449, %v5226, %v5081
        %v5467 = vsel %vm5449, %v5228, %v5082
        %v5468 = vsel %vm5449, %v5230, %v5083
        %v5469 = vsel %vm5449, %v5232, %v5084
        %v5470 = vsel %vm5449, %v5234, %v5085
        %v5471 = vsel %vm5449, %v5236, %v5086
        %v5472 = vsel %vm5449, %v5238, %v5087
        %v5473 = vsel %vm5449, %v5240, %v5088
        %v5474 = vsel %vm5449, %v5242, %v5089
        %v5475 = vsel %vm5449, %v5244, %v5090
        %v5476 = vsel %vm5449, %v5246, %v5091
        %v5477 = vsel %vm5449, %v5248, %v5092
        %v5478 = vsel %vm5449, %v5250, %v5093
        %v5479 = vsel %vm5449, %v5252, %v5094
        %v5480 = vsel %vm5449, %v5254, %v5095
        %v5481 = vsel %vm5449, %v5256, %v5096
        %v5482 = vsel %vm5449, %v5258, %v5097
        %v5483 = vsel %vm5449, %v5260, %v5098
        %v5484 = vsel %vm5449, %v5262, %v5099
        %v5485 = vsel %vm5449, %v5264, %v5100
        %v5486 = vsel %vm5449, %v5266, %v5101
        %v5487 = vsel %vm5449, %v5268, %v5102
        %v5488 = vsel %vm5449, %v5270, %v5103
        %v5489 = vsel %vm5449, %v5272, %v5104
        %v5490 = vsel %vm5449, %v5274, %v5105
        %v5491 = vsel %vm5449, %v5276, %v5106
        %v5492 = vsel %vm5449, %v5278, %v5107
        %v5493 = vsel %vm5449, %v5280, %v5108
        %v5494 = vsel %vm5449, %v5282, %v5109
        %v5495 = vsel %vm5449, %v5284, %v5110
        %v5496 = vsel %vm5449, %v5286, %v5111
        %v5497 = vsel %vm5449, %v5288, %v5112
        %v5498 = vsel %vm5449, %v5290, %v5113
        %v5499 = vsel %vm5449, %v5292, %v5114
        %v5500 = vsel %vm5449, %v5294, %v5115
        %v5501 = vsel %vm5449, %v5296, %v5116
        %v5502 = vsel %vm5449, %v5298, %v5117
        %v5503 = vsel %vm5449, %v5300, %v5118
        %v5504 = vsel %vm5449, %v5302, %v5119
        %v5505 = vsel %vm5449, %v5304, %v5120
        %v5506 = vsel %vm5449, %v5306, %v5121
        %v5507 = vsel %vm5449, %v5308, %v5122
        %v5508 = vsel %vm5449, %v5310, %v5123
        %v5509 = vsel %vm5449, %v5312, %v5124
        %v5510 = vsel %vm5449, %v5314, %v5125
        %v5511 = vsel %vm5449, %v5316, %v5126
        %v5512 = vsel %vm5449, %v5318, %v5127
        %v5513 = vsel %vm5449, %v5320, %v5128
        %v5514 = vsel %vm5449, %v5322, %v5129
        %v5515 = vsel %vm5449, %v5324, %v5130
        %v5516 = vsel %vm5449, %v5326, %v5131
        %v5517 = vsel %vm5449, %v5328, %v5132
        %v5518 = vsel %vm5449, %v5330, %v5133
        %v5519 = vsel %vm5449, %v5332, %v5134
        %v5520 = vsel %vm5449, %v5334, %v5135
        %v5521 = vsel %vm5449, %v5336, %v5136
        %v5522 = vsel %vm5449, %v5338, %v5137
        %v5523 = vsel %vm5449, %v5340, %v5138
        %v5524 = vsel %vm5449, %v5342, %v5139
        %v5525 = vsel %vm5449, %v5344, %v5140
        %v5526 = vsel %vm5449, %v5346, %v5141
        %v5527 = vsel %vm5449, %v5348, %v5142
        %v5528 = vsel %vm5449, %v5350, %v5143
        %v5529 = vsel %vm5449, %v5352, %v5144
        %v5530 = vsel %vm5449, %v5354, %v5145
        %v5531 = vsel %vm5449, %v5356, %v5146
        %v5532 = vsel %vm5449, %v5358, %v5147
        %v5533 = vsel %vm5449, %v5360, %v5148
        %v5534 = vsel %vm5449, %v5362, %v5149
        %v5535 = vsel %vm5449, %v5364, %v5150
        %v5536 = vsel %vm5449, %v5366, %v5151
        %v5537 = vsel %vm5449, %v5368, %v5152
        %v5538 = vsel %vm5449, %v5370, %v5153
        %v5539 = vsel %vm5449, %v5372, %v5154
        %v5540 = vsel %vm5449, %v5374, %v5155
        %v5541 = vsel %vm5449, %v5376, %v5156
        %v5542 = vsel %vm5449, %v5378, %v5157
        %v5543 = vsel %vm5449, %v5380, %v5158
        %v5544 = vsel %vm5449, %v5382, %v5159
        %v5545 = vsel %vm5449, %v5384, %v5160
        %v5546 = vsel %vm5449, %v5386, %v5161
        %v5547 = vsel %vm5449, %v5388, %v5162
        %v5548 = vsel %vm5449, %v5390, %v5163
        %v5549 = vsel %vm5449, %v5392, %v5164
        %v5550 = vsel %vm5449, %v5394, %v5165
        %v5551 = vsel %vm5449, %v5396, %v5166
        %v5552 = vsel %vm5449, %v5398, %v5167
        %v5553 = vsel %vm5449, %v5400, %v5168
        %v5554 = vsel %vm5449, %v5402, %v5169
        %v5555 = vsel %vm5449, %v5404, %v5170
        %v5556 = vsel %vm5449, %v5406, %v5171
        %v5557 = vsel %vm5449, %v5408, %v5172
        %v5558 = vsel %vm5449, %v5410, %v5173
        %v5559 = vsel %vm5449, %v5412, %v5174
        %v5560 = vsel %vm5449, %v5414, %v5175
        %v5561 = vsel %vm5449, %v5416, %v5176
        %v5562 = vsel %vm5449, %v5418, %v5177
        %v5563 = vsel %vm5449, %v5420, %v5178
        %v5564 = vsel %vm5449, %v5422, %v5179
        %v5565 = vsel %vm5449, %v5424, %v5180
        %v5566 = vsel %vm5449, %v5426, %v5181
        %v5567 = vsel %vm5449, %v5428, %v5182
        %v5568 = vsel %vm5449, %v5430, %v5183
        %v5569 = vsel %vm5449, %v5432, %v5184
        %v5570 = vsel %vm5449, %v5434, %v5185
        %v5571 = vsel %vm5449, %v5436, %v5186
        %v5572 = vsel %vm5449, %v5438, %v5187
        %v5573 = vsel %vm5449, %v5440, %v5188
        %v5574 = vsel %vm5449, %v5442, %v5189
        %v5575 = vsel %vm5449, %v5444, %v5190
        %v5576 = vsel %vm5449, %v5446, %v5191
        %v5577 = vsel %vm5449, %v5448, %v5192
        %5578 = vmax.xlane.f32.xlu0 %v3912
        %v5579 = vpop.xlane.xlu0 %5578
        %5580 = vmax.xlane.f32.xlu0 %v3916
        %v5581 = vpop.xlane.xlu0 %5580
        %5582 = vmax.xlane.f32.xlu0 %v3920
        %v5583 = vpop.xlane.xlu0 %5582
        %5584 = vmax.xlane.f32.xlu0 %v3924
        %v5585 = vpop.xlane.xlu0 %5584
        %5586 = vmax.xlane.f32.xlu0 %v3928
        %v5587 = vpop.xlane.xlu0 %5586
        %5588 = vmax.xlane.f32.xlu0 %v3932
        %v5589 = vpop.xlane.xlu0 %5588
        %5590 = vmax.xlane.f32.xlu0 %v3936
        %v5591 = vpop.xlane.xlu0 %5590
        %5592 = vmax.xlane.f32.xlu0 %v3940
        %v5593 = vpop.xlane.xlu0 %5592
        %5594 = vmax.xlane.f32.xlu0 %v3944
        %v5595 = vpop.xlane.xlu0 %5594
        %5596 = vmax.xlane.f32.xlu0 %v3948
        %v5597 = vpop.xlane.xlu0 %5596
        %5598 = vmax.xlane.f32.xlu0 %v3952
        %v5599 = vpop.xlane.xlu0 %5598
        %5600 = vmax.xlane.f32.xlu0 %v3956
        %v5601 = vpop.xlane.xlu0 %5600
        %5602 = vmax.xlane.f32.xlu0 %v3960
        %v5603 = vpop.xlane.xlu0 %5602
        %5604 = vmax.xlane.f32.xlu0 %v3964
        %v5605 = vpop.xlane.xlu0 %5604
        %5606 = vmax.xlane.f32.xlu0 %v3968
        %v5607 = vpop.xlane.xlu0 %5606
        %5608 = vmax.xlane.f32.xlu0 %v3972
        %v5609 = vpop.xlane.xlu0 %5608
        %5610 = vmax.xlane.f32.xlu0 %v3976
        %v5611 = vpop.xlane.xlu0 %5610
        %5612 = vmax.xlane.f32.xlu0 %v3980
        %v5613 = vpop.xlane.xlu0 %5612
        %5614 = vmax.xlane.f32.xlu0 %v3984
        %v5615 = vpop.xlane.xlu0 %5614
        %5616 = vmax.xlane.f32.xlu0 %v3988
        %v5617 = vpop.xlane.xlu0 %5616
        %5618 = vmax.xlane.f32.xlu0 %v3992
        %v5619 = vpop.xlane.xlu0 %5618
        %5620 = vmax.xlane.f32.xlu0 %v3996
        %v5621 = vpop.xlane.xlu0 %5620
        %5622 = vmax.xlane.f32.xlu0 %v4000
        %v5623 = vpop.xlane.xlu0 %5622
        %5624 = vmax.xlane.f32.xlu0 %v4004
        %v5625 = vpop.xlane.xlu0 %5624
        %5626 = vmax.xlane.f32.xlu0 %v4008
        %v5627 = vpop.xlane.xlu0 %5626
        %5628 = vmax.xlane.f32.xlu0 %v4012
        %v5629 = vpop.xlane.xlu0 %5628
        %5630 = vmax.xlane.f32.xlu0 %v4016
        %v5631 = vpop.xlane.xlu0 %5630
        %5632 = vmax.xlane.f32.xlu0 %v4020
        %v5633 = vpop.xlane.xlu0 %5632
        %5634 = vmax.xlane.f32.xlu0 %v4024
        %v5635 = vpop.xlane.xlu0 %5634
        %5636 = vmax.xlane.f32.xlu0 %v4028
        %v5637 = vpop.xlane.xlu0 %5636
        %5638 = vmax.xlane.f32.xlu0 %v4032
        %v5639 = vpop.xlane.xlu0 %5638
        %5640 = vmax.xlane.f32.xlu0 %v4036
        %v5641 = vpop.xlane.xlu0 %5640
        %5642 = vmax.xlane.f32.xlu0 %v4040
        %v5643 = vpop.xlane.xlu0 %5642
        %5644 = vmax.xlane.f32.xlu0 %v4044
        %v5645 = vpop.xlane.xlu0 %5644
        %5646 = vmax.xlane.f32.xlu0 %v4048
        %v5647 = vpop.xlane.xlu0 %5646
        %5648 = vmax.xlane.f32.xlu0 %v4052
        %v5649 = vpop.xlane.xlu0 %5648
        %5650 = vmax.xlane.f32.xlu0 %v4056
        %v5651 = vpop.xlane.xlu0 %5650
        %5652 = vmax.xlane.f32.xlu0 %v4060
        %v5653 = vpop.xlane.xlu0 %5652
        %5654 = vmax.xlane.f32.xlu0 %v4064
        %v5655 = vpop.xlane.xlu0 %5654
        %5656 = vmax.xlane.f32.xlu0 %v4068
        %v5657 = vpop.xlane.xlu0 %5656
        %5658 = vmax.xlane.f32.xlu0 %v4072
        %v5659 = vpop.xlane.xlu0 %5658
        %5660 = vmax.xlane.f32.xlu0 %v4076
        %v5661 = vpop.xlane.xlu0 %5660
        %5662 = vmax.xlane.f32.xlu0 %v4080
        %v5663 = vpop.xlane.xlu0 %5662
        %5664 = vmax.xlane.f32.xlu0 %v4084
        %v5665 = vpop.xlane.xlu0 %5664
        %5666 = vmax.xlane.f32.xlu0 %v4088
        %v5667 = vpop.xlane.xlu0 %5666
        %5668 = vmax.xlane.f32.xlu0 %v4092
        %v5669 = vpop.xlane.xlu0 %5668
        %5670 = vmax.xlane.f32.xlu0 %v4096
        %v5671 = vpop.xlane.xlu0 %5670
        %5672 = vmax.xlane.f32.xlu0 %v4100
        %v5673 = vpop.xlane.xlu0 %5672
        %5674 = vmax.xlane.f32.xlu0 %v4104
        %v5675 = vpop.xlane.xlu0 %5674
        %5676 = vmax.xlane.f32.xlu0 %v4108
        %v5677 = vpop.xlane.xlu0 %5676
        %5678 = vmax.xlane.f32.xlu0 %v4112
        %v5679 = vpop.xlane.xlu0 %5678
        %5680 = vmax.xlane.f32.xlu0 %v4116
        %v5681 = vpop.xlane.xlu0 %5680
        %5682 = vmax.xlane.f32.xlu0 %v4120
        %v5683 = vpop.xlane.xlu0 %5682
        %5684 = vmax.xlane.f32.xlu0 %v4124
        %v5685 = vpop.xlane.xlu0 %5684
        %5686 = vmax.xlane.f32.xlu0 %v4128
        %v5687 = vpop.xlane.xlu0 %5686
        %5688 = vmax.xlane.f32.xlu0 %v4132
        %v5689 = vpop.xlane.xlu0 %5688
        %5690 = vmax.xlane.f32.xlu0 %v4136
        %v5691 = vpop.xlane.xlu0 %5690
        %5692 = vmax.xlane.f32.xlu0 %v4140
        %v5693 = vpop.xlane.xlu0 %5692
        %5694 = vmax.xlane.f32.xlu0 %v4144
        %v5695 = vpop.xlane.xlu0 %5694
        %5696 = vmax.xlane.f32.xlu0 %v4148
        %v5697 = vpop.xlane.xlu0 %5696
        %5698 = vmax.xlane.f32.xlu0 %v4152
        %v5699 = vpop.xlane.xlu0 %5698
        %5700 = vmax.xlane.f32.xlu0 %v4156
        %v5701 = vpop.xlane.xlu0 %5700
        %5702 = vmax.xlane.f32.xlu0 %v4160
        %v5703 = vpop.xlane.xlu0 %5702
        %5704 = vmax.xlane.f32.xlu0 %v4164
        %v5705 = vpop.xlane.xlu0 %5704
        %5706 = vmax.xlane.f32.xlu0 %v4168
        %v5707 = vpop.xlane.xlu0 %5706
        %5708 = vmax.xlane.f32.xlu0 %v4172
        %v5709 = vpop.xlane.xlu0 %5708
        %5710 = vmax.xlane.f32.xlu0 %v4176
        %v5711 = vpop.xlane.xlu0 %5710
        %5712 = vmax.xlane.f32.xlu0 %v4180
        %v5713 = vpop.xlane.xlu0 %5712
        %5714 = vmax.xlane.f32.xlu0 %v4184
        %v5715 = vpop.xlane.xlu0 %5714
        %5716 = vmax.xlane.f32.xlu0 %v4188
        %v5717 = vpop.xlane.xlu0 %5716
        %5718 = vmax.xlane.f32.xlu0 %v4192
        %v5719 = vpop.xlane.xlu0 %5718
        %5720 = vmax.xlane.f32.xlu0 %v4196
        %v5721 = vpop.xlane.xlu0 %5720
        %5722 = vmax.xlane.f32.xlu0 %v4200
        %v5723 = vpop.xlane.xlu0 %5722
        %5724 = vmax.xlane.f32.xlu0 %v4204
        %v5725 = vpop.xlane.xlu0 %5724
        %5726 = vmax.xlane.f32.xlu0 %v4208
        %v5727 = vpop.xlane.xlu0 %5726
        %5728 = vmax.xlane.f32.xlu0 %v4212
        %v5729 = vpop.xlane.xlu0 %5728
        %5730 = vmax.xlane.f32.xlu0 %v4216
        %v5731 = vpop.xlane.xlu0 %5730
        %5732 = vmax.xlane.f32.xlu0 %v4220
        %v5733 = vpop.xlane.xlu0 %5732
        %5734 = vmax.xlane.f32.xlu0 %v4224
        %v5735 = vpop.xlane.xlu0 %5734
        %5736 = vmax.xlane.f32.xlu0 %v4228
        %v5737 = vpop.xlane.xlu0 %5736
        %5738 = vmax.xlane.f32.xlu0 %v4232
        %v5739 = vpop.xlane.xlu0 %5738
        %5740 = vmax.xlane.f32.xlu0 %v4236
        %v5741 = vpop.xlane.xlu0 %5740
        %5742 = vmax.xlane.f32.xlu0 %v4240
        %v5743 = vpop.xlane.xlu0 %5742
        %5744 = vmax.xlane.f32.xlu0 %v4244
        %v5745 = vpop.xlane.xlu0 %5744
        %5746 = vmax.xlane.f32.xlu0 %v4248
        %v5747 = vpop.xlane.xlu0 %5746
        %5748 = vmax.xlane.f32.xlu0 %v4252
        %v5749 = vpop.xlane.xlu0 %5748
        %5750 = vmax.xlane.f32.xlu0 %v4256
        %v5751 = vpop.xlane.xlu0 %5750
        %5752 = vmax.xlane.f32.xlu0 %v4260
        %v5753 = vpop.xlane.xlu0 %5752
        %5754 = vmax.xlane.f32.xlu0 %v4264
        %v5755 = vpop.xlane.xlu0 %5754
        %5756 = vmax.xlane.f32.xlu0 %v4268
        %v5757 = vpop.xlane.xlu0 %5756
        %5758 = vmax.xlane.f32.xlu0 %v4272
        %v5759 = vpop.xlane.xlu0 %5758
        %5760 = vmax.xlane.f32.xlu0 %v4276
        %v5761 = vpop.xlane.xlu0 %5760
        %5762 = vmax.xlane.f32.xlu0 %v4280
        %v5763 = vpop.xlane.xlu0 %5762
        %5764 = vmax.xlane.f32.xlu0 %v4284
        %v5765 = vpop.xlane.xlu0 %5764
        %5766 = vmax.xlane.f32.xlu0 %v4288
        %v5767 = vpop.xlane.xlu0 %5766
        %5768 = vmax.xlane.f32.xlu0 %v4292
        %v5769 = vpop.xlane.xlu0 %5768
        %5770 = vmax.xlane.f32.xlu0 %v4296
        %v5771 = vpop.xlane.xlu0 %5770
        %5772 = vmax.xlane.f32.xlu0 %v4300
        %v5773 = vpop.xlane.xlu0 %5772
        %5774 = vmax.xlane.f32.xlu0 %v4304
        %v5775 = vpop.xlane.xlu0 %5774
        %5776 = vmax.xlane.f32.xlu0 %v4308
        %v5777 = vpop.xlane.xlu0 %5776
        %5778 = vmax.xlane.f32.xlu0 %v4312
        %v5779 = vpop.xlane.xlu0 %5778
        %5780 = vmax.xlane.f32.xlu0 %v4316
        %v5781 = vpop.xlane.xlu0 %5780
        %5782 = vmax.xlane.f32.xlu0 %v4320
        %v5783 = vpop.xlane.xlu0 %5782
        %5784 = vmax.xlane.f32.xlu0 %v4324
        %v5785 = vpop.xlane.xlu0 %5784
        %5786 = vmax.xlane.f32.xlu0 %v4328
        %v5787 = vpop.xlane.xlu0 %5786
        %5788 = vmax.xlane.f32.xlu0 %v4332
        %v5789 = vpop.xlane.xlu0 %5788
        %5790 = vmax.xlane.f32.xlu0 %v4336
        %v5791 = vpop.xlane.xlu0 %5790
        %5792 = vmax.xlane.f32.xlu0 %v4340
        %v5793 = vpop.xlane.xlu0 %5792
        %5794 = vmax.xlane.f32.xlu0 %v4344
        %v5795 = vpop.xlane.xlu0 %5794
        %5796 = vmax.xlane.f32.xlu0 %v4348
        %v5797 = vpop.xlane.xlu0 %5796
        %5798 = vmax.xlane.f32.xlu0 %v4352
        %v5799 = vpop.xlane.xlu0 %5798
        %5800 = vmax.xlane.f32.xlu0 %v4356
        %v5801 = vpop.xlane.xlu0 %5800
        %5802 = vmax.xlane.f32.xlu0 %v4360
        %v5803 = vpop.xlane.xlu0 %5802
        %5804 = vmax.xlane.f32.xlu0 %v4364
        %v5805 = vpop.xlane.xlu0 %5804
        %5806 = vmax.xlane.f32.xlu0 %v4368
        %v5807 = vpop.xlane.xlu0 %5806
        %5808 = vmax.xlane.f32.xlu0 %v4372
        %v5809 = vpop.xlane.xlu0 %5808
        %5810 = vmax.xlane.f32.xlu0 %v4376
        %v5811 = vpop.xlane.xlu0 %5810
        %5812 = vmax.xlane.f32.xlu0 %v4380
        %v5813 = vpop.xlane.xlu0 %5812
        %5814 = vmax.xlane.f32.xlu0 %v4384
        %v5815 = vpop.xlane.xlu0 %5814
        %5816 = vmax.xlane.f32.xlu0 %v4388
        %v5817 = vpop.xlane.xlu0 %5816
        %5818 = vmax.xlane.f32.xlu0 %v4392
        %v5819 = vpop.xlane.xlu0 %5818
        %5820 = vmax.xlane.f32.xlu0 %v4396
        %v5821 = vpop.xlane.xlu0 %5820
        %5822 = vmax.xlane.f32.xlu0 %v4400
        %v5823 = vpop.xlane.xlu0 %5822
        %5824 = vmax.xlane.f32.xlu0 %v4404
        %v5825 = vpop.xlane.xlu0 %5824
        %5826 = vmax.xlane.f32.xlu0 %v4408
        %v5827 = vpop.xlane.xlu0 %5826
        %5828 = vmax.xlane.f32.xlu0 %v4412
        %v5829 = vpop.xlane.xlu0 %5828
        %5830 = vmax.xlane.f32.xlu0 %v4416
        %v5831 = vpop.xlane.xlu0 %5830
        %5832 = vmax.xlane.f32.xlu0 %v4420
        %v5833 = vpop.xlane.xlu0 %5832
        %vm5834 = vcmp.eq.s32.totalorder %v4422, 3
        %v5835 = vsel %vm5834, %v5579, %v5450
        %v5836 = vsel %vm5834, %v5581, %v5451
        %v5837 = vsel %vm5834, %v5583, %v5452
        %v5838 = vsel %vm5834, %v5585, %v5453
        %v5839 = vsel %vm5834, %v5587, %v5454
        %v5840 = vsel %vm5834, %v5589, %v5455
        %v5841 = vsel %vm5834, %v5591, %v5456
        %v5842 = vsel %vm5834, %v5593, %v5457
        %v5843 = vsel %vm5834, %v5595, %v5458
        %v5844 = vsel %vm5834, %v5597, %v5459
        %v5845 = vsel %vm5834, %v5599, %v5460
        %v5846 = vsel %vm5834, %v5601, %v5461
        %v5847 = vsel %vm5834, %v5603, %v5462
        %v5848 = vsel %vm5834, %v5605, %v5463
        %v5849 = vsel %vm5834, %v5607, %v5464
        %v5850 = vsel %vm5834, %v5609, %v5465
        %v5851 = vsel %vm5834, %v5611, %v5466
        %v5852 = vsel %vm5834, %v5613, %v5467
        %v5853 = vsel %vm5834, %v5615, %v5468
        %v5854 = vsel %vm5834, %v5617, %v5469
        %v5855 = vsel %vm5834, %v5619, %v5470
        %v5856 = vsel %vm5834, %v5621, %v5471
        %v5857 = vsel %vm5834, %v5623, %v5472
        %v5858 = vsel %vm5834, %v5625, %v5473
        %v5859 = vsel %vm5834, %v5627, %v5474
        %v5860 = vsel %vm5834, %v5629, %v5475
        %v5861 = vsel %vm5834, %v5631, %v5476
        %v5862 = vsel %vm5834, %v5633, %v5477
        %v5863 = vsel %vm5834, %v5635, %v5478
        %v5864 = vsel %vm5834, %v5637, %v5479
        %v5865 = vsel %vm5834, %v5639, %v5480
        %v5866 = vsel %vm5834, %v5641, %v5481
        %v5867 = vsel %vm5834, %v5643, %v5482
        %v5868 = vsel %vm5834, %v5645, %v5483
        %v5869 = vsel %vm5834, %v5647, %v5484
        %v5870 = vsel %vm5834, %v5649, %v5485
        %v5871 = vsel %vm5834, %v5651, %v5486
        %v5872 = vsel %vm5834, %v5653, %v5487
        %v5873 = vsel %vm5834, %v5655, %v5488
        %v5874 = vsel %vm5834, %v5657, %v5489
        %v5875 = vsel %vm5834, %v5659, %v5490
        %v5876 = vsel %vm5834, %v5661, %v5491
        %v5877 = vsel %vm5834, %v5663, %v5492
        %v5878 = vsel %vm5834, %v5665, %v5493
        %v5879 = vsel %vm5834, %v5667, %v5494
        %v5880 = vsel %vm5834, %v5669, %v5495
        %v5881 = vsel %vm5834, %v5671, %v5496
        %v5882 = vsel %vm5834, %v5673, %v5497
        %v5883 = vsel %vm5834, %v5675, %v5498
        %v5884 = vsel %vm5834, %v5677, %v5499
        %v5885 = vsel %vm5834, %v5679, %v5500
        %v5886 = vsel %vm5834, %v5681, %v5501
        %v5887 = vsel %vm5834, %v5683, %v5502
        %v5888 = vsel %vm5834, %v5685, %v5503
        %v5889 = vsel %vm5834, %v5687, %v5504
        %v5890 = vsel %vm5834, %v5689, %v5505
        %v5891 = vsel %vm5834, %v5691, %v5506
        %v5892 = vsel %vm5834, %v5693, %v5507
        %v5893 = vsel %vm5834, %v5695, %v5508
        %v5894 = vsel %vm5834, %v5697, %v5509
        %v5895 = vsel %vm5834, %v5699, %v5510
        %v5896 = vsel %vm5834, %v5701, %v5511
        %v5897 = vsel %vm5834, %v5703, %v5512
        %v5898 = vsel %vm5834, %v5705, %v5513
        %v5899 = vsel %vm5834, %v5707, %v5514
        %v5900 = vsel %vm5834, %v5709, %v5515
        %v5901 = vsel %vm5834, %v5711, %v5516
        %v5902 = vsel %vm5834, %v5713, %v5517
        %v5903 = vsel %vm5834, %v5715, %v5518
        %v5904 = vsel %vm5834, %v5717, %v5519
        %v5905 = vsel %vm5834, %v5719, %v5520
        %v5906 = vsel %vm5834, %v5721, %v5521
        %v5907 = vsel %vm5834, %v5723, %v5522
        %v5908 = vsel %vm5834, %v5725, %v5523
        %v5909 = vsel %vm5834, %v5727, %v5524
        %v5910 = vsel %vm5834, %v5729, %v5525
        %v5911 = vsel %vm5834, %v5731, %v5526
        %v5912 = vsel %vm5834, %v5733, %v5527
        %v5913 = vsel %vm5834, %v5735, %v5528
        %v5914 = vsel %vm5834, %v5737, %v5529
        %v5915 = vsel %vm5834, %v5739, %v5530
        %v5916 = vsel %vm5834, %v5741, %v5531
        %v5917 = vsel %vm5834, %v5743, %v5532
        %v5918 = vsel %vm5834, %v5745, %v5533
        %v5919 = vsel %vm5834, %v5747, %v5534
        %v5920 = vsel %vm5834, %v5749, %v5535
        %v5921 = vsel %vm5834, %v5751, %v5536
        %v5922 = vsel %vm5834, %v5753, %v5537
        %v5923 = vsel %vm5834, %v5755, %v5538
        %v5924 = vsel %vm5834, %v5757, %v5539
        %v5925 = vsel %vm5834, %v5759, %v5540
        %v5926 = vsel %vm5834, %v5761, %v5541
        %v5927 = vsel %vm5834, %v5763, %v5542
        %v5928 = vsel %vm5834, %v5765, %v5543
        %v5929 = vsel %vm5834, %v5767, %v5544
        %v5930 = vsel %vm5834, %v5769, %v5545
        %v5931 = vsel %vm5834, %v5771, %v5546
        %v5932 = vsel %vm5834, %v5773, %v5547
        %v5933 = vsel %vm5834, %v5775, %v5548
        %v5934 = vsel %vm5834, %v5777, %v5549
        %v5935 = vsel %vm5834, %v5779, %v5550
        %v5936 = vsel %vm5834, %v5781, %v5551
        %v5937 = vsel %vm5834, %v5783, %v5552
        %v5938 = vsel %vm5834, %v5785, %v5553
        %v5939 = vsel %vm5834, %v5787, %v5554
        %v5940 = vsel %vm5834, %v5789, %v5555
        %v5941 = vsel %vm5834, %v5791, %v5556
        %v5942 = vsel %vm5834, %v5793, %v5557
        %v5943 = vsel %vm5834, %v5795, %v5558
        %v5944 = vsel %vm5834, %v5797, %v5559
        %v5945 = vsel %vm5834, %v5799, %v5560
        %v5946 = vsel %vm5834, %v5801, %v5561
        %v5947 = vsel %vm5834, %v5803, %v5562
        %v5948 = vsel %vm5834, %v5805, %v5563
        %v5949 = vsel %vm5834, %v5807, %v5564
        %v5950 = vsel %vm5834, %v5809, %v5565
        %v5951 = vsel %vm5834, %v5811, %v5566
        %v5952 = vsel %vm5834, %v5813, %v5567
        %v5953 = vsel %vm5834, %v5815, %v5568
        %v5954 = vsel %vm5834, %v5817, %v5569
        %v5955 = vsel %vm5834, %v5819, %v5570
        %v5956 = vsel %vm5834, %v5821, %v5571
        %v5957 = vsel %vm5834, %v5823, %v5572
        %v5958 = vsel %vm5834, %v5825, %v5573
        %v5959 = vsel %vm5834, %v5827, %v5574
        %v5960 = vsel %vm5834, %v5829, %v5575
        %v5961 = vsel %vm5834, %v5831, %v5576
        %v5962 = vsel %vm5834, %v5833, %v5577
        %v5963 = vld [vmem:[%s7] sm:$0xff]
        %v5964 = vld [vmem:[%s7 + $0x8] sm:$0xff]
        %v5965 = vld [vmem:[%s7 + $0x10] sm:$0xff]
        %v5966 = vld [vmem:[%s7 + $0x18] sm:$0xff]
        %v5967 = vld [vmem:[%s7 + $0x20] sm:$0xff]
        %v5968 = vld [vmem:[%s7 + $0x28] sm:$0xff]
        %v5969 = vld [vmem:[%s7 + $0x30] sm:$0xff]
        %v5970 = vld [vmem:[%s7 + $0x38] sm:$0xff]
        %v5971 = vld [vmem:[%s7 + $0x40] sm:$0xff]
        %v5972 = vld [vmem:[%s7 + $0x48] sm:$0xff]
        %v5973 = vld [vmem:[%s7 + $0x50] sm:$0xff]
        %v5974 = vld [vmem:[%s7 + $0x58] sm:$0xff]
        %v5975 = vld [vmem:[%s7 + $0x60] sm:$0xff]
        %v5976 = vld [vmem:[%s7 + $0x68] sm:$0xff]
        %v5977 = vld [vmem:[%s7 + $0x70] sm:$0xff]
        %v5978 = vld [vmem:[%s7 + $0x78] sm:$0xff]
        %v5979 = vld [vmem:[%s7 + $0x80] sm:$0xff]
        %v5980 = vld [vmem:[%s7 + $0x88] sm:$0xff]
        %v5981 = vld [vmem:[%s7 + $0x90] sm:$0xff]
        %v5982 = vld [vmem:[%s7 + $0x98] sm:$0xff]
        %v5983 = vld [vmem:[%s7 + $0xa0] sm:$0xff]
        %v5984 = vld [vmem:[%s7 + $0xa8] sm:$0xff]
        %v5985 = vld [vmem:[%s7 + $0xb0] sm:$0xff]
        %v5986 = vld [vmem:[%s7 + $0xb8] sm:$0xff]
        %v5987 = vld [vmem:[%s7 + $0xc0] sm:$0xff]
        %v5988 = vld [vmem:[%s7 + $0xc8] sm:$0xff]
        %v5989 = vld [vmem:[%s7 + $0xd0] sm:$0xff]
        %v5990 = vld [vmem:[%s7 + $0xd8] sm:$0xff]
        %v5991 = vld [vmem:[%s7 + $0xe0] sm:$0xff]
        %v5992 = vld [vmem:[%s7 + $0xe8] sm:$0xff]
        %v5993 = vld [vmem:[%s7 + $0xf0] sm:$0xff]
        %v5994 = vld [vmem:[%s7 + $0xf8] sm:$0xff]
        %v5995 = vld [vmem:[%s7 + $0x100] sm:$0xff]
        %v5996 = vld [vmem:[%s7 + $0x108] sm:$0xff]
        %v5997 = vld [vmem:[%s7 + $0x110] sm:$0xff]
        %v5998 = vld [vmem:[%s7 + $0x118] sm:$0xff]
        %v5999 = vld [vmem:[%s7 + $0x120] sm:$0xff]
        %v6000 = vld [vmem:[%s7 + $0x128] sm:$0xff]
        %v6001 = vld [vmem:[%s7 + $0x130] sm:$0xff]
        %v6002 = vld [vmem:[%s7 + $0x138] sm:$0xff]
        %v6003 = vld [vmem:[%s7 + $0x140] sm:$0xff]
        %v6004 = vld [vmem:[%s7 + $0x148] sm:$0xff]
        %v6005 = vld [vmem:[%s7 + $0x150] sm:$0xff]
        %v6006 = vld [vmem:[%s7 + $0x158] sm:$0xff]
        %v6007 = vld [vmem:[%s7 + $0x160] sm:$0xff]
        %v6008 = vld [vmem:[%s7 + $0x168] sm:$0xff]
        %v6009 = vld [vmem:[%s7 + $0x170] sm:$0xff]
        %v6010 = vld [vmem:[%s7 + $0x178] sm:$0xff]
        %v6011 = vld [vmem:[%s7 + $0x180] sm:$0xff]
        %v6012 = vld [vmem:[%s7 + $0x188] sm:$0xff]
        %v6013 = vld [vmem:[%s7 + $0x190] sm:$0xff]
        %v6014 = vld [vmem:[%s7 + $0x198] sm:$0xff]
        %v6015 = vld [vmem:[%s7 + $0x1a0] sm:$0xff]
        %v6016 = vld [vmem:[%s7 + $0x1a8] sm:$0xff]
        %v6017 = vld [vmem:[%s7 + $0x1b0] sm:$0xff]
        %v6018 = vld [vmem:[%s7 + $0x1b8] sm:$0xff]
        %v6019 = vld [vmem:[%s7 + $0x1c0] sm:$0xff]
        %v6020 = vld [vmem:[%s7 + $0x1c8] sm:$0xff]
        %v6021 = vld [vmem:[%s7 + $0x1d0] sm:$0xff]
        %v6022 = vld [vmem:[%s7 + $0x1d8] sm:$0xff]
        %v6023 = vld [vmem:[%s7 + $0x1e0] sm:$0xff]
        %v6024 = vld [vmem:[%s7 + $0x1e8] sm:$0xff]
        %v6025 = vld [vmem:[%s7 + $0x1f0] sm:$0xff]
        %v6026 = vld [vmem:[%s7 + $0x1f8] sm:$0xff]
        %v6027 = vld [vmem:[%s7 + $0x200] sm:$0xff]
        %v6028 = vld [vmem:[%s7 + $0x208] sm:$0xff]
        %v6029 = vld [vmem:[%s7 + $0x210] sm:$0xff]
        %v6030 = vld [vmem:[%s7 + $0x218] sm:$0xff]
        %v6031 = vld [vmem:[%s7 + $0x220] sm:$0xff]
        %v6032 = vld [vmem:[%s7 + $0x228] sm:$0xff]
        %v6033 = vld [vmem:[%s7 + $0x230] sm:$0xff]
        %v6034 = vld [vmem:[%s7 + $0x238] sm:$0xff]
        %v6035 = vld [vmem:[%s7 + $0x240] sm:$0xff]
        %v6036 = vld [vmem:[%s7 + $0x248] sm:$0xff]
        %v6037 = vld [vmem:[%s7 + $0x250] sm:$0xff]
        %v6038 = vld [vmem:[%s7 + $0x258] sm:$0xff]
        %v6039 = vld [vmem:[%s7 + $0x260] sm:$0xff]
        %v6040 = vld [vmem:[%s7 + $0x268] sm:$0xff]
        %v6041 = vld [vmem:[%s7 + $0x270] sm:$0xff]
        %v6042 = vld [vmem:[%s7 + $0x278] sm:$0xff]
        %v6043 = vld [vmem:[%s7 + $0x280] sm:$0xff]
        %v6044 = vld [vmem:[%s7 + $0x288] sm:$0xff]
        %v6045 = vld [vmem:[%s7 + $0x290] sm:$0xff]
        %v6046 = vld [vmem:[%s7 + $0x298] sm:$0xff]
        %v6047 = vld [vmem:[%s7 + $0x2a0] sm:$0xff]
        %v6048 = vld [vmem:[%s7 + $0x2a8] sm:$0xff]
        %v6049 = vld [vmem:[%s7 + $0x2b0] sm:$0xff]
        %v6050 = vld [vmem:[%s7 + $0x2b8] sm:$0xff]
        %v6051 = vld [vmem:[%s7 + $0x2c0] sm:$0xff]
        %v6052 = vld [vmem:[%s7 + $0x2c8] sm:$0xff]
        %v6053 = vld [vmem:[%s7 + $0x2d0] sm:$0xff]
        %v6054 = vld [vmem:[%s7 + $0x2d8] sm:$0xff]
        %v6055 = vld [vmem:[%s7 + $0x2e0] sm:$0xff]
        %v6056 = vld [vmem:[%s7 + $0x2e8] sm:$0xff]
        %v6057 = vld [vmem:[%s7 + $0x2f0] sm:$0xff]
        %v6058 = vld [vmem:[%s7 + $0x2f8] sm:$0xff]
        %v6059 = vld [vmem:[%s7 + $0x300] sm:$0xff]
        %v6060 = vld [vmem:[%s7 + $0x308] sm:$0xff]
        %v6061 = vld [vmem:[%s7 + $0x310] sm:$0xff]
        %v6062 = vld [vmem:[%s7 + $0x318] sm:$0xff]
        %v6063 = vld [vmem:[%s7 + $0x320] sm:$0xff]
        %v6064 = vld [vmem:[%s7 + $0x328] sm:$0xff]
        %v6065 = vld [vmem:[%s7 + $0x330] sm:$0xff]
        %v6066 = vld [vmem:[%s7 + $0x338] sm:$0xff]
        %v6067 = vld [vmem:[%s7 + $0x340] sm:$0xff]
        %v6068 = vld [vmem:[%s7 + $0x348] sm:$0xff]
        %v6069 = vld [vmem:[%s7 + $0x350] sm:$0xff]
        %v6070 = vld [vmem:[%s7 + $0x358] sm:$0xff]
        %v6071 = vld [vmem:[%s7 + $0x360] sm:$0xff]
        %v6072 = vld [vmem:[%s7 + $0x368] sm:$0xff]
        %v6073 = vld [vmem:[%s7 + $0x370] sm:$0xff]
        %v6074 = vld [vmem:[%s7 + $0x378] sm:$0xff]
        %v6075 = vld [vmem:[%s7 + $0x380] sm:$0xff]
        %v6076 = vld [vmem:[%s7 + $0x388] sm:$0xff]
        %v6077 = vld [vmem:[%s7 + $0x390] sm:$0xff]
        %v6078 = vld [vmem:[%s7 + $0x398] sm:$0xff]
        %v6079 = vld [vmem:[%s7 + $0x3a0] sm:$0xff]
        %v6080 = vld [vmem:[%s7 + $0x3a8] sm:$0xff]
        %v6081 = vld [vmem:[%s7 + $0x3b0] sm:$0xff]
        %v6082 = vld [vmem:[%s7 + $0x3b8] sm:$0xff]
        %v6083 = vld [vmem:[%s7 + $0x3c0] sm:$0xff]
        %v6084 = vld [vmem:[%s7 + $0x3c8] sm:$0xff]
        %v6085 = vld [vmem:[%s7 + $0x3d0] sm:$0xff]
        %v6086 = vld [vmem:[%s7 + $0x3d8] sm:$0xff]
        %v6087 = vld [vmem:[%s7 + $0x3e0] sm:$0xff]
        %v6088 = vld [vmem:[%s7 + $0x3e8] sm:$0xff]
        %v6089 = vld [vmem:[%s7 + $0x3f0] sm:$0xff]
        %v6090 = vld [vmem:[%s7 + $0x3f8] sm:$0xff]
        %v6091 = vld [vmem:[%s7 + $0x400] sm:$0xff]
        %v6092 = vld [vmem:[%s7 + $0x408] sm:$0xff]
        %v6093 = vld [vmem:[%s7 + $0x410] sm:$0xff]
        %v6094 = vld [vmem:[%s7 + $0x418] sm:$0xff]
        %v6095 = vld [vmem:[%s7 + $0x420] sm:$0xff]
        %v6096 = vld [vmem:[%s7 + $0x428] sm:$0xff]
        %v6097 = vld [vmem:[%s7 + $0x430] sm:$0xff]
        %v6098 = vld [vmem:[%s7 + $0x438] sm:$0xff]
        %v6099 = vld [vmem:[%s7 + $0x440] sm:$0xff]
        %v6100 = vld [vmem:[%s7 + $0x448] sm:$0xff]
        %v6101 = vld [vmem:[%s7 + $0x450] sm:$0xff]
        %v6102 = vld [vmem:[%s7 + $0x458] sm:$0xff]
        %v6103 = vld [vmem:[%s7 + $0x460] sm:$0xff]
        %v6104 = vld [vmem:[%s7 + $0x468] sm:$0xff]
        %v6105 = vld [vmem:[%s7 + $0x470] sm:$0xff]
        %v6106 = vld [vmem:[%s7 + $0x478] sm:$0xff]
        %v6107 = vld [vmem:[%s7 + $0x480] sm:$0xff]
        %v6108 = vld [vmem:[%s7 + $0x488] sm:$0xff]
        %v6109 = vld [vmem:[%s7 + $0x490] sm:$0xff]
        %v6110 = vld [vmem:[%s7 + $0x498] sm:$0xff]
        %v6111 = vld [vmem:[%s7 + $0x4a0] sm:$0xff]
        %v6112 = vld [vmem:[%s7 + $0x4a8] sm:$0xff]
        %v6113 = vld [vmem:[%s7 + $0x4b0] sm:$0xff]
        %v6114 = vld [vmem:[%s7 + $0x4b8] sm:$0xff]
        %v6115 = vld [vmem:[%s7 + $0x4c0] sm:$0xff]
        %v6116 = vld [vmem:[%s7 + $0x4c8] sm:$0xff]
        %v6117 = vld [vmem:[%s7 + $0x4d0] sm:$0xff]
        %v6118 = vld [vmem:[%s7 + $0x4d8] sm:$0xff]
        %v6119 = vld [vmem:[%s7 + $0x4e0] sm:$0xff]
        %v6120 = vld [vmem:[%s7 + $0x4e8] sm:$0xff]
        %v6121 = vld [vmem:[%s7 + $0x4f0] sm:$0xff]
        %v6122 = vld [vmem:[%s7 + $0x4f8] sm:$0xff]
        %v6123 = vld [vmem:[%s7 + $0x500] sm:$0xff]
        %v6124 = vld [vmem:[%s7 + $0x508] sm:$0xff]
        %v6125 = vld [vmem:[%s7 + $0x510] sm:$0xff]
        %v6126 = vld [vmem:[%s7 + $0x518] sm:$0xff]
        %v6127 = vld [vmem:[%s7 + $0x520] sm:$0xff]
        %v6128 = vld [vmem:[%s7 + $0x528] sm:$0xff]
        %v6129 = vld [vmem:[%s7 + $0x530] sm:$0xff]
        %v6130 = vld [vmem:[%s7 + $0x538] sm:$0xff]
        %v6131 = vld [vmem:[%s7 + $0x540] sm:$0xff]
        %v6132 = vld [vmem:[%s7 + $0x548] sm:$0xff]
        %v6133 = vld [vmem:[%s7 + $0x550] sm:$0xff]
        %v6134 = vld [vmem:[%s7 + $0x558] sm:$0xff]
        %v6135 = vld [vmem:[%s7 + $0x560] sm:$0xff]
        %v6136 = vld [vmem:[%s7 + $0x568] sm:$0xff]
        %v6137 = vld [vmem:[%s7 + $0x570] sm:$0xff]
        %v6138 = vld [vmem:[%s7 + $0x578] sm:$0xff]
        %v6139 = vld [vmem:[%s7 + $0x580] sm:$0xff]
        %v6140 = vld [vmem:[%s7 + $0x588] sm:$0xff]
        %v6141 = vld [vmem:[%s7 + $0x590] sm:$0xff]
        %v6142 = vld [vmem:[%s7 + $0x598] sm:$0xff]
        %v6143 = vld [vmem:[%s7 + $0x5a0] sm:$0xff]
        %v6144 = vld [vmem:[%s7 + $0x5a8] sm:$0xff]
        %v6145 = vld [vmem:[%s7 + $0x5b0] sm:$0xff]
        %v6146 = vld [vmem:[%s7 + $0x5b8] sm:$0xff]
        %v6147 = vld [vmem:[%s7 + $0x5c0] sm:$0xff]
        %v6148 = vld [vmem:[%s7 + $0x5c8] sm:$0xff]
        %v6149 = vld [vmem:[%s7 + $0x5d0] sm:$0xff]
        %v6150 = vld [vmem:[%s7 + $0x5d8] sm:$0xff]
        %v6151 = vld [vmem:[%s7 + $0x5e0] sm:$0xff]
        %v6152 = vld [vmem:[%s7 + $0x5e8] sm:$0xff]
        %v6153 = vld [vmem:[%s7 + $0x5f0] sm:$0xff]
        %v6154 = vld [vmem:[%s7 + $0x5f8] sm:$0xff]
        %v6155 = vld [vmem:[%s7 + $0x600] sm:$0xff]
        %v6156 = vld [vmem:[%s7 + $0x608] sm:$0xff]
        %v6157 = vld [vmem:[%s7 + $0x610] sm:$0xff]
        %v6158 = vld [vmem:[%s7 + $0x618] sm:$0xff]
        %v6159 = vld [vmem:[%s7 + $0x620] sm:$0xff]
        %v6160 = vld [vmem:[%s7 + $0x628] sm:$0xff]
        %v6161 = vld [vmem:[%s7 + $0x630] sm:$0xff]
        %v6162 = vld [vmem:[%s7 + $0x638] sm:$0xff]
        %v6163 = vld [vmem:[%s7 + $0x640] sm:$0xff]
        %v6164 = vld [vmem:[%s7 + $0x648] sm:$0xff]
        %v6165 = vld [vmem:[%s7 + $0x650] sm:$0xff]
        %v6166 = vld [vmem:[%s7 + $0x658] sm:$0xff]
        %v6167 = vld [vmem:[%s7 + $0x660] sm:$0xff]
        %v6168 = vld [vmem:[%s7 + $0x668] sm:$0xff]
        %v6169 = vld [vmem:[%s7 + $0x670] sm:$0xff]
        %v6170 = vld [vmem:[%s7 + $0x678] sm:$0xff]
        %v6171 = vld [vmem:[%s7 + $0x680] sm:$0xff]
        %v6172 = vld [vmem:[%s7 + $0x688] sm:$0xff]
        %v6173 = vld [vmem:[%s7 + $0x690] sm:$0xff]
        %v6174 = vld [vmem:[%s7 + $0x698] sm:$0xff]
        %v6175 = vld [vmem:[%s7 + $0x6a0] sm:$0xff]
        %v6176 = vld [vmem:[%s7 + $0x6a8] sm:$0xff]
        %v6177 = vld [vmem:[%s7 + $0x6b0] sm:$0xff]
        %v6178 = vld [vmem:[%s7 + $0x6b8] sm:$0xff]
        %v6179 = vld [vmem:[%s7 + $0x6c0] sm:$0xff]
        %v6180 = vld [vmem:[%s7 + $0x6c8] sm:$0xff]
        %v6181 = vld [vmem:[%s7 + $0x6d0] sm:$0xff]
        %v6182 = vld [vmem:[%s7 + $0x6d8] sm:$0xff]
        %v6183 = vld [vmem:[%s7 + $0x6e0] sm:$0xff]
        %v6184 = vld [vmem:[%s7 + $0x6e8] sm:$0xff]
        %v6185 = vld [vmem:[%s7 + $0x6f0] sm:$0xff]
        %v6186 = vld [vmem:[%s7 + $0x6f8] sm:$0xff]
        %v6187 = vld [vmem:[%s7 + $0x700] sm:$0xff]
        %v6188 = vld [vmem:[%s7 + $0x708] sm:$0xff]
        %v6189 = vld [vmem:[%s7 + $0x710] sm:$0xff]
        %v6190 = vld [vmem:[%s7 + $0x718] sm:$0xff]
        %v6191 = vld [vmem:[%s7 + $0x720] sm:$0xff]
        %v6192 = vld [vmem:[%s7 + $0x728] sm:$0xff]
        %v6193 = vld [vmem:[%s7 + $0x730] sm:$0xff]
        %v6194 = vld [vmem:[%s7 + $0x738] sm:$0xff]
        %v6195 = vld [vmem:[%s7 + $0x740] sm:$0xff]
        %v6196 = vld [vmem:[%s7 + $0x748] sm:$0xff]
        %v6197 = vld [vmem:[%s7 + $0x750] sm:$0xff]
        %v6198 = vld [vmem:[%s7 + $0x758] sm:$0xff]
        %v6199 = vld [vmem:[%s7 + $0x760] sm:$0xff]
        %v6200 = vld [vmem:[%s7 + $0x768] sm:$0xff]
        %v6201 = vld [vmem:[%s7 + $0x770] sm:$0xff]
        %v6202 = vld [vmem:[%s7 + $0x778] sm:$0xff]
        %v6203 = vld [vmem:[%s7 + $0x780] sm:$0xff]
        %v6204 = vld [vmem:[%s7 + $0x788] sm:$0xff]
        %v6205 = vld [vmem:[%s7 + $0x790] sm:$0xff]
        %v6206 = vld [vmem:[%s7 + $0x798] sm:$0xff]
        %v6207 = vld [vmem:[%s7 + $0x7a0] sm:$0xff]
        %v6208 = vld [vmem:[%s7 + $0x7a8] sm:$0xff]
        %v6209 = vld [vmem:[%s7 + $0x7b0] sm:$0xff]
        %v6210 = vld [vmem:[%s7 + $0x7b8] sm:$0xff]
        %v6211 = vld [vmem:[%s7 + $0x7c0] sm:$0xff]
        %v6212 = vld [vmem:[%s7 + $0x7c8] sm:$0xff]
        %v6213 = vld [vmem:[%s7 + $0x7d0] sm:$0xff]
        %v6214 = vld [vmem:[%s7 + $0x7d8] sm:$0xff]
        %v6215 = vld [vmem:[%s7 + $0x7e0] sm:$0xff]
        %v6216 = vld [vmem:[%s7 + $0x7e8] sm:$0xff]
        %v6217 = vld [vmem:[%s7 + $0x7f0] sm:$0xff]
        %v6218 = vld [vmem:[%s7 + $0x7f8] sm:$0xff]
        %v6219 = vpack.c.bf16 %v5836, %v5835
        %v6220 = vpack.c.bf16 %v5838, %v5837
        %v6221 = vpack.c.bf16 %v5840, %v5839
        %v6222 = vpack.c.bf16 %v5842, %v5841
        %v6223 = vpack.c.bf16 %v5844, %v5843
        %v6224 = vpack.c.bf16 %v5846, %v5845
        %v6225 = vpack.c.bf16 %v5848, %v5847
        %v6226 = vpack.c.bf16 %v5850, %v5849
        %v6227 = vpack.c.bf16 %v5852, %v5851
        %v6228 = vpack.c.bf16 %v5854, %v5853
        %v6229 = vpack.c.bf16 %v5856, %v5855
        %v6230 = vpack.c.bf16 %v5858, %v5857
        %v6231 = vpack.c.bf16 %v5860, %v5859
        %v6232 = vpack.c.bf16 %v5862, %v5861
        %v6233 = vpack.c.bf16 %v5864, %v5863
        %v6234 = vpack.c.bf16 %v5866, %v5865
        %v6235 = vpack.c.bf16 %v5868, %v5867
        %v6236 = vpack.c.bf16 %v5870, %v5869
        %v6237 = vpack.c.bf16 %v5872, %v5871
        %v6238 = vpack.c.bf16 %v5874, %v5873
        %v6239 = vpack.c.bf16 %v5876, %v5875
        %v6240 = vpack.c.bf16 %v5878, %v5877
        %v6241 = vpack.c.bf16 %v5880, %v5879
        %v6242 = vpack.c.bf16 %v5882, %v5881
        %v6243 = vpack.c.bf16 %v5884, %v5883
        %v6244 = vpack.c.bf16 %v5886, %v5885
        %v6245 = vpack.c.bf16 %v5888, %v5887
        %v6246 = vpack.c.bf16 %v5890, %v5889
        %v6247 = vpack.c.bf16 %v5892, %v5891
        %v6248 = vpack.c.bf16 %v5894, %v5893
        %v6249 = vpack.c.bf16 %v5896, %v5895
        %v6250 = vpack.c.bf16 %v5898, %v5897
        %v6251 = vpack.c.bf16 %v5900, %v5899
        %v6252 = vpack.c.bf16 %v5902, %v5901
        %v6253 = vpack.c.bf16 %v5904, %v5903
        %v6254 = vpack.c.bf16 %v5906, %v5905
        %v6255 = vpack.c.bf16 %v5908, %v5907
        %v6256 = vpack.c.bf16 %v5910, %v5909
        %v6257 = vpack.c.bf16 %v5912, %v5911
        %v6258 = vpack.c.bf16 %v5914, %v5913
        %v6259 = vpack.c.bf16 %v5916, %v5915
        %v6260 = vpack.c.bf16 %v5918, %v5917
        %v6261 = vpack.c.bf16 %v5920, %v5919
        %v6262 = vpack.c.bf16 %v5922, %v5921
        %v6263 = vpack.c.bf16 %v5924, %v5923
        %v6264 = vpack.c.bf16 %v5926, %v5925
        %v6265 = vpack.c.bf16 %v5928, %v5927
        %v6266 = vpack.c.bf16 %v5930, %v5929
        %v6267 = vpack.c.bf16 %v5932, %v5931
        %v6268 = vpack.c.bf16 %v5934, %v5933
        %v6269 = vpack.c.bf16 %v5936, %v5935
        %v6270 = vpack.c.bf16 %v5938, %v5937
        %v6271 = vpack.c.bf16 %v5940, %v5939
        %v6272 = vpack.c.bf16 %v5942, %v5941
        %v6273 = vpack.c.bf16 %v5944, %v5943
        %v6274 = vpack.c.bf16 %v5946, %v5945
        %v6275 = vpack.c.bf16 %v5948, %v5947
        %v6276 = vpack.c.bf16 %v5950, %v5949
        %v6277 = vpack.c.bf16 %v5952, %v5951
        %v6278 = vpack.c.bf16 %v5954, %v5953
        %v6279 = vpack.c.bf16 %v5956, %v5955
        %v6280 = vpack.c.bf16 %v5958, %v5957
        %v6281 = vpack.c.bf16 %v5960, %v5959
        %v6282 = vpack.c.bf16 %v5962, %v5961
        %v6283 = vld [vmem:[%s8] sm:$0xff]
        %v6284 = vld [vmem:[%s8 + $0x8] sm:$0xff]
        %v6285 = vld [vmem:[%s8 + $0x10] sm:$0xff]
        %v6286 = vld [vmem:[%s8 + $0x18] sm:$0xff]
        %v6287 = vld [vmem:[%s8 + $0x20] sm:$0xff]
        %v6288 = vld [vmem:[%s8 + $0x28] sm:$0xff]
        %v6289 = vld [vmem:[%s8 + $0x30] sm:$0xff]
        %v6290 = vld [vmem:[%s8 + $0x38] sm:$0xff]
        %v6291 = vld [vmem:[%s8 + $0x40] sm:$0xff]
        %v6292 = vld [vmem:[%s8 + $0x48] sm:$0xff]
        %v6293 = vld [vmem:[%s8 + $0x50] sm:$0xff]
        %v6294 = vld [vmem:[%s8 + $0x58] sm:$0xff]
        %v6295 = vld [vmem:[%s8 + $0x60] sm:$0xff]
        %v6296 = vld [vmem:[%s8 + $0x68] sm:$0xff]
        %v6297 = vld [vmem:[%s8 + $0x70] sm:$0xff]
        %v6298 = vld [vmem:[%s8 + $0x78] sm:$0xff]
        %v6299 = vld [vmem:[%s8 + $0x80] sm:$0xff]
        %v6300 = vld [vmem:[%s8 + $0x88] sm:$0xff]
        %v6301 = vld [vmem:[%s8 + $0x90] sm:$0xff]
        %v6302 = vld [vmem:[%s8 + $0x98] sm:$0xff]
        %v6303 = vld [vmem:[%s8 + $0xa0] sm:$0xff]
        %v6304 = vld [vmem:[%s8 + $0xa8] sm:$0xff]
        %v6305 = vld [vmem:[%s8 + $0xb0] sm:$0xff]
        %v6306 = vld [vmem:[%s8 + $0xb8] sm:$0xff]
        %v6307 = vld [vmem:[%s8 + $0xc0] sm:$0xff]
        %v6308 = vld [vmem:[%s8 + $0xc8] sm:$0xff]
        %v6309 = vld [vmem:[%s8 + $0xd0] sm:$0xff]
        %v6310 = vld [vmem:[%s8 + $0xd8] sm:$0xff]
        %v6311 = vld [vmem:[%s8 + $0xe0] sm:$0xff]
        %v6312 = vld [vmem:[%s8 + $0xe8] sm:$0xff]
        %v6313 = vld [vmem:[%s8 + $0xf0] sm:$0xff]
        %v6314 = vld [vmem:[%s8 + $0xf8] sm:$0xff]
        %v6315 = vld [vmem:[%s8 + $0x100] sm:$0xff]
        %v6316 = vld [vmem:[%s8 + $0x108] sm:$0xff]
        %v6317 = vld [vmem:[%s8 + $0x110] sm:$0xff]
        %v6318 = vld [vmem:[%s8 + $0x118] sm:$0xff]
        %v6319 = vld [vmem:[%s8 + $0x120] sm:$0xff]
        %v6320 = vld [vmem:[%s8 + $0x128] sm:$0xff]
        %v6321 = vld [vmem:[%s8 + $0x130] sm:$0xff]
        %v6322 = vld [vmem:[%s8 + $0x138] sm:$0xff]
        %v6323 = vld [vmem:[%s8 + $0x140] sm:$0xff]
        %v6324 = vld [vmem:[%s8 + $0x148] sm:$0xff]
        %v6325 = vld [vmem:[%s8 + $0x150] sm:$0xff]
        %v6326 = vld [vmem:[%s8 + $0x158] sm:$0xff]
        %v6327 = vld [vmem:[%s8 + $0x160] sm:$0xff]
        %v6328 = vld [vmem:[%s8 + $0x168] sm:$0xff]
        %v6329 = vld [vmem:[%s8 + $0x170] sm:$0xff]
        %v6330 = vld [vmem:[%s8 + $0x178] sm:$0xff]
        %v6331 = vld [vmem:[%s8 + $0x180] sm:$0xff]
        %v6332 = vld [vmem:[%s8 + $0x188] sm:$0xff]
        %v6333 = vld [vmem:[%s8 + $0x190] sm:$0xff]
        %v6334 = vld [vmem:[%s8 + $0x198] sm:$0xff]
        %v6335 = vld [vmem:[%s8 + $0x1a0] sm:$0xff]
        %v6336 = vld [vmem:[%s8 + $0x1a8] sm:$0xff]
        %v6337 = vld [vmem:[%s8 + $0x1b0] sm:$0xff]
        %v6338 = vld [vmem:[%s8 + $0x1b8] sm:$0xff]
        %v6339 = vld [vmem:[%s8 + $0x1c0] sm:$0xff]
        %v6340 = vld [vmem:[%s8 + $0x1c8] sm:$0xff]
        %v6341 = vld [vmem:[%s8 + $0x1d0] sm:$0xff]
        %v6342 = vld [vmem:[%s8 + $0x1d8] sm:$0xff]
        %v6343 = vld [vmem:[%s8 + $0x1e0] sm:$0xff]
        %v6344 = vld [vmem:[%s8 + $0x1e8] sm:$0xff]
        %v6345 = vld [vmem:[%s8 + $0x1f0] sm:$0xff]
        %v6346 = vld [vmem:[%s8 + $0x1f8] sm:$0xff]
        %6348 = vset.pattern.permute.xlu0 0
        %6349 = vperm.xlu0 %6348, %v6283
        %v6350 = vpop.permute.xlu0 %6349
        %6353 = vset.pattern.permute.xlu0 0
        %6354 = vperm.xlu0 %6353, %v6284
        %v6355 = vpop.permute.xlu0 %6354
        %6358 = vset.pattern.permute.xlu0 0
        %6359 = vperm.xlu0 %6358, %v6285
        %v6360 = vpop.permute.xlu0 %6359
        %6363 = vset.pattern.permute.xlu0 0
        %6364 = vperm.xlu0 %6363, %v6286
        %v6365 = vpop.permute.xlu0 %6364
        %6368 = vset.pattern.permute.xlu0 0
        %6369 = vperm.xlu0 %6368, %v6287
        %v6370 = vpop.permute.xlu0 %6369
        %6373 = vset.pattern.permute.xlu0 0
        %6374 = vperm.xlu0 %6373, %v6288
        %v6375 = vpop.permute.xlu0 %6374
        %6378 = vset.pattern.permute.xlu0 0
        %6379 = vperm.xlu0 %6378, %v6289
        %v6380 = vpop.permute.xlu0 %6379
        %6383 = vset.pattern.permute.xlu0 0
        %6384 = vperm.xlu0 %6383, %v6290
        %v6385 = vpop.permute.xlu0 %6384
        %6388 = vset.pattern.permute.xlu0 0
        %6389 = vperm.xlu0 %6388, %v6291
        %v6390 = vpop.permute.xlu0 %6389
        %6393 = vset.pattern.permute.xlu0 0
        %6394 = vperm.xlu0 %6393, %v6292
        %v6395 = vpop.permute.xlu0 %6394
        %6398 = vset.pattern.permute.xlu0 0
        %6399 = vperm.xlu0 %6398, %v6293
        %v6400 = vpop.permute.xlu0 %6399
        %6403 = vset.pattern.permute.xlu0 0
        %6404 = vperm.xlu0 %6403, %v6294
        %v6405 = vpop.permute.xlu0 %6404
        %6408 = vset.pattern.permute.xlu0 0
        %6409 = vperm.xlu0 %6408, %v6295
        %v6410 = vpop.permute.xlu0 %6409
        %6413 = vset.pattern.permute.xlu0 0
        %6414 = vperm.xlu0 %6413, %v6296
        %v6415 = vpop.permute.xlu0 %6414
        %6418 = vset.pattern.permute.xlu0 0
        %6419 = vperm.xlu0 %6418, %v6297
        %v6420 = vpop.permute.xlu0 %6419
        %6423 = vset.pattern.permute.xlu0 0
        %6424 = vperm.xlu0 %6423, %v6298
        %v6425 = vpop.permute.xlu0 %6424
        %6428 = vset.pattern.permute.xlu0 0
        %6429 = vperm.xlu0 %6428, %v6299
        %v6430 = vpop.permute.xlu0 %6429
        %6433 = vset.pattern.permute.xlu0 0
        %6434 = vperm.xlu0 %6433, %v6300
        %v6435 = vpop.permute.xlu0 %6434
        %6438 = vset.pattern.permute.xlu0 0
        %6439 = vperm.xlu0 %6438, %v6301
        %v6440 = vpop.permute.xlu0 %6439
        %6443 = vset.pattern.permute.xlu0 0
        %6444 = vperm.xlu0 %6443, %v6302
        %v6445 = vpop.permute.xlu0 %6444
        %6448 = vset.pattern.permute.xlu0 0
        %6449 = vperm.xlu0 %6448, %v6303
        %v6450 = vpop.permute.xlu0 %6449
        %6453 = vset.pattern.permute.xlu0 0
        %6454 = vperm.xlu0 %6453, %v6304
        %v6455 = vpop.permute.xlu0 %6454
        %6458 = vset.pattern.permute.xlu0 0
        %6459 = vperm.xlu0 %6458, %v6305
        %v6460 = vpop.permute.xlu0 %6459
        %6463 = vset.pattern.permute.xlu0 0
        %6464 = vperm.xlu0 %6463, %v6306
        %v6465 = vpop.permute.xlu0 %6464
        %6468 = vset.pattern.permute.xlu0 0
        %6469 = vperm.xlu0 %6468, %v6307
        %v6470 = vpop.permute.xlu0 %6469
        %6473 = vset.pattern.permute.xlu0 0
        %6474 = vperm.xlu0 %6473, %v6308
        %v6475 = vpop.permute.xlu0 %6474
        %6478 = vset.pattern.permute.xlu0 0
        %6479 = vperm.xlu0 %6478, %v6309
        %v6480 = vpop.permute.xlu0 %6479
        %6483 = vset.pattern.permute.xlu0 0
        %6484 = vperm.xlu0 %6483, %v6310
        %v6485 = vpop.permute.xlu0 %6484
        %6488 = vset.pattern.permute.xlu0 0
        %6489 = vperm.xlu0 %6488, %v6311
        %v6490 = vpop.permute.xlu0 %6489
        %6493 = vset.pattern.permute.xlu0 0
        %6494 = vperm.xlu0 %6493, %v6312
        %v6495 = vpop.permute.xlu0 %6494
        %6498 = vset.pattern.permute.xlu0 0
        %6499 = vperm.xlu0 %6498, %v6313
        %v6500 = vpop.permute.xlu0 %6499
        %6503 = vset.pattern.permute.xlu0 0
        %6504 = vperm.xlu0 %6503, %v6314
        %v6505 = vpop.permute.xlu0 %6504
        %6508 = vset.pattern.permute.xlu0 0
        %6509 = vperm.xlu0 %6508, %v6315
        %v6510 = vpop.permute.xlu0 %6509
        %6513 = vset.pattern.permute.xlu0 0
        %6514 = vperm.xlu0 %6513, %v6316
        %v6515 = vpop.permute.xlu0 %6514
        %6518 = vset.pattern.permute.xlu0 0
        %6519 = vperm.xlu0 %6518, %v6317
        %v6520 = vpop.permute.xlu0 %6519
        %6523 = vset.pattern.permute.xlu0 0
        %6524 = vperm.xlu0 %6523, %v6318
        %v6525 = vpop.permute.xlu0 %6524
        %6528 = vset.pattern.permute.xlu0 0
        %6529 = vperm.xlu0 %6528, %v6319
        %v6530 = vpop.permute.xlu0 %6529
        %6533 = vset.pattern.permute.xlu0 0
        %6534 = vperm.xlu0 %6533, %v6320
        %v6535 = vpop.permute.xlu0 %6534
        %6538 = vset.pattern.permute.xlu0 0
        %6539 = vperm.xlu0 %6538, %v6321
        %v6540 = vpop.permute.xlu0 %6539
        %6543 = vset.pattern.permute.xlu0 0
        %6544 = vperm.xlu0 %6543, %v6322
        %v6545 = vpop.permute.xlu0 %6544
        %6548 = vset.pattern.permute.xlu0 0
        %6549 = vperm.xlu0 %6548, %v6323
        %v6550 = vpop.permute.xlu0 %6549
        %6553 = vset.pattern.permute.xlu0 0
        %6554 = vperm.xlu0 %6553, %v6324
        %v6555 = vpop.permute.xlu0 %6554
        %6558 = vset.pattern.permute.xlu0 0
        %6559 = vperm.xlu0 %6558, %v6325
        %v6560 = vpop.permute.xlu0 %6559
        %6563 = vset.pattern.permute.xlu0 0
        %6564 = vperm.xlu0 %6563, %v6326
        %v6565 = vpop.permute.xlu0 %6564
        %6568 = vset.pattern.permute.xlu0 0
        %6569 = vperm.xlu0 %6568, %v6327
        %v6570 = vpop.permute.xlu0 %6569
        %6573 = vset.pattern.permute.xlu0 0
        %6574 = vperm.xlu0 %6573, %v6328
        %v6575 = vpop.permute.xlu0 %6574
        %6578 = vset.pattern.permute.xlu0 0
        %6579 = vperm.xlu0 %6578, %v6329
        %v6580 = vpop.permute.xlu0 %6579
        %6583 = vset.pattern.permute.xlu0 0
        %6584 = vperm.xlu0 %6583, %v6330
        %v6585 = vpop.permute.xlu0 %6584
        %6588 = vset.pattern.permute.xlu0 0
        %6589 = vperm.xlu0 %6588, %v6331
        %v6590 = vpop.permute.xlu0 %6589
        %6593 = vset.pattern.permute.xlu0 0
        %6594 = vperm.xlu0 %6593, %v6332
        %v6595 = vpop.permute.xlu0 %6594
        %6598 = vset.pattern.permute.xlu0 0
        %6599 = vperm.xlu0 %6598, %v6333
        %v6600 = vpop.permute.xlu0 %6599
        %6603 = vset.pattern.permute.xlu0 0
        %6604 = vperm.xlu0 %6603, %v6334
        %v6605 = vpop.permute.xlu0 %6604
        %6608 = vset.pattern.permute.xlu0 0
        %6609 = vperm.xlu0 %6608, %v6335
        %v6610 = vpop.permute.xlu0 %6609
        %6613 = vset.pattern.permute.xlu0 0
        %6614 = vperm.xlu0 %6613, %v6336
        %v6615 = vpop.permute.xlu0 %6614
        %6618 = vset.pattern.permute.xlu0 0
        %6619 = vperm.xlu0 %6618, %v6337
        %v6620 = vpop.permute.xlu0 %6619
        %6623 = vset.pattern.permute.xlu0 0
        %6624 = vperm.xlu0 %6623, %v6338
        %v6625 = vpop.permute.xlu0 %6624
        %6628 = vset.pattern.permute.xlu0 0
        %6629 = vperm.xlu0 %6628, %v6339
        %v6630 = vpop.permute.xlu0 %6629
        %6633 = vset.pattern.permute.xlu0 0
        %6634 = vperm.xlu0 %6633, %v6340
        %v6635 = vpop.permute.xlu0 %6634
        %6638 = vset.pattern.permute.xlu0 0
        %6639 = vperm.xlu0 %6638, %v6341
        %v6640 = vpop.permute.xlu0 %6639
        %6643 = vset.pattern.permute.xlu0 0
        %6644 = vperm.xlu0 %6643, %v6342
        %v6645 = vpop.permute.xlu0 %6644
        %6648 = vset.pattern.permute.xlu0 0
        %6649 = vperm.xlu0 %6648, %v6343
        %v6650 = vpop.permute.xlu0 %6649
        %6653 = vset.pattern.permute.xlu0 0
        %6654 = vperm.xlu0 %6653, %v6344
        %v6655 = vpop.permute.xlu0 %6654
        %6658 = vset.pattern.permute.xlu0 0
        %6659 = vperm.xlu0 %6658, %v6345
        %v6660 = vpop.permute.xlu0 %6659
        %6663 = vset.pattern.permute.xlu0 0
        %6664 = vperm.xlu0 %6663, %v6346
        %v6665 = vpop.permute.xlu0 %6664
        %v6923 = vunpack.c.l.b16 %v5963
        %v6924 = vunpack.c.h.b16 %v5963
        %v6925 = vunpack.c.l.b16 %v5964
        %v6926 = vunpack.c.h.b16 %v5964
        %v6927 = vunpack.c.l.b16 %v5965
        %v6928 = vunpack.c.h.b16 %v5965
        %v6929 = vunpack.c.l.b16 %v5966
        %v6930 = vunpack.c.h.b16 %v5966
        %v6931 = vunpack.c.l.b16 %v5967
        %v6932 = vunpack.c.h.b16 %v5967
        %v6933 = vunpack.c.l.b16 %v5968
        %v6934 = vunpack.c.h.b16 %v5968
        %v6935 = vunpack.c.l.b16 %v5969
        %v6936 = vunpack.c.h.b16 %v5969
        %v6937 = vunpack.c.l.b16 %v5970
        %v6938 = vunpack.c.h.b16 %v5970
        %v6939 = vunpack.c.l.b16 %v5971
        %v6940 = vunpack.c.h.b16 %v5971
        %v6941 = vunpack.c.l.b16 %v5972
        %v6942 = vunpack.c.h.b16 %v5972
        %v6943 = vunpack.c.l.b16 %v5973
        %v6944 = vunpack.c.h.b16 %v5973
        %v6945 = vunpack.c.l.b16 %v5974
        %v6946 = vunpack.c.h.b16 %v5974
        %v6947 = vunpack.c.l.b16 %v5975
        %v6948 = vunpack.c.h.b16 %v5975
        %v6949 = vunpack.c.l.b16 %v5976
        %v6950 = vunpack.c.h.b16 %v5976
        %v6951 = vunpack.c.l.b16 %v5977
        %v6952 = vunpack.c.h.b16 %v5977
        %v6953 = vunpack.c.l.b16 %v5978
        %v6954 = vunpack.c.h.b16 %v5978
        %v6955 = vunpack.c.l.b16 %v5979
        %v6956 = vunpack.c.h.b16 %v5979
        %v6957 = vunpack.c.l.b16 %v5980
        %v6958 = vunpack.c.h.b16 %v5980
        %v6959 = vunpack.c.l.b16 %v5981
        %v6960 = vunpack.c.h.b16 %v5981
        %v6961 = vunpack.c.l.b16 %v5982
        %v6962 = vunpack.c.h.b16 %v5982
        %v6963 = vunpack.c.l.b16 %v5983
        %v6964 = vunpack.c.h.b16 %v5983
        %v6965 = vunpack.c.l.b16 %v5984
        %v6966 = vunpack.c.h.b16 %v5984
        %v6967 = vunpack.c.l.b16 %v5985
        %v6968 = vunpack.c.h.b16 %v5985
        %v6969 = vunpack.c.l.b16 %v5986
        %v6970 = vunpack.c.h.b16 %v5986
        %v6971 = vunpack.c.l.b16 %v5987
        %v6972 = vunpack.c.h.b16 %v5987
        %v6973 = vunpack.c.l.b16 %v5988
        %v6974 = vunpack.c.h.b16 %v5988
        %v6975 = vunpack.c.l.b16 %v5989
        %v6976 = vunpack.c.h.b16 %v5989
        %v6977 = vunpack.c.l.b16 %v5990
        %v6978 = vunpack.c.h.b16 %v5990
        %v6979 = vunpack.c.l.b16 %v5991
        %v6980 = vunpack.c.h.b16 %v5991
        %v6981 = vunpack.c.l.b16 %v5992
        %v6982 = vunpack.c.h.b16 %v5992
        %v6983 = vunpack.c.l.b16 %v5993
        %v6984 = vunpack.c.h.b16 %v5993
        %v6985 = vunpack.c.l.b16 %v5994
        %v6986 = vunpack.c.h.b16 %v5994
        %v6987 = vunpack.c.l.b16 %v5995
        %v6988 = vunpack.c.h.b16 %v5995
        %v6989 = vunpack.c.l.b16 %v5996
        %v6990 = vunpack.c.h.b16 %v5996
        %v6991 = vunpack.c.l.b16 %v5997
        %v6992 = vunpack.c.h.b16 %v5997
        %v6993 = vunpack.c.l.b16 %v5998
        %v6994 = vunpack.c.h.b16 %v5998
        %v6995 = vunpack.c.l.b16 %v5999
        %v6996 = vunpack.c.h.b16 %v5999
        %v6997 = vunpack.c.l.b16 %v6000
        %v6998 = vunpack.c.h.b16 %v6000
        %v6999 = vunpack.c.l.b16 %v6001
        %v7000 = vunpack.c.h.b16 %v6001
        %v7001 = vunpack.c.l.b16 %v6002
        %v7002 = vunpack.c.h.b16 %v6002
        %v7003 = vunpack.c.l.b16 %v6003
        %v7004 = vunpack.c.h.b16 %v6003
        %v7005 = vunpack.c.l.b16 %v6004
        %v7006 = vunpack.c.h.b16 %v6004
        %v7007 = vunpack.c.l.b16 %v6005
        %v7008 = vunpack.c.h.b16 %v6005
        %v7009 = vunpack.c.l.b16 %v6006
        %v7010 = vunpack.c.h.b16 %v6006
        %v7011 = vunpack.c.l.b16 %v6007
        %v7012 = vunpack.c.h.b16 %v6007
        %v7013 = vunpack.c.l.b16 %v6008
        %v7014 = vunpack.c.h.b16 %v6008
        %v7015 = vunpack.c.l.b16 %v6009
        %v7016 = vunpack.c.h.b16 %v6009
        %v7017 = vunpack.c.l.b16 %v6010
        %v7018 = vunpack.c.h.b16 %v6010
        %v7019 = vunpack.c.l.b16 %v6011
        %v7020 = vunpack.c.h.b16 %v6011
        %v7021 = vunpack.c.l.b16 %v6012
        %v7022 = vunpack.c.h.b16 %v6012
        %v7023 = vunpack.c.l.b16 %v6013
        %v7024 = vunpack.c.h.b16 %v6013
        %v7025 = vunpack.c.l.b16 %v6014
        %v7026 = vunpack.c.h.b16 %v6014
        %v7027 = vunpack.c.l.b16 %v6015
        %v7028 = vunpack.c.h.b16 %v6015
        %v7029 = vunpack.c.l.b16 %v6016
        %v7030 = vunpack.c.h.b16 %v6016
        %v7031 = vunpack.c.l.b16 %v6017
        %v7032 = vunpack.c.h.b16 %v6017
        %v7033 = vunpack.c.l.b16 %v6018
        %v7034 = vunpack.c.h.b16 %v6018
        %v7035 = vunpack.c.l.b16 %v6019
        %v7036 = vunpack.c.h.b16 %v6019
        %v7037 = vunpack.c.l.b16 %v6020
        %v7038 = vunpack.c.h.b16 %v6020
        %v7039 = vunpack.c.l.b16 %v6021
        %v7040 = vunpack.c.h.b16 %v6021
        %v7041 = vunpack.c.l.b16 %v6022
        %v7042 = vunpack.c.h.b16 %v6022
        %v7043 = vunpack.c.l.b16 %v6023
        %v7044 = vunpack.c.h.b16 %v6023
        %v7045 = vunpack.c.l.b16 %v6024
        %v7046 = vunpack.c.h.b16 %v6024
        %v7047 = vunpack.c.l.b16 %v6025
        %v7048 = vunpack.c.h.b16 %v6025
        %v7049 = vunpack.c.l.b16 %v6026
        %v7050 = vunpack.c.h.b16 %v6026
        %v7051 = vunpack.c.l.b16 %v6027
        %v7052 = vunpack.c.h.b16 %v6027
        %v7053 = vunpack.c.l.b16 %v6028
        %v7054 = vunpack.c.h.b16 %v6028
        %v7055 = vunpack.c.l.b16 %v6029
        %v7056 = vunpack.c.h.b16 %v6029
        %v7057 = vunpack.c.l.b16 %v6030
        %v7058 = vunpack.c.h.b16 %v6030
        %v7059 = vunpack.c.l.b16 %v6031
        %v7060 = vunpack.c.h.b16 %v6031
        %v7061 = vunpack.c.l.b16 %v6032
        %v7062 = vunpack.c.h.b16 %v6032
        %v7063 = vunpack.c.l.b16 %v6033
        %v7064 = vunpack.c.h.b16 %v6033
        %v7065 = vunpack.c.l.b16 %v6034
        %v7066 = vunpack.c.h.b16 %v6034
        %v7067 = vunpack.c.l.b16 %v6035
        %v7068 = vunpack.c.h.b16 %v6035
        %v7069 = vunpack.c.l.b16 %v6036
        %v7070 = vunpack.c.h.b16 %v6036
        %v7071 = vunpack.c.l.b16 %v6037
        %v7072 = vunpack.c.h.b16 %v6037
        %v7073 = vunpack.c.l.b16 %v6038
        %v7074 = vunpack.c.h.b16 %v6038
        %v7075 = vunpack.c.l.b16 %v6039
        %v7076 = vunpack.c.h.b16 %v6039
        %v7077 = vunpack.c.l.b16 %v6040
        %v7078 = vunpack.c.h.b16 %v6040
        %v7079 = vunpack.c.l.b16 %v6041
        %v7080 = vunpack.c.h.b16 %v6041
        %v7081 = vunpack.c.l.b16 %v6042
        %v7082 = vunpack.c.h.b16 %v6042
        %v7083 = vunpack.c.l.b16 %v6043
        %v7084 = vunpack.c.h.b16 %v6043
        %v7085 = vunpack.c.l.b16 %v6044
        %v7086 = vunpack.c.h.b16 %v6044
        %v7087 = vunpack.c.l.b16 %v6045
        %v7088 = vunpack.c.h.b16 %v6045
        %v7089 = vunpack.c.l.b16 %v6046
        %v7090 = vunpack.c.h.b16 %v6046
        %v7091 = vunpack.c.l.b16 %v6047
        %v7092 = vunpack.c.h.b16 %v6047
        %v7093 = vunpack.c.l.b16 %v6048
        %v7094 = vunpack.c.h.b16 %v6048
        %v7095 = vunpack.c.l.b16 %v6049
        %v7096 = vunpack.c.h.b16 %v6049
        %v7097 = vunpack.c.l.b16 %v6050
        %v7098 = vunpack.c.h.b16 %v6050
        %v7099 = vunpack.c.l.b16 %v6051
        %v7100 = vunpack.c.h.b16 %v6051
        %v7101 = vunpack.c.l.b16 %v6052
        %v7102 = vunpack.c.h.b16 %v6052
        %v7103 = vunpack.c.l.b16 %v6053
        %v7104 = vunpack.c.h.b16 %v6053
        %v7105 = vunpack.c.l.b16 %v6054
        %v7106 = vunpack.c.h.b16 %v6054
        %v7107 = vunpack.c.l.b16 %v6055
        %v7108 = vunpack.c.h.b16 %v6055
        %v7109 = vunpack.c.l.b16 %v6056
        %v7110 = vunpack.c.h.b16 %v6056
        %v7111 = vunpack.c.l.b16 %v6057
        %v7112 = vunpack.c.h.b16 %v6057
        %v7113 = vunpack.c.l.b16 %v6058
        %v7114 = vunpack.c.h.b16 %v6058
        %v7115 = vunpack.c.l.b16 %v6059
        %v7116 = vunpack.c.h.b16 %v6059
        %v7117 = vunpack.c.l.b16 %v6060
        %v7118 = vunpack.c.h.b16 %v6060
        %v7119 = vunpack.c.l.b16 %v6061
        %v7120 = vunpack.c.h.b16 %v6061
        %v7121 = vunpack.c.l.b16 %v6062
        %v7122 = vunpack.c.h.b16 %v6062
        %v7123 = vunpack.c.l.b16 %v6063
        %v7124 = vunpack.c.h.b16 %v6063
        %v7125 = vunpack.c.l.b16 %v6064
        %v7126 = vunpack.c.h.b16 %v6064
        %v7127 = vunpack.c.l.b16 %v6065
        %v7128 = vunpack.c.h.b16 %v6065
        %v7129 = vunpack.c.l.b16 %v6066
        %v7130 = vunpack.c.h.b16 %v6066
        %v7131 = vunpack.c.l.b16 %v6067
        %v7132 = vunpack.c.h.b16 %v6067
        %v7133 = vunpack.c.l.b16 %v6068
        %v7134 = vunpack.c.h.b16 %v6068
        %v7135 = vunpack.c.l.b16 %v6069
        %v7136 = vunpack.c.h.b16 %v6069
        %v7137 = vunpack.c.l.b16 %v6070
        %v7138 = vunpack.c.h.b16 %v6070
        %v7139 = vunpack.c.l.b16 %v6071
        %v7140 = vunpack.c.h.b16 %v6071
        %v7141 = vunpack.c.l.b16 %v6072
        %v7142 = vunpack.c.h.b16 %v6072
        %v7143 = vunpack.c.l.b16 %v6073
        %v7144 = vunpack.c.h.b16 %v6073
        %v7145 = vunpack.c.l.b16 %v6074
        %v7146 = vunpack.c.h.b16 %v6074
        %v7147 = vunpack.c.l.b16 %v6075
        %v7148 = vunpack.c.h.b16 %v6075
        %v7149 = vunpack.c.l.b16 %v6076
        %v7150 = vunpack.c.h.b16 %v6076
        %v7151 = vunpack.c.l.b16 %v6077
        %v7152 = vunpack.c.h.b16 %v6077
        %v7153 = vunpack.c.l.b16 %v6078
        %v7154 = vunpack.c.h.b16 %v6078
        %v7155 = vunpack.c.l.b16 %v6079
        %v7156 = vunpack.c.h.b16 %v6079
        %v7157 = vunpack.c.l.b16 %v6080
        %v7158 = vunpack.c.h.b16 %v6080
        %v7159 = vunpack.c.l.b16 %v6081
        %v7160 = vunpack.c.h.b16 %v6081
        %v7161 = vunpack.c.l.b16 %v6082
        %v7162 = vunpack.c.h.b16 %v6082
        %v7163 = vunpack.c.l.b16 %v6083
        %v7164 = vunpack.c.h.b16 %v6083
        %v7165 = vunpack.c.l.b16 %v6084
        %v7166 = vunpack.c.h.b16 %v6084
        %v7167 = vunpack.c.l.b16 %v6085
        %v7168 = vunpack.c.h.b16 %v6085
        %v7169 = vunpack.c.l.b16 %v6086
        %v7170 = vunpack.c.h.b16 %v6086
        %v7171 = vunpack.c.l.b16 %v6087
        %v7172 = vunpack.c.h.b16 %v6087
        %v7173 = vunpack.c.l.b16 %v6088
        %v7174 = vunpack.c.h.b16 %v6088
        %v7175 = vunpack.c.l.b16 %v6089
        %v7176 = vunpack.c.h.b16 %v6089
        %v7177 = vunpack.c.l.b16 %v6090
        %v7178 = vunpack.c.h.b16 %v6090
        %v7179 = vunpack.c.l.b16 %v6091
        %v7180 = vunpack.c.h.b16 %v6091
        %v7181 = vunpack.c.l.b16 %v6092
        %v7182 = vunpack.c.h.b16 %v6092
        %v7183 = vunpack.c.l.b16 %v6093
        %v7184 = vunpack.c.h.b16 %v6093
        %v7185 = vunpack.c.l.b16 %v6094
        %v7186 = vunpack.c.h.b16 %v6094
        %v7187 = vunpack.c.l.b16 %v6095
        %v7188 = vunpack.c.h.b16 %v6095
        %v7189 = vunpack.c.l.b16 %v6096
        %v7190 = vunpack.c.h.b16 %v6096
        %v7191 = vunpack.c.l.b16 %v6097
        %v7192 = vunpack.c.h.b16 %v6097
        %v7193 = vunpack.c.l.b16 %v6098
        %v7194 = vunpack.c.h.b16 %v6098
        %v7195 = vunpack.c.l.b16 %v6099
        %v7196 = vunpack.c.h.b16 %v6099
        %v7197 = vunpack.c.l.b16 %v6100
        %v7198 = vunpack.c.h.b16 %v6100
        %v7199 = vunpack.c.l.b16 %v6101
        %v7200 = vunpack.c.h.b16 %v6101
        %v7201 = vunpack.c.l.b16 %v6102
        %v7202 = vunpack.c.h.b16 %v6102
        %v7203 = vunpack.c.l.b16 %v6103
        %v7204 = vunpack.c.h.b16 %v6103
        %v7205 = vunpack.c.l.b16 %v6104
        %v7206 = vunpack.c.h.b16 %v6104
        %v7207 = vunpack.c.l.b16 %v6105
        %v7208 = vunpack.c.h.b16 %v6105
        %v7209 = vunpack.c.l.b16 %v6106
        %v7210 = vunpack.c.h.b16 %v6106
        %v7211 = vunpack.c.l.b16 %v6107
        %v7212 = vunpack.c.h.b16 %v6107
        %v7213 = vunpack.c.l.b16 %v6108
        %v7214 = vunpack.c.h.b16 %v6108
        %v7215 = vunpack.c.l.b16 %v6109
        %v7216 = vunpack.c.h.b16 %v6109
        %v7217 = vunpack.c.l.b16 %v6110
        %v7218 = vunpack.c.h.b16 %v6110
        %v7219 = vunpack.c.l.b16 %v6111
        %v7220 = vunpack.c.h.b16 %v6111
        %v7221 = vunpack.c.l.b16 %v6112
        %v7222 = vunpack.c.h.b16 %v6112
        %v7223 = vunpack.c.l.b16 %v6113
        %v7224 = vunpack.c.h.b16 %v6113
        %v7225 = vunpack.c.l.b16 %v6114
        %v7226 = vunpack.c.h.b16 %v6114
        %v7227 = vunpack.c.l.b16 %v6115
        %v7228 = vunpack.c.h.b16 %v6115
        %v7229 = vunpack.c.l.b16 %v6116
        %v7230 = vunpack.c.h.b16 %v6116
        %v7231 = vunpack.c.l.b16 %v6117
        %v7232 = vunpack.c.h.b16 %v6117
        %v7233 = vunpack.c.l.b16 %v6118
        %v7234 = vunpack.c.h.b16 %v6118
        %v7235 = vunpack.c.l.b16 %v6119
        %v7236 = vunpack.c.h.b16 %v6119
        %v7237 = vunpack.c.l.b16 %v6120
        %v7238 = vunpack.c.h.b16 %v6120
        %v7239 = vunpack.c.l.b16 %v6121
        %v7240 = vunpack.c.h.b16 %v6121
        %v7241 = vunpack.c.l.b16 %v6122
        %v7242 = vunpack.c.h.b16 %v6122
        %v7243 = vunpack.c.l.b16 %v6123
        %v7244 = vunpack.c.h.b16 %v6123
        %v7245 = vunpack.c.l.b16 %v6124
        %v7246 = vunpack.c.h.b16 %v6124
        %v7247 = vunpack.c.l.b16 %v6125
        %v7248 = vunpack.c.h.b16 %v6125
        %v7249 = vunpack.c.l.b16 %v6126
        %v7250 = vunpack.c.h.b16 %v6126
        %v7251 = vunpack.c.l.b16 %v6127
        %v7252 = vunpack.c.h.b16 %v6127
        %v7253 = vunpack.c.l.b16 %v6128
        %v7254 = vunpack.c.h.b16 %v6128
        %v7255 = vunpack.c.l.b16 %v6129
        %v7256 = vunpack.c.h.b16 %v6129
        %v7257 = vunpack.c.l.b16 %v6130
        %v7258 = vunpack.c.h.b16 %v6130
        %v7259 = vunpack.c.l.b16 %v6131
        %v7260 = vunpack.c.h.b16 %v6131
        %v7261 = vunpack.c.l.b16 %v6132
        %v7262 = vunpack.c.h.b16 %v6132
        %v7263 = vunpack.c.l.b16 %v6133
        %v7264 = vunpack.c.h.b16 %v6133
        %v7265 = vunpack.c.l.b16 %v6134
        %v7266 = vunpack.c.h.b16 %v6134
        %v7267 = vunpack.c.l.b16 %v6135
        %v7268 = vunpack.c.h.b16 %v6135
        %v7269 = vunpack.c.l.b16 %v6136
        %v7270 = vunpack.c.h.b16 %v6136
        %v7271 = vunpack.c.l.b16 %v6137
        %v7272 = vunpack.c.h.b16 %v6137
        %v7273 = vunpack.c.l.b16 %v6138
        %v7274 = vunpack.c.h.b16 %v6138
        %v7275 = vunpack.c.l.b16 %v6139
        %v7276 = vunpack.c.h.b16 %v6139
        %v7277 = vunpack.c.l.b16 %v6140
        %v7278 = vunpack.c.h.b16 %v6140
        %v7279 = vunpack.c.l.b16 %v6141
        %v7280 = vunpack.c.h.b16 %v6141
        %v7281 = vunpack.c.l.b16 %v6142
        %v7282 = vunpack.c.h.b16 %v6142
        %v7283 = vunpack.c.l.b16 %v6143
        %v7284 = vunpack.c.h.b16 %v6143
        %v7285 = vunpack.c.l.b16 %v6144
        %v7286 = vunpack.c.h.b16 %v6144
        %v7287 = vunpack.c.l.b16 %v6145
        %v7288 = vunpack.c.h.b16 %v6145
        %v7289 = vunpack.c.l.b16 %v6146
        %v7290 = vunpack.c.h.b16 %v6146
        %v7291 = vunpack.c.l.b16 %v6147
        %v7292 = vunpack.c.h.b16 %v6147
        %v7293 = vunpack.c.l.b16 %v6148
        %v7294 = vunpack.c.h.b16 %v6148
        %v7295 = vunpack.c.l.b16 %v6149
        %v7296 = vunpack.c.h.b16 %v6149
        %v7297 = vunpack.c.l.b16 %v6150
        %v7298 = vunpack.c.h.b16 %v6150
        %v7299 = vunpack.c.l.b16 %v6151
        %v7300 = vunpack.c.h.b16 %v6151
        %v7301 = vunpack.c.l.b16 %v6152
        %v7302 = vunpack.c.h.b16 %v6152
        %v7303 = vunpack.c.l.b16 %v6153
        %v7304 = vunpack.c.h.b16 %v6153
        %v7305 = vunpack.c.l.b16 %v6154
        %v7306 = vunpack.c.h.b16 %v6154
        %v7307 = vunpack.c.l.b16 %v6155
        %v7308 = vunpack.c.h.b16 %v6155
        %v7309 = vunpack.c.l.b16 %v6156
        %v7310 = vunpack.c.h.b16 %v6156
        %v7311 = vunpack.c.l.b16 %v6157
        %v7312 = vunpack.c.h.b16 %v6157
        %v7313 = vunpack.c.l.b16 %v6158
        %v7314 = vunpack.c.h.b16 %v6158
        %v7315 = vunpack.c.l.b16 %v6159
        %v7316 = vunpack.c.h.b16 %v6159
        %v7317 = vunpack.c.l.b16 %v6160
        %v7318 = vunpack.c.h.b16 %v6160
        %v7319 = vunpack.c.l.b16 %v6161
        %v7320 = vunpack.c.h.b16 %v6161
        %v7321 = vunpack.c.l.b16 %v6162
        %v7322 = vunpack.c.h.b16 %v6162
        %v7323 = vunpack.c.l.b16 %v6163
        %v7324 = vunpack.c.h.b16 %v6163
        %v7325 = vunpack.c.l.b16 %v6164
        %v7326 = vunpack.c.h.b16 %v6164
        %v7327 = vunpack.c.l.b16 %v6165
        %v7328 = vunpack.c.h.b16 %v6165
        %v7329 = vunpack.c.l.b16 %v6166
        %v7330 = vunpack.c.h.b16 %v6166
        %v7331 = vunpack.c.l.b16 %v6167
        %v7332 = vunpack.c.h.b16 %v6167
        %v7333 = vunpack.c.l.b16 %v6168
        %v7334 = vunpack.c.h.b16 %v6168
        %v7335 = vunpack.c.l.b16 %v6169
        %v7336 = vunpack.c.h.b16 %v6169
        %v7337 = vunpack.c.l.b16 %v6170
        %v7338 = vunpack.c.h.b16 %v6170
        %v7339 = vunpack.c.l.b16 %v6171
        %v7340 = vunpack.c.h.b16 %v6171
        %v7341 = vunpack.c.l.b16 %v6172
        %v7342 = vunpack.c.h.b16 %v6172
        %v7343 = vunpack.c.l.b16 %v6173
        %v7344 = vunpack.c.h.b16 %v6173
        %v7345 = vunpack.c.l.b16 %v6174
        %v7346 = vunpack.c.h.b16 %v6174
        %v7347 = vunpack.c.l.b16 %v6175
        %v7348 = vunpack.c.h.b16 %v6175
        %v7349 = vunpack.c.l.b16 %v6176
        %v7350 = vunpack.c.h.b16 %v6176
        %v7351 = vunpack.c.l.b16 %v6177
        %v7352 = vunpack.c.h.b16 %v6177
        %v7353 = vunpack.c.l.b16 %v6178
        %v7354 = vunpack.c.h.b16 %v6178
        %v7355 = vunpack.c.l.b16 %v6179
        %v7356 = vunpack.c.h.b16 %v6179
        %v7357 = vunpack.c.l.b16 %v6180
        %v7358 = vunpack.c.h.b16 %v6180
        %v7359 = vunpack.c.l.b16 %v6181
        %v7360 = vunpack.c.h.b16 %v6181
        %v7361 = vunpack.c.l.b16 %v6182
        %v7362 = vunpack.c.h.b16 %v6182
        %v7363 = vunpack.c.l.b16 %v6183
        %v7364 = vunpack.c.h.b16 %v6183
        %v7365 = vunpack.c.l.b16 %v6184
        %v7366 = vunpack.c.h.b16 %v6184
        %v7367 = vunpack.c.l.b16 %v6185
        %v7368 = vunpack.c.h.b16 %v6185
        %v7369 = vunpack.c.l.b16 %v6186
        %v7370 = vunpack.c.h.b16 %v6186
        %v7371 = vunpack.c.l.b16 %v6187
        %v7372 = vunpack.c.h.b16 %v6187
        %v7373 = vunpack.c.l.b16 %v6188
        %v7374 = vunpack.c.h.b16 %v6188
        %v7375 = vunpack.c.l.b16 %v6189
        %v7376 = vunpack.c.h.b16 %v6189
        %v7377 = vunpack.c.l.b16 %v6190
        %v7378 = vunpack.c.h.b16 %v6190
        %v7379 = vunpack.c.l.b16 %v6191
        %v7380 = vunpack.c.h.b16 %v6191
        %v7381 = vunpack.c.l.b16 %v6192
        %v7382 = vunpack.c.h.b16 %v6192
        %v7383 = vunpack.c.l.b16 %v6193
        %v7384 = vunpack.c.h.b16 %v6193
        %v7385 = vunpack.c.l.b16 %v6194
        %v7386 = vunpack.c.h.b16 %v6194
        %v7387 = vunpack.c.l.b16 %v6195
        %v7388 = vunpack.c.h.b16 %v6195
        %v7389 = vunpack.c.l.b16 %v6196
        %v7390 = vunpack.c.h.b16 %v6196
        %v7391 = vunpack.c.l.b16 %v6197
        %v7392 = vunpack.c.h.b16 %v6197
        %v7393 = vunpack.c.l.b16 %v6198
        %v7394 = vunpack.c.h.b16 %v6198
        %v7395 = vunpack.c.l.b16 %v6199
        %v7396 = vunpack.c.h.b16 %v6199
        %v7397 = vunpack.c.l.b16 %v6200
        %v7398 = vunpack.c.h.b16 %v6200
        %v7399 = vunpack.c.l.b16 %v6201
        %v7400 = vunpack.c.h.b16 %v6201
        %v7401 = vunpack.c.l.b16 %v6202
        %v7402 = vunpack.c.h.b16 %v6202
        %v7403 = vunpack.c.l.b16 %v6203
        %v7404 = vunpack.c.h.b16 %v6203
        %v7405 = vunpack.c.l.b16 %v6204
        %v7406 = vunpack.c.h.b16 %v6204
        %v7407 = vunpack.c.l.b16 %v6205
        %v7408 = vunpack.c.h.b16 %v6205
        %v7409 = vunpack.c.l.b16 %v6206
        %v7410 = vunpack.c.h.b16 %v6206
        %v7411 = vunpack.c.l.b16 %v6207
        %v7412 = vunpack.c.h.b16 %v6207
        %v7413 = vunpack.c.l.b16 %v6208
        %v7414 = vunpack.c.h.b16 %v6208
        %v7415 = vunpack.c.l.b16 %v6209
        %v7416 = vunpack.c.h.b16 %v6209
        %v7417 = vunpack.c.l.b16 %v6210
        %v7418 = vunpack.c.h.b16 %v6210
        %v7419 = vunpack.c.l.b16 %v6211
        %v7420 = vunpack.c.h.b16 %v6211
        %v7421 = vunpack.c.l.b16 %v6212
        %v7422 = vunpack.c.h.b16 %v6212
        %v7423 = vunpack.c.l.b16 %v6213
        %v7424 = vunpack.c.h.b16 %v6213
        %v7425 = vunpack.c.l.b16 %v6214
        %v7426 = vunpack.c.h.b16 %v6214
        %v7427 = vunpack.c.l.b16 %v6215
        %v7428 = vunpack.c.h.b16 %v6215
        %v7429 = vunpack.c.l.b16 %v6216
        %v7430 = vunpack.c.h.b16 %v6216
        %v7431 = vunpack.c.l.b16 %v6217
        %v7432 = vunpack.c.h.b16 %v6217
        %v7433 = vunpack.c.l.b16 %v6218
        %v7434 = vunpack.c.h.b16 %v6218
        %v7435 = vpack.c.b16 %v6931, %v6923
        %v7436 = vpack.c.b16 %v6932, %v6924
        %v7437 = vpack.c.b16 %v6933, %v6925
        %v7438 = vpack.c.b16 %v6934, %v6926
        %v7439 = vpack.c.b16 %v6935, %v6927
        %v7440 = vpack.c.b16 %v6936, %v6928
        %v7441 = vpack.c.b16 %v6937, %v6929
        %v7442 = vpack.c.b16 %v6938, %v6930
        %v7443 = vpack.c.b16 %v6947, %v6939
        %v7444 = vpack.c.b16 %v6948, %v6940
        %v7445 = vpack.c.b16 %v6949, %v6941
        %v7446 = vpack.c.b16 %v6950, %v6942
        %v7447 = vpack.c.b16 %v6951, %v6943
        %v7448 = vpack.c.b16 %v6952, %v6944
        %v7449 = vpack.c.b16 %v6953, %v6945
        %v7450 = vpack.c.b16 %v6954, %v6946
        %v7451 = vpack.c.b16 %v6963, %v6955
        %v7452 = vpack.c.b16 %v6964, %v6956
        %v7453 = vpack.c.b16 %v6965, %v6957
        %v7454 = vpack.c.b16 %v6966, %v6958
        %v7455 = vpack.c.b16 %v6967, %v6959
        %v7456 = vpack.c.b16 %v6968, %v6960
        %v7457 = vpack.c.b16 %v6969, %v6961
        %v7458 = vpack.c.b16 %v6970, %v6962
        %v7459 = vpack.c.b16 %v6979, %v6971
        %v7460 = vpack.c.b16 %v6980, %v6972
        %v7461 = vpack.c.b16 %v6981, %v6973
        %v7462 = vpack.c.b16 %v6982, %v6974
        %v7463 = vpack.c.b16 %v6983, %v6975
        %v7464 = vpack.c.b16 %v6984, %v6976
        %v7465 = vpack.c.b16 %v6985, %v6977
        %v7466 = vpack.c.b16 %v6986, %v6978
        %v7467 = vpack.c.b16 %v6995, %v6987
        %v7468 = vpack.c.b16 %v6996, %v6988
        %v7469 = vpack.c.b16 %v6997, %v6989
        %v7470 = vpack.c.b16 %v6998, %v6990
        %v7471 = vpack.c.b16 %v6999, %v6991
        %v7472 = vpack.c.b16 %v7000, %v6992
        %v7473 = vpack.c.b16 %v7001, %v6993
        %v7474 = vpack.c.b16 %v7002, %v6994
        %v7475 = vpack.c.b16 %v7011, %v7003
        %v7476 = vpack.c.b16 %v7012, %v7004
        %v7477 = vpack.c.b16 %v7013, %v7005
        %v7478 = vpack.c.b16 %v7014, %v7006
        %v7479 = vpack.c.b16 %v7015, %v7007
        %v7480 = vpack.c.b16 %v7016, %v7008
        %v7481 = vpack.c.b16 %v7017, %v7009
        %v7482 = vpack.c.b16 %v7018, %v7010
        %v7483 = vpack.c.b16 %v7027, %v7019
        %v7484 = vpack.c.b16 %v7028, %v7020
        %v7485 = vpack.c.b16 %v7029, %v7021
        %v7486 = vpack.c.b16 %v7030, %v7022
        %v7487 = vpack.c.b16 %v7031, %v7023
        %v7488 = vpack.c.b16 %v7032, %v7024
        %v7489 = vpack.c.b16 %v7033, %v7025
        %v7490 = vpack.c.b16 %v7034, %v7026
        %v7491 = vpack.c.b16 %v7043, %v7035
        %v7492 = vpack.c.b16 %v7044, %v7036
        %v7493 = vpack.c.b16 %v7045, %v7037
        %v7494 = vpack.c.b16 %v7046, %v7038
        %v7495 = vpack.c.b16 %v7047, %v7039
        %v7496 = vpack.c.b16 %v7048, %v7040
        %v7497 = vpack.c.b16 %v7049, %v7041
        %v7498 = vpack.c.b16 %v7050, %v7042
        %v7499 = vpack.c.b16 %v7059, %v7051
        %v7500 = vpack.c.b16 %v7060, %v7052
        %v7501 = vpack.c.b16 %v7061, %v7053
        %v7502 = vpack.c.b16 %v7062, %v7054
        %v7503 = vpack.c.b16 %v7063, %v7055
        %v7504 = vpack.c.b16 %v7064, %v7056
        %v7505 = vpack.c.b16 %v7065, %v7057
        %v7506 = vpack.c.b16 %v7066, %v7058
        %v7507 = vpack.c.b16 %v7075, %v7067
        %v7508 = vpack.c.b16 %v7076, %v7068
        %v7509 = vpack.c.b16 %v7077, %v7069
        %v7510 = vpack.c.b16 %v7078, %v7070
        %v7511 = vpack.c.b16 %v7079, %v7071
        %v7512 = vpack.c.b16 %v7080, %v7072
        %v7513 = vpack.c.b16 %v7081, %v7073
        %v7514 = vpack.c.b16 %v7082, %v7074
        %v7515 = vpack.c.b16 %v7091, %v7083
        %v7516 = vpack.c.b16 %v7092, %v7084
        %v7517 = vpack.c.b16 %v7093, %v7085
        %v7518 = vpack.c.b16 %v7094, %v7086
        %v7519 = vpack.c.b16 %v7095, %v7087
        %v7520 = vpack.c.b16 %v7096, %v7088
        %v7521 = vpack.c.b16 %v7097, %v7089
        %v7522 = vpack.c.b16 %v7098, %v7090
        %v7523 = vpack.c.b16 %v7107, %v7099
        %v7524 = vpack.c.b16 %v7108, %v7100
        %v7525 = vpack.c.b16 %v7109, %v7101
        %v7526 = vpack.c.b16 %v7110, %v7102
        %v7527 = vpack.c.b16 %v7111, %v7103
        %v7528 = vpack.c.b16 %v7112, %v7104
        %v7529 = vpack.c.b16 %v7113, %v7105
        %v7530 = vpack.c.b16 %v7114, %v7106
        %v7531 = vpack.c.b16 %v7123, %v7115
        %v7532 = vpack.c.b16 %v7124, %v7116
        %v7533 = vpack.c.b16 %v7125, %v7117
        %v7534 = vpack.c.b16 %v7126, %v7118
        %v7535 = vpack.c.b16 %v7127, %v7119
        %v7536 = vpack.c.b16 %v7128, %v7120
        %v7537 = vpack.c.b16 %v7129, %v7121
        %v7538 = vpack.c.b16 %v7130, %v7122
        %v7539 = vpack.c.b16 %v7139, %v7131
        %v7540 = vpack.c.b16 %v7140, %v7132
        %v7541 = vpack.c.b16 %v7141, %v7133
        %v7542 = vpack.c.b16 %v7142, %v7134
        %v7543 = vpack.c.b16 %v7143, %v7135
        %v7544 = vpack.c.b16 %v7144, %v7136
        %v7545 = vpack.c.b16 %v7145, %v7137
        %v7546 = vpack.c.b16 %v7146, %v7138
        %v7547 = vpack.c.b16 %v7155, %v7147
        %v7548 = vpack.c.b16 %v7156, %v7148
        %v7549 = vpack.c.b16 %v7157, %v7149
        %v7550 = vpack.c.b16 %v7158, %v7150
        %v7551 = vpack.c.b16 %v7159, %v7151
        %v7552 = vpack.c.b16 %v7160, %v7152
        %v7553 = vpack.c.b16 %v7161, %v7153
        %v7554 = vpack.c.b16 %v7162, %v7154
        %v7555 = vpack.c.b16 %v7171, %v7163
        %v7556 = vpack.c.b16 %v7172, %v7164
        %v7557 = vpack.c.b16 %v7173, %v7165
        %v7558 = vpack.c.b16 %v7174, %v7166
        %v7559 = vpack.c.b16 %v7175, %v7167
        %v7560 = vpack.c.b16 %v7176, %v7168
        %v7561 = vpack.c.b16 %v7177, %v7169
        %v7562 = vpack.c.b16 %v7178, %v7170
        %v7563 = vpack.c.b16 %v7187, %v7179
        %v7564 = vpack.c.b16 %v7188, %v7180
        %v7565 = vpack.c.b16 %v7189, %v7181
        %v7566 = vpack.c.b16 %v7190, %v7182
        %v7567 = vpack.c.b16 %v7191, %v7183
        %v7568 = vpack.c.b16 %v7192, %v7184
        %v7569 = vpack.c.b16 %v7193, %v7185
        %v7570 = vpack.c.b16 %v7194, %v7186
        %v7571 = vpack.c.b16 %v7203, %v7195
        %v7572 = vpack.c.b16 %v7204, %v7196
        %v7573 = vpack.c.b16 %v7205, %v7197
        %v7574 = vpack.c.b16 %v7206, %v7198
        %v7575 = vpack.c.b16 %v7207, %v7199
        %v7576 = vpack.c.b16 %v7208, %v7200
        %v7577 = vpack.c.b16 %v7209, %v7201
        %v7578 = vpack.c.b16 %v7210, %v7202
        %v7579 = vpack.c.b16 %v7219, %v7211
        %v7580 = vpack.c.b16 %v7220, %v7212
        %v7581 = vpack.c.b16 %v7221, %v7213
        %v7582 = vpack.c.b16 %v7222, %v7214
        %v7583 = vpack.c.b16 %v7223, %v7215
        %v7584 = vpack.c.b16 %v7224, %v7216
        %v7585 = vpack.c.b16 %v7225, %v7217
        %v7586 = vpack.c.b16 %v7226, %v7218
        %v7587 = vpack.c.b16 %v7235, %v7227
        %v7588 = vpack.c.b16 %v7236, %v7228
        %v7589 = vpack.c.b16 %v7237, %v7229
        %v7590 = vpack.c.b16 %v7238, %v7230
        %v7591 = vpack.c.b16 %v7239, %v7231
        %v7592 = vpack.c.b16 %v7240, %v7232
        %v7593 = vpack.c.b16 %v7241, %v7233
        %v7594 = vpack.c.b16 %v7242, %v7234
        %v7595 = vpack.c.b16 %v7251, %v7243
        %v7596 = vpack.c.b16 %v7252, %v7244
        %v7597 = vpack.c.b16 %v7253, %v7245
        %v7598 = vpack.c.b16 %v7254, %v7246
        %v7599 = vpack.c.b16 %v7255, %v7247
        %v7600 = vpack.c.b16 %v7256, %v7248
        %v7601 = vpack.c.b16 %v7257, %v7249
        %v7602 = vpack.c.b16 %v7258, %v7250
        %v7603 = vpack.c.b16 %v7267, %v7259
        %v7604 = vpack.c.b16 %v7268, %v7260
        %v7605 = vpack.c.b16 %v7269, %v7261
        %v7606 = vpack.c.b16 %v7270, %v7262
        %v7607 = vpack.c.b16 %v7271, %v7263
        %v7608 = vpack.c.b16 %v7272, %v7264
        %v7609 = vpack.c.b16 %v7273, %v7265
        %v7610 = vpack.c.b16 %v7274, %v7266
        %v7611 = vpack.c.b16 %v7283, %v7275
        %v7612 = vpack.c.b16 %v7284, %v7276
        %v7613 = vpack.c.b16 %v7285, %v7277
        %v7614 = vpack.c.b16 %v7286, %v7278
        %v7615 = vpack.c.b16 %v7287, %v7279
        %v7616 = vpack.c.b16 %v7288, %v7280
        %v7617 = vpack.c.b16 %v7289, %v7281
        %v7618 = vpack.c.b16 %v7290, %v7282
        %v7619 = vpack.c.b16 %v7299, %v7291
        %v7620 = vpack.c.b16 %v7300, %v7292
        %v7621 = vpack.c.b16 %v7301, %v7293
        %v7622 = vpack.c.b16 %v7302, %v7294
        %v7623 = vpack.c.b16 %v7303, %v7295
        %v7624 = vpack.c.b16 %v7304, %v7296
        %v7625 = vpack.c.b16 %v7305, %v7297
        %v7626 = vpack.c.b16 %v7306, %v7298
        %v7627 = vpack.c.b16 %v7315, %v7307
        %v7628 = vpack.c.b16 %v7316, %v7308
        %v7629 = vpack.c.b16 %v7317, %v7309
        %v7630 = vpack.c.b16 %v7318, %v7310
        %v7631 = vpack.c.b16 %v7319, %v7311
        %v7632 = vpack.c.b16 %v7320, %v7312
        %v7633 = vpack.c.b16 %v7321, %v7313
        %v7634 = vpack.c.b16 %v7322, %v7314
        %v7635 = vpack.c.b16 %v7331, %v7323
        %v7636 = vpack.c.b16 %v7332, %v7324
        %v7637 = vpack.c.b16 %v7333, %v7325
        %v7638 = vpack.c.b16 %v7334, %v7326
        %v7639 = vpack.c.b16 %v7335, %v7327
        %v7640 = vpack.c.b16 %v7336, %v7328
        %v7641 = vpack.c.b16 %v7337, %v7329
        %v7642 = vpack.c.b16 %v7338, %v7330
        %v7643 = vpack.c.b16 %v7347, %v7339
        %v7644 = vpack.c.b16 %v7348, %v7340
        %v7645 = vpack.c.b16 %v7349, %v7341
        %v7646 = vpack.c.b16 %v7350, %v7342
        %v7647 = vpack.c.b16 %v7351, %v7343
        %v7648 = vpack.c.b16 %v7352, %v7344
        %v7649 = vpack.c.b16 %v7353, %v7345
        %v7650 = vpack.c.b16 %v7354, %v7346
        %v7651 = vpack.c.b16 %v7363, %v7355
        %v7652 = vpack.c.b16 %v7364, %v7356
        %v7653 = vpack.c.b16 %v7365, %v7357
        %v7654 = vpack.c.b16 %v7366, %v7358
        %v7655 = vpack.c.b16 %v7367, %v7359
        %v7656 = vpack.c.b16 %v7368, %v7360
        %v7657 = vpack.c.b16 %v7369, %v7361
        %v7658 = vpack.c.b16 %v7370, %v7362
        %v7659 = vpack.c.b16 %v7379, %v7371
        %v7660 = vpack.c.b16 %v7380, %v7372
        %v7661 = vpack.c.b16 %v7381, %v7373
        %v7662 = vpack.c.b16 %v7382, %v7374
        %v7663 = vpack.c.b16 %v7383, %v7375
        %v7664 = vpack.c.b16 %v7384, %v7376
        %v7665 = vpack.c.b16 %v7385, %v7377
        %v7666 = vpack.c.b16 %v7386, %v7378
        %v7667 = vpack.c.b16 %v7395, %v7387
        %v7668 = vpack.c.b16 %v7396, %v7388
        %v7669 = vpack.c.b16 %v7397, %v7389
        %v7670 = vpack.c.b16 %v7398, %v7390
        %v7671 = vpack.c.b16 %v7399, %v7391
        %v7672 = vpack.c.b16 %v7400, %v7392
        %v7673 = vpack.c.b16 %v7401, %v7393
        %v7674 = vpack.c.b16 %v7402, %v7394
        %v7675 = vpack.c.b16 %v7411, %v7403
        %v7676 = vpack.c.b16 %v7412, %v7404
        %v7677 = vpack.c.b16 %v7413, %v7405
        %v7678 = vpack.c.b16 %v7414, %v7406
        %v7679 = vpack.c.b16 %v7415, %v7407
        %v7680 = vpack.c.b16 %v7416, %v7408
        %v7681 = vpack.c.b16 %v7417, %v7409
        %v7682 = vpack.c.b16 %v7418, %v7410
        %v7683 = vpack.c.b16 %v7427, %v7419
        %v7684 = vpack.c.b16 %v7428, %v7420
        %v7685 = vpack.c.b16 %v7429, %v7421
        %v7686 = vpack.c.b16 %v7430, %v7422
        %v7687 = vpack.c.b16 %v7431, %v7423
        %v7688 = vpack.c.b16 %v7432, %v7424
        %v7689 = vpack.c.b16 %v7433, %v7425
        %v7690 = vpack.c.b16 %v7434, %v7426
        %7947 = vmatprep.subr.bf16.mxu0 0
        %7948 = vmatpush1.bf16.msra.mxu0 %v6219
        %7949 = vmatprep.subr.bf16.mxu0 0
        %7950 = vmatpush1.bf16.msra.mxu0 %v6220
        %7951 = vmatprep.subr.bf16.mxu0 0
        %7952 = vmatpush1.bf16.msra.mxu0 %v6221
        %7953 = vmatprep.subr.bf16.mxu0 0
        %7954 = vmatpush1.bf16.msra.mxu0 %v6222
        %7955 = vmatprep.subr.bf16.mxu0 0
        %7956 = vmatpush1.bf16.msra.mxu0 %v6223
        %7957 = vmatprep.subr.bf16.mxu0 0
        %7958 = vmatpush1.bf16.msra.mxu0 %v6224
        %7959 = vmatprep.subr.bf16.mxu0 0
        %7960 = vmatpush1.bf16.msra.mxu0 %v6225
        %7961 = vmatprep.subr.bf16.mxu0 0
        %7962 = vmatpush1.bf16.msra.mxu0 %v6226
        %7963 = vmatprep.subr.bf16.mxu0 0
        %7964 = vmatpush1.bf16.msra.mxu0 %v6227
        %7965 = vmatprep.subr.bf16.mxu0 0
        %7966 = vmatpush1.bf16.msra.mxu0 %v6228
        %7967 = vmatprep.subr.bf16.mxu0 0
        %7968 = vmatpush1.bf16.msra.mxu0 %v6229
        %7969 = vmatprep.subr.bf16.mxu0 0
        %7970 = vmatpush1.bf16.msra.mxu0 %v6230
        %7971 = vmatprep.subr.bf16.mxu0 0
        %7972 = vmatpush1.bf16.msra.mxu0 %v6231
        %7973 = vmatprep.subr.bf16.mxu0 0
        %7974 = vmatpush1.bf16.msra.mxu0 %v6232
        %7975 = vmatprep.subr.bf16.mxu0 0
        %7976 = vmatpush1.bf16.msra.mxu0 %v6233
        %7977 = vmatprep.subr.bf16.mxu0 0
        %7978 = vmatpush1.bf16.msra.mxu0 %v6234
        %7979 = vmatprep.mubr.bf16.mxu0 %v7436
        %7980 = vmatmul.mubr.bf16.gmra.mrb[0].mxu0 %v7435
        %v7981 = vpop.f32.mrb[0].mxu0
        %v7982 = vadd.f32 %v6350, %v7981
        %v7983 = vpop.f32.mrb[0].mxu0
        %v7984 = vpop.f32.mrb[0].mxu0
        %v7985 = vadd.f32 %v6355, %v7984
        %v7986 = vpop.f32.mrb[0].mxu0
        %7987 = vmatprep.mubr.bf16.mxu0 %v7444
        %7988 = vmatmul.mubr.bf16.gmra.mrb[0].mxu0 %v7443
        %v7989 = vpop.f32.mrb[0].mxu0
        %v7990 = vadd.f32 %v6360, %v7989
        %v7991 = vpop.f32.mrb[0].mxu0
        %v7992 = vpop.f32.mrb[0].mxu0
        %v7993 = vadd.f32 %v6365, %v7992
        %v7994 = vpop.f32.mrb[0].mxu0
        %7995 = vmatprep.mubr.bf16.mxu0 %v7452
        %7996 = vmatmul.mubr.bf16.gmra.mrb[0].mxu0 %v7451
        %v7997 = vpop.f32.mrb[0].mxu0
        %v7998 = vadd.f32 %v6370, %v7997
        %v7999 = vpop.f32.mrb[0].mxu0
        %v8000 = vpop.f32.mrb[0].mxu0
        %v8001 = vadd.f32 %v6375, %v8000
        %v8002 = vpop.f32.mrb[0].mxu0
        %8003 = vmatprep.mubr.bf16.mxu0 %v7460
        %8004 = vmatmul.mubr.bf16.gmra.mrb[0].mxu0 %v7459
        %v8005 = vpop.f32.mrb[0].mxu0
        %v8006 = vadd.f32 %v6380, %v8005
        %v8007 = vpop.f32.mrb[0].mxu0
        %v8008 = vpop.f32.mrb[0].mxu0
        %v8009 = vadd.f32 %v6385, %v8008
        %v8010 = vpop.f32.mrb[0].mxu0
        %8011 = vmatprep.mubr.bf16.mxu0 %v7468
        %8012 = vmatmul.mubr.bf16.gmra.mrb[0].mxu0 %v7467
        %v8013 = vpop.f32.mrb[0].mxu0
        %v8014 = vadd.f32 %v6390, %v8013
        %v8015 = vpop.f32.mrb[0].mxu0
        %v8016 = vpop.f32.mrb[0].mxu0
        %v8017 = vadd.f32 %v6395, %v8016
        %v8018 = vpop.f32.mrb[0].mxu0
        %8019 = vmatprep.mubr.bf16.mxu0 %v7476
        %8020 = vmatmul.mubr.bf16.gmra.mrb[0].mxu0 %v7475
        %v8021 = vpop.f32.mrb[0].mxu0
        %v8022 = vadd.f32 %v6400, %v8021
        %v8023 = vpop.f32.mrb[0].mxu0
        %v8024 = vpop.f32.mrb[0].mxu0
        %v8025 = vadd.f32 %v6405, %v8024
        %v8026 = vpop.f32.mrb[0].mxu0
        %8027 = vmatprep.mubr.bf16.mxu0 %v7484
        %8028 = vmatmul.mubr.bf16.gmra.mrb[0].mxu0 %v7483
        %v8029 = vpop.f32.mrb[0].mxu0
        %v8030 = vadd.f32 %v6410, %v8029
        %v8031 = vpop.f32.mrb[0].mxu0
        %v8032 = vpop.f32.mrb[0].mxu0
        %v8033 = vadd.f32 %v6415, %v8032
        %v8034 = vpop.f32.mrb[0].mxu0
        %8035 = vmatprep.mubr.bf16.mxu0 %v7492
        %8036 = vmatmul.mubr.bf16.gmra.mrb[0].mxu0 %v7491
        %v8037 = vpop.f32.mrb[0].mxu0
        %v8038 = vadd.f32 %v6420, %v8037
        %v8039 = vpop.f32.mrb[0].mxu0
        %v8040 = vpop.f32.mrb[0].mxu0
        %v8041 = vadd.f32 %v6425, %v8040
        %v8042 = vpop.f32.mrb[0].mxu0
        %8043 = vmatprep.mubr.bf16.mxu0 %v7500
        %8044 = vmatmul.mubr.bf16.gmra.mrb[0].mxu0 %v7499
        %v8045 = vpop.f32.mrb[0].mxu0
        %v8046 = vadd.f32 %v6430, %v8045
        %v8047 = vpop.f32.mrb[0].mxu0
        %v8048 = vpop.f32.mrb[0].mxu0
        %v8049 = vadd.f32 %v6435, %v8048
        %v8050 = vpop.f32.mrb[0].mxu0
        %8051 = vmatprep.mubr.bf16.mxu0 %v7508
        %8052 = vmatmul.mubr.bf16.gmra.mrb[0].mxu0 %v7507
        %v8053 = vpop.f32.mrb[0].mxu0
        %v8054 = vadd.f32 %v6440, %v8053
        %v8055 = vpop.f32.mrb[0].mxu0
        %v8056 = vpop.f32.mrb[0].mxu0
        %v8057 = vadd.f32 %v6445, %v8056
        %v8058 = vpop.f32.mrb[0].mxu0
        %8059 = vmatprep.mubr.bf16.mxu0 %v7516
        %8060 = vmatmul.mubr.bf16.gmra.mrb[0].mxu0 %v7515
        %v8061 = vpop.f32.mrb[0].mxu0
        %v8062 = vadd.f32 %v6450, %v8061
        %v8063 = vpop.f32.mrb[0].mxu0
        %v8064 = vpop.f32.mrb[0].mxu0
        %v8065 = vadd.f32 %v6455, %v8064
        %v8066 = vpop.f32.mrb[0].mxu0
        %8067 = vmatprep.mubr.bf16.mxu0 %v7524
        %8068 = vmatmul.mubr.bf16.gmra.mrb[0].mxu0 %v7523
        %v8069 = vpop.f32.mrb[0].mxu0
        %v8070 = vadd.f32 %v6460, %v8069
        %v8071 = vpop.f32.mrb[0].mxu0
        %v8072 = vpop.f32.mrb[0].mxu0
        %v8073 = vadd.f32 %v6465, %v8072
        %v8074 = vpop.f32.mrb[0].mxu0
        %8075 = vmatprep.mubr.bf16.mxu0 %v7532
        %8076 = vmatmul.mubr.bf16.gmra.mrb[0].mxu0 %v7531
        %v8077 = vpop.f32.mrb[0].mxu0
        %v8078 = vadd.f32 %v6470, %v8077
        %v8079 = vpop.f32.mrb[0].mxu0
        %v8080 = vpop.f32.mrb[0].mxu0
        %v8081 = vadd.f32 %v6475, %v8080
        %v8082 = vpop.f32.mrb[0].mxu0
        %8083 = vmatprep.mubr.bf16.mxu0 %v7540
        %8084 = vmatmul.mubr.bf16.gmra.mrb[0].mxu0 %v7539
        %v8085 = vpop.f32.mrb[0].mxu0
        %v8086 = vadd.f32 %v6480, %v8085
        %v8087 = vpop.f32.mrb[0].mxu0
        %v8088 = vpop.f32.mrb[0].mxu0
        %v8089 = vadd.f32 %v6485, %v8088
        %v8090 = vpop.f32.mrb[0].mxu0
        %8091 = vmatprep.mubr.bf16.mxu0 %v7548
        %8092 = vmatmul.mubr.bf16.gmra.mrb[0].mxu0 %v7547
        %v8093 = vpop.f32.mrb[0].mxu0
        %v8094 = vadd.f32 %v6490, %v8093
        %v8095 = vpop.f32.mrb[0].mxu0
        %v8096 = vpop.f32.mrb[0].mxu0
        %v8097 = vadd.f32 %v6495, %v8096
        %v8098 = vpop.f32.mrb[0].mxu0
        %8099 = vmatprep.mubr.bf16.mxu0 %v7556
        %8100 = vmatmul.mubr.bf16.gmra.mrb[0].mxu0 %v7555
        %v8101 = vpop.f32.mrb[0].mxu0
        %v8102 = vadd.f32 %v6500, %v8101
        %v8103 = vpop.f32.mrb[0].mxu0
        %v8104 = vpop.f32.mrb[0].mxu0
        %v8105 = vadd.f32 %v6505, %v8104
        %v8106 = vpop.f32.mrb[0].mxu0
        %8107 = vmatprep.mubr.bf16.mxu0 %v7564
        %8108 = vmatmul.mubr.bf16.gmra.mrb[0].mxu0 %v7563
        %v8109 = vpop.f32.mrb[0].mxu0
        %v8110 = vadd.f32 %v6510, %v8109
        %v8111 = vpop.f32.mrb[0].mxu0
        %v8112 = vpop.f32.mrb[0].mxu0
        %v8113 = vadd.f32 %v6515, %v8112
        %v8114 = vpop.f32.mrb[0].mxu0
        %8115 = vmatprep.mubr.bf16.mxu0 %v7572
        %8116 = vmatmul.mubr.bf16.gmra.mrb[0].mxu0 %v7571
        %v8117 = vpop.f32.mrb[0].mxu0
        %v8118 = vadd.f32 %v6520, %v8117
        %v8119 = vpop.f32.mrb[0].mxu0
        %v8120 = vpop.f32.mrb[0].mxu0
        %v8121 = vadd.f32 %v6525, %v8120
        %v8122 = vpop.f32.mrb[0].mxu0
        %8123 = vmatprep.mubr.bf16.mxu0 %v7580
        %8124 = vmatmul.mubr.bf16.gmra.mrb[0].mxu0 %v7579
        %v8125 = vpop.f32.mrb[0].mxu0
        %v8126 = vadd.f32 %v6530, %v8125
        %v8127 = vpop.f32.mrb[0].mxu0
        %v8128 = vpop.f32.mrb[0].mxu0
        %v8129 = vadd.f32 %v6535, %v8128
        %v8130 = vpop.f32.mrb[0].mxu0
        %8131 = vmatprep.mubr.bf16.mxu0 %v7588
        %8132 = vmatmul.mubr.bf16.gmra.mrb[0].mxu0 %v7587
        %v8133 = vpop.f32.mrb[0].mxu0
        %v8134 = vadd.f32 %v6540, %v8133
        %v8135 = vpop.f32.mrb[0].mxu0
        %v8136 = vpop.f32.mrb[0].mxu0
        %v8137 = vadd.f32 %v6545, %v8136
        %v8138 = vpop.f32.mrb[0].mxu0
        %8139 = vmatprep.mubr.bf16.mxu0 %v7596
        %8140 = vmatmul.mubr.bf16.gmra.mrb[0].mxu0 %v7595
        %v8141 = vpop.f32.mrb[0].mxu0
        %v8142 = vadd.f32 %v6550, %v8141
        %v8143 = vpop.f32.mrb[0].mxu0
        %v8144 = vpop.f32.mrb[0].mxu0
        %v8145 = vadd.f32 %v6555, %v8144
        %v8146 = vpop.f32.mrb[0].mxu0
        %8147 = vmatprep.mubr.bf16.mxu0 %v7604
        %8148 = vmatmul.mubr.bf16.gmra.mrb[0].mxu0 %v7603
        %v8149 = vpop.f32.mrb[0].mxu0
        %v8150 = vadd.f32 %v6560, %v8149
        %v8151 = vpop.f32.mrb[0].mxu0
        %v8152 = vpop.f32.mrb[0].mxu0
        %v8153 = vadd.f32 %v6565, %v8152
        %v8154 = vpop.f32.mrb[0].mxu0
        %8155 = vmatprep.mubr.bf16.mxu0 %v7612
        %8156 = vmatmul.mubr.bf16.gmra.mrb[0].mxu0 %v7611
        %v8157 = vpop.f32.mrb[0].mxu0
        %v8158 = vadd.f32 %v6570, %v8157
        %v8159 = vpop.f32.mrb[0].mxu0
        %v8160 = vpop.f32.mrb[0].mxu0
        %v8161 = vadd.f32 %v6575, %v8160
        %v8162 = vpop.f32.mrb[0].mxu0
        %8163 = vmatprep.mubr.bf16.mxu0 %v7620
        %8164 = vmatmul.mubr.bf16.gmra.mrb[0].mxu0 %v7619
        %v8165 = vpop.f32.mrb[0].mxu0
        %v8166 = vadd.f32 %v6580, %v8165
        %v8167 = vpop.f32.mrb[0].mxu0
        %v8168 = vpop.f32.mrb[0].mxu0
        %v8169 = vadd.f32 %v6585, %v8168
        %v8170 = vpop.f32.mrb[0].mxu0
        %8171 = vmatprep.mubr.bf16.mxu0 %v7628
        %8172 = vmatmul.mubr.bf16.gmra.mrb[0].mxu0 %v7627
        %v8173 = vpop.f32.mrb[0].mxu0
        %v8174 = vadd.f32 %v6590, %v8173
        %v8175 = vpop.f32.mrb[0].mxu0
        %v8176 = vpop.f32.mrb[0].mxu0
        %v8177 = vadd.f32 %v6595, %v8176
        %v8178 = vpop.f32.mrb[0].mxu0
        %8179 = vmatprep.mubr.bf16.mxu0 %v7636
        %8180 = vmatmul.mubr.bf16.gmra.mrb[0].mxu0 %v7635
        %v8181 = vpop.f32.mrb[0].mxu0
        %v8182 = vadd.f32 %v6600, %v8181
        %v8183 = vpop.f32.mrb[0].mxu0
        %v8184 = vpop.f32.mrb[0].mxu0
        %v8185 = vadd.f32 %v6605, %v8184
        %v8186 = vpop.f32.mrb[0].mxu0
        %8187 = vmatprep.mubr.bf16.mxu0 %v7644
        %8188 = vmatmul.mubr.bf16.gmra.mrb[0].mxu0 %v7643
        %v8189 = vpop.f32.mrb[0].mxu0
        %v8190 = vadd.f32 %v6610, %v8189
        %v8191 = vpop.f32.mrb[0].mxu0
        %v8192 = vpop.f32.mrb[0].mxu0
        %v8193 = vadd.f32 %v6615, %v8192
        %v8194 = vpop.f32.mrb[0].mxu0
        %8195 = vmatprep.mubr.bf16.mxu0 %v7652
        %8196 = vmatmul.mubr.bf16.gmra.mrb[0].mxu0 %v7651
        %v8197 = vpop.f32.mrb[0].mxu0
        %v8198 = vadd.f32 %v6620, %v8197
        %v8199 = vpop.f32.mrb[0].mxu0
        %v8200 = vpop.f32.mrb[0].mxu0
        %v8201 = vadd.f32 %v6625, %v8200
        %v8202 = vpop.f32.mrb[0].mxu0
        %8203 = vmatprep.mubr.bf16.mxu0 %v7660
        %8204 = vmatmul.mubr.bf16.gmra.mrb[0].mxu0 %v7659
        %v8205 = vpop.f32.mrb[0].mxu0
        %v8206 = vadd.f32 %v6630, %v8205
        %v8207 = vpop.f32.mrb[0].mxu0
        %v8208 = vpop.f32.mrb[0].mxu0
        %v8209 = vadd.f32 %v6635, %v8208
        %v8210 = vpop.f32.mrb[0].mxu0
        %8211 = vmatprep.mubr.bf16.mxu0 %v7668
        %8212 = vmatmul.mubr.bf16.gmra.mrb[0].mxu0 %v7667
        %v8213 = vpop.f32.mrb[0].mxu0
        %v8214 = vadd.f32 %v6640, %v8213
        %v8215 = vpop.f32.mrb[0].mxu0
        %v8216 = vpop.f32.mrb[0].mxu0
        %v8217 = vadd.f32 %v6645, %v8216
        %v8218 = vpop.f32.mrb[0].mxu0
        %8219 = vmatprep.mubr.bf16.mxu0 %v7676
        %8220 = vmatmul.mubr.bf16.gmra.mrb[0].mxu0 %v7675
        %v8221 = vpop.f32.mrb[0].mxu0
        %v8222 = vadd.f32 %v6650, %v8221
        %v8223 = vpop.f32.mrb[0].mxu0
        %v8224 = vpop.f32.mrb[0].mxu0
        %v8225 = vadd.f32 %v6655, %v8224
        %v8226 = vpop.f32.mrb[0].mxu0
        %8227 = vmatprep.mubr.bf16.mxu0 %v7684
        %8228 = vmatmul.mubr.bf16.gmra.mrb[0].mxu0 %v7683
        %v8229 = vpop.f32.mrb[0].mxu0
        %v8230 = vadd.f32 %v6660, %v8229
        %v8231 = vpop.f32.mrb[0].mxu0
        %v8232 = vpop.f32.mrb[0].mxu0
        %v8233 = vadd.f32 %v6665, %v8232
        %v8234 = vpop.f32.mrb[0].mxu0
        %8235 = vdwg.mxu0
        %8236 = vmatprep.subr.bf16.mxu0 0
        %8237 = vmatpush1.bf16.msra.mxu0 %v6235
        %8238 = vmatprep.subr.bf16.mxu0 0
        %8239 = vmatpush1.bf16.msra.mxu0 %v6236
        %8240 = vmatprep.subr.bf16.mxu0 0
        %8241 = vmatpush1.bf16.msra.mxu0 %v6237
        %8242 = vmatprep.subr.bf16.mxu0 0
        %8243 = vmatpush1.bf16.msra.mxu0 %v6238
        %8244 = vmatprep.subr.bf16.mxu0 0
        %8245 = vmatpush1.bf16.msra.mxu0 %v6239
        %8246 = vmatprep.subr.bf16.mxu0 0
        %8247 = vmatpush1.bf16.msra.mxu0 %v6240
        %8248 = vmatprep.subr.bf16.mxu0 0
        %8249 = vmatpush1.bf16.msra.mxu0 %v6241
        %8250 = vmatprep.subr.bf16.mxu0 0
        %8251 = vmatpush1.bf16.msra.mxu0 %v6242
        %8252 = vmatprep.subr.bf16.mxu0 0
        %8253 = vmatpush1.bf16.msra.mxu0 %v6243
        %8254 = vmatprep.subr.bf16.mxu0 0
        %8255 = vmatpush1.bf16.msra.mxu0 %v6244
        %8256 = vmatprep.subr.bf16.mxu0 0
        %8257 = vmatpush1.bf16.msra.mxu0 %v6245
        %8258 = vmatprep.subr.bf16.mxu0 0
        %8259 = vmatpush1.bf16.msra.mxu0 %v6246
        %8260 = vmatprep.subr.bf16.mxu0 0
        %8261 = vmatpush1.bf16.msra.mxu0 %v6247
        %8262 = vmatprep.subr.bf16.mxu0 0
        %8263 = vmatpush1.bf16.msra.mxu0 %v6248
        %8264 = vmatprep.subr.bf16.mxu0 0
        %8265 = vmatpush1.bf16.msra.mxu0 %v6249
        %8266 = vmatprep.subr.bf16.mxu0 0
        %8267 = vmatpush1.bf16.msra.mxu0 %v6250
        %8268 = vmatprep.mubr.bf16.mxu0 %v7438
        %8269 = vmatmul.mubr.bf16.gmra.mrb[0].mxu0 %v7437
        %v8270 = vpop.f32.mrb[0].mxu0
        %v8271 = vadd.f32 %v7982, %v8270
        %v8272 = vpop.f32.mrb[0].mxu0
        %v8273 = vpop.f32.mrb[0].mxu0
        %v8274 = vadd.f32 %v7985, %v8273
        %v8275 = vpop.f32.mrb[0].mxu0
        %8276 = vmatprep.mubr.bf16.mxu0 %v7446
        %8277 = vmatmul.mubr.bf16.gmra.mrb[0].mxu0 %v7445
        %v8278 = vpop.f32.mrb[0].mxu0
        %v8279 = vadd.f32 %v7990, %v8278
        %v8280 = vpop.f32.mrb[0].mxu0
        %v8281 = vpop.f32.mrb[0].mxu0
        %v8282 = vadd.f32 %v7993, %v8281
        %v8283 = vpop.f32.mrb[0].mxu0
        %8284 = vmatprep.mubr.bf16.mxu0 %v7454
        %8285 = vmatmul.mubr.bf16.gmra.mrb[0].mxu0 %v7453
        %v8286 = vpop.f32.mrb[0].mxu0
        %v8287 = vadd.f32 %v7998, %v8286
        %v8288 = vpop.f32.mrb[0].mxu0
        %v8289 = vpop.f32.mrb[0].mxu0
        %v8290 = vadd.f32 %v8001, %v8289
        %v8291 = vpop.f32.mrb[0].mxu0
        %8292 = vmatprep.mubr.bf16.mxu0 %v7462
        %8293 = vmatmul.mubr.bf16.gmra.mrb[0].mxu0 %v7461
        %v8294 = vpop.f32.mrb[0].mxu0
        %v8295 = vadd.f32 %v8006, %v8294
        %v8296 = vpop.f32.mrb[0].mxu0
        %v8297 = vpop.f32.mrb[0].mxu0
        %v8298 = vadd.f32 %v8009, %v8297
        %v8299 = vpop.f32.mrb[0].mxu0
        %8300 = vmatprep.mubr.bf16.mxu0 %v7470
        %8301 = vmatmul.mubr.bf16.gmra.mrb[0].mxu0 %v7469
        %v8302 = vpop.f32.mrb[0].mxu0
        %v8303 = vadd.f32 %v8014, %v8302
        %v8304 = vpop.f32.mrb[0].mxu0
        %v8305 = vpop.f32.mrb[0].mxu0
        %v8306 = vadd.f32 %v8017, %v8305
        %v8307 = vpop.f32.mrb[0].mxu0
        %8308 = vmatprep.mubr.bf16.mxu0 %v7478
        %8309 = vmatmul.mubr.bf16.gmra.mrb[0].mxu0 %v7477
        %v8310 = vpop.f32.mrb[0].mxu0
        %v8311 = vadd.f32 %v8022, %v8310
        %v8312 = vpop.f32.mrb[0].mxu0
        %v8313 = vpop.f32.mrb[0].mxu0
        %v8314 = vadd.f32 %v8025, %v8313
        %v8315 = vpop.f32.mrb[0].mxu0
        %8316 = vmatprep.mubr.bf16.mxu0 %v7486
        %8317 = vmatmul.mubr.bf16.gmra.mrb[0].mxu0 %v7485
        %v8318 = vpop.f32.mrb[0].mxu0
        %v8319 = vadd.f32 %v8030, %v8318
        %v8320 = vpop.f32.mrb[0].mxu0
        %v8321 = vpop.f32.mrb[0].mxu0
        %v8322 = vadd.f32 %v8033, %v8321
        %v8323 = vpop.f32.mrb[0].mxu0
        %8324 = vmatprep.mubr.bf16.mxu0 %v7494
        %8325 = vmatmul.mubr.bf16.gmra.mrb[0].mxu0 %v7493
        %v8326 = vpop.f32.mrb[0].mxu0
        %v8327 = vadd.f32 %v8038, %v8326
        %v8328 = vpop.f32.mrb[0].mxu0
        %v8329 = vpop.f32.mrb[0].mxu0
        %v8330 = vadd.f32 %v8041, %v8329
        %v8331 = vpop.f32.mrb[0].mxu0
        %8332 = vmatprep.mubr.bf16.mxu0 %v7502
        %8333 = vmatmul.mubr.bf16.gmra.mrb[0].mxu0 %v7501
        %v8334 = vpop.f32.mrb[0].mxu0
        %v8335 = vadd.f32 %v8046, %v8334
        %v8336 = vpop.f32.mrb[0].mxu0
        %v8337 = vpop.f32.mrb[0].mxu0
        %v8338 = vadd.f32 %v8049, %v8337
        %v8339 = vpop.f32.mrb[0].mxu0
        %8340 = vmatprep.mubr.bf16.mxu0 %v7510
        %8341 = vmatmul.mubr.bf16.gmra.mrb[0].mxu0 %v7509
        %v8342 = vpop.f32.mrb[0].mxu0
        %v8343 = vadd.f32 %v8054, %v8342
        %v8344 = vpop.f32.mrb[0].mxu0
        %v8345 = vpop.f32.mrb[0].mxu0
        %v8346 = vadd.f32 %v8057, %v8345
        %v8347 = vpop.f32.mrb[0].mxu0
        %8348 = vmatprep.mubr.bf16.mxu0 %v7518
        %8349 = vmatmul.mubr.bf16.gmra.mrb[0].mxu0 %v7517
        %v8350 = vpop.f32.mrb[0].mxu0
        %v8351 = vadd.f32 %v8062, %v8350
        %v8352 = vpop.f32.mrb[0].mxu0
        %v8353 = vpop.f32.mrb[0].mxu0
        %v8354 = vadd.f32 %v8065, %v8353
        %v8355 = vpop.f32.mrb[0].mxu0
        %8356 = vmatprep.mubr.bf16.mxu0 %v7526
        %8357 = vmatmul.mubr.bf16.gmra.mrb[0].mxu0 %v7525
        %v8358 = vpop.f32.mrb[0].mxu0
        %v8359 = vadd.f32 %v8070, %v8358
        %v8360 = vpop.f32.mrb[0].mxu0
        %v8361 = vpop.f32.mrb[0].mxu0
        %v8362 = vadd.f32 %v8073, %v8361
        %v8363 = vpop.f32.mrb[0].mxu0
        %8364 = vmatprep.mubr.bf16.mxu0 %v7534
        %8365 = vmatmul.mubr.bf16.gmra.mrb[0].mxu0 %v7533
        %v8366 = vpop.f32.mrb[0].mxu0
        %v8367 = vadd.f32 %v8078, %v8366
        %v8368 = vpop.f32.mrb[0].mxu0
        %v8369 = vpop.f32.mrb[0].mxu0
        %v8370 = vadd.f32 %v8081, %v8369
        %v8371 = vpop.f32.mrb[0].mxu0
        %8372 = vmatprep.mubr.bf16.mxu0 %v7542
        %8373 = vmatmul.mubr.bf16.gmra.mrb[0].mxu0 %v7541
        %v8374 = vpop.f32.mrb[0].mxu0
        %v8375 = vadd.f32 %v8086, %v8374
        %v8376 = vpop.f32.mrb[0].mxu0
        %v8377 = vpop.f32.mrb[0].mxu0
        %v8378 = vadd.f32 %v8089, %v8377
        %v8379 = vpop.f32.mrb[0].mxu0
        %8380 = vmatprep.mubr.bf16.mxu0 %v7550
        %8381 = vmatmul.mubr.bf16.gmra.mrb[0].mxu0 %v7549
        %v8382 = vpop.f32.mrb[0].mxu0
        %v8383 = vadd.f32 %v8094, %v8382
        %v8384 = vpop.f32.mrb[0].mxu0
        %v8385 = vpop.f32.mrb[0].mxu0
        %v8386 = vadd.f32 %v8097, %v8385
        %v8387 = vpop.f32.mrb[0].mxu0
        %8388 = vmatprep.mubr.bf16.mxu0 %v7558
        %8389 = vmatmul.mubr.bf16.gmra.mrb[0].mxu0 %v7557
        %v8390 = vpop.f32.mrb[0].mxu0
        %v8391 = vadd.f32 %v8102, %v8390
        %v8392 = vpop.f32.mrb[0].mxu0
        %v8393 = vpop.f32.mrb[0].mxu0
        %v8394 = vadd.f32 %v8105, %v8393
        %v8395 = vpop.f32.mrb[0].mxu0
        %8396 = vmatprep.mubr.bf16.mxu0 %v7566
        %8397 = vmatmul.mubr.bf16.gmra.mrb[0].mxu0 %v7565
        %v8398 = vpop.f32.mrb[0].mxu0
        %v8399 = vadd.f32 %v8110, %v8398
        %v8400 = vpop.f32.mrb[0].mxu0
        %v8401 = vpop.f32.mrb[0].mxu0
        %v8402 = vadd.f32 %v8113, %v8401
        %v8403 = vpop.f32.mrb[0].mxu0
        %8404 = vmatprep.mubr.bf16.mxu0 %v7574
        %8405 = vmatmul.mubr.bf16.gmra.mrb[0].mxu0 %v7573
        %v8406 = vpop.f32.mrb[0].mxu0
        %v8407 = vadd.f32 %v8118, %v8406
        %v8408 = vpop.f32.mrb[0].mxu0
        %v8409 = vpop.f32.mrb[0].mxu0
        %v8410 = vadd.f32 %v8121, %v8409
        %v8411 = vpop.f32.mrb[0].mxu0
        %8412 = vmatprep.mubr.bf16.mxu0 %v7582
        %8413 = vmatmul.mubr.bf16.gmra.mrb[0].mxu0 %v7581
        %v8414 = vpop.f32.mrb[0].mxu0
        %v8415 = vadd.f32 %v8126, %v8414
        %v8416 = vpop.f32.mrb[0].mxu0
        %v8417 = vpop.f32.mrb[0].mxu0
        %v8418 = vadd.f32 %v8129, %v8417
        %v8419 = vpop.f32.mrb[0].mxu0
        %8420 = vmatprep.mubr.bf16.mxu0 %v7590
        %8421 = vmatmul.mubr.bf16.gmra.mrb[0].mxu0 %v7589
        %v8422 = vpop.f32.mrb[0].mxu0
        %v8423 = vadd.f32 %v8134, %v8422
        %v8424 = vpop.f32.mrb[0].mxu0
        %v8425 = vpop.f32.mrb[0].mxu0
        %v8426 = vadd.f32 %v8137, %v8425
        %v8427 = vpop.f32.mrb[0].mxu0
        %8428 = vmatprep.mubr.bf16.mxu0 %v7598
        %8429 = vmatmul.mubr.bf16.gmra.mrb[0].mxu0 %v7597
        %v8430 = vpop.f32.mrb[0].mxu0
        %v8431 = vadd.f32 %v8142, %v8430
        %v8432 = vpop.f32.mrb[0].mxu0
        %v8433 = vpop.f32.mrb[0].mxu0
        %v8434 = vadd.f32 %v8145, %v8433
        %v8435 = vpop.f32.mrb[0].mxu0
        %8436 = vmatprep.mubr.bf16.mxu0 %v7606
        %8437 = vmatmul.mubr.bf16.gmra.mrb[0].mxu0 %v7605
        %v8438 = vpop.f32.mrb[0].mxu0
        %v8439 = vadd.f32 %v8150, %v8438
        %v8440 = vpop.f32.mrb[0].mxu0
        %v8441 = vpop.f32.mrb[0].mxu0
        %v8442 = vadd.f32 %v8153, %v8441
        %v8443 = vpop.f32.mrb[0].mxu0
        %8444 = vmatprep.mubr.bf16.mxu0 %v7614
        %8445 = vmatmul.mubr.bf16.gmra.mrb[0].mxu0 %v7613
        %v8446 = vpop.f32.mrb[0].mxu0
        %v8447 = vadd.f32 %v8158, %v8446
        %v8448 = vpop.f32.mrb[0].mxu0
        %v8449 = vpop.f32.mrb[0].mxu0
        %v8450 = vadd.f32 %v8161, %v8449
        %v8451 = vpop.f32.mrb[0].mxu0
        %8452 = vmatprep.mubr.bf16.mxu0 %v7622
        %8453 = vmatmul.mubr.bf16.gmra.mrb[0].mxu0 %v7621
        %v8454 = vpop.f32.mrb[0].mxu0
        %v8455 = vadd.f32 %v8166, %v8454
        %v8456 = vpop.f32.mrb[0].mxu0
        %v8457 = vpop.f32.mrb[0].mxu0
        %v8458 = vadd.f32 %v8169, %v8457
        %v8459 = vpop.f32.mrb[0].mxu0
        %8460 = vmatprep.mubr.bf16.mxu0 %v7630
        %8461 = vmatmul.mubr.bf16.gmra.mrb[0].mxu0 %v7629
        %v8462 = vpop.f32.mrb[0].mxu0
        %v8463 = vadd.f32 %v8174, %v8462
        %v8464 = vpop.f32.mrb[0].mxu0
        %v8465 = vpop.f32.mrb[0].mxu0
        %v8466 = vadd.f32 %v8177, %v8465
        %v8467 = vpop.f32.mrb[0].mxu0
        %8468 = vmatprep.mubr.bf16.mxu0 %v7638
        %8469 = vmatmul.mubr.bf16.gmra.mrb[0].mxu0 %v7637
        %v8470 = vpop.f32.mrb[0].mxu0
        %v8471 = vadd.f32 %v8182, %v8470
        %v8472 = vpop.f32.mrb[0].mxu0
        %v8473 = vpop.f32.mrb[0].mxu0
        %v8474 = vadd.f32 %v8185, %v8473
        %v8475 = vpop.f32.mrb[0].mxu0
        %8476 = vmatprep.mubr.bf16.mxu0 %v7646
        %8477 = vmatmul.mubr.bf16.gmra.mrb[0].mxu0 %v7645
        %v8478 = vpop.f32.mrb[0].mxu0
        %v8479 = vadd.f32 %v8190, %v8478
        %v8480 = vpop.f32.mrb[0].mxu0
        %v8481 = vpop.f32.mrb[0].mxu0
        %v8482 = vadd.f32 %v8193, %v8481
        %v8483 = vpop.f32.mrb[0].mxu0
        %8484 = vmatprep.mubr.bf16.mxu0 %v7654
        %8485 = vmatmul.mubr.bf16.gmra.mrb[0].mxu0 %v7653
        %v8486 = vpop.f32.mrb[0].mxu0
        %v8487 = vadd.f32 %v8198, %v8486
        %v8488 = vpop.f32.mrb[0].mxu0
        %v8489 = vpop.f32.mrb[0].mxu0
        %v8490 = vadd.f32 %v8201, %v8489
        %v8491 = vpop.f32.mrb[0].mxu0
        %8492 = vmatprep.mubr.bf16.mxu0 %v7662
        %8493 = vmatmul.mubr.bf16.gmra.mrb[0].mxu0 %v7661
        %v8494 = vpop.f32.mrb[0].mxu0
        %v8495 = vadd.f32 %v8206, %v8494
        %v8496 = vpop.f32.mrb[0].mxu0
        %v8497 = vpop.f32.mrb[0].mxu0
        %v8498 = vadd.f32 %v8209, %v8497
        %v8499 = vpop.f32.mrb[0].mxu0
        %8500 = vmatprep.mubr.bf16.mxu0 %v7670
        %8501 = vmatmul.mubr.bf16.gmra.mrb[0].mxu0 %v7669
        %v8502 = vpop.f32.mrb[0].mxu0
        %v8503 = vadd.f32 %v8214, %v8502
        %v8504 = vpop.f32.mrb[0].mxu0
        %v8505 = vpop.f32.mrb[0].mxu0
        %v8506 = vadd.f32 %v8217, %v8505
        %v8507 = vpop.f32.mrb[0].mxu0
        %8508 = vmatprep.mubr.bf16.mxu0 %v7678
        %8509 = vmatmul.mubr.bf16.gmra.mrb[0].mxu0 %v7677
        %v8510 = vpop.f32.mrb[0].mxu0
        %v8511 = vadd.f32 %v8222, %v8510
        %v8512 = vpop.f32.mrb[0].mxu0
        %v8513 = vpop.f32.mrb[0].mxu0
        %v8514 = vadd.f32 %v8225, %v8513
        %v8515 = vpop.f32.mrb[0].mxu0
        %8516 = vmatprep.mubr.bf16.mxu0 %v7686
        %8517 = vmatmul.mubr.bf16.gmra.mrb[0].mxu0 %v7685
        %v8518 = vpop.f32.mrb[0].mxu0
        %v8519 = vadd.f32 %v8230, %v8518
        %v8520 = vpop.f32.mrb[0].mxu0
        %v8521 = vpop.f32.mrb[0].mxu0
        %v8522 = vadd.f32 %v8233, %v8521
        %v8523 = vpop.f32.mrb[0].mxu0
        %8524 = vdwg.mxu0
        %8525 = vmatprep.subr.bf16.mxu0 0
        %8526 = vmatpush1.bf16.msra.mxu0 %v6251
        %8527 = vmatprep.subr.bf16.mxu0 0
        %8528 = vmatpush1.bf16.msra.mxu0 %v6252
        %8529 = vmatprep.subr.bf16.mxu0 0
        %8530 = vmatpush1.bf16.msra.mxu0 %v6253
        %8531 = vmatprep.subr.bf16.mxu0 0
        %8532 = vmatpush1.bf16.msra.mxu0 %v6254
        %8533 = vmatprep.subr.bf16.mxu0 0
        %8534 = vmatpush1.bf16.msra.mxu0 %v6255
        %8535 = vmatprep.subr.bf16.mxu0 0
        %8536 = vmatpush1.bf16.msra.mxu0 %v6256
        %8537 = vmatprep.subr.bf16.mxu0 0
        %8538 = vmatpush1.bf16.msra.mxu0 %v6257
        %8539 = vmatprep.subr.bf16.mxu0 0
        %8540 = vmatpush1.bf16.msra.mxu0 %v6258
        %8541 = vmatprep.subr.bf16.mxu0 0
        %8542 = vmatpush1.bf16.msra.mxu0 %v6259
        %8543 = vmatprep.subr.bf16.mxu0 0
        %8544 = vmatpush1.bf16.msra.mxu0 %v6260
        %8545 = vmatprep.subr.bf16.mxu0 0
        %8546 = vmatpush1.bf16.msra.mxu0 %v6261
        %8547 = vmatprep.subr.bf16.mxu0 0
        %8548 = vmatpush1.bf16.msra.mxu0 %v6262
        %8549 = vmatprep.subr.bf16.mxu0 0
        %8550 = vmatpush1.bf16.msra.mxu0 %v6263
        %8551 = vmatprep.subr.bf16.mxu0 0
        %8552 = vmatpush1.bf16.msra.mxu0 %v6264
        %8553 = vmatprep.subr.bf16.mxu0 0
        %8554 = vmatpush1.bf16.msra.mxu0 %v6265
        %8555 = vmatprep.subr.bf16.mxu0 0
        %8556 = vmatpush1.bf16.msra.mxu0 %v6266
        %8557 = vmatprep.mubr.bf16.mxu0 %v7440
        %8558 = vmatmul.mubr.bf16.gmra.mrb[0].mxu0 %v7439
        %v8559 = vpop.f32.mrb[0].mxu0
        %v8560 = vadd.f32 %v8271, %v8559
        %v8561 = vpop.f32.mrb[0].mxu0
        %v8562 = vpop.f32.mrb[0].mxu0
        %v8563 = vadd.f32 %v8274, %v8562
        %v8564 = vpop.f32.mrb[0].mxu0
        %8565 = vmatprep.mubr.bf16.mxu0 %v7448
        %8566 = vmatmul.mubr.bf16.gmra.mrb[0].mxu0 %v7447
        %v8567 = vpop.f32.mrb[0].mxu0
        %v8568 = vadd.f32 %v8279, %v8567
        %v8569 = vpop.f32.mrb[0].mxu0
        %v8570 = vpop.f32.mrb[0].mxu0
        %v8571 = vadd.f32 %v8282, %v8570
        %v8572 = vpop.f32.mrb[0].mxu0
        %8573 = vmatprep.mubr.bf16.mxu0 %v7456
        %8574 = vmatmul.mubr.bf16.gmra.mrb[0].mxu0 %v7455
        %v8575 = vpop.f32.mrb[0].mxu0
        %v8576 = vadd.f32 %v8287, %v8575
        %v8577 = vpop.f32.mrb[0].mxu0
        %v8578 = vpop.f32.mrb[0].mxu0
        %v8579 = vadd.f32 %v8290, %v8578
        %v8580 = vpop.f32.mrb[0].mxu0
        %8581 = vmatprep.mubr.bf16.mxu0 %v7464
        %8582 = vmatmul.mubr.bf16.gmra.mrb[0].mxu0 %v7463
        %v8583 = vpop.f32.mrb[0].mxu0
        %v8584 = vadd.f32 %v8295, %v8583
        %v8585 = vpop.f32.mrb[0].mxu0
        %v8586 = vpop.f32.mrb[0].mxu0
        %v8587 = vadd.f32 %v8298, %v8586
        %v8588 = vpop.f32.mrb[0].mxu0
        %8589 = vmatprep.mubr.bf16.mxu0 %v7472
        %8590 = vmatmul.mubr.bf16.gmra.mrb[0].mxu0 %v7471
        %v8591 = vpop.f32.mrb[0].mxu0
        %v8592 = vadd.f32 %v8303, %v8591
        %v8593 = vpop.f32.mrb[0].mxu0
        %v8594 = vpop.f32.mrb[0].mxu0
        %v8595 = vadd.f32 %v8306, %v8594
        %v8596 = vpop.f32.mrb[0].mxu0
        %8597 = vmatprep.mubr.bf16.mxu0 %v7480
        %8598 = vmatmul.mubr.bf16.gmra.mrb[0].mxu0 %v7479
        %v8599 = vpop.f32.mrb[0].mxu0
        %v8600 = vadd.f32 %v8311, %v8599
        %v8601 = vpop.f32.mrb[0].mxu0
        %v8602 = vpop.f32.mrb[0].mxu0
        %v8603 = vadd.f32 %v8314, %v8602
        %v8604 = vpop.f32.mrb[0].mxu0
        %8605 = vmatprep.mubr.bf16.mxu0 %v7488
        %8606 = vmatmul.mubr.bf16.gmra.mrb[0].mxu0 %v7487
        %v8607 = vpop.f32.mrb[0].mxu0
        %v8608 = vadd.f32 %v8319, %v8607
        %v8609 = vpop.f32.mrb[0].mxu0
        %v8610 = vpop.f32.mrb[0].mxu0
        %v8611 = vadd.f32 %v8322, %v8610
        %v8612 = vpop.f32.mrb[0].mxu0
        %8613 = vmatprep.mubr.bf16.mxu0 %v7496
        %8614 = vmatmul.mubr.bf16.gmra.mrb[0].mxu0 %v7495
        %v8615 = vpop.f32.mrb[0].mxu0
        %v8616 = vadd.f32 %v8327, %v8615
        %v8617 = vpop.f32.mrb[0].mxu0
        %v8618 = vpop.f32.mrb[0].mxu0
        %v8619 = vadd.f32 %v8330, %v8618
        %v8620 = vpop.f32.mrb[0].mxu0
        %8621 = vmatprep.mubr.bf16.mxu0 %v7504
        %8622 = vmatmul.mubr.bf16.gmra.mrb[0].mxu0 %v7503
        %v8623 = vpop.f32.mrb[0].mxu0
        %v8624 = vadd.f32 %v8335, %v8623
        %v8625 = vpop.f32.mrb[0].mxu0
        %v8626 = vpop.f32.mrb[0].mxu0
        %v8627 = vadd.f32 %v8338, %v8626
        %v8628 = vpop.f32.mrb[0].mxu0
        %8629 = vmatprep.mubr.bf16.mxu0 %v7512
        %8630 = vmatmul.mubr.bf16.gmra.mrb[0].mxu0 %v7511
        %v8631 = vpop.f32.mrb[0].mxu0
        %v8632 = vadd.f32 %v8343, %v8631
        %v8633 = vpop.f32.mrb[0].mxu0
        %v8634 = vpop.f32.mrb[0].mxu0
        %v8635 = vadd.f32 %v8346, %v8634
        %v8636 = vpop.f32.mrb[0].mxu0
        %8637 = vmatprep.mubr.bf16.mxu0 %v7520
        %8638 = vmatmul.mubr.bf16.gmra.mrb[0].mxu0 %v7519
        %v8639 = vpop.f32.mrb[0].mxu0
        %v8640 = vadd.f32 %v8351, %v8639
        %v8641 = vpop.f32.mrb[0].mxu0
        %v8642 = vpop.f32.mrb[0].mxu0
        %v8643 = vadd.f32 %v8354, %v8642
        %v8644 = vpop.f32.mrb[0].mxu0
        %8645 = vmatprep.mubr.bf16.mxu0 %v7528
        %8646 = vmatmul.mubr.bf16.gmra.mrb[0].mxu0 %v7527
        %v8647 = vpop.f32.mrb[0].mxu0
        %v8648 = vadd.f32 %v8359, %v8647
        %v8649 = vpop.f32.mrb[0].mxu0
        %v8650 = vpop.f32.mrb[0].mxu0
        %v8651 = vadd.f32 %v8362, %v8650
        %v8652 = vpop.f32.mrb[0].mxu0
        %8653 = vmatprep.mubr.bf16.mxu0 %v7536
        %8654 = vmatmul.mubr.bf16.gmra.mrb[0].mxu0 %v7535
        %v8655 = vpop.f32.mrb[0].mxu0
        %v8656 = vadd.f32 %v8367, %v8655
        %v8657 = vpop.f32.mrb[0].mxu0
        %v8658 = vpop.f32.mrb[0].mxu0
        %v8659 = vadd.f32 %v8370, %v8658
        %v8660 = vpop.f32.mrb[0].mxu0
        %8661 = vmatprep.mubr.bf16.mxu0 %v7544
        %8662 = vmatmul.mubr.bf16.gmra.mrb[0].mxu0 %v7543
        %v8663 = vpop.f32.mrb[0].mxu0
        %v8664 = vadd.f32 %v8375, %v8663
        %v8665 = vpop.f32.mrb[0].mxu0
        %v8666 = vpop.f32.mrb[0].mxu0
        %v8667 = vadd.f32 %v8378, %v8666
        %v8668 = vpop.f32.mrb[0].mxu0
        %8669 = vmatprep.mubr.bf16.mxu0 %v7552
        %8670 = vmatmul.mubr.bf16.gmra.mrb[0].mxu0 %v7551
        %v8671 = vpop.f32.mrb[0].mxu0
        %v8672 = vadd.f32 %v8383, %v8671
        %v8673 = vpop.f32.mrb[0].mxu0
        %v8674 = vpop.f32.mrb[0].mxu0
        %v8675 = vadd.f32 %v8386, %v8674
        %v8676 = vpop.f32.mrb[0].mxu0
        %8677 = vmatprep.mubr.bf16.mxu0 %v7560
        %8678 = vmatmul.mubr.bf16.gmra.mrb[0].mxu0 %v7559
        %v8679 = vpop.f32.mrb[0].mxu0
        %v8680 = vadd.f32 %v8391, %v8679
        %v8681 = vpop.f32.mrb[0].mxu0
        %v8682 = vpop.f32.mrb[0].mxu0
        %v8683 = vadd.f32 %v8394, %v8682
        %v8684 = vpop.f32.mrb[0].mxu0
        %8685 = vmatprep.mubr.bf16.mxu0 %v7568
        %8686 = vmatmul.mubr.bf16.gmra.mrb[0].mxu0 %v7567
        %v8687 = vpop.f32.mrb[0].mxu0
        %v8688 = vadd.f32 %v8399, %v8687
        %v8689 = vpop.f32.mrb[0].mxu0
        %v8690 = vpop.f32.mrb[0].mxu0
        %v8691 = vadd.f32 %v8402, %v8690
        %v8692 = vpop.f32.mrb[0].mxu0
        %8693 = vmatprep.mubr.bf16.mxu0 %v7576
        %8694 = vmatmul.mubr.bf16.gmra.mrb[0].mxu0 %v7575
        %v8695 = vpop.f32.mrb[0].mxu0
        %v8696 = vadd.f32 %v8407, %v8695
        %v8697 = vpop.f32.mrb[0].mxu0
        %v8698 = vpop.f32.mrb[0].mxu0
        %v8699 = vadd.f32 %v8410, %v8698
        %v8700 = vpop.f32.mrb[0].mxu0
        %8701 = vmatprep.mubr.bf16.mxu0 %v7584
        %8702 = vmatmul.mubr.bf16.gmra.mrb[0].mxu0 %v7583
        %v8703 = vpop.f32.mrb[0].mxu0
        %v8704 = vadd.f32 %v8415, %v8703
        %v8705 = vpop.f32.mrb[0].mxu0
        %v8706 = vpop.f32.mrb[0].mxu0
        %v8707 = vadd.f32 %v8418, %v8706
        %v8708 = vpop.f32.mrb[0].mxu0
        %8709 = vmatprep.mubr.bf16.mxu0 %v7592
        %8710 = vmatmul.mubr.bf16.gmra.mrb[0].mxu0 %v7591
        %v8711 = vpop.f32.mrb[0].mxu0
        %v8712 = vadd.f32 %v8423, %v8711
        %v8713 = vpop.f32.mrb[0].mxu0
        %v8714 = vpop.f32.mrb[0].mxu0
        %v8715 = vadd.f32 %v8426, %v8714
        %v8716 = vpop.f32.mrb[0].mxu0
        %8717 = vmatprep.mubr.bf16.mxu0 %v7600
        %8718 = vmatmul.mubr.bf16.gmra.mrb[0].mxu0 %v7599
        %v8719 = vpop.f32.mrb[0].mxu0
        %v8720 = vadd.f32 %v8431, %v8719
        %v8721 = vpop.f32.mrb[0].mxu0
        %v8722 = vpop.f32.mrb[0].mxu0
        %v8723 = vadd.f32 %v8434, %v8722
        %v8724 = vpop.f32.mrb[0].mxu0
        %8725 = vmatprep.mubr.bf16.mxu0 %v7608
        %8726 = vmatmul.mubr.bf16.gmra.mrb[0].mxu0 %v7607
        %v8727 = vpop.f32.mrb[0].mxu0
        %v8728 = vadd.f32 %v8439, %v8727
        %v8729 = vpop.f32.mrb[0].mxu0
        %v8730 = vpop.f32.mrb[0].mxu0
        %v8731 = vadd.f32 %v8442, %v8730
        %v8732 = vpop.f32.mrb[0].mxu0
        %8733 = vmatprep.mubr.bf16.mxu0 %v7616
        %8734 = vmatmul.mubr.bf16.gmra.mrb[0].mxu0 %v7615
        %v8735 = vpop.f32.mrb[0].mxu0
        %v8736 = vadd.f32 %v8447, %v8735
        %v8737 = vpop.f32.mrb[0].mxu0
        %v8738 = vpop.f32.mrb[0].mxu0
        %v8739 = vadd.f32 %v8450, %v8738
        %v8740 = vpop.f32.mrb[0].mxu0
        %8741 = vmatprep.mubr.bf16.mxu0 %v7624
        %8742 = vmatmul.mubr.bf16.gmra.mrb[0].mxu0 %v7623
        %v8743 = vpop.f32.mrb[0].mxu0
        %v8744 = vadd.f32 %v8455, %v8743
        %v8745 = vpop.f32.mrb[0].mxu0
        %v8746 = vpop.f32.mrb[0].mxu0
        %v8747 = vadd.f32 %v8458, %v8746
        %v8748 = vpop.f32.mrb[0].mxu0
        %8749 = vmatprep.mubr.bf16.mxu0 %v7632
        %8750 = vmatmul.mubr.bf16.gmra.mrb[0].mxu0 %v7631
        %v8751 = vpop.f32.mrb[0].mxu0
        %v8752 = vadd.f32 %v8463, %v8751
        %v8753 = vpop.f32.mrb[0].mxu0
        %v8754 = vpop.f32.mrb[0].mxu0
        %v8755 = vadd.f32 %v8466, %v8754
        %v8756 = vpop.f32.mrb[0].mxu0
        %8757 = vmatprep.mubr.bf16.mxu0 %v7640
        %8758 = vmatmul.mubr.bf16.gmra.mrb[0].mxu0 %v7639
        %v8759 = vpop.f32.mrb[0].mxu0
        %v8760 = vadd.f32 %v8471, %v8759
        %v8761 = vpop.f32.mrb[0].mxu0
        %v8762 = vpop.f32.mrb[0].mxu0
        %v8763 = vadd.f32 %v8474, %v8762
        %v8764 = vpop.f32.mrb[0].mxu0
        %8765 = vmatprep.mubr.bf16.mxu0 %v7648
        %8766 = vmatmul.mubr.bf16.gmra.mrb[0].mxu0 %v7647
        %v8767 = vpop.f32.mrb[0].mxu0
        %v8768 = vadd.f32 %v8479, %v8767
        %v8769 = vpop.f32.mrb[0].mxu0
        %v8770 = vpop.f32.mrb[0].mxu0
        %v8771 = vadd.f32 %v8482, %v8770
        %v8772 = vpop.f32.mrb[0].mxu0
        %8773 = vmatprep.mubr.bf16.mxu0 %v7656
        %8774 = vmatmul.mubr.bf16.gmra.mrb[0].mxu0 %v7655
        %v8775 = vpop.f32.mrb[0].mxu0
        %v8776 = vadd.f32 %v8487, %v8775
        %v8777 = vpop.f32.mrb[0].mxu0
        %v8778 = vpop.f32.mrb[0].mxu0
        %v8779 = vadd.f32 %v8490, %v8778
        %v8780 = vpop.f32.mrb[0].mxu0
        %8781 = vmatprep.mubr.bf16.mxu0 %v7664
        %8782 = vmatmul.mubr.bf16.gmra.mrb[0].mxu0 %v7663
        %v8783 = vpop.f32.mrb[0].mxu0
        %v8784 = vadd.f32 %v8495, %v8783
        %v8785 = vpop.f32.mrb[0].mxu0
        %v8786 = vpop.f32.mrb[0].mxu0
        %v8787 = vadd.f32 %v8498, %v8786
        %v8788 = vpop.f32.mrb[0].mxu0
        %8789 = vmatprep.mubr.bf16.mxu0 %v7672
        %8790 = vmatmul.mubr.bf16.gmra.mrb[0].mxu0 %v7671
        %v8791 = vpop.f32.mrb[0].mxu0
        %v8792 = vadd.f32 %v8503, %v8791
        %v8793 = vpop.f32.mrb[0].mxu0
        %v8794 = vpop.f32.mrb[0].mxu0
        %v8795 = vadd.f32 %v8506, %v8794
        %v8796 = vpop.f32.mrb[0].mxu0
        %8797 = vmatprep.mubr.bf16.mxu0 %v7680
        %8798 = vmatmul.mubr.bf16.gmra.mrb[0].mxu0 %v7679
        %v8799 = vpop.f32.mrb[0].mxu0
        %v8800 = vadd.f32 %v8511, %v8799
        %v8801 = vpop.f32.mrb[0].mxu0
        %v8802 = vpop.f32.mrb[0].mxu0
        %v8803 = vadd.f32 %v8514, %v8802
        %v8804 = vpop.f32.mrb[0].mxu0
        %8805 = vmatprep.mubr.bf16.mxu0 %v7688
        %8806 = vmatmul.mubr.bf16.gmra.mrb[0].mxu0 %v7687
        %v8807 = vpop.f32.mrb[0].mxu0
        %v8808 = vadd.f32 %v8519, %v8807
        %v8809 = vpop.f32.mrb[0].mxu0
        %v8810 = vpop.f32.mrb[0].mxu0
        %v8811 = vadd.f32 %v8522, %v8810
        %v8812 = vpop.f32.mrb[0].mxu0
        %8813 = vdwg.mxu0
        %8814 = vmatprep.subr.bf16.mxu0 0
        %8815 = vmatpush1.bf16.msra.mxu0 %v6267
        %8816 = vmatprep.subr.bf16.mxu0 0
        %8817 = vmatpush1.bf16.msra.mxu0 %v6268
        %8818 = vmatprep.subr.bf16.mxu0 0
        %8819 = vmatpush1.bf16.msra.mxu0 %v6269
        %8820 = vmatprep.subr.bf16.mxu0 0
        %8821 = vmatpush1.bf16.msra.mxu0 %v6270
        %8822 = vmatprep.subr.bf16.mxu0 0
        %8823 = vmatpush1.bf16.msra.mxu0 %v6271
        %8824 = vmatprep.subr.bf16.mxu0 0
        %8825 = vmatpush1.bf16.msra.mxu0 %v6272
        %8826 = vmatprep.subr.bf16.mxu0 0
        %8827 = vmatpush1.bf16.msra.mxu0 %v6273
        %8828 = vmatprep.subr.bf16.mxu0 0
        %8829 = vmatpush1.bf16.msra.mxu0 %v6274
        %8830 = vmatprep.subr.bf16.mxu0 0
        %8831 = vmatpush1.bf16.msra.mxu0 %v6275
        %8832 = vmatprep.subr.bf16.mxu0 0
        %8833 = vmatpush1.bf16.msra.mxu0 %v6276
        %8834 = vmatprep.subr.bf16.mxu0 0
        %8835 = vmatpush1.bf16.msra.mxu0 %v6277
        %8836 = vmatprep.subr.bf16.mxu0 0
        %8837 = vmatpush1.bf16.msra.mxu0 %v6278
        %8838 = vmatprep.subr.bf16.mxu0 0
        %8839 = vmatpush1.bf16.msra.mxu0 %v6279
        %8840 = vmatprep.subr.bf16.mxu0 0
        %8841 = vmatpush1.bf16.msra.mxu0 %v6280
        %8842 = vmatprep.subr.bf16.mxu0 0
        %8843 = vmatpush1.bf16.msra.mxu0 %v6281
        %8844 = vmatprep.subr.bf16.mxu0 0
        %8845 = vmatpush1.bf16.msra.mxu0 %v6282
        %8846 = vmatprep.mubr.bf16.mxu0 %v7442
        %8847 = vmatmul.mubr.bf16.gmra.mrb[0].mxu0 %v7441
        %v8848 = vpop.f32.mrb[0].mxu0
        %v8849 = vadd.f32 %v8560, %v8848
        %v8850 = vpop.f32.mrb[0].mxu0
        %v8851 = vpop.f32.mrb[0].mxu0
        %v8852 = vadd.f32 %v8563, %v8851
        %v8853 = vpop.f32.mrb[0].mxu0
        %8854 = vmatprep.mubr.bf16.mxu0 %v7450
        %8855 = vmatmul.mubr.bf16.gmra.mrb[0].mxu0 %v7449
        %v8856 = vpop.f32.mrb[0].mxu0
        %v8857 = vadd.f32 %v8568, %v8856
        %v8858 = vpop.f32.mrb[0].mxu0
        %v8859 = vpop.f32.mrb[0].mxu0
        %v8860 = vadd.f32 %v8571, %v8859
        %v8861 = vpop.f32.mrb[0].mxu0
        %8862 = vmatprep.mubr.bf16.mxu0 %v7458
        %8863 = vmatmul.mubr.bf16.gmra.mrb[0].mxu0 %v7457
        %v8864 = vpop.f32.mrb[0].mxu0
        %v8865 = vadd.f32 %v8576, %v8864
        %v8866 = vpop.f32.mrb[0].mxu0
        %v8867 = vpop.f32.mrb[0].mxu0
        %v8868 = vadd.f32 %v8579, %v8867
        %v8869 = vpop.f32.mrb[0].mxu0
        %8870 = vmatprep.mubr.bf16.mxu0 %v7466
        %8871 = vmatmul.mubr.bf16.gmra.mrb[0].mxu0 %v7465
        %v8872 = vpop.f32.mrb[0].mxu0
        %v8873 = vadd.f32 %v8584, %v8872
        %v8874 = vpop.f32.mrb[0].mxu0
        %v8875 = vpop.f32.mrb[0].mxu0
        %v8876 = vadd.f32 %v8587, %v8875
        %v8877 = vpop.f32.mrb[0].mxu0
        %8878 = vmatprep.mubr.bf16.mxu0 %v7474
        %8879 = vmatmul.mubr.bf16.gmra.mrb[0].mxu0 %v7473
        %v8880 = vpop.f32.mrb[0].mxu0
        %v8881 = vadd.f32 %v8592, %v8880
        %v8882 = vpop.f32.mrb[0].mxu0
        %v8883 = vpop.f32.mrb[0].mxu0
        %v8884 = vadd.f32 %v8595, %v8883
        %v8885 = vpop.f32.mrb[0].mxu0
        %8886 = vmatprep.mubr.bf16.mxu0 %v7482
        %8887 = vmatmul.mubr.bf16.gmra.mrb[0].mxu0 %v7481
        %v8888 = vpop.f32.mrb[0].mxu0
        %v8889 = vadd.f32 %v8600, %v8888
        %v8890 = vpop.f32.mrb[0].mxu0
        %v8891 = vpop.f32.mrb[0].mxu0
        %v8892 = vadd.f32 %v8603, %v8891
        %v8893 = vpop.f32.mrb[0].mxu0
        %8894 = vmatprep.mubr.bf16.mxu0 %v7490
        %8895 = vmatmul.mubr.bf16.gmra.mrb[0].mxu0 %v7489
        %v8896 = vpop.f32.mrb[0].mxu0
        %v8897 = vadd.f32 %v8608, %v8896
        %v8898 = vpop.f32.mrb[0].mxu0
        %v8899 = vpop.f32.mrb[0].mxu0
        %v8900 = vadd.f32 %v8611, %v8899
        %v8901 = vpop.f32.mrb[0].mxu0
        %8902 = vmatprep.mubr.bf16.mxu0 %v7498
        %8903 = vmatmul.mubr.bf16.gmra.mrb[0].mxu0 %v7497
        %v8904 = vpop.f32.mrb[0].mxu0
        %v8905 = vadd.f32 %v8616, %v8904
        %v8906 = vpop.f32.mrb[0].mxu0
        %v8907 = vpop.f32.mrb[0].mxu0
        %v8908 = vadd.f32 %v8619, %v8907
        %v8909 = vpop.f32.mrb[0].mxu0
        %8910 = vmatprep.mubr.bf16.mxu0 %v7506
        %8911 = vmatmul.mubr.bf16.gmra.mrb[0].mxu0 %v7505
        %v8912 = vpop.f32.mrb[0].mxu0
        %v8913 = vadd.f32 %v8624, %v8912
        %v8914 = vpop.f32.mrb[0].mxu0
        %v8915 = vpop.f32.mrb[0].mxu0
        %v8916 = vadd.f32 %v8627, %v8915
        %v8917 = vpop.f32.mrb[0].mxu0
        %8918 = vmatprep.mubr.bf16.mxu0 %v7514
        %8919 = vmatmul.mubr.bf16.gmra.mrb[0].mxu0 %v7513
        %v8920 = vpop.f32.mrb[0].mxu0
        %v8921 = vadd.f32 %v8632, %v8920
        %v8922 = vpop.f32.mrb[0].mxu0
        %v8923 = vpop.f32.mrb[0].mxu0
        %v8924 = vadd.f32 %v8635, %v8923
        %v8925 = vpop.f32.mrb[0].mxu0
        %8926 = vmatprep.mubr.bf16.mxu0 %v7522
        %8927 = vmatmul.mubr.bf16.gmra.mrb[0].mxu0 %v7521
        %v8928 = vpop.f32.mrb[0].mxu0
        %v8929 = vadd.f32 %v8640, %v8928
        %v8930 = vpop.f32.mrb[0].mxu0
        %v8931 = vpop.f32.mrb[0].mxu0
        %v8932 = vadd.f32 %v8643, %v8931
        %v8933 = vpop.f32.mrb[0].mxu0
        %8934 = vmatprep.mubr.bf16.mxu0 %v7530
        %8935 = vmatmul.mubr.bf16.gmra.mrb[0].mxu0 %v7529
        %v8936 = vpop.f32.mrb[0].mxu0
        %v8937 = vadd.f32 %v8648, %v8936
        %v8938 = vpop.f32.mrb[0].mxu0
        %v8939 = vpop.f32.mrb[0].mxu0
        %v8940 = vadd.f32 %v8651, %v8939
        %v8941 = vpop.f32.mrb[0].mxu0
        %8942 = vmatprep.mubr.bf16.mxu0 %v7538
        %8943 = vmatmul.mubr.bf16.gmra.mrb[0].mxu0 %v7537
        %v8944 = vpop.f32.mrb[0].mxu0
        %v8945 = vadd.f32 %v8656, %v8944
        %v8946 = vpop.f32.mrb[0].mxu0
        %v8947 = vpop.f32.mrb[0].mxu0
        %v8948 = vadd.f32 %v8659, %v8947
        %v8949 = vpop.f32.mrb[0].mxu0
        %8950 = vmatprep.mubr.bf16.mxu0 %v7546
        %8951 = vmatmul.mubr.bf16.gmra.mrb[0].mxu0 %v7545
        %v8952 = vpop.f32.mrb[0].mxu0
        %v8953 = vadd.f32 %v8664, %v8952
        %v8954 = vpop.f32.mrb[0].mxu0
        %v8955 = vpop.f32.mrb[0].mxu0
        %v8956 = vadd.f32 %v8667, %v8955
        %v8957 = vpop.f32.mrb[0].mxu0
        %8958 = vmatprep.mubr.bf16.mxu0 %v7554
        %8959 = vmatmul.mubr.bf16.gmra.mrb[0].mxu0 %v7553
        %v8960 = vpop.f32.mrb[0].mxu0
        %v8961 = vadd.f32 %v8672, %v8960
        %v8962 = vpop.f32.mrb[0].mxu0
        %v8963 = vpop.f32.mrb[0].mxu0
        %v8964 = vadd.f32 %v8675, %v8963
        %v8965 = vpop.f32.mrb[0].mxu0
        %8966 = vmatprep.mubr.bf16.mxu0 %v7562
        %8967 = vmatmul.mubr.bf16.gmra.mrb[0].mxu0 %v7561
        %v8968 = vpop.f32.mrb[0].mxu0
        %v8969 = vadd.f32 %v8680, %v8968
        %v8970 = vpop.f32.mrb[0].mxu0
        %v8971 = vpop.f32.mrb[0].mxu0
        %v8972 = vadd.f32 %v8683, %v8971
        %v8973 = vpop.f32.mrb[0].mxu0
        %8974 = vmatprep.mubr.bf16.mxu0 %v7570
        %8975 = vmatmul.mubr.bf16.gmra.mrb[0].mxu0 %v7569
        %v8976 = vpop.f32.mrb[0].mxu0
        %v8977 = vadd.f32 %v8688, %v8976
        %v8978 = vpop.f32.mrb[0].mxu0
        %v8979 = vpop.f32.mrb[0].mxu0
        %v8980 = vadd.f32 %v8691, %v8979
        %v8981 = vpop.f32.mrb[0].mxu0
        %8982 = vmatprep.mubr.bf16.mxu0 %v7578
        %8983 = vmatmul.mubr.bf16.gmra.mrb[0].mxu0 %v7577
        %v8984 = vpop.f32.mrb[0].mxu0
        %v8985 = vadd.f32 %v8696, %v8984
        %v8986 = vpop.f32.mrb[0].mxu0
        %v8987 = vpop.f32.mrb[0].mxu0
        %v8988 = vadd.f32 %v8699, %v8987
        %v8989 = vpop.f32.mrb[0].mxu0
        %8990 = vmatprep.mubr.bf16.mxu0 %v7586
        %8991 = vmatmul.mubr.bf16.gmra.mrb[0].mxu0 %v7585
        %v8992 = vpop.f32.mrb[0].mxu0
        %v8993 = vadd.f32 %v8704, %v8992
        %v8994 = vpop.f32.mrb[0].mxu0
        %v8995 = vpop.f32.mrb[0].mxu0
        %v8996 = vadd.f32 %v8707, %v8995
        %v8997 = vpop.f32.mrb[0].mxu0
        %8998 = vmatprep.mubr.bf16.mxu0 %v7594
        %8999 = vmatmul.mubr.bf16.gmra.mrb[0].mxu0 %v7593
        %v9000 = vpop.f32.mrb[0].mxu0
        %v9001 = vadd.f32 %v8712, %v9000
        %v9002 = vpop.f32.mrb[0].mxu0
        %v9003 = vpop.f32.mrb[0].mxu0
        %v9004 = vadd.f32 %v8715, %v9003
        %v9005 = vpop.f32.mrb[0].mxu0
        %9006 = vmatprep.mubr.bf16.mxu0 %v7602
        %9007 = vmatmul.mubr.bf16.gmra.mrb[0].mxu0 %v7601
        %v9008 = vpop.f32.mrb[0].mxu0
        %v9009 = vadd.f32 %v8720, %v9008
        %v9010 = vpop.f32.mrb[0].mxu0
        %v9011 = vpop.f32.mrb[0].mxu0
        %v9012 = vadd.f32 %v8723, %v9011
        %v9013 = vpop.f32.mrb[0].mxu0
        %9014 = vmatprep.mubr.bf16.mxu0 %v7610
        %9015 = vmatmul.mubr.bf16.gmra.mrb[0].mxu0 %v7609
        %v9016 = vpop.f32.mrb[0].mxu0
        %v9017 = vadd.f32 %v8728, %v9016
        %v9018 = vpop.f32.mrb[0].mxu0
        %v9019 = vpop.f32.mrb[0].mxu0
        %v9020 = vadd.f32 %v8731, %v9019
        %v9021 = vpop.f32.mrb[0].mxu0
        %9022 = vmatprep.mubr.bf16.mxu0 %v7618
        %9023 = vmatmul.mubr.bf16.gmra.mrb[0].mxu0 %v7617
        %v9024 = vpop.f32.mrb[0].mxu0
        %v9025 = vadd.f32 %v8736, %v9024
        %v9026 = vpop.f32.mrb[0].mxu0
        %v9027 = vpop.f32.mrb[0].mxu0
        %v9028 = vadd.f32 %v8739, %v9027
        %v9029 = vpop.f32.mrb[0].mxu0
        %9030 = vmatprep.mubr.bf16.mxu0 %v7626
        %9031 = vmatmul.mubr.bf16.gmra.mrb[0].mxu0 %v7625
        %v9032 = vpop.f32.mrb[0].mxu0
        %v9033 = vadd.f32 %v8744, %v9032
        %v9034 = vpop.f32.mrb[0].mxu0
        %v9035 = vpop.f32.mrb[0].mxu0
        %v9036 = vadd.f32 %v8747, %v9035
        %v9037 = vpop.f32.mrb[0].mxu0
        %9038 = vmatprep.mubr.bf16.mxu0 %v7634
        %9039 = vmatmul.mubr.bf16.gmra.mrb[0].mxu0 %v7633
        %v9040 = vpop.f32.mrb[0].mxu0
        %v9041 = vadd.f32 %v8752, %v9040
        %v9042 = vpop.f32.mrb[0].mxu0
        %v9043 = vpop.f32.mrb[0].mxu0
        %v9044 = vadd.f32 %v8755, %v9043
        %v9045 = vpop.f32.mrb[0].mxu0
        %9046 = vmatprep.mubr.bf16.mxu0 %v7642
        %9047 = vmatmul.mubr.bf16.gmra.mrb[0].mxu0 %v7641
        %v9048 = vpop.f32.mrb[0].mxu0
        %v9049 = vadd.f32 %v8760, %v9048
        %v9050 = vpop.f32.mrb[0].mxu0
        %v9051 = vpop.f32.mrb[0].mxu0
        %v9052 = vadd.f32 %v8763, %v9051
        %v9053 = vpop.f32.mrb[0].mxu0
        %9054 = vmatprep.mubr.bf16.mxu0 %v7650
        %9055 = vmatmul.mubr.bf16.gmra.mrb[0].mxu0 %v7649
        %v9056 = vpop.f32.mrb[0].mxu0
        %v9057 = vadd.f32 %v8768, %v9056
        %v9058 = vpop.f32.mrb[0].mxu0
        %v9059 = vpop.f32.mrb[0].mxu0
        %v9060 = vadd.f32 %v8771, %v9059
        %v9061 = vpop.f32.mrb[0].mxu0
        %9062 = vmatprep.mubr.bf16.mxu0 %v7658
        %9063 = vmatmul.mubr.bf16.gmra.mrb[0].mxu0 %v7657
        %v9064 = vpop.f32.mrb[0].mxu0
        %v9065 = vadd.f32 %v8776, %v9064
        %v9066 = vpop.f32.mrb[0].mxu0
        %v9067 = vpop.f32.mrb[0].mxu0
        %v9068 = vadd.f32 %v8779, %v9067
        %v9069 = vpop.f32.mrb[0].mxu0
        %9070 = vmatprep.mubr.bf16.mxu0 %v7666
        %9071 = vmatmul.mubr.bf16.gmra.mrb[0].mxu0 %v7665
        %v9072 = vpop.f32.mrb[0].mxu0
        %v9073 = vadd.f32 %v8784, %v9072
        %v9074 = vpop.f32.mrb[0].mxu0
        %v9075 = vpop.f32.mrb[0].mxu0
        %v9076 = vadd.f32 %v8787, %v9075
        %v9077 = vpop.f32.mrb[0].mxu0
        %9078 = vmatprep.mubr.bf16.mxu0 %v7674
        %9079 = vmatmul.mubr.bf16.gmra.mrb[0].mxu0 %v7673
        %v9080 = vpop.f32.mrb[0].mxu0
        %v9081 = vadd.f32 %v8792, %v9080
        %v9082 = vpop.f32.mrb[0].mxu0
        %v9083 = vpop.f32.mrb[0].mxu0
        %v9084 = vadd.f32 %v8795, %v9083
        %v9085 = vpop.f32.mrb[0].mxu0
        %9086 = vmatprep.mubr.bf16.mxu0 %v7682
        %9087 = vmatmul.mubr.bf16.gmra.mrb[0].mxu0 %v7681
        %v9088 = vpop.f32.mrb[0].mxu0
        %v9089 = vadd.f32 %v8800, %v9088
        %v9090 = vpop.f32.mrb[0].mxu0
        %v9091 = vpop.f32.mrb[0].mxu0
        %v9092 = vadd.f32 %v8803, %v9091
        %v9093 = vpop.f32.mrb[0].mxu0
        %9094 = vmatprep.mubr.bf16.mxu0 %v7690
        %9095 = vmatmul.mubr.bf16.gmra.mrb[0].mxu0 %v7689
        %v9096 = vpop.f32.mrb[0].mxu0
        %v9097 = vadd.f32 %v8808, %v9096
        %v9098 = vpop.f32.mrb[0].mxu0
        %v9099 = vpop.f32.mrb[0].mxu0
        %v9100 = vadd.f32 %v8811, %v9099
        %v9101 = vpop.f32.mrb[0].mxu0
        %9102 = vdwg.mxu0
        %v9103 = vmax.f32 %v8849, 0.0
        %v9104 = vmax.f32 %v8852, 0.0
        %v9105 = vmax.f32 %v8857, 0.0
        %v9106 = vmax.f32 %v8860, 0.0
        %v9107 = vmax.f32 %v8865, 0.0
        %v9108 = vmax.f32 %v8868, 0.0
        %v9109 = vmax.f32 %v8873, 0.0
        %v9110 = vmax.f32 %v8876, 0.0
        %v9111 = vmax.f32 %v8881, 0.0
        %v9112 = vmax.f32 %v8884, 0.0
        %v9113 = vmax.f32 %v8889, 0.0
        %v9114 = vmax.f32 %v8892, 0.0
        %v9115 = vmax.f32 %v8897, 0.0
        %v9116 = vmax.f32 %v8900, 0.0
        %v9117 = vmax.f32 %v8905, 0.0
        %v9118 = vmax.f32 %v8908, 0.0
        %v9119 = vmax.f32 %v8913, 0.0
        %v9120 = vmax.f32 %v8916, 0.0
        %v9121 = vmax.f32 %v8921, 0.0
        %v9122 = vmax.f32 %v8924, 0.0
        %v9123 = vmax.f32 %v8929, 0.0
        %v9124 = vmax.f32 %v8932, 0.0
        %v9125 = vmax.f32 %v8937, 0.0
        %v9126 = vmax.f32 %v8940, 0.0
        %v9127 = vmax.f32 %v8945, 0.0
        %v9128 = vmax.f32 %v8948, 0.0
        %v9129 = vmax.f32 %v8953, 0.0
        %v9130 = vmax.f32 %v8956, 0.0
        %v9131 = vmax.f32 %v8961, 0.0
        %v9132 = vmax.f32 %v8964, 0.0
        %v9133 = vmax.f32 %v8969, 0.0
        %v9134 = vmax.f32 %v8972, 0.0
        %v9135 = vmax.f32 %v8977, 0.0
        %v9136 = vmax.f32 %v8980, 0.0
        %v9137 = vmax.f32 %v8985, 0.0
        %v9138 = vmax.f32 %v8988, 0.0
        %v9139 = vmax.f32 %v8993, 0.0
        %v9140 = vmax.f32 %v8996, 0.0
        %v9141 = vmax.f32 %v9001, 0.0
        %v9142 = vmax.f32 %v9004, 0.0
        %v9143 = vmax.f32 %v9009, 0.0
        %v9144 = vmax.f32 %v9012, 0.0
        %v9145 = vmax.f32 %v9017, 0.0
        %v9146 = vmax.f32 %v9020, 0.0
        %v9147 = vmax.f32 %v9025, 0.0
        %v9148 = vmax.f32 %v9028, 0.0
        %v9149 = vmax.f32 %v9033, 0.0
        %v9150 = vmax.f32 %v9036, 0.0
        %v9151 = vmax.f32 %v9041, 0.0
        %v9152 = vmax.f32 %v9044, 0.0
        %v9153 = vmax.f32 %v9049, 0.0
        %v9154 = vmax.f32 %v9052, 0.0
        %v9155 = vmax.f32 %v9057, 0.0
        %v9156 = vmax.f32 %v9060, 0.0
        %v9157 = vmax.f32 %v9065, 0.0
        %v9158 = vmax.f32 %v9068, 0.0
        %v9159 = vmax.f32 %v9073, 0.0
        %v9160 = vmax.f32 %v9076, 0.0
        %v9161 = vmax.f32 %v9081, 0.0
        %v9162 = vmax.f32 %v9084, 0.0
        %v9163 = vmax.f32 %v9089, 0.0
        %v9164 = vmax.f32 %v9092, 0.0
        %v9165 = vmax.f32 %v9097, 0.0
        %v9166 = vmax.f32 %v9100, 0.0
        %v9167 = vld [vmem:[#allocation4] sm:$0xff]
        %v9168 = vld [vmem:[#allocation4 + $0x8] sm:$0xff]
        %v9169 = vld [vmem:[#allocation4 + $0x10] sm:$0xff]
        %v9170 = vld [vmem:[#allocation4 + $0x18] sm:$0xff]
        %v9171 = vld [vmem:[#allocation4 + $0x20] sm:$0xff]
        %v9172 = vld [vmem:[#allocation4 + $0x28] sm:$0xff]
        %v9173 = vld [vmem:[#allocation4 + $0x30] sm:$0xff]
        %v9174 = vld [vmem:[#allocation4 + $0x38] sm:$0xff]
        %v9175 = vld [vmem:[#allocation4 + $0x40] sm:$0xff]
        %v9176 = vld [vmem:[#allocation4 + $0x48] sm:$0xff]
        %v9177 = vld [vmem:[#allocation4 + $0x50] sm:$0xff]
        %v9178 = vld [vmem:[#allocation4 + $0x58] sm:$0xff]
        %v9179 = vld [vmem:[#allocation4 + $0x60] sm:$0xff]
        %v9180 = vld [vmem:[#allocation4 + $0x68] sm:$0xff]
        %v9181 = vld [vmem:[#allocation4 + $0x70] sm:$0xff]
        %v9182 = vld [vmem:[#allocation4 + $0x78] sm:$0xff]
        %v9183 = vld [vmem:[#allocation4 + $0x80] sm:$0xff]
        %v9184 = vld [vmem:[#allocation4 + $0x88] sm:$0xff]
        %v9185 = vld [vmem:[#allocation4 + $0x90] sm:$0xff]
        %v9186 = vld [vmem:[#allocation4 + $0x98] sm:$0xff]
        %v9187 = vld [vmem:[#allocation4 + $0xa0] sm:$0xff]
        %v9188 = vld [vmem:[#allocation4 + $0xa8] sm:$0xff]
        %v9189 = vld [vmem:[#allocation4 + $0xb0] sm:$0xff]
        %v9190 = vld [vmem:[#allocation4 + $0xb8] sm:$0xff]
        %v9191 = vld [vmem:[#allocation4 + $0xc0] sm:$0xff]
        %v9192 = vld [vmem:[#allocation4 + $0xc8] sm:$0xff]
        %v9193 = vld [vmem:[#allocation4 + $0xd0] sm:$0xff]
        %v9194 = vld [vmem:[#allocation4 + $0xd8] sm:$0xff]
        %v9195 = vld [vmem:[#allocation4 + $0xe0] sm:$0xff]
        %v9196 = vld [vmem:[#allocation4 + $0xe8] sm:$0xff]
        %v9197 = vld [vmem:[#allocation4 + $0xf0] sm:$0xff]
        %v9198 = vld [vmem:[#allocation4 + $0xf8] sm:$0xff]
        %v9199 = vld [vmem:[#allocation4 + $0x100] sm:$0xff]
        %v9200 = vld [vmem:[#allocation4 + $0x108] sm:$0xff]
        %v9201 = vld [vmem:[#allocation4 + $0x110] sm:$0xff]
        %v9202 = vld [vmem:[#allocation4 + $0x118] sm:$0xff]
        %v9203 = vld [vmem:[#allocation4 + $0x120] sm:$0xff]
        %v9204 = vld [vmem:[#allocation4 + $0x128] sm:$0xff]
        %v9205 = vld [vmem:[#allocation4 + $0x130] sm:$0xff]
        %v9206 = vld [vmem:[#allocation4 + $0x138] sm:$0xff]
        %v9207 = vld [vmem:[#allocation4 + $0x140] sm:$0xff]
        %v9208 = vld [vmem:[#allocation4 + $0x148] sm:$0xff]
        %v9209 = vld [vmem:[#allocation4 + $0x150] sm:$0xff]
        %v9210 = vld [vmem:[#allocation4 + $0x158] sm:$0xff]
        %v9211 = vld [vmem:[#allocation4 + $0x160] sm:$0xff]
        %v9212 = vld [vmem:[#allocation4 + $0x168] sm:$0xff]
        %v9213 = vld [vmem:[#allocation4 + $0x170] sm:$0xff]
        %v9214 = vld [vmem:[#allocation4 + $0x178] sm:$0xff]
        %v9215 = vld [vmem:[#allocation4 + $0x180] sm:$0xff]
        %v9216 = vld [vmem:[#allocation4 + $0x188] sm:$0xff]
        %v9217 = vld [vmem:[#allocation4 + $0x190] sm:$0xff]
        %v9218 = vld [vmem:[#allocation4 + $0x198] sm:$0xff]
        %v9219 = vld [vmem:[#allocation4 + $0x1a0] sm:$0xff]
        %v9220 = vld [vmem:[#allocation4 + $0x1a8] sm:$0xff]
        %v9221 = vld [vmem:[#allocation4 + $0x1b0] sm:$0xff]
        %v9222 = vld [vmem:[#allocation4 + $0x1b8] sm:$0xff]
        %v9223 = vld [vmem:[#allocation4 + $0x1c0] sm:$0xff]
        %v9224 = vld [vmem:[#allocation4 + $0x1c8] sm:$0xff]
        %v9225 = vld [vmem:[#allocation4 + $0x1d0] sm:$0xff]
        %v9226 = vld [vmem:[#allocation4 + $0x1d8] sm:$0xff]
        %v9227 = vld [vmem:[#allocation4 + $0x1e0] sm:$0xff]
        %v9228 = vld [vmem:[#allocation4 + $0x1e8] sm:$0xff]
        %v9229 = vld [vmem:[#allocation4 + $0x1f0] sm:$0xff]
        %v9230 = vld [vmem:[#allocation4 + $0x1f8] sm:$0xff]
        %v9231 = vpack.c.bf16 %v9104, %v9103
        %v9232 = vpack.c.bf16 %v9106, %v9105
        %v9233 = vpack.c.bf16 %v9108, %v9107
        %v9234 = vpack.c.bf16 %v9110, %v9109
        %v9235 = vpack.c.bf16 %v9112, %v9111
        %v9236 = vpack.c.bf16 %v9114, %v9113
        %v9237 = vpack.c.bf16 %v9116, %v9115
        %v9238 = vpack.c.bf16 %v9118, %v9117
        %v9239 = vpack.c.bf16 %v9120, %v9119
        %v9240 = vpack.c.bf16 %v9122, %v9121
        %v9241 = vpack.c.bf16 %v9124, %v9123
        %v9242 = vpack.c.bf16 %v9126, %v9125
        %v9243 = vpack.c.bf16 %v9128, %v9127
        %v9244 = vpack.c.bf16 %v9130, %v9129
        %v9245 = vpack.c.bf16 %v9132, %v9131
        %v9246 = vpack.c.bf16 %v9134, %v9133
        %v9247 = vpack.c.bf16 %v9136, %v9135
        %v9248 = vpack.c.bf16 %v9138, %v9137
        %v9249 = vpack.c.bf16 %v9140, %v9139
        %v9250 = vpack.c.bf16 %v9142, %v9141
        %v9251 = vpack.c.bf16 %v9144, %v9143
        %v9252 = vpack.c.bf16 %v9146, %v9145
        %v9253 = vpack.c.bf16 %v9148, %v9147
        %v9254 = vpack.c.bf16 %v9150, %v9149
        %v9255 = vpack.c.bf16 %v9152, %v9151
        %v9256 = vpack.c.bf16 %v9154, %v9153
        %v9257 = vpack.c.bf16 %v9156, %v9155
        %v9258 = vpack.c.bf16 %v9158, %v9157
        %v9259 = vpack.c.bf16 %v9160, %v9159
        %v9260 = vpack.c.bf16 %v9162, %v9161
        %v9261 = vpack.c.bf16 %v9164, %v9163
        %v9262 = vpack.c.bf16 %v9166, %v9165
        %v9263 = vld [vmem:[%s10] sm:$0xff]
        %v9264 = vld [vmem:[%s10 + $0x8] sm:$0xff]
        %v9265 = vld [vmem:[%s10 + $0x10] sm:$0xff]
        %v9266 = vld [vmem:[%s10 + $0x18] sm:$0xff]
        %v9267 = vld [vmem:[%s10 + $0x20] sm:$0xff]
        %v9268 = vld [vmem:[%s10 + $0x28] sm:$0xff]
        %v9269 = vld [vmem:[%s10 + $0x30] sm:$0xff]
        %v9270 = vld [vmem:[%s10 + $0x38] sm:$0xff]
        %v9271 = vld [vmem:[%s10 + $0x40] sm:$0xff]
        %v9272 = vld [vmem:[%s10 + $0x48] sm:$0xff]
        %v9273 = vld [vmem:[%s10 + $0x50] sm:$0xff]
        %v9274 = vld [vmem:[%s10 + $0x58] sm:$0xff]
        %v9275 = vld [vmem:[%s10 + $0x60] sm:$0xff]
        %v9276 = vld [vmem:[%s10 + $0x68] sm:$0xff]
        %v9277 = vld [vmem:[%s10 + $0x70] sm:$0xff]
        %v9278 = vld [vmem:[%s10 + $0x78] sm:$0xff]
        %v9279 = vld [vmem:[%s10 + $0x80] sm:$0xff]
        %v9280 = vld [vmem:[%s10 + $0x88] sm:$0xff]
        %v9281 = vld [vmem:[%s10 + $0x90] sm:$0xff]
        %v9282 = vld [vmem:[%s10 + $0x98] sm:$0xff]
        %v9283 = vld [vmem:[%s10 + $0xa0] sm:$0xff]
        %v9284 = vld [vmem:[%s10 + $0xa8] sm:$0xff]
        %v9285 = vld [vmem:[%s10 + $0xb0] sm:$0xff]
        %v9286 = vld [vmem:[%s10 + $0xb8] sm:$0xff]
        %v9287 = vld [vmem:[%s10 + $0xc0] sm:$0xff]
        %v9288 = vld [vmem:[%s10 + $0xc8] sm:$0xff]
        %v9289 = vld [vmem:[%s10 + $0xd0] sm:$0xff]
        %v9290 = vld [vmem:[%s10 + $0xd8] sm:$0xff]
        %v9291 = vld [vmem:[%s10 + $0xe0] sm:$0xff]
        %v9292 = vld [vmem:[%s10 + $0xe8] sm:$0xff]
        %v9293 = vld [vmem:[%s10 + $0xf0] sm:$0xff]
        %v9294 = vld [vmem:[%s10 + $0xf8] sm:$0xff]
        %9296 = vset.pattern.permute.xlu0 0
        %9297 = vperm.xlu0 %9296, %v9263
        %v9298 = vpop.permute.xlu0 %9297
        %9301 = vset.pattern.permute.xlu0 0
        %9302 = vperm.xlu0 %9301, %v9264
        %v9303 = vpop.permute.xlu0 %9302
        %9306 = vset.pattern.permute.xlu0 0
        %9307 = vperm.xlu0 %9306, %v9265
        %v9308 = vpop.permute.xlu0 %9307
        %9311 = vset.pattern.permute.xlu0 0
        %9312 = vperm.xlu0 %9311, %v9266
        %v9313 = vpop.permute.xlu0 %9312
        %9316 = vset.pattern.permute.xlu0 0
        %9317 = vperm.xlu0 %9316, %v9267
        %v9318 = vpop.permute.xlu0 %9317
        %9321 = vset.pattern.permute.xlu0 0
        %9322 = vperm.xlu0 %9321, %v9268
        %v9323 = vpop.permute.xlu0 %9322
        %9326 = vset.pattern.permute.xlu0 0
        %9327 = vperm.xlu0 %9326, %v9269
        %v9328 = vpop.permute.xlu0 %9327
        %9331 = vset.pattern.permute.xlu0 0
        %9332 = vperm.xlu0 %9331, %v9270
        %v9333 = vpop.permute.xlu0 %9332
        %9336 = vset.pattern.permute.xlu0 0
        %9337 = vperm.xlu0 %9336, %v9271
        %v9338 = vpop.permute.xlu0 %9337
        %9341 = vset.pattern.permute.xlu0 0
        %9342 = vperm.xlu0 %9341, %v9272
        %v9343 = vpop.permute.xlu0 %9342
        %9346 = vset.pattern.permute.xlu0 0
        %9347 = vperm.xlu0 %9346, %v9273
        %v9348 = vpop.permute.xlu0 %9347
        %9351 = vset.pattern.permute.xlu0 0
        %9352 = vperm.xlu0 %9351, %v9274
        %v9353 = vpop.permute.xlu0 %9352
        %9356 = vset.pattern.permute.xlu0 0
        %9357 = vperm.xlu0 %9356, %v9275
        %v9358 = vpop.permute.xlu0 %9357
        %9361 = vset.pattern.permute.xlu0 0
        %9362 = vperm.xlu0 %9361, %v9276
        %v9363 = vpop.permute.xlu0 %9362
        %9366 = vset.pattern.permute.xlu0 0
        %9367 = vperm.xlu0 %9366, %v9277
        %v9368 = vpop.permute.xlu0 %9367
        %9371 = vset.pattern.permute.xlu0 0
        %9372 = vperm.xlu0 %9371, %v9278
        %v9373 = vpop.permute.xlu0 %9372
        %9376 = vset.pattern.permute.xlu0 0
        %9377 = vperm.xlu0 %9376, %v9279
        %v9378 = vpop.permute.xlu0 %9377
        %9381 = vset.pattern.permute.xlu0 0
        %9382 = vperm.xlu0 %9381, %v9280
        %v9383 = vpop.permute.xlu0 %9382
        %9386 = vset.pattern.permute.xlu0 0
        %9387 = vperm.xlu0 %9386, %v9281
        %v9388 = vpop.permute.xlu0 %9387
        %9391 = vset.pattern.permute.xlu0 0
        %9392 = vperm.xlu0 %9391, %v9282
        %v9393 = vpop.permute.xlu0 %9392
        %9396 = vset.pattern.permute.xlu0 0
        %9397 = vperm.xlu0 %9396, %v9283
        %v9398 = vpop.permute.xlu0 %9397
        %9401 = vset.pattern.permute.xlu0 0
        %9402 = vperm.xlu0 %9401, %v9284
        %v9403 = vpop.permute.xlu0 %9402
        %9406 = vset.pattern.permute.xlu0 0
        %9407 = vperm.xlu0 %9406, %v9285
        %v9408 = vpop.permute.xlu0 %9407
        %9411 = vset.pattern.permute.xlu0 0
        %9412 = vperm.xlu0 %9411, %v9286
        %v9413 = vpop.permute.xlu0 %9412
        %9416 = vset.pattern.permute.xlu0 0
        %9417 = vperm.xlu0 %9416, %v9287
        %v9418 = vpop.permute.xlu0 %9417
        %9421 = vset.pattern.permute.xlu0 0
        %9422 = vperm.xlu0 %9421, %v9288
        %v9423 = vpop.permute.xlu0 %9422
        %9426 = vset.pattern.permute.xlu0 0
        %9427 = vperm.xlu0 %9426, %v9289
        %v9428 = vpop.permute.xlu0 %9427
        %9431 = vset.pattern.permute.xlu0 0
        %9432 = vperm.xlu0 %9431, %v9290
        %v9433 = vpop.permute.xlu0 %9432
        %9436 = vset.pattern.permute.xlu0 0
        %9437 = vperm.xlu0 %9436, %v9291
        %v9438 = vpop.permute.xlu0 %9437
        %9441 = vset.pattern.permute.xlu0 0
        %9442 = vperm.xlu0 %9441, %v9292
        %v9443 = vpop.permute.xlu0 %9442
        %9446 = vset.pattern.permute.xlu0 0
        %9447 = vperm.xlu0 %9446, %v9293
        %v9448 = vpop.permute.xlu0 %9447
        %9451 = vset.pattern.permute.xlu0 0
        %9452 = vperm.xlu0 %9451, %v9294
        %v9453 = vpop.permute.xlu0 %9452
        %v9519 = vunpack.c.l.b16 %v9167
        %v9520 = vunpack.c.h.b16 %v9167
        %v9521 = vunpack.c.l.b16 %v9168
        %v9522 = vunpack.c.h.b16 %v9168
        %v9523 = vunpack.c.l.b16 %v9169
        %v9524 = vunpack.c.h.b16 %v9169
        %v9525 = vunpack.c.l.b16 %v9170
        %v9526 = vunpack.c.h.b16 %v9170
        %v9527 = vunpack.c.l.b16 %v9171
        %v9528 = vunpack.c.h.b16 %v9171
        %v9529 = vunpack.c.l.b16 %v9172
        %v9530 = vunpack.c.h.b16 %v9172
        %v9531 = vunpack.c.l.b16 %v9173
        %v9532 = vunpack.c.h.b16 %v9173
        %v9533 = vunpack.c.l.b16 %v9174
        %v9534 = vunpack.c.h.b16 %v9174
        %v9535 = vunpack.c.l.b16 %v9175
        %v9536 = vunpack.c.h.b16 %v9175
        %v9537 = vunpack.c.l.b16 %v9176
        %v9538 = vunpack.c.h.b16 %v9176
        %v9539 = vunpack.c.l.b16 %v9177
        %v9540 = vunpack.c.h.b16 %v9177
        %v9541 = vunpack.c.l.b16 %v9178
        %v9542 = vunpack.c.h.b16 %v9178
        %v9543 = vunpack.c.l.b16 %v9179
        %v9544 = vunpack.c.h.b16 %v9179
        %v9545 = vunpack.c.l.b16 %v9180
        %v9546 = vunpack.c.h.b16 %v9180
        %v9547 = vunpack.c.l.b16 %v9181
        %v9548 = vunpack.c.h.b16 %v9181
        %v9549 = vunpack.c.l.b16 %v9182
        %v9550 = vunpack.c.h.b16 %v9182
        %v9551 = vunpack.c.l.b16 %v9183
        %v9552 = vunpack.c.h.b16 %v9183
        %v9553 = vunpack.c.l.b16 %v9184
        %v9554 = vunpack.c.h.b16 %v9184
        %v9555 = vunpack.c.l.b16 %v9185
        %v9556 = vunpack.c.h.b16 %v9185
        %v9557 = vunpack.c.l.b16 %v9186
        %v9558 = vunpack.c.h.b16 %v9186
        %v9559 = vunpack.c.l.b16 %v9187
        %v9560 = vunpack.c.h.b16 %v9187
        %v9561 = vunpack.c.l.b16 %v9188
        %v9562 = vunpack.c.h.b16 %v9188
        %v9563 = vunpack.c.l.b16 %v9189
        %v9564 = vunpack.c.h.b16 %v9189
        %v9565 = vunpack.c.l.b16 %v9190
        %v9566 = vunpack.c.h.b16 %v9190
        %v9567 = vunpack.c.l.b16 %v9191
        %v9568 = vunpack.c.h.b16 %v9191
        %v9569 = vunpack.c.l.b16 %v9192
        %v9570 = vunpack.c.h.b16 %v9192
        %v9571 = vunpack.c.l.b16 %v9193
        %v9572 = vunpack.c.h.b16 %v9193
        %v9573 = vunpack.c.l.b16 %v9194
        %v9574 = vunpack.c.h.b16 %v9194
        %v9575 = vunpack.c.l.b16 %v9195
        %v9576 = vunpack.c.h.b16 %v9195
        %v9577 = vunpack.c.l.b16 %v9196
        %v9578 = vunpack.c.h.b16 %v9196
        %v9579 = vunpack.c.l.b16 %v9197
        %v9580 = vunpack.c.h.b16 %v9197
        %v9581 = vunpack.c.l.b16 %v9198
        %v9582 = vunpack.c.h.b16 %v9198
        %v9583 = vunpack.c.l.b16 %v9199
        %v9584 = vunpack.c.h.b16 %v9199
        %v9585 = vunpack.c.l.b16 %v9200
        %v9586 = vunpack.c.h.b16 %v9200
        %v9587 = vunpack.c.l.b16 %v9201
        %v9588 = vunpack.c.h.b16 %v9201
        %v9589 = vunpack.c.l.b16 %v9202
        %v9590 = vunpack.c.h.b16 %v9202
        %v9591 = vunpack.c.l.b16 %v9203
        %v9592 = vunpack.c.h.b16 %v9203
        %v9593 = vunpack.c.l.b16 %v9204
        %v9594 = vunpack.c.h.b16 %v9204
        %v9595 = vunpack.c.l.b16 %v9205
        %v9596 = vunpack.c.h.b16 %v9205
        %v9597 = vunpack.c.l.b16 %v9206
        %v9598 = vunpack.c.h.b16 %v9206
        %v9599 = vunpack.c.l.b16 %v9207
        %v9600 = vunpack.c.h.b16 %v9207
        %v9601 = vunpack.c.l.b16 %v9208
        %v9602 = vunpack.c.h.b16 %v9208
        %v9603 = vunpack.c.l.b16 %v9209
        %v9604 = vunpack.c.h.b16 %v9209
        %v9605 = vunpack.c.l.b16 %v9210
        %v9606 = vunpack.c.h.b16 %v9210
        %v9607 = vunpack.c.l.b16 %v9211
        %v9608 = vunpack.c.h.b16 %v9211
        %v9609 = vunpack.c.l.b16 %v9212
        %v9610 = vunpack.c.h.b16 %v9212
        %v9611 = vunpack.c.l.b16 %v9213
        %v9612 = vunpack.c.h.b16 %v9213
        %v9613 = vunpack.c.l.b16 %v9214
        %v9614 = vunpack.c.h.b16 %v9214
        %v9615 = vunpack.c.l.b16 %v9215
        %v9616 = vunpack.c.h.b16 %v9215
        %v9617 = vunpack.c.l.b16 %v9216
        %v9618 = vunpack.c.h.b16 %v9216
        %v9619 = vunpack.c.l.b16 %v9217
        %v9620 = vunpack.c.h.b16 %v9217
        %v9621 = vunpack.c.l.b16 %v9218
        %v9622 = vunpack.c.h.b16 %v9218
        %v9623 = vunpack.c.l.b16 %v9219
        %v9624 = vunpack.c.h.b16 %v9219
        %v9625 = vunpack.c.l.b16 %v9220
        %v9626 = vunpack.c.h.b16 %v9220
        %v9627 = vunpack.c.l.b16 %v9221
        %v9628 = vunpack.c.h.b16 %v9221
        %v9629 = vunpack.c.l.b16 %v9222
        %v9630 = vunpack.c.h.b16 %v9222
        %v9631 = vunpack.c.l.b16 %v9223
        %v9632 = vunpack.c.h.b16 %v9223
        %v9633 = vunpack.c.l.b16 %v9224
        %v9634 = vunpack.c.h.b16 %v9224
        %v9635 = vunpack.c.l.b16 %v9225
        %v9636 = vunpack.c.h.b16 %v9225
        %v9637 = vunpack.c.l.b16 %v9226
        %v9638 = vunpack.c.h.b16 %v9226
        %v9639 = vunpack.c.l.b16 %v9227
        %v9640 = vunpack.c.h.b16 %v9227
        %v9641 = vunpack.c.l.b16 %v9228
        %v9642 = vunpack.c.h.b16 %v9228
        %v9643 = vunpack.c.l.b16 %v9229
        %v9644 = vunpack.c.h.b16 %v9229
        %v9645 = vunpack.c.l.b16 %v9230
        %v9646 = vunpack.c.h.b16 %v9230
        %v9647 = vpack.c.b16 %v9523, %v9519
        %v9648 = vpack.c.b16 %v9524, %v9520
        %v9649 = vpack.c.b16 %v9525, %v9521
        %v9650 = vpack.c.b16 %v9526, %v9522
        %v9651 = vpack.c.b16 %v9531, %v9527
        %v9652 = vpack.c.b16 %v9532, %v9528
        %v9653 = vpack.c.b16 %v9533, %v9529
        %v9654 = vpack.c.b16 %v9534, %v9530
        %v9655 = vpack.c.b16 %v9539, %v9535
        %v9656 = vpack.c.b16 %v9540, %v9536
        %v9657 = vpack.c.b16 %v9541, %v9537
        %v9658 = vpack.c.b16 %v9542, %v9538
        %v9659 = vpack.c.b16 %v9547, %v9543
        %v9660 = vpack.c.b16 %v9548, %v9544
        %v9661 = vpack.c.b16 %v9549, %v9545
        %v9662 = vpack.c.b16 %v9550, %v9546
        %v9663 = vpack.c.b16 %v9555, %v9551
        %v9664 = vpack.c.b16 %v9556, %v9552
        %v9665 = vpack.c.b16 %v9557, %v9553
        %v9666 = vpack.c.b16 %v9558, %v9554
        %v9667 = vpack.c.b16 %v9563, %v9559
        %v9668 = vpack.c.b16 %v9564, %v9560
        %v9669 = vpack.c.b16 %v9565, %v9561
        %v9670 = vpack.c.b16 %v9566, %v9562
        %v9671 = vpack.c.b16 %v9571, %v9567
        %v9672 = vpack.c.b16 %v9572, %v9568
        %v9673 = vpack.c.b16 %v9573, %v9569
        %v9674 = vpack.c.b16 %v9574, %v9570
        %v9675 = vpack.c.b16 %v9579, %v9575
        %v9676 = vpack.c.b16 %v9580, %v9576
        %v9677 = vpack.c.b16 %v9581, %v9577
        %v9678 = vpack.c.b16 %v9582, %v9578
        %v9679 = vpack.c.b16 %v9587, %v9583
        %v9680 = vpack.c.b16 %v9588, %v9584
        %v9681 = vpack.c.b16 %v9589, %v9585
        %v9682 = vpack.c.b16 %v9590, %v9586
        %v9683 = vpack.c.b16 %v9595, %v9591
        %v9684 = vpack.c.b16 %v9596, %v9592
        %v9685 = vpack.c.b16 %v9597, %v9593
        %v9686 = vpack.c.b16 %v9598, %v9594
        %v9687 = vpack.c.b16 %v9603, %v9599
        %v9688 = vpack.c.b16 %v9604, %v9600
        %v9689 = vpack.c.b16 %v9605, %v9601
        %v9690 = vpack.c.b16 %v9606, %v9602
        %v9691 = vpack.c.b16 %v9611, %v9607
        %v9692 = vpack.c.b16 %v9612, %v9608
        %v9693 = vpack.c.b16 %v9613, %v9609
        %v9694 = vpack.c.b16 %v9614, %v9610
        %v9695 = vpack.c.b16 %v9619, %v9615
        %v9696 = vpack.c.b16 %v9620, %v9616
        %v9697 = vpack.c.b16 %v9621, %v9617
        %v9698 = vpack.c.b16 %v9622, %v9618
        %v9699 = vpack.c.b16 %v9627, %v9623
        %v9700 = vpack.c.b16 %v9628, %v9624
        %v9701 = vpack.c.b16 %v9629, %v9625
        %v9702 = vpack.c.b16 %v9630, %v9626
        %v9703 = vpack.c.b16 %v9635, %v9631
        %v9704 = vpack.c.b16 %v9636, %v9632
        %v9705 = vpack.c.b16 %v9637, %v9633
        %v9706 = vpack.c.b16 %v9638, %v9634
        %v9707 = vpack.c.b16 %v9643, %v9639
        %v9708 = vpack.c.b16 %v9644, %v9640
        %v9709 = vpack.c.b16 %v9645, %v9641
        %v9710 = vpack.c.b16 %v9646, %v9642
        %9775 = vmatprep.subr.bf16.mxu0 0
        %9776 = vmatpush1.bf16.msra.mxu0 %v9231
        %9777 = vmatprep.subr.bf16.mxu0 0
        %9778 = vmatpush1.bf16.msra.mxu0 %v9232
        %9779 = vmatprep.subr.bf16.mxu0 0
        %9780 = vmatpush1.bf16.msra.mxu0 %v9233
        %9781 = vmatprep.subr.bf16.mxu0 0
        %9782 = vmatpush1.bf16.msra.mxu0 %v9234
        %9783 = vmatprep.subr.bf16.mxu0 0
        %9784 = vmatpush1.bf16.msra.mxu0 %v9235
        %9785 = vmatprep.subr.bf16.mxu0 0
        %9786 = vmatpush1.bf16.msra.mxu0 %v9236
        %9787 = vmatprep.subr.bf16.mxu0 0
        %9788 = vmatpush1.bf16.msra.mxu0 %v9237
        %9789 = vmatprep.subr.bf16.mxu0 0
        %9790 = vmatpush1.bf16.msra.mxu0 %v9238
        %9791 = vmatprep.subr.bf16.mxu0 0
        %9792 = vmatpush1.bf16.msra.mxu0 %v9239
        %9793 = vmatprep.subr.bf16.mxu0 0
        %9794 = vmatpush1.bf16.msra.mxu0 %v9240
        %9795 = vmatprep.subr.bf16.mxu0 0
        %9796 = vmatpush1.bf16.msra.mxu0 %v9241
        %9797 = vmatprep.subr.bf16.mxu0 0
        %9798 = vmatpush1.bf16.msra.mxu0 %v9242
        %9799 = vmatprep.subr.bf16.mxu0 0
        %9800 = vmatpush1.bf16.msra.mxu0 %v9243
        %9801 = vmatprep.subr.bf16.mxu0 0
        %9802 = vmatpush1.bf16.msra.mxu0 %v9244
        %9803 = vmatprep.subr.bf16.mxu0 0
        %9804 = vmatpush1.bf16.msra.mxu0 %v9245
        %9805 = vmatprep.subr.bf16.mxu0 0
        %9806 = vmatpush1.bf16.msra.mxu0 %v9246
        %9807 = vmatprep.mubr.bf16.mxu0 %v9648
        %9808 = vmatmul.mubr.bf16.gmra.mrb[0].mxu0 %v9647
        %v9809 = vpop.f32.mrb[0].mxu0
        %v9810 = vadd.f32 %v9298, %v9809
        %v9811 = vpop.f32.mrb[0].mxu0
        %v9812 = vpop.f32.mrb[0].mxu0
        %v9813 = vadd.f32 %v9303, %v9812
        %v9814 = vpop.f32.mrb[0].mxu0
        %9815 = vmatprep.mubr.bf16.mxu0 %v9652
        %9816 = vmatmul.mubr.bf16.gmra.mrb[0].mxu0 %v9651
        %v9817 = vpop.f32.mrb[0].mxu0
        %v9818 = vadd.f32 %v9308, %v9817
        %v9819 = vpop.f32.mrb[0].mxu0
        %v9820 = vpop.f32.mrb[0].mxu0
        %v9821 = vadd.f32 %v9313, %v9820
        %v9822 = vpop.f32.mrb[0].mxu0
        %9823 = vmatprep.mubr.bf16.mxu0 %v9656
        %9824 = vmatmul.mubr.bf16.gmra.mrb[0].mxu0 %v9655
        %v9825 = vpop.f32.mrb[0].mxu0
        %v9826 = vadd.f32 %v9318, %v9825
        %v9827 = vpop.f32.mrb[0].mxu0
        %v9828 = vpop.f32.mrb[0].mxu0
        %v9829 = vadd.f32 %v9323, %v9828
        %v9830 = vpop.f32.mrb[0].mxu0
        %9831 = vmatprep.mubr.bf16.mxu0 %v9660
        %9832 = vmatmul.mubr.bf16.gmra.mrb[0].mxu0 %v9659
        %v9833 = vpop.f32.mrb[0].mxu0
        %v9834 = vadd.f32 %v9328, %v9833
        %v9835 = vpop.f32.mrb[0].mxu0
        %v9836 = vpop.f32.mrb[0].mxu0
        %v9837 = vadd.f32 %v9333, %v9836
        %v9838 = vpop.f32.mrb[0].mxu0
        %9839 = vmatprep.mubr.bf16.mxu0 %v9664
        %9840 = vmatmul.mubr.bf16.gmra.mrb[0].mxu0 %v9663
        %v9841 = vpop.f32.mrb[0].mxu0
        %v9842 = vadd.f32 %v9338, %v9841
        %v9843 = vpop.f32.mrb[0].mxu0
        %v9844 = vpop.f32.mrb[0].mxu0
        %v9845 = vadd.f32 %v9343, %v9844
        %v9846 = vpop.f32.mrb[0].mxu0
        %9847 = vmatprep.mubr.bf16.mxu0 %v9668
        %9848 = vmatmul.mubr.bf16.gmra.mrb[0].mxu0 %v9667
        %v9849 = vpop.f32.mrb[0].mxu0
        %v9850 = vadd.f32 %v9348, %v9849
        %v9851 = vpop.f32.mrb[0].mxu0
        %v9852 = vpop.f32.mrb[0].mxu0
        %v9853 = vadd.f32 %v9353, %v9852
        %v9854 = vpop.f32.mrb[0].mxu0
        %9855 = vmatprep.mubr.bf16.mxu0 %v9672
        %9856 = vmatmul.mubr.bf16.gmra.mrb[0].mxu0 %v9671
        %v9857 = vpop.f32.mrb[0].mxu0
        %v9858 = vadd.f32 %v9358, %v9857
        %v9859 = vpop.f32.mrb[0].mxu0
        %v9860 = vpop.f32.mrb[0].mxu0
        %v9861 = vadd.f32 %v9363, %v9860
        %v9862 = vpop.f32.mrb[0].mxu0
        %9863 = vmatprep.mubr.bf16.mxu0 %v9676
        %9864 = vmatmul.mubr.bf16.gmra.mrb[0].mxu0 %v9675
        %v9865 = vpop.f32.mrb[0].mxu0
        %v9866 = vadd.f32 %v9368, %v9865
        %v9867 = vpop.f32.mrb[0].mxu0
        %v9868 = vpop.f32.mrb[0].mxu0
        %v9869 = vadd.f32 %v9373, %v9868
        %v9870 = vpop.f32.mrb[0].mxu0
        %9871 = vmatprep.mubr.bf16.mxu0 %v9680
        %9872 = vmatmul.mubr.bf16.gmra.mrb[0].mxu0 %v9679
        %v9873 = vpop.f32.mrb[0].mxu0
        %v9874 = vadd.f32 %v9378, %v9873
        %v9875 = vpop.f32.mrb[0].mxu0
        %v9876 = vpop.f32.mrb[0].mxu0
        %v9877 = vadd.f32 %v9383, %v9876
        %v9878 = vpop.f32.mrb[0].mxu0
        %9879 = vmatprep.mubr.bf16.mxu0 %v9684
        %9880 = vmatmul.mubr.bf16.gmra.mrb[0].mxu0 %v9683
        %v9881 = vpop.f32.mrb[0].mxu0
        %v9882 = vadd.f32 %v9388, %v9881
        %v9883 = vpop.f32.mrb[0].mxu0
        %v9884 = vpop.f32.mrb[0].mxu0
        %v9885 = vadd.f32 %v9393, %v9884
        %v9886 = vpop.f32.mrb[0].mxu0
        %9887 = vmatprep.mubr.bf16.mxu0 %v9688
        %9888 = vmatmul.mubr.bf16.gmra.mrb[0].mxu0 %v9687
        %v9889 = vpop.f32.mrb[0].mxu0
        %v9890 = vadd.f32 %v9398, %v9889
        %v9891 = vpop.f32.mrb[0].mxu0
        %v9892 = vpop.f32.mrb[0].mxu0
        %v9893 = vadd.f32 %v9403, %v9892
        %v9894 = vpop.f32.mrb[0].mxu0
        %9895 = vmatprep.mubr.bf16.mxu0 %v9692
        %9896 = vmatmul.mubr.bf16.gmra.mrb[0].mxu0 %v9691
        %v9897 = vpop.f32.mrb[0].mxu0
        %v9898 = vadd.f32 %v9408, %v9897
        %v9899 = vpop.f32.mrb[0].mxu0
        %v9900 = vpop.f32.mrb[0].mxu0
        %v9901 = vadd.f32 %v9413, %v9900
        %v9902 = vpop.f32.mrb[0].mxu0
        %9903 = vmatprep.mubr.bf16.mxu0 %v9696
        %9904 = vmatmul.mubr.bf16.gmra.mrb[0].mxu0 %v9695
        %v9905 = vpop.f32.mrb[0].mxu0
        %v9906 = vadd.f32 %v9418, %v9905
        %v9907 = vpop.f32.mrb[0].mxu0
        %v9908 = vpop.f32.mrb[0].mxu0
        %v9909 = vadd.f32 %v9423, %v9908
        %v9910 = vpop.f32.mrb[0].mxu0
        %9911 = vmatprep.mubr.bf16.mxu0 %v9700
        %9912 = vmatmul.mubr.bf16.gmra.mrb[0].mxu0 %v9699
        %v9913 = vpop.f32.mrb[0].mxu0
        %v9914 = vadd.f32 %v9428, %v9913
        %v9915 = vpop.f32.mrb[0].mxu0
        %v9916 = vpop.f32.mrb[0].mxu0
        %v9917 = vadd.f32 %v9433, %v9916
        %v9918 = vpop.f32.mrb[0].mxu0
        %9919 = vmatprep.mubr.bf16.mxu0 %v9704
        %9920 = vmatmul.mubr.bf16.gmra.mrb[0].mxu0 %v9703
        %v9921 = vpop.f32.mrb[0].mxu0
        %v9922 = vadd.f32 %v9438, %v9921
        %v9923 = vpop.f32.mrb[0].mxu0
        %v9924 = vpop.f32.mrb[0].mxu0
        %v9925 = vadd.f32 %v9443, %v9924
        %v9926 = vpop.f32.mrb[0].mxu0
        %9927 = vmatprep.mubr.bf16.mxu0 %v9708
        %9928 = vmatmul.mubr.bf16.gmra.mrb[0].mxu0 %v9707
        %v9929 = vpop.f32.mrb[0].mxu0
        %v9930 = vadd.f32 %v9448, %v9929
        %v9931 = vpop.f32.mrb[0].mxu0
        %v9932 = vpop.f32.mrb[0].mxu0
        %v9933 = vadd.f32 %v9453, %v9932
        %v9934 = vpop.f32.mrb[0].mxu0
        %9935 = vdwg.mxu0
        %9936 = vmatprep.subr.bf16.mxu0 0
        %9937 = vmatpush1.bf16.msra.mxu0 %v9247
        %9938 = vmatprep.subr.bf16.mxu0 0
        %9939 = vmatpush1.bf16.msra.mxu0 %v9248
        %9940 = vmatprep.subr.bf16.mxu0 0
        %9941 = vmatpush1.bf16.msra.mxu0 %v9249
        %9942 = vmatprep.subr.bf16.mxu0 0
        %9943 = vmatpush1.bf16.msra.mxu0 %v9250
        %9944 = vmatprep.subr.bf16.mxu0 0
        %9945 = vmatpush1.bf16.msra.mxu0 %v9251
        %9946 = vmatprep.subr.bf16.mxu0 0
        %9947 = vmatpush1.bf16.msra.mxu0 %v9252
        %9948 = vmatprep.subr.bf16.mxu0 0
        %9949 = vmatpush1.bf16.msra.mxu0 %v9253
        %9950 = vmatprep.subr.bf16.mxu0 0
        %9951 = vmatpush1.bf16.msra.mxu0 %v9254
        %9952 = vmatprep.subr.bf16.mxu0 0
        %9953 = vmatpush1.bf16.msra.mxu0 %v9255
        %9954 = vmatprep.subr.bf16.mxu0 0
        %9955 = vmatpush1.bf16.msra.mxu0 %v9256
        %9956 = vmatprep.subr.bf16.mxu0 0
        %9957 = vmatpush1.bf16.msra.mxu0 %v9257
        %9958 = vmatprep.subr.bf16.mxu0 0
        %9959 = vmatpush1.bf16.msra.mxu0 %v9258
        %9960 = vmatprep.subr.bf16.mxu0 0
        %9961 = vmatpush1.bf16.msra.mxu0 %v9259
        %9962 = vmatprep.subr.bf16.mxu0 0
        %9963 = vmatpush1.bf16.msra.mxu0 %v9260
        %9964 = vmatprep.subr.bf16.mxu0 0
        %9965 = vmatpush1.bf16.msra.mxu0 %v9261
        %9966 = vmatprep.subr.bf16.mxu0 0
        %9967 = vmatpush1.bf16.msra.mxu0 %v9262
        %9968 = vmatprep.mubr.bf16.mxu0 %v9650
        %9969 = vmatmul.mubr.bf16.gmra.mrb[0].mxu0 %v9649
        %v9970 = vpop.f32.mrb[0].mxu0
        %v9971 = vadd.f32 %v9810, %v9970
        %v9972 = vpop.f32.mrb[0].mxu0
        %v9973 = vpop.f32.mrb[0].mxu0
        %v9974 = vadd.f32 %v9813, %v9973
        %v9975 = vpop.f32.mrb[0].mxu0
        %9976 = vmatprep.mubr.bf16.mxu0 %v9654
        %9977 = vmatmul.mubr.bf16.gmra.mrb[0].mxu0 %v9653
        %v9978 = vpop.f32.mrb[0].mxu0
        %v9979 = vadd.f32 %v9818, %v9978
        %v9980 = vpop.f32.mrb[0].mxu0
        %v9981 = vpop.f32.mrb[0].mxu0
        %v9982 = vadd.f32 %v9821, %v9981
        %v9983 = vpop.f32.mrb[0].mxu0
        %9984 = vmatprep.mubr.bf16.mxu0 %v9658
        %9985 = vmatmul.mubr.bf16.gmra.mrb[0].mxu0 %v9657
        %v9986 = vpop.f32.mrb[0].mxu0
        %v9987 = vadd.f32 %v9826, %v9986
        %v9988 = vpop.f32.mrb[0].mxu0
        %v9989 = vpop.f32.mrb[0].mxu0
        %v9990 = vadd.f32 %v9829, %v9989
        %v9991 = vpop.f32.mrb[0].mxu0
        %9992 = vmatprep.mubr.bf16.mxu0 %v9662
        %9993 = vmatmul.mubr.bf16.gmra.mrb[0].mxu0 %v9661
        %v9994 = vpop.f32.mrb[0].mxu0
        %v9995 = vadd.f32 %v9834, %v9994
        %v9996 = vpop.f32.mrb[0].mxu0
        %v9997 = vpop.f32.mrb[0].mxu0
        %v9998 = vadd.f32 %v9837, %v9997
        %v9999 = vpop.f32.mrb[0].mxu0
        %10000 = vmatprep.mubr.bf16.mxu0 %v9666
        %10001 = vmatmul.mubr.bf16.gmra.mrb[0].mxu0 %v9665
        %v10002 = vpop.f32.mrb[0].mxu0
        %v10003 = vadd.f32 %v9842, %v10002
        %v10004 = vpop.f32.mrb[0].mxu0
        %v10005 = vpop.f32.mrb[0].mxu0
        %v10006 = vadd.f32 %v9845, %v10005
        %v10007 = vpop.f32.mrb[0].mxu0
        %10008 = vmatprep.mubr.bf16.mxu0 %v9670
        %10009 = vmatmul.mubr.bf16.gmra.mrb[0].mxu0 %v9669
        %v10010 = vpop.f32.mrb[0].mxu0
        %v10011 = vadd.f32 %v9850, %v10010
        %v10012 = vpop.f32.mrb[0].mxu0
        %v10013 = vpop.f32.mrb[0].mxu0
        %v10014 = vadd.f32 %v9853, %v10013
        %v10015 = vpop.f32.mrb[0].mxu0
        %10016 = vmatprep.mubr.bf16.mxu0 %v9674
        %10017 = vmatmul.mubr.bf16.gmra.mrb[0].mxu0 %v9673
        %v10018 = vpop.f32.mrb[0].mxu0
        %v10019 = vadd.f32 %v9858, %v10018
        %v10020 = vpop.f32.mrb[0].mxu0
        %v10021 = vpop.f32.mrb[0].mxu0
        %v10022 = vadd.f32 %v9861, %v10021
        %v10023 = vpop.f32.mrb[0].mxu0
        %10024 = vmatprep.mubr.bf16.mxu0 %v9678
        %10025 = vmatmul.mubr.bf16.gmra.mrb[0].mxu0 %v9677
        %v10026 = vpop.f32.mrb[0].mxu0
        %v10027 = vadd.f32 %v9866, %v10026
        %v10028 = vpop.f32.mrb[0].mxu0
        %v10029 = vpop.f32.mrb[0].mxu0
        %v10030 = vadd.f32 %v9869, %v10029
        %v10031 = vpop.f32.mrb[0].mxu0
        %10032 = vmatprep.mubr.bf16.mxu0 %v9682
        %10033 = vmatmul.mubr.bf16.gmra.mrb[0].mxu0 %v9681
        %v10034 = vpop.f32.mrb[0].mxu0
        %v10035 = vadd.f32 %v9874, %v10034
        %v10036 = vpop.f32.mrb[0].mxu0
        %v10037 = vpop.f32.mrb[0].mxu0
        %v10038 = vadd.f32 %v9877, %v10037
        %v10039 = vpop.f32.mrb[0].mxu0
        %10040 = vmatprep.mubr.bf16.mxu0 %v9686
        %10041 = vmatmul.mubr.bf16.gmra.mrb[0].mxu0 %v9685
        %v10042 = vpop.f32.mrb[0].mxu0
        %v10043 = vadd.f32 %v9882, %v10042
        %v10044 = vpop.f32.mrb[0].mxu0
        %v10045 = vpop.f32.mrb[0].mxu0
        %v10046 = vadd.f32 %v9885, %v10045
        %v10047 = vpop.f32.mrb[0].mxu0
        %10048 = vmatprep.mubr.bf16.mxu0 %v9690
        %10049 = vmatmul.mubr.bf16.gmra.mrb[0].mxu0 %v9689
        %v10050 = vpop.f32.mrb[0].mxu0
        %v10051 = vadd.f32 %v9890, %v10050
        %v10052 = vpop.f32.mrb[0].mxu0
        %v10053 = vpop.f32.mrb[0].mxu0
        %v10054 = vadd.f32 %v9893, %v10053
        %v10055 = vpop.f32.mrb[0].mxu0
        %10056 = vmatprep.mubr.bf16.mxu0 %v9694
        %10057 = vmatmul.mubr.bf16.gmra.mrb[0].mxu0 %v9693
        %v10058 = vpop.f32.mrb[0].mxu0
        %v10059 = vadd.f32 %v9898, %v10058
        %v10060 = vpop.f32.mrb[0].mxu0
        %v10061 = vpop.f32.mrb[0].mxu0
        %v10062 = vadd.f32 %v9901, %v10061
        %v10063 = vpop.f32.mrb[0].mxu0
        %10064 = vmatprep.mubr.bf16.mxu0 %v9698
        %10065 = vmatmul.mubr.bf16.gmra.mrb[0].mxu0 %v9697
        %v10066 = vpop.f32.mrb[0].mxu0
        %v10067 = vadd.f32 %v9906, %v10066
        %v10068 = vpop.f32.mrb[0].mxu0
        %v10069 = vpop.f32.mrb[0].mxu0
        %v10070 = vadd.f32 %v9909, %v10069
        %v10071 = vpop.f32.mrb[0].mxu0
        %10072 = vmatprep.mubr.bf16.mxu0 %v9702
        %10073 = vmatmul.mubr.bf16.gmra.mrb[0].mxu0 %v9701
        %v10074 = vpop.f32.mrb[0].mxu0
        %v10075 = vadd.f32 %v9914, %v10074
        %v10076 = vpop.f32.mrb[0].mxu0
        %v10077 = vpop.f32.mrb[0].mxu0
        %v10078 = vadd.f32 %v9917, %v10077
        %v10079 = vpop.f32.mrb[0].mxu0
        %10080 = vmatprep.mubr.bf16.mxu0 %v9706
        %10081 = vmatmul.mubr.bf16.gmra.mrb[0].mxu0 %v9705
        %v10082 = vpop.f32.mrb[0].mxu0
        %v10083 = vadd.f32 %v9922, %v10082
        %v10084 = vpop.f32.mrb[0].mxu0
        %v10085 = vpop.f32.mrb[0].mxu0
        %v10086 = vadd.f32 %v9925, %v10085
        %v10087 = vpop.f32.mrb[0].mxu0
        %10088 = vmatprep.mubr.bf16.mxu0 %v9710
        %10089 = vmatmul.mubr.bf16.gmra.mrb[0].mxu0 %v9709
        %v10090 = vpop.f32.mrb[0].mxu0
        %v10091 = vadd.f32 %v9930, %v10090
        %v10092 = vpop.f32.mrb[0].mxu0
        %v10093 = vpop.f32.mrb[0].mxu0
        %v10094 = vadd.f32 %v9933, %v10093
        %v10095 = vpop.f32.mrb[0].mxu0
        %10096 = vdwg.mxu0
        %v10097 = vmax.f32 %v9971, 0.0
        %v10098 = vmax.f32 %v9974, 0.0
        %v10099 = vmax.f32 %v9979, 0.0
        %v10100 = vmax.f32 %v9982, 0.0
        %v10101 = vmax.f32 %v9987, 0.0
        %v10102 = vmax.f32 %v9990, 0.0
        %v10103 = vmax.f32 %v9995, 0.0
        %v10104 = vmax.f32 %v9998, 0.0
        %v10105 = vmax.f32 %v10003, 0.0
        %v10106 = vmax.f32 %v10006, 0.0
        %v10107 = vmax.f32 %v10011, 0.0
        %v10108 = vmax.f32 %v10014, 0.0
        %v10109 = vmax.f32 %v10019, 0.0
        %v10110 = vmax.f32 %v10022, 0.0
        %v10111 = vmax.f32 %v10027, 0.0
        %v10112 = vmax.f32 %v10030, 0.0
        %v10113 = vmax.f32 %v10035, 0.0
        %v10114 = vmax.f32 %v10038, 0.0
        %v10115 = vmax.f32 %v10043, 0.0
        %v10116 = vmax.f32 %v10046, 0.0
        %v10117 = vmax.f32 %v10051, 0.0
        %v10118 = vmax.f32 %v10054, 0.0
        %v10119 = vmax.f32 %v10059, 0.0
        %v10120 = vmax.f32 %v10062, 0.0
        %v10121 = vmax.f32 %v10067, 0.0
        %v10122 = vmax.f32 %v10070, 0.0
        %v10123 = vmax.f32 %v10075, 0.0
        %v10124 = vmax.f32 %v10078, 0.0
        %v10125 = vmax.f32 %v10083, 0.0
        %v10126 = vmax.f32 %v10086, 0.0
        %v10127 = vmax.f32 %v10091, 0.0
        %v10128 = vmax.f32 %v10094, 0.0
        %v10129 = vld [vmem:[%s11] sm:$0xff]
        %v10130 = vld [vmem:[%s11 + $0x8] sm:$0x11]
        %v10131 = vpack.c.bf16 %v10098, %v10097
        %v10132 = vpack.c.bf16 %v10100, %v10099
        %v10133 = vpack.c.bf16 %v10102, %v10101
        %v10134 = vpack.c.bf16 %v10104, %v10103
        %v10135 = vpack.c.bf16 %v10106, %v10105
        %v10136 = vpack.c.bf16 %v10108, %v10107
        %v10137 = vpack.c.bf16 %v10110, %v10109
        %v10138 = vpack.c.bf16 %v10112, %v10111
        %v10139 = vpack.c.bf16 %v10114, %v10113
        %v10140 = vpack.c.bf16 %v10116, %v10115
        %v10141 = vpack.c.bf16 %v10118, %v10117
        %v10142 = vpack.c.bf16 %v10120, %v10119
        %v10143 = vpack.c.bf16 %v10122, %v10121
        %v10144 = vpack.c.bf16 %v10124, %v10123
        %v10145 = vpack.c.bf16 %v10126, %v10125
        %v10146 = vpack.c.bf16 %v10128, %v10127
        %v10147 = vld [vmem:[%s12] sm:$0xff]
        %v10148 = vld [vmem:[%s12 + $0x8] sm:$0x1]
        %10150 = vset.pattern.permute.xlu0 0
        %10151 = vperm.xlu0 %10150, %v10147
        %v10152 = vpop.permute.xlu0 %10151
        %10155 = vset.pattern.permute.xlu0 0
        %10156 = vperm.xlu0 %10155, %v10148
        %v10157 = vpop.permute.xlu0 %10156
        %v10161 = vunpack.c.l.b16 %v10129
        %v10162 = vunpack.c.h.b16 %v10129
        %v10163 = vunpack.c.l.b16 %v10130
        %v10164 = vunpack.c.h.b16 %v10130
        %v10165 = vpack.c.b16 %v10163, %v10161
        %v10166 = vpack.c.b16 %v10164, %v10162
        %10169 = vmatprep.subr.bf16.mxu0 0
        %10170 = vmatpush1.bf16.msra.mxu0 %v10131
        %10171 = vmatprep.subr.bf16.mxu0 0
        %10172 = vmatpush1.bf16.msra.mxu0 %v10132
        %10173 = vmatprep.subr.bf16.mxu0 0
        %10174 = vmatpush1.bf16.msra.mxu0 %v10133
        %10175 = vmatprep.subr.bf16.mxu0 0
        %10176 = vmatpush1.bf16.msra.mxu0 %v10134
        %10177 = vmatprep.subr.bf16.mxu0 0
        %10178 = vmatpush1.bf16.msra.mxu0 %v10135
        %10179 = vmatprep.subr.bf16.mxu0 0
        %10180 = vmatpush1.bf16.msra.mxu0 %v10136
        %10181 = vmatprep.subr.bf16.mxu0 0
        %10182 = vmatpush1.bf16.msra.mxu0 %v10137
        %10183 = vmatprep.subr.bf16.mxu0 0
        %10184 = vmatpush1.bf16.msra.mxu0 %v10138
        %10185 = vmatprep.subr.bf16.mxu0 0
        %10186 = vmatpush1.bf16.msra.mxu0 %v10139
        %10187 = vmatprep.subr.bf16.mxu0 0
        %10188 = vmatpush1.bf16.msra.mxu0 %v10140
        %10189 = vmatprep.subr.bf16.mxu0 0
        %10190 = vmatpush1.bf16.msra.mxu0 %v10141
        %10191 = vmatprep.subr.bf16.mxu0 0
        %10192 = vmatpush1.bf16.msra.mxu0 %v10142
        %10193 = vmatprep.subr.bf16.mxu0 0
        %10194 = vmatpush1.bf16.msra.mxu0 %v10143
        %10195 = vmatprep.subr.bf16.mxu0 0
        %10196 = vmatpush1.bf16.msra.mxu0 %v10144
        %10197 = vmatprep.subr.bf16.mxu0 0
        %10198 = vmatpush1.bf16.msra.mxu0 %v10145
        %10199 = vmatprep.subr.bf16.mxu0 0
        %10200 = vmatpush1.bf16.msra.mxu0 %v10146
        %10201 = vmatprep.mubr.bf16.mxu0 %v10166
        %10202 = vmatmul.mubr.bf16.gmra.mrb[0].mxu0 %v10165
        %v10203 = vpop.f32.mrb[0].mxu0
        %v10204 = vadd.f32 %v10152, %v10203
        %v10205 = vpop.f32.mrb[0].mxu0
        %v10206 = vpop.f32.mrb[0].mxu0
        %v10207 = vadd.f32 %v10157, %v10206
        %v10208 = vpop.f32.mrb[0].mxu0
        %10209 = vdwg.mxu0
        %vm10210 = vcmask 31744
        %10211 = vst.msk [vmem:[%s472] sm:$0xff] %vm10210, %v10204
        %vm10212 = vcmask 24576
        %10213 = vst.msk [vmem:[%s472 + $0x8] sm:$0x1] %vm10212, %v10207
        %p10214 = scmp.lt.s32.totalorder %s26, 1
        %s10215 = scalar_select %p10214, %s26, 1
        %s10216 = smul.addr %s10215, 2
        %s10217 = smul.addr %s10216, 8
        %s10218 = scalar_lea.vmem %s13, %s10217
        // Predicated region
        $region81: #{tpu_custom_call.1} parent=71 // pred_check
          %p10219 = pneg %p322
        $region82: #{tpu_custom_call.1} parent=71 // pred_check_branch
          %10221 = sbr.rel (%p10219) target = $region84
        $region83: #{tpu_custom_call.1} parent=71 // pred_region
          _
        $region84: #{tpu_custom_call.1} parent=71 // pred_fallthru
          _
      $region72: #{tpu_custom_call.1} parent=5 // pred_fallthru
        _
      %p10222 = scmp.le.s32.totalorder 2, %s21
      // Predicated region
      $region85: #{tpu_custom_call.1} parent=5 // pred_check
        %p10223 = pneg %p10222
      $region86: #{tpu_custom_call.1} parent=5 // pred_check_branch
        %10225 = sbr.rel (%p10223) target = $region88
      $region87: #{tpu_custom_call.1} parent=5 // pred_region
        %s10226 = ssub.s32 %s21, 2
        // Predicated region
        $region89: #{tpu_custom_call.1} parent=87 // pred_check
          %p10227 = pneg %p328
        $region90: #{tpu_custom_call.1} parent=87 // pred_check_branch
          %10229 = sbr.rel (%p10227) target = $region92
        $region91: #{tpu_custom_call.1} parent=87 // pred_region
          %p10230 = scmp.lt.s32.totalorder %s27, 1
          %s10231 = scalar_select %p10230, %s27, 1
          %s10232 = smul.addr %s10231, 2
          %s10233 = smul.addr %s10232, 8
          %s10234 = scalar_lea.vmem %s13, %s10233
        $region92: #{tpu_custom_call.1} parent=87 // pred_fallthru
          _
      $region88: #{tpu_custom_call.1} parent=5 // pred_fallthru
        _
    $region6: #{tpu_custom_call.1} parent=1 // loop_footer
      %s25 = sadd.s32 1, %s21
    $region7: #{tpu_custom_call.1} parent=1 // loop_footer_branch
      %20 = sbr.rel target = $region3
    $region8: #{tpu_custom_call.1} parent=1 // loop_exit
      _
    %10235 = vsyncpa [#allocation3], 1
    %s10236 = scalar_lea.sflag [#allocation3], 1
    %10237 = vsyncpa %s10236, 1
    %10238 = vsyncpa [#allocation5], 1

</llo_original>
